<compile_context>
chip_gen: v7x
topology: tpu7x:2x2x1
jax: 0.10.0
libtpu: 0.0.40
codegen_flags: <defaults>
</compile_context>

<pallas_src>
import functools

import jax
import jax.numpy as jnp
from jax.experimental import pallas as pl
from jax.experimental.pallas import tpu as pltpu


# ----------------------------------------------------------------------------
# Fused kernel: whole forward (5 contract + 5 expand layers) in VMEM / vregs.
# ----------------------------------------------------------------------------
def _fused_kernel(*refs, L, c_h, T0, nbatch):
    i = 0
    x_ref = refs[i]; i += 1
    contract = [refs[i + 3 * n: i + 3 * n + 3] for n in range(L)]; i += 3 * L
    expand = [refs[i + 3 * n: i + 3 * n + 3] for n in range(L)]; i += 3 * L
    pools = refs[i: i + L - 1]; i += L - 1
    ups = refs[i: i + L - 1]; i += L - 1
    codes = refs[i: i + L]; i += L
    out_refs = refs[i: i + L]; i += L
    buf = refs[i]                      # (R0 + 2, 3*c_h) f32 conv-tap staging scratch

    def rd(ref):                       # (R, C) folded block or (1, R, C) grid block
        return ref[...] if len(ref.shape) == 2 else ref[0]

    def wr(ref, val):
        if len(ref.shape) == 2:
            ref[...] = val
        else:
            ref[0] = val

    def gelu(v):                       # tanh-form GELU: transcendental on the EUP
        return 0.5 * v * (1.0 + jnp.tanh(0.7978845608028654
                                         * (v + 0.044715 * v * v * v)))

    # Segment-boundary masks, one pair per depth d (time length T0 >> d); shared
    # between contract level d and expand level L-1-d.
    lmask = [codes[d][...] == 1 for d in range(L)]    # row is a segment start
    rmask = [codes[d][...] == 2 for d in range(L)]    # row is a segment end

    def conv3_reflect(x16, w3_ref, b3, d):
        # 3-tap conv with reflect padding: one packed matmul (R, 3*c_h); the
        # +-1-row shifts of the tap0/tap2 results are contiguous offset reads of
        # `buf`, with reflect boundaries fixed by a per-row select.
        R = x16.shape[0]
        y = jnp.dot(x16, w3_ref[...], preferred_element_type=jnp.float32)
        buf[pl.ds(1, R), :] = y
        l0 = buf[pl.ds(0, R), pl.ds(0, c_h)]            # tap0 result at row t-1
        r0 = buf[pl.ds(2, R), pl.ds(0, c_h)]            # tap0 result at row t+1
        l2 = buf[pl.ds(0, R), pl.ds(2 * c_h, c_h)]      # tap2 result at row t-1
        r2 = buf[pl.ds(2, R), pl.ds(2 * c_h, c_h)]      # tap2 result at row t+1
        mid = y[:, c_h:2 * c_h]
        return (jnp.where(lmask[d], r0, l0) + mid
                + jnp.where(rmask[d], l2, r2) + b3)

    def k1(h, w_ref, b):               # pointwise conv: bf16 matmul, f32 accumulate
        return jnp.dot(h.astype(jnp.bfloat16), w_ref[...],
                       preferred_element_type=jnp.float32) + b

    def rowmix(m_ref, v):
        # Exact application of a {0, 0.5, 1}-valued row-mixing matrix (avg-pool /
        # nearest-upsample) to the f32 residual stream: bf16 hi/lo split keeps
        # ~f32 precision while using the (otherwise idle) MXU.
        hi = v.astype(jnp.bfloat16)
        lo = (v - hi.astype(jnp.float32)).astype(jnp.bfloat16)
        m = m_ref[...]
        return (jnp.dot(m, hi, preferred_element_type=jnp.float32)
                + jnp.dot(m, lo, preferred_element_type=jnp.float32))

    # ------------------------- contracting path -------------------------
    skips = []
    rs = None
    for n in range(L):
        w3_ref, w1_ref, b_ref = contract[n]
        b3 = b_ref[pl.ds(0, 1), :]                     # (1, c_h) f32
        b1 = b_ref[pl.ds(1, 1), :]                     # (1, c_h) f32
        if n == 0:
            x16 = rd(x_ref)                            # (R0, c_h) bf16, pre-padded
        else:
            rs = rowmix(pools[n - 1], rs)              # avg_pool1d(2, 2)
            x16 = rs.astype(jnp.bfloat16)
        h = gelu(conv3_reflect(x16, w3_ref, b3, n))
        skip = k1(h, w1_ref, b1)
        skips.append(skip)
        rs = gelu(skip) if n == 0 else rs + gelu(skip)

    skips = skips[::-1]

    # -------------------------- expanding path --------------------------
    for n in range(L):
        w3_ref, w1_ref, b_ref = expand[n]
        d = L - 1 - n
        b3 = b_ref[pl.ds(0, 1), pl.ds(0, c_h)]         # (1, c_h) f32
        b1 = b_ref[pl.ds(1, 1), :]                     # (1, 192) / (1, 128) f32
        h = gelu(conv3_reflect(rs.astype(jnp.bfloat16), w3_ref, b3, d))
        h = h + skips[n]
        z = k1(h, w1_ref, b1)                          # [out(pad128) | skip] or out(pad128)
        if n < L - 1:
            wr(out_refs[n], z[:, 0:128])               # lane-dense 128-wide store
            rs = rs + gelu(z[:, 128:128 + c_h])        # skip half, lane-aligned at 128
            rs = rowmix(ups[n], rs)                    # nearest x2 upsample
        else:
            wr(out_refs[n], z)


# ----------------------------------------------------------------------------
# Wrapper helpers (all precomputed outside the kernel).
# ----------------------------------------------------------------------------
def _pool_matrix(rows_in):
    r = jnp.arange(rows_in // 2)[:, None]
    c = jnp.arange(rows_in)[None, :]
    return jnp.where(c // 2 == r, 0.5, 0.0).astype(jnp.bfloat16)


def _dup_matrix(rows_in):
    r = jnp.arange(2 * rows_in)[:, None]
    c = jnp.arange(rows_in)[None, :]
    return (r // 2 == c).astype(jnp.bfloat16)


def _boundary_code(nbatch, T):
    t = jnp.arange(nbatch * T) % T
    return jnp.where(t == 0, 1, jnp.where(t == T - 1, 2, 0)).astype(jnp.int32)[:, None]


def uencoder_forward(x, params, c_h=64, c_out=2, c_k=64, L=5, batch_parallel=False):
    """x: (B, T, c_in) f32  -- PyTorch's (B, C, T) with the last two axes swapped."""
    B, T0, c_in = x.shape
    assert T0 % (1 << (L - 1)) == 0 and (T0 >> (L - 1)) >= 2, \
        "T must be divisible by 2**(L-1) and >= 2 at the deepest level"
    assert c_in <= c_h
    nb = 1 if batch_parallel else B        # batch elements folded into matmul rows
    R0 = nb * T0

    xp = x if c_in == c_h else jnp.pad(x, ((0, 0), (0, 0), (0, c_h - c_in)))
    x16 = xp.astype(jnp.bfloat16)
    if not batch_parallel:
        x16 = x16.reshape(B * T0, c_h)

    args = [x16]
    for n in range(L):
        args.extend(params["contract"][n])
    for n in range(L):
        args.extend(params["expand"][n])
    for n in range(1, L):                  # avg-pool matrices (contract levels 1..L-1)
        args.append(_pool_matrix(nb * (T0 >> (n - 1))))
    for n in range(L - 1):                 # upsample matrices (expand levels 0..L-2)
        args.append(_dup_matrix(nb * (T0 >> (L - 1 - n))))
    for d in range(L):                     # reflect-boundary codes per depth
        args.append(_boundary_code(nb, T0 >> d))

    out_rows = [nb * (T0 >> (L - 1 - n)) for n in range(L)]
    kernel = functools.partial(_fused_kernel, L=L, c_h=c_h, T0=T0, nbatch=nb)
    scratch = [pltpu.VMEM((R0 + 2, 3 * c_h), jnp.float32)]

    if batch_parallel:
        # v7x: one batch element per program so both TensorCores are used.
        def const_spec(a):
            nd = a.ndim
            return pl.BlockSpec(a.shape, lambda b, _n=nd: (0,) * _n)
        in_specs = [pl.BlockSpec((1, T0, c_h), lambda b: (b, 0, 0))]
        in_specs += [const_spec(a) for a in args[1:]]
        out_specs = tuple(pl.BlockSpec((1, r, 128), lambda b: (b, 0, 0))
                          for r in out_rows)
        out_shape = tuple(jax.ShapeDtypeStruct((B, r, 128), jnp.float32)
                          for r in out_rows)
        outs = pl.pallas_call(
            kernel, grid=(B,), in_specs=in_specs, out_specs=out_specs,
            out_shape=out_shape, scratch_shapes=scratch,
            compiler_params=pltpu.CompilerParams(
                dimension_semantics=("parallel",)),
        )(*args)
    else:
        # v5e / v6e (single TensorCore): no grid, whole problem in one invocation.
        out_shape = tuple(jax.ShapeDtypeStruct((r, 128), jnp.float32)
                          for r in out_rows)
        outs = pl.pallas_call(kernel, out_shape=out_shape,
                              scratch_shapes=scratch)(*args)

    results = []
    for n in range(L):
        Tn = T0 >> (L - 1 - n)
        Cn = (c_k + c_out * (1 << (L - 1 - n))) if n < L - 1 else (c_out + c_k)
        o = outs[n] if batch_parallel else outs[n].reshape(B, Tn, 128)
        results.append(o[:, :, :Cn])
    return results


# ----------------------------------------------------------------------------
# Parameter init (deterministic, xavier-uniform-like; weight_norm folded in).
# Weights are packed for the fused kernel (bf16); biases stacked per layer as a
# (2, .) f32 array [conv3_bias ; conv1_bias].
# ----------------------------------------------------------------------------
def init_params(key, c_in=40, c_h=64, c_out=2, c_k=64, L=5):
    keys = iter(jax.random.split(key, 8 * L))

    def uni(k, shape, lim):
        return jax.random.uniform(k, shape, jnp.float32, -lim, lim)

    def w3_taps(k, cin, cout):             # k=3 conv, taps packed along out columns
        lim = (6.0 / ((cin + cout) * 3.0)) ** 0.5
        w = uni(k, (3, cin, cout), lim)
        wp = jnp.concatenate([w[0], w[1], w[2]], axis=1)         # (Cin, 3*Cout)
        if cin < c_h:                       # pad K dim to c_h (input is zero-padded)
            wp = jnp.pad(wp, ((0, c_h - cin), (0, 0)))
        return wp.astype(jnp.bfloat16)

    def w1(k, cin, cout):                   # k=1 conv
        lim = (6.0 / (cin + cout)) ** 0.5
        return uni(k, (cin, cout), lim)

    def bias(k, cin, ksize, cout):
        lim = 1.0 / (cin * ksize) ** 0.5
        return uni(k, (cout,), lim)

    contract, expand = [], []
    cin = c_in
    for _ in range(L):
        w3p = w3_taps(next(keys), cin, c_h)
        b3 = bias(next(keys), cin, 3, c_h)
        w1c = w1(next(keys), c_h, c_h).astype(jnp.bfloat16)
        b1 = bias(next(keys), c_h, 1, c_h)
        contract.append((w3p, w1c, jnp.stack([b3, b1], axis=0)))         # (2, 64)
        cin = c_h

    for n in range(L):
        last = n == L - 1
        c_e = c_out * (1 << (L - 1 - n))
        c_tot = (c_out + c_k) if last else (c_h + c_k + c_e)
        w3p = w3_taps(next(keys), c_h, c_h)
        b3 = bias(next(keys), c_h, 3, c_h)
        w1e = w1(next(keys), c_h, c_tot)
        b1 = bias(next(keys), c_h, 1, c_tot)
        if last:
            pad = 128 - c_tot
            w1p = jnp.pad(w1e, ((0, 0), (0, pad)))                       # (c_h, 128)
            b1p = jnp.pad(b1, (0, pad))
            bias2 = jnp.stack([jnp.pad(b3, (0, 128 - c_h)), b1p], axis=0)  # (2, 128)
        else:
            pad = 128 - (c_k + c_e)
            # pack as [out (padded to 128 lanes) | skip] -> lane-aligned split
            w1p = jnp.concatenate(
                [jnp.pad(w1e[:, c_h:], ((0, 0), (0, pad))), w1e[:, :c_h]],
                axis=1)                                                  # (c_h, 192)
            b1p = jnp.concatenate([jnp.pad(b1[c_h:], (0, pad)), b1[:c_h]])  # (192,)
            bias2 = jnp.stack([jnp.pad(b3, (0, 192 - c_h)), b1p], axis=0)   # (2, 192)
        expand.append((w3p, w1p.astype(jnp.bfloat16), bias2))
    return {"contract": contract, "expand": expand}


if __name__ == "__main__":
    key = jax.random.PRNGKey(0)
    kx, kp = jax.random.split(key)

    B, T, C_IN = 2, 32, 40            # T divisible by 2**(L-1)=16, deepest level T=2
    # layout: x is (B, T, C) == PyTorch (B, C_in, T) with the last two axes swapped.
    x = jax.random.normal(kx, (B, T, C_IN), dtype=jnp.float32)
    params = init_params(kp)

    # Default (v5e / v6e): batch folded into matmul rows, grid-free.
    fwd = jax.jit(functools.partial(uencoder_forward, batch_parallel=False))
    outs = jax.block_until_ready(fwd(x, params))

    expected = [(B, 2, 96), (B, 4, 80), (B, 8, 72), (B, 16, 68), (B, 32, 66)]
    assert [tuple(o.shape) for o in outs] == expected, [o.shape for o in outs]
    assert all(bool(jnp.isfinite(o).all()) for o in outs)

    # v7x-style batch-parallel grid variant must agree with the folded one.
    fwd_bp = jax.jit(functools.partial(uencoder_forward, batch_parallel=True))
    outs_bp = jax.block_until_ready(fwd_bp(x, params))
    assert all(bool(jnp.allclose(a, b, atol=1e-5, rtol=1e-5))
               for a, b in zip(outs, outs_bp))

    print("KERNEL_OK")
</pallas_src>

<mosaic_0001>
module attributes {stable_mosaic.version = 11 : i64} {
  func.func @_fused_kernel(%arg0: memref<64x64xbf16, #tpu.memory_space<vmem>>, %arg1: memref<64x192xbf16, #tpu.memory_space<vmem>>, %arg2: memref<64x64xbf16, #tpu.memory_space<vmem>>, %arg3: memref<2x64xf32, #tpu.memory_space<vmem>>, %arg4: memref<64x192xbf16, #tpu.memory_space<vmem>>, %arg5: memref<64x64xbf16, #tpu.memory_space<vmem>>, %arg6: memref<2x64xf32, #tpu.memory_space<vmem>>, %arg7: memref<64x192xbf16, #tpu.memory_space<vmem>>, %arg8: memref<64x64xbf16, #tpu.memory_space<vmem>>, %arg9: memref<2x64xf32, #tpu.memory_space<vmem>>, %arg10: memref<64x192xbf16, #tpu.memory_space<vmem>>, %arg11: memref<64x64xbf16, #tpu.memory_space<vmem>>, %arg12: memref<2x64xf32, #tpu.memory_space<vmem>>, %arg13: memref<64x192xbf16, #tpu.memory_space<vmem>>, %arg14: memref<64x64xbf16, #tpu.memory_space<vmem>>, %arg15: memref<2x64xf32, #tpu.memory_space<vmem>>, %arg16: memref<64x192xbf16, #tpu.memory_space<vmem>>, %arg17: memref<64x192xbf16, #tpu.memory_space<vmem>>, %arg18: memref<2x192xf32, #tpu.memory_space<vmem>>, %arg19: memref<64x192xbf16, #tpu.memory_space<vmem>>, %arg20: memref<64x192xbf16, #tpu.memory_space<vmem>>, %arg21: memref<2x192xf32, #tpu.memory_space<vmem>>, %arg22: memref<64x192xbf16, #tpu.memory_space<vmem>>, %arg23: memref<64x192xbf16, #tpu.memory_space<vmem>>, %arg24: memref<2x192xf32, #tpu.memory_space<vmem>>, %arg25: memref<64x192xbf16, #tpu.memory_space<vmem>>, %arg26: memref<64x192xbf16, #tpu.memory_space<vmem>>, %arg27: memref<2x192xf32, #tpu.memory_space<vmem>>, %arg28: memref<64x192xbf16, #tpu.memory_space<vmem>>, %arg29: memref<64x128xbf16, #tpu.memory_space<vmem>>, %arg30: memref<2x128xf32, #tpu.memory_space<vmem>>, %arg31: memref<32x64xbf16, #tpu.memory_space<vmem>>, %arg32: memref<16x32xbf16, #tpu.memory_space<vmem>>, %arg33: memref<8x16xbf16, #tpu.memory_space<vmem>>, %arg34: memref<4x8xbf16, #tpu.memory_space<vmem>>, %arg35: memref<8x4xbf16, #tpu.memory_space<vmem>>, %arg36: memref<16x8xbf16, #tpu.memory_space<vmem>>, %arg37: memref<32x16xbf16, #tpu.memory_space<vmem>>, %arg38: memref<64x32xbf16, #tpu.memory_space<vmem>>, %arg39: memref<64x1xi32, #tpu.memory_space<vmem>>, %arg40: memref<32x1xi32, #tpu.memory_space<vmem>>, %arg41: memref<16x1xi32, #tpu.memory_space<vmem>>, %arg42: memref<8x1xi32, #tpu.memory_space<vmem>>, %arg43: memref<4x1xi32, #tpu.memory_space<vmem>>, %arg44: memref<4x128xf32, #tpu.memory_space<vmem>>, %arg45: memref<8x128xf32, #tpu.memory_space<vmem>>, %arg46: memref<16x128xf32, #tpu.memory_space<vmem>>, %arg47: memref<32x128xf32, #tpu.memory_space<vmem>>, %arg48: memref<64x128xf32, #tpu.memory_space<vmem>>, %arg49: memref<66x192xf32, #tpu.memory_space<vmem>>) attributes {dimension_semantics = [], scalar_prefetch = 0 : i64, scratch_operands = 1 : i64, tpu.core_type = #tpu.core_type<tc>} {
    %c0 = arith.constant 0 : index
    %c0_0 = arith.constant 0 : index
    %0 = vector.load %arg39[%c0, %c0_0] : memref<64x1xi32, #tpu.memory_space<vmem>>, vector<64x1xi32>
    %c1_i32 = arith.constant 1 : i32
    %1 = vector.broadcast %c1_i32 : i32 to vector<64x1xi32>
    %2 = arith.cmpi eq, %0, %1 : vector<64x1xi32>
    %c0_1 = arith.constant 0 : index
    %c0_2 = arith.constant 0 : index
    %3 = vector.load %arg40[%c0_1, %c0_2] : memref<32x1xi32, #tpu.memory_space<vmem>>, vector<32x1xi32>
    %c1_i32_3 = arith.constant 1 : i32
    %4 = vector.broadcast %c1_i32_3 : i32 to vector<32x1xi32>
    %5 = arith.cmpi eq, %3, %4 : vector<32x1xi32>
    %c0_4 = arith.constant 0 : index
    %c0_5 = arith.constant 0 : index
    %6 = vector.load %arg41[%c0_4, %c0_5] : memref<16x1xi32, #tpu.memory_space<vmem>>, vector<16x1xi32>
    %c1_i32_6 = arith.constant 1 : i32
    %7 = vector.broadcast %c1_i32_6 : i32 to vector<16x1xi32>
    %8 = arith.cmpi eq, %6, %7 : vector<16x1xi32>
    %c0_7 = arith.constant 0 : index
    %c0_8 = arith.constant 0 : index
    %9 = vector.load %arg42[%c0_7, %c0_8] : memref<8x1xi32, #tpu.memory_space<vmem>>, vector<8x1xi32>
    %c1_i32_9 = arith.constant 1 : i32
    %10 = vector.broadcast %c1_i32_9 : i32 to vector<8x1xi32>
    %11 = arith.cmpi eq, %9, %10 : vector<8x1xi32>
    %c0_10 = arith.constant 0 : index
    %c0_11 = arith.constant 0 : index
    %12 = vector.load %arg43[%c0_10, %c0_11] : memref<4x1xi32, #tpu.memory_space<vmem>>, vector<4x1xi32>
    %c1_i32_12 = arith.constant 1 : i32
    %13 = vector.broadcast %c1_i32_12 : i32 to vector<4x1xi32>
    %14 = arith.cmpi eq, %12, %13 : vector<4x1xi32>
    %c0_13 = arith.constant 0 : index
    %c0_14 = arith.constant 0 : index
    %15 = vector.load %arg39[%c0_13, %c0_14] : memref<64x1xi32, #tpu.memory_space<vmem>>, vector<64x1xi32>
    %c2_i32 = arith.constant 2 : i32
    %16 = vector.broadcast %c2_i32 : i32 to vector<64x1xi32>
    %17 = arith.cmpi eq, %15, %16 : vector<64x1xi32>
    %c0_15 = arith.constant 0 : index
    %c0_16 = arith.constant 0 : index
    %18 = vector.load %arg40[%c0_15, %c0_16] : memref<32x1xi32, #tpu.memory_space<vmem>>, vector<32x1xi32>
    %c2_i32_17 = arith.constant 2 : i32
    %19 = vector.broadcast %c2_i32_17 : i32 to vector<32x1xi32>
    %20 = arith.cmpi eq, %18, %19 : vector<32x1xi32>
    %c0_18 = arith.constant 0 : index
    %c0_19 = arith.constant 0 : index
    %21 = vector.load %arg41[%c0_18, %c0_19] : memref<16x1xi32, #tpu.memory_space<vmem>>, vector<16x1xi32>
    %c2_i32_20 = arith.constant 2 : i32
    %22 = vector.broadcast %c2_i32_20 : i32 to vector<16x1xi32>
    %23 = arith.cmpi eq, %21, %22 : vector<16x1xi32>
    %c0_21 = arith.constant 0 : index
    %c0_22 = arith.constant 0 : index
    %24 = vector.load %arg42[%c0_21, %c0_22] : memref<8x1xi32, #tpu.memory_space<vmem>>, vector<8x1xi32>
    %c2_i32_23 = arith.constant 2 : i32
    %25 = vector.broadcast %c2_i32_23 : i32 to vector<8x1xi32>
    %26 = arith.cmpi eq, %24, %25 : vector<8x1xi32>
    %c0_24 = arith.constant 0 : index
    %c0_25 = arith.constant 0 : index
    %27 = vector.load %arg43[%c0_24, %c0_25] : memref<4x1xi32, #tpu.memory_space<vmem>>, vector<4x1xi32>
    %c2_i32_26 = arith.constant 2 : i32
    %28 = vector.broadcast %c2_i32_26 : i32 to vector<4x1xi32>
    %29 = arith.cmpi eq, %27, %28 : vector<4x1xi32>
    %c0_27 = arith.constant 0 : index
    %c0_28 = arith.constant 0 : index
    %30 = vector.load %arg3[%c0_27, %c0_28] : memref<2x64xf32, #tpu.memory_space<vmem>>, vector<1x64xf32>
    %c1 = arith.constant 1 : index
    %c0_29 = arith.constant 0 : index
    %31 = vector.load %arg3[%c1, %c0_29] : memref<2x64xf32, #tpu.memory_space<vmem>>, vector<1x64xf32>
    %c0_30 = arith.constant 0 : index
    %c0_31 = arith.constant 0 : index
    %32 = vector.load %arg0[%c0_30, %c0_31] : memref<64x64xbf16, #tpu.memory_space<vmem>>, vector<64x64xbf16>
    %c0_32 = arith.constant 0 : index
    %c0_33 = arith.constant 0 : index
    %33 = vector.load %arg1[%c0_32, %c0_33] : memref<64x192xbf16, #tpu.memory_space<vmem>>, vector<64x192xbf16>
    %cst = arith.constant dense<0.000000e+00> : vector<64x192xf32>
    %34 = tpu.matmul %32, %33, %cst {dimension_numbers = #tpu.dot_dimension_numbers<[1], [0], [0], [1], [0, 0, 1, 1], [], []>} : vector<64x64xbf16>, vector<64x192xbf16>, vector<64x192xf32> -> vector<64x192xf32>
    %c1_34 = arith.constant 1 : index
    %c0_35 = arith.constant 0 : index
    %35 = vector.load %arg49[%c1_34, %c0_35] : memref<66x192xf32, #tpu.memory_space<vmem>>, vector<64x192xf32>
    tpu.vector_store %arg49[%c1_34, %c0_35], %34 {strides = array<i32>} : memref<66x192xf32, #tpu.memory_space<vmem>>, vector<64x192xf32>,
    %c0_36 = arith.constant 0 : index
    %c0_37 = arith.constant 0 : index
    %36 = vector.load %arg49[%c0_36, %c0_37] : memref<66x192xf32, #tpu.memory_space<vmem>>, vector<64x64xf32>
    %c2 = arith.constant 2 : index
    %c0_38 = arith.constant 0 : index
    %37 = vector.load %arg49[%c2, %c0_38] : memref<66x192xf32, #tpu.memory_space<vmem>>, vector<64x64xf32>
    %c0_39 = arith.constant 0 : index
    %c128 = arith.constant 128 : index
    %38 = vector.load %arg49[%c0_39, %c128] : memref<66x192xf32, #tpu.memory_space<vmem>>, vector<64x64xf32>
    %c2_40 = arith.constant 2 : index
    %c128_41 = arith.constant 128 : index
    %39 = vector.load %arg49[%c2_40, %c128_41] : memref<66x192xf32, #tpu.memory_space<vmem>>, vector<64x64xf32>
    %40 = vector.extract_strided_slice %34 {offsets = [0, 64], sizes = [64, 64], strides = [1, 1]} : vector<64x192xf32> to vector<64x64xf32>
    %41 = vector.shape_cast %2 : vector<64x1xi1> to vector<64x1xi1>
    %42 = vector.broadcast %41 : vector<64x1xi1> to vector<64x64xi1>
    %43 = arith.select %42, %37, %36 : vector<64x64xi1>, vector<64x64xf32>
    %44 = arith.addf %43, %40 : vector<64x64xf32>
    %45 = vector.shape_cast %17 : vector<64x1xi1> to vector<64x1xi1>
    %46 = vector.broadcast %45 : vector<64x1xi1> to vector<64x64xi1>
    %47 = arith.select %46, %38, %39 : vector<64x64xi1>, vector<64x64xf32>
    %48 = arith.addf %44, %47 : vector<64x64xf32>
    %49 = vector.broadcast %30 : vector<1x64xf32> to vector<64x64xf32>
    %50 = arith.addf %48, %49 : vector<64x64xf32>
    %cst_42 = arith.constant 5.000000e-01 : f32
    %51 = vector.broadcast %cst_42 : f32 to vector<64x64xf32>
    %52 = arith.mulf %51, %50 : vector<64x64xf32>
    %cst_43 = arith.constant 4.471500e-02 : f32
    %53 = vector.broadcast %cst_43 : f32 to vector<64x64xf32>
    %54 = arith.mulf %53, %50 : vector<64x64xf32>
    %55 = arith.mulf %54, %50 : vector<64x64xf32>
    %56 = arith.mulf %55, %50 : vector<64x64xf32>
    %57 = arith.addf %50, %56 : vector<64x64xf32>
    %cst_44 = arith.constant 0.797884583 : f32
    %58 = vector.broadcast %cst_44 : f32 to vector<64x64xf32>
    %59 = arith.mulf %58, %57 : vector<64x64xf32>
    %60 = math.tanh %59 : vector<64x64xf32>
    %cst_45 = arith.constant 1.000000e+00 : f32
    %61 = vector.broadcast %cst_45 : f32 to vector<64x64xf32>
    %62 = arith.addf %61, %60 : vector<64x64xf32>
    %63 = arith.mulf %52, %62 : vector<64x64xf32>
    %64 = arith.truncf %63 : vector<64x64xf32> to vector<64x64xbf16>
    %c0_46 = arith.constant 0 : index
    %c0_47 = arith.constant 0 : index
    %65 = vector.load %arg2[%c0_46, %c0_47] : memref<64x64xbf16, #tpu.memory_space<vmem>>, vector<64x64xbf16>
    %cst_48 = arith.constant dense<0.000000e+00> : vector<64x64xf32>
    %66 = tpu.matmul %64, %65, %cst_48 {dimension_numbers = #tpu.dot_dimension_numbers<[1], [0], [0], [1], [0, 0, 1, 1], [], []>} : vector<64x64xbf16>, vector<64x64xbf16>, vector<64x64xf32> -> vector<64x64xf32>
    %67 = vector.broadcast %31 : vector<1x64xf32> to vector<64x64xf32>
    %68 = arith.addf %66, %67 : vector<64x64xf32>
    %cst_49 = arith.constant 5.000000e-01 : f32
    %69 = vector.broadcast %cst_49 : f32 to vector<64x64xf32>
    %70 = arith.mulf %69, %68 : vector<64x64xf32>
    %cst_50 = arith.constant 4.471500e-02 : f32
    %71 = vector.broadcast %cst_50 : f32 to vector<64x64xf32>
    %72 = arith.mulf %71, %68 : vector<64x64xf32>
    %73 = arith.mulf %72, %68 : vector<64x64xf32>
    %74 = arith.mulf %73, %68 : vector<64x64xf32>
    %75 = arith.addf %68, %74 : vector<64x64xf32>
    %cst_51 = arith.constant 0.797884583 : f32
    %76 = vector.broadcast %cst_51 : f32 to vector<64x64xf32>
    %77 = arith.mulf %76, %75 : vector<64x64xf32>
    %78 = math.tanh %77 : vector<64x64xf32>
    %cst_52 = arith.constant 1.000000e+00 : f32
    %79 = vector.broadcast %cst_52 : f32 to vector<64x64xf32>
    %80 = arith.addf %79, %78 : vector<64x64xf32>
    %81 = arith.mulf %70, %80 : vector<64x64xf32>
    %c0_53 = arith.constant 0 : index
    %c0_54 = arith.constant 0 : index
    %82 = vector.load %arg6[%c0_53, %c0_54] : memref<2x64xf32, #tpu.memory_space<vmem>>, vector<1x64xf32>
    %c1_55 = arith.constant 1 : index
    %c0_56 = arith.constant 0 : index
    %83 = vector.load %arg6[%c1_55, %c0_56] : memref<2x64xf32, #tpu.memory_space<vmem>>, vector<1x64xf32>
    %84 = arith.truncf %81 : vector<64x64xf32> to vector<64x64xbf16>
    %85 = arith.extf %84 : vector<64x64xbf16> to vector<64x64xf32>
    %86 = arith.subf %81, %85 : vector<64x64xf32>
    %87 = arith.truncf %86 : vector<64x64xf32> to vector<64x64xbf16>
    %c0_57 = arith.constant 0 : index
    %c0_58 = arith.constant 0 : index
    %88 = vector.load %arg31[%c0_57, %c0_58] : memref<32x64xbf16, #tpu.memory_space<vmem>>, vector<32x64xbf16>
    %cst_59 = arith.constant dense<0.000000e+00> : vector<32x64xf32>
    %89 = tpu.matmul %88, %84, %cst_59 {dimension_numbers = #tpu.dot_dimension_numbers<[1], [0], [0], [1], [0, 0, 1, 1], [], []>} : vector<32x64xbf16>, vector<64x64xbf16>, vector<32x64xf32> -> vector<32x64xf32>
    %cst_60 = arith.constant dense<0.000000e+00> : vector<32x64xf32>
    %90 = tpu.matmul %88, %87, %cst_60 {dimension_numbers = #tpu.dot_dimension_numbers<[1], [0], [0], [1], [0, 0, 1, 1], [], []>} : vector<32x64xbf16>, vector<64x64xbf16>, vector<32x64xf32> -> vector<32x64xf32>
    %91 = arith.addf %89, %90 : vector<32x64xf32>
    %92 = arith.truncf %91 : vector<32x64xf32> to vector<32x64xbf16>
    %c0_61 = arith.constant 0 : index
    %c0_62 = arith.constant 0 : index
    %93 = vector.load %arg4[%c0_61, %c0_62] : memref<64x192xbf16, #tpu.memory_space<vmem>>, vector<64x192xbf16>
    %cst_63 = arith.constant dense<0.000000e+00> : vector<32x192xf32>
    %94 = tpu.matmul %92, %93, %cst_63 {dimension_numbers = #tpu.dot_dimension_numbers<[1], [0], [0], [1], [0, 0, 1, 1], [], []>} : vector<32x64xbf16>, vector<64x192xbf16>, vector<32x192xf32> -> vector<32x192xf32>
    %c1_64 = arith.constant 1 : index
    %c0_65 = arith.constant 0 : index
    %95 = vector.load %arg49[%c1_64, %c0_65] : memref<66x192xf32, #tpu.memory_space<vmem>>, vector<32x192xf32>
    tpu.vector_store %arg49[%c1_64, %c0_65], %94 {strides = array<i32>} : memref<66x192xf32, #tpu.memory_space<vmem>>, vector<32x192xf32>,
    %c0_66 = arith.constant 0 : index
    %c0_67 = arith.constant 0 : index
    %96 = vector.load %arg49[%c0_66, %c0_67] : memref<66x192xf32, #tpu.memory_space<vmem>>, vector<32x64xf32>
    %c2_68 = arith.constant 2 : index
    %c0_69 = arith.constant 0 : index
    %97 = vector.load %arg49[%c2_68, %c0_69] : memref<66x192xf32, #tpu.memory_space<vmem>>, vector<32x64xf32>
    %c0_70 = arith.constant 0 : index
    %c128_71 = arith.constant 128 : index
    %98 = vector.load %arg49[%c0_70, %c128_71] : memref<66x192xf32, #tpu.memory_space<vmem>>, vector<32x64xf32>
    %c2_72 = arith.constant 2 : index
    %c128_73 = arith.constant 128 : index
    %99 = vector.load %arg49[%c2_72, %c128_73] : memref<66x192xf32, #tpu.memory_space<vmem>>, vector<32x64xf32>
    %100 = vector.extract_strided_slice %94 {offsets = [0, 64], sizes = [32, 64], strides = [1, 1]} : vector<32x192xf32> to vector<32x64xf32>
    %101 = vector.shape_cast %5 : vector<32x1xi1> to vector<32x1xi1>
    %102 = vector.broadcast %101 : vector<32x1xi1> to vector<32x64xi1>
    %103 = arith.select %102, %97, %96 : vector<32x64xi1>, vector<32x64xf32>
    %104 = arith.addf %103, %100 : vector<32x64xf32>
    %105 = vector.shape_cast %20 : vector<32x1xi1> to vector<32x1xi1>
    %106 = vector.broadcast %105 : vector<32x1xi1> to vector<32x64xi1>
    %107 = arith.select %106, %98, %99 : vector<32x64xi1>, vector<32x64xf32>
    %108 = arith.addf %104, %107 : vector<32x64xf32>
    %109 = vector.broadcast %82 : vector<1x64xf32> to vector<32x64xf32>
    %110 = arith.addf %108, %109 : vector<32x64xf32>
    %cst_74 = arith.constant 5.000000e-01 : f32
    %111 = vector.broadcast %cst_74 : f32 to vector<32x64xf32>
    %112 = arith.mulf %111, %110 : vector<32x64xf32>
    %cst_75 = arith.constant 4.471500e-02 : f32
    %113 = vector.broadcast %cst_75 : f32 to vector<32x64xf32>
    %114 = arith.mulf %113, %110 : vector<32x64xf32>
    %115 = arith.mulf %114, %110 : vector<32x64xf32>
    %116 = arith.mulf %115, %110 : vector<32x64xf32>
    %117 = arith.addf %110, %116 : vector<32x64xf32>
    %cst_76 = arith.constant 0.797884583 : f32
    %118 = vector.broadcast %cst_76 : f32 to vector<32x64xf32>
    %119 = arith.mulf %118, %117 : vector<32x64xf32>
    %120 = math.tanh %119 : vector<32x64xf32>
    %cst_77 = arith.constant 1.000000e+00 : f32
    %121 = vector.broadcast %cst_77 : f32 to vector<32x64xf32>
    %122 = arith.addf %121, %120 : vector<32x64xf32>
    %123 = arith.mulf %112, %122 : vector<32x64xf32>
    %124 = arith.truncf %123 : vector<32x64xf32> to vector<32x64xbf16>
    %c0_78 = arith.constant 0 : index
    %c0_79 = arith.constant 0 : index
    %125 = vector.load %arg5[%c0_78, %c0_79] : memref<64x64xbf16, #tpu.memory_space<vmem>>, vector<64x64xbf16>
    %cst_80 = arith.constant dense<0.000000e+00> : vector<32x64xf32>
    %126 = tpu.matmul %124, %125, %cst_80 {dimension_numbers = #tpu.dot_dimension_numbers<[1], [0], [0], [1], [0, 0, 1, 1], [], []>} : vector<32x64xbf16>, vector<64x64xbf16>, vector<32x64xf32> -> vector<32x64xf32>
    %127 = vector.broadcast %83 : vector<1x64xf32> to vector<32x64xf32>
    %128 = arith.addf %126, %127 : vector<32x64xf32>
    %cst_81 = arith.constant 5.000000e-01 : f32
    %129 = vector.broadcast %cst_81 : f32 to vector<32x64xf32>
    %130 = arith.mulf %129, %128 : vector<32x64xf32>
    %cst_82 = arith.constant 4.471500e-02 : f32
    %131 = vector.broadcast %cst_82 : f32 to vector<32x64xf32>
    %132 = arith.mulf %131, %128 : vector<32x64xf32>
    %133 = arith.mulf %132, %128 : vector<32x64xf32>
    %134 = arith.mulf %133, %128 : vector<32x64xf32>
    %135 = arith.addf %128, %134 : vector<32x64xf32>
    %cst_83 = arith.constant 0.797884583 : f32
    %136 = vector.broadcast %cst_83 : f32 to vector<32x64xf32>
    %137 = arith.mulf %136, %135 : vector<32x64xf32>
    %138 = math.tanh %137 : vector<32x64xf32>
    %cst_84 = arith.constant 1.000000e+00 : f32
    %139 = vector.broadcast %cst_84 : f32 to vector<32x64xf32>
    %140 = arith.addf %139, %138 : vector<32x64xf32>
    %141 = arith.mulf %130, %140 : vector<32x64xf32>
    %142 = arith.addf %91, %141 : vector<32x64xf32>
    %c0_85 = arith.constant 0 : index
    %c0_86 = arith.constant 0 : index
    %143 = vector.load %arg9[%c0_85, %c0_86] : memref<2x64xf32, #tpu.memory_space<vmem>>, vector<1x64xf32>
    %c1_87 = arith.constant 1 : index
    %c0_88 = arith.constant 0 : index
    %144 = vector.load %arg9[%c1_87, %c0_88] : memref<2x64xf32, #tpu.memory_space<vmem>>, vector<1x64xf32>
    %145 = arith.truncf %142 : vector<32x64xf32> to vector<32x64xbf16>
    %146 = arith.extf %145 : vector<32x64xbf16> to vector<32x64xf32>
    %147 = arith.subf %142, %146 : vector<32x64xf32>
    %148 = arith.truncf %147 : vector<32x64xf32> to vector<32x64xbf16>
    %c0_89 = arith.constant 0 : index
    %c0_90 = arith.constant 0 : index
    %149 = vector.load %arg32[%c0_89, %c0_90] : memref<16x32xbf16, #tpu.memory_space<vmem>>, vector<16x32xbf16>
    %cst_91 = arith.constant dense<0.000000e+00> : vector<16x64xf32>
    %150 = tpu.matmul %149, %145, %cst_91 {dimension_numbers = #tpu.dot_dimension_numbers<[1], [0], [0], [1], [0, 0, 1, 1], [], []>} : vector<16x32xbf16>, vector<32x64xbf16>, vector<16x64xf32> -> vector<16x64xf32>
    %cst_92 = arith.constant dense<0.000000e+00> : vector<16x64xf32>
    %151 = tpu.matmul %149, %148, %cst_92 {dimension_numbers = #tpu.dot_dimension_numbers<[1], [0], [0], [1], [0, 0, 1, 1], [], []>} : vector<16x32xbf16>, vector<32x64xbf16>, vector<16x64xf32> -> vector<16x64xf32>
    %152 = arith.addf %150, %151 : vector<16x64xf32>
    %153 = arith.truncf %152 : vector<16x64xf32> to vector<16x64xbf16>
    %c0_93 = arith.constant 0 : index
    %c0_94 = arith.constant 0 : index
    %154 = vector.load %arg7[%c0_93, %c0_94] : memref<64x192xbf16, #tpu.memory_space<vmem>>, vector<64x192xbf16>
    %cst_95 = arith.constant dense<0.000000e+00> : vector<16x192xf32>
    %155 = tpu.matmul %153, %154, %cst_95 {dimension_numbers = #tpu.dot_dimension_numbers<[1], [0], [0], [1], [0, 0, 1, 1], [], []>} : vector<16x64xbf16>, vector<64x192xbf16>, vector<16x192xf32> -> vector<16x192xf32>
    %c1_96 = arith.constant 1 : index
    %c0_97 = arith.constant 0 : index
    %156 = vector.load %arg49[%c1_96, %c0_97] : memref<66x192xf32, #tpu.memory_space<vmem>>, vector<16x192xf32>
    tpu.vector_store %arg49[%c1_96, %c0_97], %155 {strides = array<i32>} : memref<66x192xf32, #tpu.memory_space<vmem>>, vector<16x192xf32>,
    %c0_98 = arith.constant 0 : index
    %c0_99 = arith.constant 0 : index
    %157 = vector.load %arg49[%c0_98, %c0_99] : memref<66x192xf32, #tpu.memory_space<vmem>>, vector<16x64xf32>
    %c2_100 = arith.constant 2 : index
    %c0_101 = arith.constant 0 : index
    %158 = vector.load %arg49[%c2_100, %c0_101] : memref<66x192xf32, #tpu.memory_space<vmem>>, vector<16x64xf32>
    %c0_102 = arith.constant 0 : index
    %c128_103 = arith.constant 128 : index
    %159 = vector.load %arg49[%c0_102, %c128_103] : memref<66x192xf32, #tpu.memory_space<vmem>>, vector<16x64xf32>
    %c2_104 = arith.constant 2 : index
    %c128_105 = arith.constant 128 : index
    %160 = vector.load %arg49[%c2_104, %c128_105] : memref<66x192xf32, #tpu.memory_space<vmem>>, vector<16x64xf32>
    %161 = vector.extract_strided_slice %155 {offsets = [0, 64], sizes = [16, 64], strides = [1, 1]} : vector<16x192xf32> to vector<16x64xf32>
    %162 = vector.shape_cast %8 : vector<16x1xi1> to vector<16x1xi1>
    %163 = vector.broadcast %162 : vector<16x1xi1> to vector<16x64xi1>
    %164 = arith.select %163, %158, %157 : vector<16x64xi1>, vector<16x64xf32>
    %165 = arith.addf %164, %161 : vector<16x64xf32>
    %166 = vector.shape_cast %23 : vector<16x1xi1> to vector<16x1xi1>
    %167 = vector.broadcast %166 : vector<16x1xi1> to vector<16x64xi1>
    %168 = arith.select %167, %159, %160 : vector<16x64xi1>, vector<16x64xf32>
    %169 = arith.addf %165, %168 : vector<16x64xf32>
    %170 = vector.broadcast %143 : vector<1x64xf32> to vector<16x64xf32>
    %171 = arith.addf %169, %170 : vector<16x64xf32>
    %cst_106 = arith.constant 5.000000e-01 : f32
    %172 = vector.broadcast %cst_106 : f32 to vector<16x64xf32>
    %173 = arith.mulf %172, %171 : vector<16x64xf32>
    %cst_107 = arith.constant 4.471500e-02 : f32
    %174 = vector.broadcast %cst_107 : f32 to vector<16x64xf32>
    %175 = arith.mulf %174, %171 : vector<16x64xf32>
    %176 = arith.mulf %175, %171 : vector<16x64xf32>
    %177 = arith.mulf %176, %171 : vector<16x64xf32>
    %178 = arith.addf %171, %177 : vector<16x64xf32>
    %cst_108 = arith.constant 0.797884583 : f32
    %179 = vector.broadcast %cst_108 : f32 to vector<16x64xf32>
    %180 = arith.mulf %179, %178 : vector<16x64xf32>
    %181 = math.tanh %180 : vector<16x64xf32>
    %cst_109 = arith.constant 1.000000e+00 : f32
    %182 = vector.broadcast %cst_109 : f32 to vector<16x64xf32>
    %183 = arith.addf %182, %181 : vector<16x64xf32>
    %184 = arith.mulf %173, %183 : vector<16x64xf32>
    %185 = arith.truncf %184 : vector<16x64xf32> to vector<16x64xbf16>
    %c0_110 = arith.constant 0 : index
    %c0_111 = arith.constant 0 : index
    %186 = vector.load %arg8[%c0_110, %c0_111] : memref<64x64xbf16, #tpu.memory_space<vmem>>, vector<64x64xbf16>
    %cst_112 = arith.constant dense<0.000000e+00> : vector<16x64xf32>
    %187 = tpu.matmul %185, %186, %cst_112 {dimension_numbers = #tpu.dot_dimension_numbers<[1], [0], [0], [1], [0, 0, 1, 1], [], []>} : vector<16x64xbf16>, vector<64x64xbf16>, vector<16x64xf32> -> vector<16x64xf32>
    %188 = vector.broadcast %144 : vector<1x64xf32> to vector<16x64xf32>
    %189 = arith.addf %187, %188 : vector<16x64xf32>
    %cst_113 = arith.constant 5.000000e-01 : f32
    %190 = vector.broadcast %cst_113 : f32 to vector<16x64xf32>
    %191 = arith.mulf %190, %189 : vector<16x64xf32>
    %cst_114 = arith.constant 4.471500e-02 : f32
    %192 = vector.broadcast %cst_114 : f32 to vector<16x64xf32>
    %193 = arith.mulf %192, %189 : vector<16x64xf32>
    %194 = arith.mulf %193, %189 : vector<16x64xf32>
    %195 = arith.mulf %194, %189 : vector<16x64xf32>
    %196 = arith.addf %189, %195 : vector<16x64xf32>
    %cst_115 = arith.constant 0.797884583 : f32
    %197 = vector.broadcast %cst_115 : f32 to vector<16x64xf32>
    %198 = arith.mulf %197, %196 : vector<16x64xf32>
    %199 = math.tanh %198 : vector<16x64xf32>
    %cst_116 = arith.constant 1.000000e+00 : f32
    %200 = vector.broadcast %cst_116 : f32 to vector<16x64xf32>
    %201 = arith.addf %200, %199 : vector<16x64xf32>
    %202 = arith.mulf %191, %201 : vector<16x64xf32>
    %203 = arith.addf %152, %202 : vector<16x64xf32>
    %c0_117 = arith.constant 0 : index
    %c0_118 = arith.constant 0 : index
    %204 = vector.load %arg12[%c0_117, %c0_118] : memref<2x64xf32, #tpu.memory_space<vmem>>, vector<1x64xf32>
    %c1_119 = arith.constant 1 : index
    %c0_120 = arith.constant 0 : index
    %205 = vector.load %arg12[%c1_119, %c0_120] : memref<2x64xf32, #tpu.memory_space<vmem>>, vector<1x64xf32>
    %206 = arith.truncf %203 : vector<16x64xf32> to vector<16x64xbf16>
    %207 = arith.extf %206 : vector<16x64xbf16> to vector<16x64xf32>
    %208 = arith.subf %203, %207 : vector<16x64xf32>
    %209 = arith.truncf %208 : vector<16x64xf32> to vector<16x64xbf16>
    %c0_121 = arith.constant 0 : index
    %c0_122 = arith.constant 0 : index
    %210 = vector.load %arg33[%c0_121, %c0_122] : memref<8x16xbf16, #tpu.memory_space<vmem>>, vector<8x16xbf16>
    %cst_123 = arith.constant dense<0.000000e+00> : vector<8x64xf32>
    %211 = tpu.matmul %210, %206, %cst_123 {dimension_numbers = #tpu.dot_dimension_numbers<[1], [0], [0], [1], [0, 0, 1, 1], [], []>} : vector<8x16xbf16>, vector<16x64xbf16>, vector<8x64xf32> -> vector<8x64xf32>
    %cst_124 = arith.constant dense<0.000000e+00> : vector<8x64xf32>
    %212 = tpu.matmul %210, %209, %cst_124 {dimension_numbers = #tpu.dot_dimension_numbers<[1], [0], [0], [1], [0, 0, 1, 1], [], []>} : vector<8x16xbf16>, vector<16x64xbf16>, vector<8x64xf32> -> vector<8x64xf32>
    %213 = arith.addf %211, %212 : vector<8x64xf32>
    %214 = arith.truncf %213 : vector<8x64xf32> to vector<8x64xbf16>
    %c0_125 = arith.constant 0 : index
    %c0_126 = arith.constant 0 : index
    %215 = vector.load %arg10[%c0_125, %c0_126] : memref<64x192xbf16, #tpu.memory_space<vmem>>, vector<64x192xbf16>
    %cst_127 = arith.constant dense<0.000000e+00> : vector<8x192xf32>
    %216 = tpu.matmul %214, %215, %cst_127 {dimension_numbers = #tpu.dot_dimension_numbers<[1], [0], [0], [1], [0, 0, 1, 1], [], []>} : vector<8x64xbf16>, vector<64x192xbf16>, vector<8x192xf32> -> vector<8x192xf32>
    %c1_128 = arith.constant 1 : index
    %c0_129 = arith.constant 0 : index
    %217 = vector.load %arg49[%c1_128, %c0_129] : memref<66x192xf32, #tpu.memory_space<vmem>>, vector<8x192xf32>
    tpu.vector_store %arg49[%c1_128, %c0_129], %216 {strides = array<i32>} : memref<66x192xf32, #tpu.memory_space<vmem>>, vector<8x192xf32>,
    %c0_130 = arith.constant 0 : index
    %c0_131 = arith.constant 0 : index
    %218 = vector.load %arg49[%c0_130, %c0_131] : memref<66x192xf32, #tpu.memory_space<vmem>>, vector<8x64xf32>
    %c2_132 = arith.constant 2 : index
    %c0_133 = arith.constant 0 : index
    %219 = vector.load %arg49[%c2_132, %c0_133] : memref<66x192xf32, #tpu.memory_space<vmem>>, vector<8x64xf32>
    %c0_134 = arith.constant 0 : index
    %c128_135 = arith.constant 128 : index
    %220 = vector.load %arg49[%c0_134, %c128_135] : memref<66x192xf32, #tpu.memory_space<vmem>>, vector<8x64xf32>
    %c2_136 = arith.constant 2 : index
    %c128_137 = arith.constant 128 : index
    %221 = vector.load %arg49[%c2_136, %c128_137] : memref<66x192xf32, #tpu.memory_space<vmem>>, vector<8x64xf32>
    %222 = vector.extract_strided_slice %216 {offsets = [0, 64], sizes = [8, 64], strides = [1, 1]} : vector<8x192xf32> to vector<8x64xf32>
    %223 = vector.shape_cast %11 : vector<8x1xi1> to vector<8x1xi1>
    %224 = vector.broadcast %223 : vector<8x1xi1> to vector<8x64xi1>
    %225 = arith.select %224, %219, %218 : vector<8x64xi1>, vector<8x64xf32>
    %226 = arith.addf %225, %222 : vector<8x64xf32>
    %227 = vector.shape_cast %26 : vector<8x1xi1> to vector<8x1xi1>
    %228 = vector.broadcast %227 : vector<8x1xi1> to vector<8x64xi1>
    %229 = arith.select %228, %220, %221 : vector<8x64xi1>, vector<8x64xf32>
    %230 = arith.addf %226, %229 : vector<8x64xf32>
    %231 = vector.broadcast %204 : vector<1x64xf32> to vector<8x64xf32>
    %232 = arith.addf %230, %231 : vector<8x64xf32>
    %cst_138 = arith.constant 5.000000e-01 : f32
    %233 = vector.broadcast %cst_138 : f32 to vector<8x64xf32>
    %234 = arith.mulf %233, %232 : vector<8x64xf32>
    %cst_139 = arith.constant 4.471500e-02 : f32
    %235 = vector.broadcast %cst_139 : f32 to vector<8x64xf32>
    %236 = arith.mulf %235, %232 : vector<8x64xf32>
    %237 = arith.mulf %236, %232 : vector<8x64xf32>
    %238 = arith.mulf %237, %232 : vector<8x64xf32>
    %239 = arith.addf %232, %238 : vector<8x64xf32>
    %cst_140 = arith.constant 0.797884583 : f32
    %240 = vector.broadcast %cst_140 : f32 to vector<8x64xf32>
    %241 = arith.mulf %240, %239 : vector<8x64xf32>
    %242 = math.tanh %241 : vector<8x64xf32>
    %cst_141 = arith.constant 1.000000e+00 : f32
    %243 = vector.broadcast %cst_141 : f32 to vector<8x64xf32>
    %244 = arith.addf %243, %242 : vector<8x64xf32>
    %245 = arith.mulf %234, %244 : vector<8x64xf32>
    %246 = arith.truncf %245 : vector<8x64xf32> to vector<8x64xbf16>
    %c0_142 = arith.constant 0 : index
    %c0_143 = arith.constant 0 : index
    %247 = vector.load %arg11[%c0_142, %c0_143] : memref<64x64xbf16, #tpu.memory_space<vmem>>, vector<64x64xbf16>
    %cst_144 = arith.constant dense<0.000000e+00> : vector<8x64xf32>
    %248 = tpu.matmul %246, %247, %cst_144 {dimension_numbers = #tpu.dot_dimension_numbers<[1], [0], [0], [1], [0, 0, 1, 1], [], []>} : vector<8x64xbf16>, vector<64x64xbf16>, vector<8x64xf32> -> vector<8x64xf32>
    %249 = vector.broadcast %205 : vector<1x64xf32> to vector<8x64xf32>
    %250 = arith.addf %248, %249 : vector<8x64xf32>
    %cst_145 = arith.constant 5.000000e-01 : f32
    %251 = vector.broadcast %cst_145 : f32 to vector<8x64xf32>
    %252 = arith.mulf %251, %250 : vector<8x64xf32>
    %cst_146 = arith.constant 4.471500e-02 : f32
    %253 = vector.broadcast %cst_146 : f32 to vector<8x64xf32>
    %254 = arith.mulf %253, %250 : vector<8x64xf32>
    %255 = arith.mulf %254, %250 : vector<8x64xf32>
    %256 = arith.mulf %255, %250 : vector<8x64xf32>
    %257 = arith.addf %250, %256 : vector<8x64xf32>
    %cst_147 = arith.constant 0.797884583 : f32
    %258 = vector.broadcast %cst_147 : f32 to vector<8x64xf32>
    %259 = arith.mulf %258, %257 : vector<8x64xf32>
    %260 = math.tanh %259 : vector<8x64xf32>
    %cst_148 = arith.constant 1.000000e+00 : f32
    %261 = vector.broadcast %cst_148 : f32 to vector<8x64xf32>
    %262 = arith.addf %261, %260 : vector<8x64xf32>
    %263 = arith.mulf %252, %262 : vector<8x64xf32>
    %264 = arith.addf %213, %263 : vector<8x64xf32>
    %c0_149 = arith.constant 0 : index
    %c0_150 = arith.constant 0 : index
    %265 = vector.load %arg15[%c0_149, %c0_150] : memref<2x64xf32, #tpu.memory_space<vmem>>, vector<1x64xf32>
    %c1_151 = arith.constant 1 : index
    %c0_152 = arith.constant 0 : index
    %266 = vector.load %arg15[%c1_151, %c0_152] : memref<2x64xf32, #tpu.memory_space<vmem>>, vector<1x64xf32>
    %267 = arith.truncf %264 : vector<8x64xf32> to vector<8x64xbf16>
    %268 = arith.extf %267 : vector<8x64xbf16> to vector<8x64xf32>
    %269 = arith.subf %264, %268 : vector<8x64xf32>
    %270 = arith.truncf %269 : vector<8x64xf32> to vector<8x64xbf16>
    %c0_153 = arith.constant 0 : index
    %c0_154 = arith.constant 0 : index
    %271 = vector.load %arg34[%c0_153, %c0_154] : memref<4x8xbf16, #tpu.memory_space<vmem>>, vector<4x8xbf16>
    %cst_155 = arith.constant dense<0.000000e+00> : vector<4x64xf32>
    %272 = tpu.matmul %271, %267, %cst_155 {dimension_numbers = #tpu.dot_dimension_numbers<[1], [0], [0], [1], [0, 0, 1, 1], [], []>} : vector<4x8xbf16>, vector<8x64xbf16>, vector<4x64xf32> -> vector<4x64xf32>
    %cst_156 = arith.constant dense<0.000000e+00> : vector<4x64xf32>
    %273 = tpu.matmul %271, %270, %cst_156 {dimension_numbers = #tpu.dot_dimension_numbers<[1], [0], [0], [1], [0, 0, 1, 1], [], []>} : vector<4x8xbf16>, vector<8x64xbf16>, vector<4x64xf32> -> vector<4x64xf32>
    %274 = arith.addf %272, %273 : vector<4x64xf32>
    %275 = arith.truncf %274 : vector<4x64xf32> to vector<4x64xbf16>
    %c0_157 = arith.constant 0 : index
    %c0_158 = arith.constant 0 : index
    %276 = vector.load %arg13[%c0_157, %c0_158] : memref<64x192xbf16, #tpu.memory_space<vmem>>, vector<64x192xbf16>
    %cst_159 = arith.constant dense<0.000000e+00> : vector<4x192xf32>
    %277 = tpu.matmul %275, %276, %cst_159 {dimension_numbers = #tpu.dot_dimension_numbers<[1], [0], [0], [1], [0, 0, 1, 1], [], []>} : vector<4x64xbf16>, vector<64x192xbf16>, vector<4x192xf32> -> vector<4x192xf32>
    %c1_160 = arith.constant 1 : index
    %c0_161 = arith.constant 0 : index
    %278 = vector.load %arg49[%c1_160, %c0_161] : memref<66x192xf32, #tpu.memory_space<vmem>>, vector<4x192xf32>
    tpu.vector_store %arg49[%c1_160, %c0_161], %277 {strides = array<i32>} : memref<66x192xf32, #tpu.memory_space<vmem>>, vector<4x192xf32>,
    %c0_162 = arith.constant 0 : index
    %c0_163 = arith.constant 0 : index
    %279 = vector.load %arg49[%c0_162, %c0_163] : memref<66x192xf32, #tpu.memory_space<vmem>>, vector<4x64xf32>
    %c2_164 = arith.constant 2 : index
    %c0_165 = arith.constant 0 : index
    %280 = vector.load %arg49[%c2_164, %c0_165] : memref<66x192xf32, #tpu.memory_space<vmem>>, vector<4x64xf32>
    %c0_166 = arith.constant 0 : index
    %c128_167 = arith.constant 128 : index
    %281 = vector.load %arg49[%c0_166, %c128_167] : memref<66x192xf32, #tpu.memory_space<vmem>>, vector<4x64xf32>
    %c2_168 = arith.constant 2 : index
    %c128_169 = arith.constant 128 : index
    %282 = vector.load %arg49[%c2_168, %c128_169] : memref<66x192xf32, #tpu.memory_space<vmem>>, vector<4x64xf32>
    %283 = vector.extract_strided_slice %277 {offsets = [0, 64], sizes = [4, 64], strides = [1, 1]} : vector<4x192xf32> to vector<4x64xf32>
    %284 = vector.shape_cast %14 : vector<4x1xi1> to vector<4x1xi1>
    %285 = vector.broadcast %284 : vector<4x1xi1> to vector<4x64xi1>
    %286 = arith.select %285, %280, %279 : vector<4x64xi1>, vector<4x64xf32>
    %287 = arith.addf %286, %283 : vector<4x64xf32>
    %288 = vector.shape_cast %29 : vector<4x1xi1> to vector<4x1xi1>
    %289 = vector.broadcast %288 : vector<4x1xi1> to vector<4x64xi1>
    %290 = arith.select %289, %281, %282 : vector<4x64xi1>, vector<4x64xf32>
    %291 = arith.addf %287, %290 : vector<4x64xf32>
    %292 = vector.broadcast %265 : vector<1x64xf32> to vector<4x64xf32>
    %293 = arith.addf %291, %292 : vector<4x64xf32>
    %cst_170 = arith.constant 5.000000e-01 : f32
    %294 = vector.broadcast %cst_170 : f32 to vector<4x64xf32>
    %295 = arith.mulf %294, %293 : vector<4x64xf32>
    %cst_171 = arith.constant 4.471500e-02 : f32
    %296 = vector.broadcast %cst_171 : f32 to vector<4x64xf32>
    %297 = arith.mulf %296, %293 : vector<4x64xf32>
    %298 = arith.mulf %297, %293 : vector<4x64xf32>
    %299 = arith.mulf %298, %293 : vector<4x64xf32>
    %300 = arith.addf %293, %299 : vector<4x64xf32>
    %cst_172 = arith.constant 0.797884583 : f32
    %301 = vector.broadcast %cst_172 : f32 to vector<4x64xf32>
    %302 = arith.mulf %301, %300 : vector<4x64xf32>
    %303 = math.tanh %302 : vector<4x64xf32>
    %cst_173 = arith.constant 1.000000e+00 : f32
    %304 = vector.broadcast %cst_173 : f32 to vector<4x64xf32>
    %305 = arith.addf %304, %303 : vector<4x64xf32>
    %306 = arith.mulf %295, %305 : vector<4x64xf32>
    %307 = arith.truncf %306 : vector<4x64xf32> to vector<4x64xbf16>
    %c0_174 = arith.constant 0 : index
    %c0_175 = arith.constant 0 : index
    %308 = vector.load %arg14[%c0_174, %c0_175] : memref<64x64xbf16, #tpu.memory_space<vmem>>, vector<64x64xbf16>
    %cst_176 = arith.constant dense<0.000000e+00> : vector<4x64xf32>
    %309 = tpu.matmul %307, %308, %cst_176 {dimension_numbers = #tpu.dot_dimension_numbers<[1], [0], [0], [1], [0, 0, 1, 1], [], []>} : vector<4x64xbf16>, vector<64x64xbf16>, vector<4x64xf32> -> vector<4x64xf32>
    %310 = vector.broadcast %266 : vector<1x64xf32> to vector<4x64xf32>
    %311 = arith.addf %309, %310 : vector<4x64xf32>
    %cst_177 = arith.constant 5.000000e-01 : f32
    %312 = vector.broadcast %cst_177 : f32 to vector<4x64xf32>
    %313 = arith.mulf %312, %311 : vector<4x64xf32>
    %cst_178 = arith.constant 4.471500e-02 : f32
    %314 = vector.broadcast %cst_178 : f32 to vector<4x64xf32>
    %315 = arith.mulf %314, %311 : vector<4x64xf32>
    %316 = arith.mulf %315, %311 : vector<4x64xf32>
    %317 = arith.mulf %316, %311 : vector<4x64xf32>
    %318 = arith.addf %311, %317 : vector<4x64xf32>
    %cst_179 = arith.constant 0.797884583 : f32
    %319 = vector.broadcast %cst_179 : f32 to vector<4x64xf32>
    %320 = arith.mulf %319, %318 : vector<4x64xf32>
    %321 = math.tanh %320 : vector<4x64xf32>
    %cst_180 = arith.constant 1.000000e+00 : f32
    %322 = vector.broadcast %cst_180 : f32 to vector<4x64xf32>
    %323 = arith.addf %322, %321 : vector<4x64xf32>
    %324 = arith.mulf %313, %323 : vector<4x64xf32>
    %325 = arith.addf %274, %324 : vector<4x64xf32>
    %c0_181 = arith.constant 0 : index
    %c0_182 = arith.constant 0 : index
    %326 = vector.load %arg18[%c0_181, %c0_182] : memref<2x192xf32, #tpu.memory_space<vmem>>, vector<1x64xf32>
    %c1_183 = arith.constant 1 : index
    %c0_184 = arith.constant 0 : index
    %327 = vector.load %arg18[%c1_183, %c0_184] : memref<2x192xf32, #tpu.memory_space<vmem>>, vector<1x192xf32>
    %328 = arith.truncf %325 : vector<4x64xf32> to vector<4x64xbf16>
    %c0_185 = arith.constant 0 : index
    %c0_186 = arith.constant 0 : index
    %329 = vector.load %arg16[%c0_185, %c0_186] : memref<64x192xbf16, #tpu.memory_space<vmem>>, vector<64x192xbf16>
    %cst_187 = arith.constant dense<0.000000e+00> : vector<4x192xf32>
    %330 = tpu.matmul %328, %329, %cst_187 {dimension_numbers = #tpu.dot_dimension_numbers<[1], [0], [0], [1], [0, 0, 1, 1], [], []>} : vector<4x64xbf16>, vector<64x192xbf16>, vector<4x192xf32> -> vector<4x192xf32>
    %c1_188 = arith.constant 1 : index
    %c0_189 = arith.constant 0 : index
    %331 = vector.load %arg49[%c1_188, %c0_189] : memref<66x192xf32, #tpu.memory_space<vmem>>, vector<4x192xf32>
    tpu.vector_store %arg49[%c1_188, %c0_189], %330 {strides = array<i32>} : memref<66x192xf32, #tpu.memory_space<vmem>>, vector<4x192xf32>,
    %c0_190 = arith.constant 0 : index
    %c0_191 = arith.constant 0 : index
    %332 = vector.load %arg49[%c0_190, %c0_191] : memref<66x192xf32, #tpu.memory_space<vmem>>, vector<4x64xf32>
    %c2_192 = arith.constant 2 : index
    %c0_193 = arith.constant 0 : index
    %333 = vector.load %arg49[%c2_192, %c0_193] : memref<66x192xf32, #tpu.memory_space<vmem>>, vector<4x64xf32>
    %c0_194 = arith.constant 0 : index
    %c128_195 = arith.constant 128 : index
    %334 = vector.load %arg49[%c0_194, %c128_195] : memref<66x192xf32, #tpu.memory_space<vmem>>, vector<4x64xf32>
    %c2_196 = arith.constant 2 : index
    %c128_197 = arith.constant 128 : index
    %335 = vector.load %arg49[%c2_196, %c128_197] : memref<66x192xf32, #tpu.memory_space<vmem>>, vector<4x64xf32>
    %336 = vector.extract_strided_slice %330 {offsets = [0, 64], sizes = [4, 64], strides = [1, 1]} : vector<4x192xf32> to vector<4x64xf32>
    %337 = vector.shape_cast %14 : vector<4x1xi1> to vector<4x1xi1>
    %338 = vector.broadcast %337 : vector<4x1xi1> to vector<4x64xi1>
    %339 = arith.select %338, %333, %332 : vector<4x64xi1>, vector<4x64xf32>
    %340 = arith.addf %339, %336 : vector<4x64xf32>
    %341 = vector.shape_cast %29 : vector<4x1xi1> to vector<4x1xi1>
    %342 = vector.broadcast %341 : vector<4x1xi1> to vector<4x64xi1>
    %343 = arith.select %342, %334, %335 : vector<4x64xi1>, vector<4x64xf32>
    %344 = arith.addf %340, %343 : vector<4x64xf32>
    %345 = vector.broadcast %326 : vector<1x64xf32> to vector<4x64xf32>
    %346 = arith.addf %344, %345 : vector<4x64xf32>
    %cst_198 = arith.constant 5.000000e-01 : f32
    %347 = vector.broadcast %cst_198 : f32 to vector<4x64xf32>
    %348 = arith.mulf %347, %346 : vector<4x64xf32>
    %cst_199 = arith.constant 4.471500e-02 : f32
    %349 = vector.broadcast %cst_199 : f32 to vector<4x64xf32>
    %350 = arith.mulf %349, %346 : vector<4x64xf32>
    %351 = arith.mulf %350, %346 : vector<4x64xf32>
    %352 = arith.mulf %351, %346 : vector<4x64xf32>
    %353 = arith.addf %346, %352 : vector<4x64xf32>
    %cst_200 = arith.constant 0.797884583 : f32
    %354 = vector.broadcast %cst_200 : f32 to vector<4x64xf32>
    %355 = arith.mulf %354, %353 : vector<4x64xf32>
    %356 = math.tanh %355 : vector<4x64xf32>
    %cst_201 = arith.constant 1.000000e+00 : f32
    %357 = vector.broadcast %cst_201 : f32 to vector<4x64xf32>
    %358 = arith.addf %357, %356 : vector<4x64xf32>
    %359 = arith.mulf %348, %358 : vector<4x64xf32>
    %360 = arith.addf %359, %311 : vector<4x64xf32>
    %361 = arith.truncf %360 : vector<4x64xf32> to vector<4x64xbf16>
    %c0_202 = arith.constant 0 : index
    %c0_203 = arith.constant 0 : index
    %362 = vector.load %arg17[%c0_202, %c0_203] : memref<64x192xbf16, #tpu.memory_space<vmem>>, vector<64x192xbf16>
    %cst_204 = arith.constant dense<0.000000e+00> : vector<4x192xf32>
    %363 = tpu.matmul %361, %362, %cst_204 {dimension_numbers = #tpu.dot_dimension_numbers<[1], [0], [0], [1], [0, 0, 1, 1], [], []>} : vector<4x64xbf16>, vector<64x192xbf16>, vector<4x192xf32> -> vector<4x192xf32>
    %364 = vector.broadcast %327 : vector<1x192xf32> to vector<4x192xf32>
    %365 = arith.addf %363, %364 : vector<4x192xf32>
    %366 = vector.extract_strided_slice %365 {offsets = [0, 0], sizes = [4, 128], strides = [1, 1]} : vector<4x192xf32> to vector<4x128xf32>
    %c0_205 = arith.constant 0 : index
    %c0_206 = arith.constant 0 : index
    %367 = vector.load %arg44[%c0_205, %c0_206] : memref<4x128xf32, #tpu.memory_space<vmem>>, vector<4x128xf32>
    tpu.vector_store %arg44[%c0_205, %c0_206], %366 {strides = array<i32>} : memref<4x128xf32, #tpu.memory_space<vmem>>, vector<4x128xf32>,
    %368 = vector.extract_strided_slice %365 {offsets = [0, 128], sizes = [4, 64], strides = [1, 1]} : vector<4x192xf32> to vector<4x64xf32>
    %cst_207 = arith.constant 5.000000e-01 : f32
    %369 = vector.broadcast %cst_207 : f32 to vector<4x64xf32>
    %370 = arith.mulf %369, %368 : vector<4x64xf32>
    %cst_208 = arith.constant 4.471500e-02 : f32
    %371 = vector.broadcast %cst_208 : f32 to vector<4x64xf32>
    %372 = arith.mulf %371, %368 : vector<4x64xf32>
    %373 = arith.mulf %372, %368 : vector<4x64xf32>
    %374 = arith.mulf %373, %368 : vector<4x64xf32>
    %375 = arith.addf %368, %374 : vector<4x64xf32>
    %cst_209 = arith.constant 0.797884583 : f32
    %376 = vector.broadcast %cst_209 : f32 to vector<4x64xf32>
    %377 = arith.mulf %376, %375 : vector<4x64xf32>
    %378 = math.tanh %377 : vector<4x64xf32>
    %cst_210 = arith.constant 1.000000e+00 : f32
    %379 = vector.broadcast %cst_210 : f32 to vector<4x64xf32>
    %380 = arith.addf %379, %378 : vector<4x64xf32>
    %381 = arith.mulf %370, %380 : vector<4x64xf32>
    %382 = arith.addf %325, %381 : vector<4x64xf32>
    %383 = arith.truncf %382 : vector<4x64xf32> to vector<4x64xbf16>
    %384 = arith.extf %383 : vector<4x64xbf16> to vector<4x64xf32>
    %385 = arith.subf %382, %384 : vector<4x64xf32>
    %386 = arith.truncf %385 : vector<4x64xf32> to vector<4x64xbf16>
    %c0_211 = arith.constant 0 : index
    %c0_212 = arith.constant 0 : index
    %387 = vector.load %arg35[%c0_211, %c0_212] : memref<8x4xbf16, #tpu.memory_space<vmem>>, vector<8x4xbf16>
    %cst_213 = arith.constant dense<0.000000e+00> : vector<8x64xf32>
    %388 = tpu.matmul %387, %383, %cst_213 {dimension_numbers = #tpu.dot_dimension_numbers<[1], [0], [0], [1], [0, 0, 1, 1], [], []>} : vector<8x4xbf16>, vector<4x64xbf16>, vector<8x64xf32> -> vector<8x64xf32>
    %cst_214 = arith.constant dense<0.000000e+00> : vector<8x64xf32>
    %389 = tpu.matmul %387, %386, %cst_214 {dimension_numbers = #tpu.dot_dimension_numbers<[1], [0], [0], [1], [0, 0, 1, 1], [], []>} : vector<8x4xbf16>, vector<4x64xbf16>, vector<8x64xf32> -> vector<8x64xf32>
    %390 = arith.addf %388, %389 : vector<8x64xf32>
    %c0_215 = arith.constant 0 : index
    %c0_216 = arith.constant 0 : index
    %391 = vector.load %arg21[%c0_215, %c0_216] : memref<2x192xf32, #tpu.memory_space<vmem>>, vector<1x64xf32>
    %c1_217 = arith.constant 1 : index
    %c0_218 = arith.constant 0 : index
    %392 = vector.load %arg21[%c1_217, %c0_218] : memref<2x192xf32, #tpu.memory_space<vmem>>, vector<1x192xf32>
    %393 = arith.truncf %390 : vector<8x64xf32> to vector<8x64xbf16>
    %c0_219 = arith.constant 0 : index
    %c0_220 = arith.constant 0 : index
    %394 = vector.load %arg19[%c0_219, %c0_220] : memref<64x192xbf16, #tpu.memory_space<vmem>>, vector<64x192xbf16>
    %cst_221 = arith.constant dense<0.000000e+00> : vector<8x192xf32>
    %395 = tpu.matmul %393, %394, %cst_221 {dimension_numbers = #tpu.dot_dimension_numbers<[1], [0], [0], [1], [0, 0, 1, 1], [], []>} : vector<8x64xbf16>, vector<64x192xbf16>, vector<8x192xf32> -> vector<8x192xf32>
    %c1_222 = arith.constant 1 : index
    %c0_223 = arith.constant 0 : index
    %396 = vector.load %arg49[%c1_222, %c0_223] : memref<66x192xf32, #tpu.memory_space<vmem>>, vector<8x192xf32>
    tpu.vector_store %arg49[%c1_222, %c0_223], %395 {strides = array<i32>} : memref<66x192xf32, #tpu.memory_space<vmem>>, vector<8x192xf32>,
    %c0_224 = arith.constant 0 : index
    %c0_225 = arith.constant 0 : index
    %397 = vector.load %arg49[%c0_224, %c0_225] : memref<66x192xf32, #tpu.memory_space<vmem>>, vector<8x64xf32>
    %c2_226 = arith.constant 2 : index
    %c0_227 = arith.constant 0 : index
    %398 = vector.load %arg49[%c2_226, %c0_227] : memref<66x192xf32, #tpu.memory_space<vmem>>, vector<8x64xf32>
    %c0_228 = arith.constant 0 : index
    %c128_229 = arith.constant 128 : index
    %399 = vector.load %arg49[%c0_228, %c128_229] : memref<66x192xf32, #tpu.memory_space<vmem>>, vector<8x64xf32>
    %c2_230 = arith.constant 2 : index
    %c128_231 = arith.constant 128 : index
    %400 = vector.load %arg49[%c2_230, %c128_231] : memref<66x192xf32, #tpu.memory_space<vmem>>, vector<8x64xf32>
    %401 = vector.extract_strided_slice %395 {offsets = [0, 64], sizes = [8, 64], strides = [1, 1]} : vector<8x192xf32> to vector<8x64xf32>
    %402 = vector.shape_cast %11 : vector<8x1xi1> to vector<8x1xi1>
    %403 = vector.broadcast %402 : vector<8x1xi1> to vector<8x64xi1>
    %404 = arith.select %403, %398, %397 : vector<8x64xi1>, vector<8x64xf32>
    %405 = arith.addf %404, %401 : vector<8x64xf32>
    %406 = vector.shape_cast %26 : vector<8x1xi1> to vector<8x1xi1>
    %407 = vector.broadcast %406 : vector<8x1xi1> to vector<8x64xi1>
    %408 = arith.select %407, %399, %400 : vector<8x64xi1>, vector<8x64xf32>
    %409 = arith.addf %405, %408 : vector<8x64xf32>
    %410 = vector.broadcast %391 : vector<1x64xf32> to vector<8x64xf32>
    %411 = arith.addf %409, %410 : vector<8x64xf32>
    %cst_232 = arith.constant 5.000000e-01 : f32
    %412 = vector.broadcast %cst_232 : f32 to vector<8x64xf32>
    %413 = arith.mulf %412, %411 : vector<8x64xf32>
    %cst_233 = arith.constant 4.471500e-02 : f32
    %414 = vector.broadcast %cst_233 : f32 to vector<8x64xf32>
    %415 = arith.mulf %414, %411 : vector<8x64xf32>
    %416 = arith.mulf %415, %411 : vector<8x64xf32>
    %417 = arith.mulf %416, %411 : vector<8x64xf32>
    %418 = arith.addf %411, %417 : vector<8x64xf32>
    %cst_234 = arith.constant 0.797884583 : f32
    %419 = vector.broadcast %cst_234 : f32 to vector<8x64xf32>
    %420 = arith.mulf %419, %418 : vector<8x64xf32>
    %421 = math.tanh %420 : vector<8x64xf32>
    %cst_235 = arith.constant 1.000000e+00 : f32
    %422 = vector.broadcast %cst_235 : f32 to vector<8x64xf32>
    %423 = arith.addf %422, %421 : vector<8x64xf32>
    %424 = arith.mulf %413, %423 : vector<8x64xf32>
    %425 = arith.addf %424, %250 : vector<8x64xf32>
    %426 = arith.truncf %425 : vector<8x64xf32> to vector<8x64xbf16>
    %c0_236 = arith.constant 0 : index
    %c0_237 = arith.constant 0 : index
    %427 = vector.load %arg20[%c0_236, %c0_237] : memref<64x192xbf16, #tpu.memory_space<vmem>>, vector<64x192xbf16>
    %cst_238 = arith.constant dense<0.000000e+00> : vector<8x192xf32>
    %428 = tpu.matmul %426, %427, %cst_238 {dimension_numbers = #tpu.dot_dimension_numbers<[1], [0], [0], [1], [0, 0, 1, 1], [], []>} : vector<8x64xbf16>, vector<64x192xbf16>, vector<8x192xf32> -> vector<8x192xf32>
    %429 = vector.broadcast %392 : vector<1x192xf32> to vector<8x192xf32>
    %430 = arith.addf %428, %429 : vector<8x192xf32>
    %431 = vector.extract_strided_slice %430 {offsets = [0, 0], sizes = [8, 128], strides = [1, 1]} : vector<8x192xf32> to vector<8x128xf32>
    %c0_239 = arith.constant 0 : index
    %c0_240 = arith.constant 0 : index
    %432 = vector.load %arg45[%c0_239, %c0_240] : memref<8x128xf32, #tpu.memory_space<vmem>>, vector<8x128xf32>
    tpu.vector_store %arg45[%c0_239, %c0_240], %431 {strides = array<i32>} : memref<8x128xf32, #tpu.memory_space<vmem>>, vector<8x128xf32>,
    %433 = vector.extract_strided_slice %430 {offsets = [0, 128], sizes = [8, 64], strides = [1, 1]} : vector<8x192xf32> to vector<8x64xf32>
    %cst_241 = arith.constant 5.000000e-01 : f32
    %434 = vector.broadcast %cst_241 : f32 to vector<8x64xf32>
    %435 = arith.mulf %434, %433 : vector<8x64xf32>
    %cst_242 = arith.constant 4.471500e-02 : f32
    %436 = vector.broadcast %cst_242 : f32 to vector<8x64xf32>
    %437 = arith.mulf %436, %433 : vector<8x64xf32>
    %438 = arith.mulf %437, %433 : vector<8x64xf32>
    %439 = arith.mulf %438, %433 : vector<8x64xf32>
    %440 = arith.addf %433, %439 : vector<8x64xf32>
    %cst_243 = arith.constant 0.797884583 : f32
    %441 = vector.broadcast %cst_243 : f32 to vector<8x64xf32>
    %442 = arith.mulf %441, %440 : vector<8x64xf32>
    %443 = math.tanh %442 : vector<8x64xf32>
    %cst_244 = arith.constant 1.000000e+00 : f32
    %444 = vector.broadcast %cst_244 : f32 to vector<8x64xf32>
    %445 = arith.addf %444, %443 : vector<8x64xf32>
    %446 = arith.mulf %435, %445 : vector<8x64xf32>
    %447 = arith.addf %390, %446 : vector<8x64xf32>
    %448 = arith.truncf %447 : vector<8x64xf32> to vector<8x64xbf16>
    %449 = arith.extf %448 : vector<8x64xbf16> to vector<8x64xf32>
    %450 = arith.subf %447, %449 : vector<8x64xf32>
    %451 = arith.truncf %450 : vector<8x64xf32> to vector<8x64xbf16>
    %c0_245 = arith.constant 0 : index
    %c0_246 = arith.constant 0 : index
    %452 = vector.load %arg36[%c0_245, %c0_246] : memref<16x8xbf16, #tpu.memory_space<vmem>>, vector<16x8xbf16>
    %cst_247 = arith.constant dense<0.000000e+00> : vector<16x64xf32>
    %453 = tpu.matmul %452, %448, %cst_247 {dimension_numbers = #tpu.dot_dimension_numbers<[1], [0], [0], [1], [0, 0, 1, 1], [], []>} : vector<16x8xbf16>, vector<8x64xbf16>, vector<16x64xf32> -> vector<16x64xf32>
    %cst_248 = arith.constant dense<0.000000e+00> : vector<16x64xf32>
    %454 = tpu.matmul %452, %451, %cst_248 {dimension_numbers = #tpu.dot_dimension_numbers<[1], [0], [0], [1], [0, 0, 1, 1], [], []>} : vector<16x8xbf16>, vector<8x64xbf16>, vector<16x64xf32> -> vector<16x64xf32>
    %455 = arith.addf %453, %454 : vector<16x64xf32>
    %c0_249 = arith.constant 0 : index
    %c0_250 = arith.constant 0 : index
    %456 = vector.load %arg24[%c0_249, %c0_250] : memref<2x192xf32, #tpu.memory_space<vmem>>, vector<1x64xf32>
    %c1_251 = arith.constant 1 : index
    %c0_252 = arith.constant 0 : index
    %457 = vector.load %arg24[%c1_251, %c0_252] : memref<2x192xf32, #tpu.memory_space<vmem>>, vector<1x192xf32>
    %458 = arith.truncf %455 : vector<16x64xf32> to vector<16x64xbf16>
    %c0_253 = arith.constant 0 : index
    %c0_254 = arith.constant 0 : index
    %459 = vector.load %arg22[%c0_253, %c0_254] : memref<64x192xbf16, #tpu.memory_space<vmem>>, vector<64x192xbf16>
    %cst_255 = arith.constant dense<0.000000e+00> : vector<16x192xf32>
    %460 = tpu.matmul %458, %459, %cst_255 {dimension_numbers = #tpu.dot_dimension_numbers<[1], [0], [0], [1], [0, 0, 1, 1], [], []>} : vector<16x64xbf16>, vector<64x192xbf16>, vector<16x192xf32> -> vector<16x192xf32>
    %c1_256 = arith.constant 1 : index
    %c0_257 = arith.constant 0 : index
    %461 = vector.load %arg49[%c1_256, %c0_257] : memref<66x192xf32, #tpu.memory_space<vmem>>, vector<16x192xf32>
    tpu.vector_store %arg49[%c1_256, %c0_257], %460 {strides = array<i32>} : memref<66x192xf32, #tpu.memory_space<vmem>>, vector<16x192xf32>,
    %c0_258 = arith.constant 0 : index
    %c0_259 = arith.constant 0 : index
    %462 = vector.load %arg49[%c0_258, %c0_259] : memref<66x192xf32, #tpu.memory_space<vmem>>, vector<16x64xf32>
    %c2_260 = arith.constant 2 : index
    %c0_261 = arith.constant 0 : index
    %463 = vector.load %arg49[%c2_260, %c0_261] : memref<66x192xf32, #tpu.memory_space<vmem>>, vector<16x64xf32>
    %c0_262 = arith.constant 0 : index
    %c128_263 = arith.constant 128 : index
    %464 = vector.load %arg49[%c0_262, %c128_263] : memref<66x192xf32, #tpu.memory_space<vmem>>, vector<16x64xf32>
    %c2_264 = arith.constant 2 : index
    %c128_265 = arith.constant 128 : index
    %465 = vector.load %arg49[%c2_264, %c128_265] : memref<66x192xf32, #tpu.memory_space<vmem>>, vector<16x64xf32>
    %466 = vector.extract_strided_slice %460 {offsets = [0, 64], sizes = [16, 64], strides = [1, 1]} : vector<16x192xf32> to vector<16x64xf32>
    %467 = vector.shape_cast %8 : vector<16x1xi1> to vector<16x1xi1>
    %468 = vector.broadcast %467 : vector<16x1xi1> to vector<16x64xi1>
    %469 = arith.select %468, %463, %462 : vector<16x64xi1>, vector<16x64xf32>
    %470 = arith.addf %469, %466 : vector<16x64xf32>
    %471 = vector.shape_cast %23 : vector<16x1xi1> to vector<16x1xi1>
    %472 = vector.broadcast %471 : vector<16x1xi1> to vector<16x64xi1>
    %473 = arith.select %472, %464, %465 : vector<16x64xi1>, vector<16x64xf32>
    %474 = arith.addf %470, %473 : vector<16x64xf32>
    %475 = vector.broadcast %456 : vector<1x64xf32> to vector<16x64xf32>
    %476 = arith.addf %474, %475 : vector<16x64xf32>
    %cst_266 = arith.constant 5.000000e-01 : f32
    %477 = vector.broadcast %cst_266 : f32 to vector<16x64xf32>
    %478 = arith.mulf %477, %476 : vector<16x64xf32>
    %cst_267 = arith.constant 4.471500e-02 : f32
    %479 = vector.broadcast %cst_267 : f32 to vector<16x64xf32>
    %480 = arith.mulf %479, %476 : vector<16x64xf32>
    %481 = arith.mulf %480, %476 : vector<16x64xf32>
    %482 = arith.mulf %481, %476 : vector<16x64xf32>
    %483 = arith.addf %476, %482 : vector<16x64xf32>
    %cst_268 = arith.constant 0.797884583 : f32
    %484 = vector.broadcast %cst_268 : f32 to vector<16x64xf32>
    %485 = arith.mulf %484, %483 : vector<16x64xf32>
    %486 = math.tanh %485 : vector<16x64xf32>
    %cst_269 = arith.constant 1.000000e+00 : f32
    %487 = vector.broadcast %cst_269 : f32 to vector<16x64xf32>
    %488 = arith.addf %487, %486 : vector<16x64xf32>
    %489 = arith.mulf %478, %488 : vector<16x64xf32>
    %490 = arith.addf %489, %189 : vector<16x64xf32>
    %491 = arith.truncf %490 : vector<16x64xf32> to vector<16x64xbf16>
    %c0_270 = arith.constant 0 : index
    %c0_271 = arith.constant 0 : index
    %492 = vector.load %arg23[%c0_270, %c0_271] : memref<64x192xbf16, #tpu.memory_space<vmem>>, vector<64x192xbf16>
    %cst_272 = arith.constant dense<0.000000e+00> : vector<16x192xf32>
    %493 = tpu.matmul %491, %492, %cst_272 {dimension_numbers = #tpu.dot_dimension_numbers<[1], [0], [0], [1], [0, 0, 1, 1], [], []>} : vector<16x64xbf16>, vector<64x192xbf16>, vector<16x192xf32> -> vector<16x192xf32>
    %494 = vector.broadcast %457 : vector<1x192xf32> to vector<16x192xf32>
    %495 = arith.addf %493, %494 : vector<16x192xf32>
    %496 = vector.extract_strided_slice %495 {offsets = [0, 0], sizes = [16, 128], strides = [1, 1]} : vector<16x192xf32> to vector<16x128xf32>
    %c0_273 = arith.constant 0 : index
    %c0_274 = arith.constant 0 : index
    %497 = vector.load %arg46[%c0_273, %c0_274] : memref<16x128xf32, #tpu.memory_space<vmem>>, vector<16x128xf32>
    tpu.vector_store %arg46[%c0_273, %c0_274], %496 {strides = array<i32>} : memref<16x128xf32, #tpu.memory_space<vmem>>, vector<16x128xf32>,
    %498 = vector.extract_strided_slice %495 {offsets = [0, 128], sizes = [16, 64], strides = [1, 1]} : vector<16x192xf32> to vector<16x64xf32>
    %cst_275 = arith.constant 5.000000e-01 : f32
    %499 = vector.broadcast %cst_275 : f32 to vector<16x64xf32>
    %500 = arith.mulf %499, %498 : vector<16x64xf32>
    %cst_276 = arith.constant 4.471500e-02 : f32
    %501 = vector.broadcast %cst_276 : f32 to vector<16x64xf32>
    %502 = arith.mulf %501, %498 : vector<16x64xf32>
    %503 = arith.mulf %502, %498 : vector<16x64xf32>
    %504 = arith.mulf %503, %498 : vector<16x64xf32>
    %505 = arith.addf %498, %504 : vector<16x64xf32>
    %cst_277 = arith.constant 0.797884583 : f32
    %506 = vector.broadcast %cst_277 : f32 to vector<16x64xf32>
    %507 = arith.mulf %506, %505 : vector<16x64xf32>
    %508 = math.tanh %507 : vector<16x64xf32>
    %cst_278 = arith.constant 1.000000e+00 : f32
    %509 = vector.broadcast %cst_278 : f32 to vector<16x64xf32>
    %510 = arith.addf %509, %508 : vector<16x64xf32>
    %511 = arith.mulf %500, %510 : vector<16x64xf32>
    %512 = arith.addf %455, %511 : vector<16x64xf32>
    %513 = arith.truncf %512 : vector<16x64xf32> to vector<16x64xbf16>
    %514 = arith.extf %513 : vector<16x64xbf16> to vector<16x64xf32>
    %515 = arith.subf %512, %514 : vector<16x64xf32>
    %516 = arith.truncf %515 : vector<16x64xf32> to vector<16x64xbf16>
    %c0_279 = arith.constant 0 : index
    %c0_280 = arith.constant 0 : index
    %517 = vector.load %arg37[%c0_279, %c0_280] : memref<32x16xbf16, #tpu.memory_space<vmem>>, vector<32x16xbf16>
    %cst_281 = arith.constant dense<0.000000e+00> : vector<32x64xf32>
    %518 = tpu.matmul %517, %513, %cst_281 {dimension_numbers = #tpu.dot_dimension_numbers<[1], [0], [0], [1], [0, 0, 1, 1], [], []>} : vector<32x16xbf16>, vector<16x64xbf16>, vector<32x64xf32> -> vector<32x64xf32>
    %cst_282 = arith.constant dense<0.000000e+00> : vector<32x64xf32>
    %519 = tpu.matmul %517, %516, %cst_282 {dimension_numbers = #tpu.dot_dimension_numbers<[1], [0], [0], [1], [0, 0, 1, 1], [], []>} : vector<32x16xbf16>, vector<16x64xbf16>, vector<32x64xf32> -> vector<32x64xf32>
    %520 = arith.addf %518, %519 : vector<32x64xf32>
    %c0_283 = arith.constant 0 : index
    %c0_284 = arith.constant 0 : index
    %521 = vector.load %arg27[%c0_283, %c0_284] : memref<2x192xf32, #tpu.memory_space<vmem>>, vector<1x64xf32>
    %c1_285 = arith.constant 1 : index
    %c0_286 = arith.constant 0 : index
    %522 = vector.load %arg27[%c1_285, %c0_286] : memref<2x192xf32, #tpu.memory_space<vmem>>, vector<1x192xf32>
    %523 = arith.truncf %520 : vector<32x64xf32> to vector<32x64xbf16>
    %c0_287 = arith.constant 0 : index
    %c0_288 = arith.constant 0 : index
    %524 = vector.load %arg25[%c0_287, %c0_288] : memref<64x192xbf16, #tpu.memory_space<vmem>>, vector<64x192xbf16>
    %cst_289 = arith.constant dense<0.000000e+00> : vector<32x192xf32>
    %525 = tpu.matmul %523, %524, %cst_289 {dimension_numbers = #tpu.dot_dimension_numbers<[1], [0], [0], [1], [0, 0, 1, 1], [], []>} : vector<32x64xbf16>, vector<64x192xbf16>, vector<32x192xf32> -> vector<32x192xf32>
    %c1_290 = arith.constant 1 : index
    %c0_291 = arith.constant 0 : index
    %526 = vector.load %arg49[%c1_290, %c0_291] : memref<66x192xf32, #tpu.memory_space<vmem>>, vector<32x192xf32>
    tpu.vector_store %arg49[%c1_290, %c0_291], %525 {strides = array<i32>} : memref<66x192xf32, #tpu.memory_space<vmem>>, vector<32x192xf32>,
    %c0_292 = arith.constant 0 : index
    %c0_293 = arith.constant 0 : index
    %527 = vector.load %arg49[%c0_292, %c0_293] : memref<66x192xf32, #tpu.memory_space<vmem>>, vector<32x64xf32>
    %c2_294 = arith.constant 2 : index
    %c0_295 = arith.constant 0 : index
    %528 = vector.load %arg49[%c2_294, %c0_295] : memref<66x192xf32, #tpu.memory_space<vmem>>, vector<32x64xf32>
    %c0_296 = arith.constant 0 : index
    %c128_297 = arith.constant 128 : index
    %529 = vector.load %arg49[%c0_296, %c128_297] : memref<66x192xf32, #tpu.memory_space<vmem>>, vector<32x64xf32>
    %c2_298 = arith.constant 2 : index
    %c128_299 = arith.constant 128 : index
    %530 = vector.load %arg49[%c2_298, %c128_299] : memref<66x192xf32, #tpu.memory_space<vmem>>, vector<32x64xf32>
    %531 = vector.extract_strided_slice %525 {offsets = [0, 64], sizes = [32, 64], strides = [1, 1]} : vector<32x192xf32> to vector<32x64xf32>
    %532 = vector.shape_cast %5 : vector<32x1xi1> to vector<32x1xi1>
    %533 = vector.broadcast %532 : vector<32x1xi1> to vector<32x64xi1>
    %534 = arith.select %533, %528, %527 : vector<32x64xi1>, vector<32x64xf32>
    %535 = arith.addf %534, %531 : vector<32x64xf32>
    %536 = vector.shape_cast %20 : vector<32x1xi1> to vector<32x1xi1>
    %537 = vector.broadcast %536 : vector<32x1xi1> to vector<32x64xi1>
    %538 = arith.select %537, %529, %530 : vector<32x64xi1>, vector<32x64xf32>
    %539 = arith.addf %535, %538 : vector<32x64xf32>
    %540 = vector.broadcast %521 : vector<1x64xf32> to vector<32x64xf32>
    %541 = arith.addf %539, %540 : vector<32x64xf32>
    %cst_300 = arith.constant 5.000000e-01 : f32
    %542 = vector.broadcast %cst_300 : f32 to vector<32x64xf32>
    %543 = arith.mulf %542, %541 : vector<32x64xf32>
    %cst_301 = arith.constant 4.471500e-02 : f32
    %544 = vector.broadcast %cst_301 : f32 to vector<32x64xf32>
    %545 = arith.mulf %544, %541 : vector<32x64xf32>
    %546 = arith.mulf %545, %541 : vector<32x64xf32>
    %547 = arith.mulf %546, %541 : vector<32x64xf32>
    %548 = arith.addf %541, %547 : vector<32x64xf32>
    %cst_302 = arith.constant 0.797884583 : f32
    %549 = vector.broadcast %cst_302 : f32 to vector<32x64xf32>
    %550 = arith.mulf %549, %548 : vector<32x64xf32>
    %551 = math.tanh %550 : vector<32x64xf32>
    %cst_303 = arith.constant 1.000000e+00 : f32
    %552 = vector.broadcast %cst_303 : f32 to vector<32x64xf32>
    %553 = arith.addf %552, %551 : vector<32x64xf32>
    %554 = arith.mulf %543, %553 : vector<32x64xf32>
    %555 = arith.addf %554, %128 : vector<32x64xf32>
    %556 = arith.truncf %555 : vector<32x64xf32> to vector<32x64xbf16>
    %c0_304 = arith.constant 0 : index
    %c0_305 = arith.constant 0 : index
    %557 = vector.load %arg26[%c0_304, %c0_305] : memref<64x192xbf16, #tpu.memory_space<vmem>>, vector<64x192xbf16>
    %cst_306 = arith.constant dense<0.000000e+00> : vector<32x192xf32>
    %558 = tpu.matmul %556, %557, %cst_306 {dimension_numbers = #tpu.dot_dimension_numbers<[1], [0], [0], [1], [0, 0, 1, 1], [], []>} : vector<32x64xbf16>, vector<64x192xbf16>, vector<32x192xf32> -> vector<32x192xf32>
    %559 = vector.broadcast %522 : vector<1x192xf32> to vector<32x192xf32>
    %560 = arith.addf %558, %559 : vector<32x192xf32>
    %561 = vector.extract_strided_slice %560 {offsets = [0, 0], sizes = [32, 128], strides = [1, 1]} : vector<32x192xf32> to vector<32x128xf32>
    %c0_307 = arith.constant 0 : index
    %c0_308 = arith.constant 0 : index
    %562 = vector.load %arg47[%c0_307, %c0_308] : memref<32x128xf32, #tpu.memory_space<vmem>>, vector<32x128xf32>
    tpu.vector_store %arg47[%c0_307, %c0_308], %561 {strides = array<i32>} : memref<32x128xf32, #tpu.memory_space<vmem>>, vector<32x128xf32>,
    %563 = vector.extract_strided_slice %560 {offsets = [0, 128], sizes = [32, 64], strides = [1, 1]} : vector<32x192xf32> to vector<32x64xf32>
    %cst_309 = arith.constant 5.000000e-01 : f32
    %564 = vector.broadcast %cst_309 : f32 to vector<32x64xf32>
    %565 = arith.mulf %564, %563 : vector<32x64xf32>
    %cst_310 = arith.constant 4.471500e-02 : f32
    %566 = vector.broadcast %cst_310 : f32 to vector<32x64xf32>
    %567 = arith.mulf %566, %563 : vector<32x64xf32>
    %568 = arith.mulf %567, %563 : vector<32x64xf32>
    %569 = arith.mulf %568, %563 : vector<32x64xf32>
    %570 = arith.addf %563, %569 : vector<32x64xf32>
    %cst_311 = arith.constant 0.797884583 : f32
    %571 = vector.broadcast %cst_311 : f32 to vector<32x64xf32>
    %572 = arith.mulf %571, %570 : vector<32x64xf32>
    %573 = math.tanh %572 : vector<32x64xf32>
    %cst_312 = arith.constant 1.000000e+00 : f32
    %574 = vector.broadcast %cst_312 : f32 to vector<32x64xf32>
    %575 = arith.addf %574, %573 : vector<32x64xf32>
    %576 = arith.mulf %565, %575 : vector<32x64xf32>
    %577 = arith.addf %520, %576 : vector<32x64xf32>
    %578 = arith.truncf %577 : vector<32x64xf32> to vector<32x64xbf16>
    %579 = arith.extf %578 : vector<32x64xbf16> to vector<32x64xf32>
    %580 = arith.subf %577, %579 : vector<32x64xf32>
    %581 = arith.truncf %580 : vector<32x64xf32> to vector<32x64xbf16>
    %c0_313 = arith.constant 0 : index
    %c0_314 = arith.constant 0 : index
    %582 = vector.load %arg38[%c0_313, %c0_314] : memref<64x32xbf16, #tpu.memory_space<vmem>>, vector<64x32xbf16>
    %cst_315 = arith.constant dense<0.000000e+00> : vector<64x64xf32>
    %583 = tpu.matmul %582, %578, %cst_315 {dimension_numbers = #tpu.dot_dimension_numbers<[1], [0], [0], [1], [0, 0, 1, 1], [], []>} : vector<64x32xbf16>, vector<32x64xbf16>, vector<64x64xf32> -> vector<64x64xf32>
    %cst_316 = arith.constant dense<0.000000e+00> : vector<64x64xf32>
    %584 = tpu.matmul %582, %581, %cst_316 {dimension_numbers = #tpu.dot_dimension_numbers<[1], [0], [0], [1], [0, 0, 1, 1], [], []>} : vector<64x32xbf16>, vector<32x64xbf16>, vector<64x64xf32> -> vector<64x64xf32>
    %585 = arith.addf %583, %584 : vector<64x64xf32>
    %c0_317 = arith.constant 0 : index
    %c0_318 = arith.constant 0 : index
    %586 = vector.load %arg30[%c0_317, %c0_318] : memref<2x128xf32, #tpu.memory_space<vmem>>, vector<1x64xf32>
    %c1_319 = arith.constant 1 : index
    %c0_320 = arith.constant 0 : index
    %587 = vector.load %arg30[%c1_319, %c0_320] : memref<2x128xf32, #tpu.memory_space<vmem>>, vector<1x128xf32>
    %588 = arith.truncf %585 : vector<64x64xf32> to vector<64x64xbf16>
    %c0_321 = arith.constant 0 : index
    %c0_322 = arith.constant 0 : index
    %589 = vector.load %arg28[%c0_321, %c0_322] : memref<64x192xbf16, #tpu.memory_space<vmem>>, vector<64x192xbf16>
    %cst_323 = arith.constant dense<0.000000e+00> : vector<64x192xf32>
    %590 = tpu.matmul %588, %589, %cst_323 {dimension_numbers = #tpu.dot_dimension_numbers<[1], [0], [0], [1], [0, 0, 1, 1], [], []>} : vector<64x64xbf16>, vector<64x192xbf16>, vector<64x192xf32> -> vector<64x192xf32>
    %c1_324 = arith.constant 1 : index
    %c0_325 = arith.constant 0 : index
    %591 = vector.load %arg49[%c1_324, %c0_325] : memref<66x192xf32, #tpu.memory_space<vmem>>, vector<64x192xf32>
    tpu.vector_store %arg49[%c1_324, %c0_325], %590 {strides = array<i32>} : memref<66x192xf32, #tpu.memory_space<vmem>>, vector<64x192xf32>,
    %c0_326 = arith.constant 0 : index
    %c0_327 = arith.constant 0 : index
    %592 = vector.load %arg49[%c0_326, %c0_327] : memref<66x192xf32, #tpu.memory_space<vmem>>, vector<64x64xf32>
    %c2_328 = arith.constant 2 : index
    %c0_329 = arith.constant 0 : index
    %593 = vector.load %arg49[%c2_328, %c0_329] : memref<66x192xf32, #tpu.memory_space<vmem>>, vector<64x64xf32>
    %c0_330 = arith.constant 0 : index
    %c128_331 = arith.constant 128 : index
    %594 = vector.load %arg49[%c0_330, %c128_331] : memref<66x192xf32, #tpu.memory_space<vmem>>, vector<64x64xf32>
    %c2_332 = arith.constant 2 : index
    %c128_333 = arith.constant 128 : index
    %595 = vector.load %arg49[%c2_332, %c128_333] : memref<66x192xf32, #tpu.memory_space<vmem>>, vector<64x64xf32>
    %596 = vector.extract_strided_slice %590 {offsets = [0, 64], sizes = [64, 64], strides = [1, 1]} : vector<64x192xf32> to vector<64x64xf32>
    %597 = vector.shape_cast %2 : vector<64x1xi1> to vector<64x1xi1>
    %598 = vector.broadcast %597 : vector<64x1xi1> to vector<64x64xi1>
    %599 = arith.select %598, %593, %592 : vector<64x64xi1>, vector<64x64xf32>
    %600 = arith.addf %599, %596 : vector<64x64xf32>
    %601 = vector.shape_cast %17 : vector<64x1xi1> to vector<64x1xi1>
    %602 = vector.broadcast %601 : vector<64x1xi1> to vector<64x64xi1>
    %603 = arith.select %602, %594, %595 : vector<64x64xi1>, vector<64x64xf32>
    %604 = arith.addf %600, %603 : vector<64x64xf32>
    %605 = vector.broadcast %586 : vector<1x64xf32> to vector<64x64xf32>
    %606 = arith.addf %604, %605 : vector<64x64xf32>
    %cst_334 = arith.constant 5.000000e-01 : f32
    %607 = vector.broadcast %cst_334 : f32 to vector<64x64xf32>
    %608 = arith.mulf %607, %606 : vector<64x64xf32>
    %cst_335 = arith.constant 4.471500e-02 : f32
    %609 = vector.broadcast %cst_335 : f32 to vector<64x64xf32>
    %610 = arith.mulf %609, %606 : vector<64x64xf32>
    %611 = arith.mulf %610, %606 : vector<64x64xf32>
    %612 = arith.mulf %611, %606 : vector<64x64xf32>
    %613 = arith.addf %606, %612 : vector<64x64xf32>
    %cst_336 = arith.constant 0.797884583 : f32
    %614 = vector.broadcast %cst_336 : f32 to vector<64x64xf32>
    %615 = arith.mulf %614, %613 : vector<64x64xf32>
    %616 = math.tanh %615 : vector<64x64xf32>
    %cst_337 = arith.constant 1.000000e+00 : f32
    %617 = vector.broadcast %cst_337 : f32 to vector<64x64xf32>
    %618 = arith.addf %617, %616 : vector<64x64xf32>
    %619 = arith.mulf %608, %618 : vector<64x64xf32>
    %620 = arith.addf %619, %68 : vector<64x64xf32>
    %621 = arith.truncf %620 : vector<64x64xf32> to vector<64x64xbf16>
    %c0_338 = arith.constant 0 : index
    %c0_339 = arith.constant 0 : index
    %622 = vector.load %arg29[%c0_338, %c0_339] : memref<64x128xbf16, #tpu.memory_space<vmem>>, vector<64x128xbf16>
    %cst_340 = arith.constant dense<0.000000e+00> : vector<64x128xf32>
    %623 = tpu.matmul %621, %622, %cst_340 {dimension_numbers = #tpu.dot_dimension_numbers<[1], [0], [0], [1], [0, 0, 1, 1], [], []>} : vector<64x64xbf16>, vector<64x128xbf16>, vector<64x128xf32> -> vector<64x128xf32>
    %624 = vector.broadcast %587 : vector<1x128xf32> to vector<64x128xf32>
    %625 = arith.addf %623, %624 : vector<64x128xf32>
    %c0_341 = arith.constant 0 : index
    %c0_342 = arith.constant 0 : index
    %626 = vector.load %arg48[%c0_341, %c0_342] : memref<64x128xf32, #tpu.memory_space<vmem>>, vector<64x128xf32>
    tpu.vector_store %arg48[%c0_341, %c0_342], %625 {strides = array<i32>} : memref<64x128xf32, #tpu.memory_space<vmem>>, vector<64x128xf32>,
    return
  }
}

</mosaic_0001>

<llo_original>
// kernel: uencoder_forward.1
$region0: #{uencoder_forward.1}
  #allocation0 [shape = 'u32[]', space=smem, size = 0x4, offset = 0x4, fixed_abs, tag = 'smem constant byte address 0x4 - core index']
  #allocation1 [shape = 'u32[144,128]{1,0:T(1,128)}', space=vmem, size = 0x12000, scoped, tag = 'internal scratch']
  #allocation2 [shape = 'f32[66,192]{1,0:T(8,128)}', space=vmem, size = 0x12000, scoped, tag = 'scratch operand']
  %s0 = inlined_call_operand.smem [shape: u32[49], index: -1, kind: input, shape index: {}]
  %s1 = sld [smem:[%s0]]
  %s2 = scalar_lea.smem %s0, 1
  %s3 = sld [smem:[%s2]]
  %s4 = scalar_lea.smem %s0, 2
  %s5 = sld [smem:[%s4]]
  %s6 = scalar_lea.smem %s0, 3
  %s7 = sld [smem:[%s6]]
  %s8 = scalar_lea.smem %s0, 4
  %s9 = sld [smem:[%s8]]
  %s10 = scalar_lea.smem %s0, 5
  %s11 = sld [smem:[%s10]]
  %s12 = scalar_lea.smem %s0, 6
  %s13 = sld [smem:[%s12]]
  %s14 = scalar_lea.smem %s0, 7
  %s15 = sld [smem:[%s14]]
  %s16 = scalar_lea.smem %s0, 8
  %s17 = sld [smem:[%s16]]
  %s18 = scalar_lea.smem %s0, 9
  %s19 = sld [smem:[%s18]]
  %s20 = scalar_lea.smem %s0, 10
  %s21 = sld [smem:[%s20]]
  %s22 = scalar_lea.smem %s0, 11
  %s23 = sld [smem:[%s22]]
  %s24 = scalar_lea.smem %s0, 12
  %s25 = sld [smem:[%s24]]
  %s26 = scalar_lea.smem %s0, 13
  %s27 = sld [smem:[%s26]]
  %s28 = scalar_lea.smem %s0, 14
  %s29 = sld [smem:[%s28]]
  %s30 = scalar_lea.smem %s0, 15
  %s31 = sld [smem:[%s30]]
  %s32 = scalar_lea.smem %s0, 16
  %s33 = sld [smem:[%s32]]
  %s34 = scalar_lea.smem %s0, 17
  %s35 = sld [smem:[%s34]]
  %s36 = scalar_lea.smem %s0, 18
  %s37 = sld [smem:[%s36]]
  %s38 = scalar_lea.smem %s0, 19
  %s39 = sld [smem:[%s38]]
  %s40 = scalar_lea.smem %s0, 20
  %s41 = sld [smem:[%s40]]
  %s42 = scalar_lea.smem %s0, 21
  %s43 = sld [smem:[%s42]]
  %s44 = scalar_lea.smem %s0, 22
  %s45 = sld [smem:[%s44]]
  %s46 = scalar_lea.smem %s0, 23
  %s47 = sld [smem:[%s46]]
  %s48 = scalar_lea.smem %s0, 24
  %s49 = sld [smem:[%s48]]
  %s50 = scalar_lea.smem %s0, 25
  %s51 = sld [smem:[%s50]]
  %s52 = scalar_lea.smem %s0, 26
  %s53 = sld [smem:[%s52]]
  %s54 = scalar_lea.smem %s0, 27
  %s55 = sld [smem:[%s54]]
  %s56 = scalar_lea.smem %s0, 28
  %s57 = sld [smem:[%s56]]
  %s58 = scalar_lea.smem %s0, 29
  %s59 = sld [smem:[%s58]]
  %s60 = scalar_lea.smem %s0, 30
  %s61 = sld [smem:[%s60]]
  %s62 = scalar_lea.smem %s0, 31
  %s63 = sld [smem:[%s62]]
  %s64 = scalar_lea.smem %s0, 32
  %s65 = sld [smem:[%s64]]
  %s66 = scalar_lea.smem %s0, 33
  %s67 = sld [smem:[%s66]]
  %s68 = scalar_lea.smem %s0, 34
  %s69 = sld [smem:[%s68]]
  %s70 = scalar_lea.smem %s0, 35
  %s71 = sld [smem:[%s70]]
  %s72 = scalar_lea.smem %s0, 36
  %s73 = sld [smem:[%s72]]
  %s74 = scalar_lea.smem %s0, 37
  %s75 = sld [smem:[%s74]]
  %s76 = scalar_lea.smem %s0, 38
  %s77 = sld [smem:[%s76]]
  %s78 = scalar_lea.smem %s0, 39
  %s79 = sld [smem:[%s78]]
  %s80 = scalar_lea.smem %s0, 40
  %s81 = sld [smem:[%s80]]
  %s82 = scalar_lea.smem %s0, 41
  %s83 = sld [smem:[%s82]]
  %s84 = scalar_lea.smem %s0, 42
  %s85 = sld [smem:[%s84]]
  %s86 = scalar_lea.smem %s0, 43
  %s87 = sld [smem:[%s86]]
  %s88 = scalar_lea.smem %s0, 44
  %s89 = sld [smem:[%s88]]
  %s90 = scalar_lea.smem %s0, 45
  %s91 = sld [smem:[%s90]]
  %s92 = scalar_lea.smem %s0, 46
  %s93 = sld [smem:[%s92]]
  %s94 = scalar_lea.smem %s0, 47
  %s95 = sld [smem:[%s94]]
  %s96 = scalar_lea.smem %s0, 48
  %s97 = sld [smem:[%s96]]
  %98 = xla_tuple %s89, %s91, %s93, %s95, %s97
  %s99 = sld [smem:[#allocation0]]
  $region290: #{uencoder_forward.1} parent=0
    _
  %s101 = ssub.s32 1, %s99
  %s102 = scalar_select 0, %s101, %s99
  $region1: #{uencoder_forward.1} parent=0
    #allocation3 [shape = 'u8[16384]{0}', space=vmem, size = 0x4000, scoped, tag = 'input window, operand 2, single buffered']
    #allocation4 [shape = 's32[1]{0}', space=sflag, size = 0x4, scoped, tag = 'scoped memory for uencoder_forward.1']
    #allocation5 [shape = 's32[1]{0}', space=sflag, size = 0x4, scoped, tag = 'scoped memory for uencoder_forward.1']
    #allocation6 [shape = 'u8[1024]{0}', space=vmem, size = 0x400, scoped, tag = 'input window, operand 3, single buffered']
    #allocation7 [shape = 's32[1]{0}', space=sflag, size = 0x4, scoped, tag = 'scoped memory for uencoder_forward.1']
    #allocation8 [shape = 'u8[16384]{0}', space=vmem, size = 0x4000, scoped, tag = 'input window, operand 5, single buffered']
    #allocation9 [shape = 'u8[1024]{0}', space=vmem, size = 0x400, scoped, tag = 'input window, operand 6, single buffered']
    #allocation10 [shape = 's32[1]{0}', space=sflag, size = 0x4, scoped, tag = 'scoped memory for uencoder_forward.1']
    #allocation11 [shape = 'u8[16384]{0}', space=vmem, size = 0x4000, scoped, tag = 'input window, operand 8, single buffered']
    #allocation12 [shape = 'u8[1024]{0}', space=vmem, size = 0x400, scoped, tag = 'input window, operand 9, single buffered']
    #allocation13 [shape = 's32[1]{0}', space=sflag, size = 0x4, scoped, tag = 'scoped memory for uencoder_forward.1']
    #allocation14 [shape = 'u8[16384]{0}', space=vmem, size = 0x4000, scoped, tag = 'input window, operand 11, single buffered']
    #allocation15 [shape = 'u8[1024]{0}', space=vmem, size = 0x400, scoped, tag = 'input window, operand 12, single buffered']
    #allocation16 [shape = 's32[1]{0}', space=sflag, size = 0x4, scoped, tag = 'scoped memory for uencoder_forward.1']
    #allocation17 [shape = 'u8[16384]{0}', space=vmem, size = 0x4000, scoped, tag = 'input window, operand 14, single buffered']
    #allocation18 [shape = 'u8[1024]{0}', space=vmem, size = 0x400, scoped, tag = 'input window, operand 15, single buffered']
    #allocation19 [shape = 's32[1]{0}', space=sflag, size = 0x4, scoped, tag = 'scoped memory for uencoder_forward.1']
    #allocation20 [shape = 'u8[32768]{0}', space=vmem, size = 0x8000, scoped, tag = 'input window, operand 19, single buffered']
    #allocation21 [shape = 'u8[32768]{0}', space=vmem, size = 0x8000, scoped, tag = 'input window, operand 20, single buffered']
    #allocation22 [shape = 's32[1]{0}', space=sflag, size = 0x4, scoped, tag = 'scoped memory for uencoder_forward.1']
    #allocation23 [shape = 'u8[2048]{0}', space=vmem, size = 0x800, scoped, tag = 'input window, operand 21, single buffered']
    #allocation24 [shape = 'u8[32768]{0}', space=vmem, size = 0x8000, scoped, tag = 'input window, operand 22, single buffered']
    #allocation25 [shape = 's32[1]{0}', space=sflag, size = 0x4, scoped, tag = 'scoped memory for uencoder_forward.1']
    #allocation26 [shape = 'u8[32768]{0}', space=vmem, size = 0x8000, scoped, tag = 'input window, operand 23, single buffered']
    #allocation27 [shape = 'u8[32768]{0}', space=vmem, size = 0x8000, scoped, tag = 'input window, operand 25, single buffered']
    #allocation28 [shape = 's32[1]{0}', space=sflag, size = 0x4, scoped, tag = 'scoped memory for uencoder_forward.1']
    #allocation29 [shape = 'u8[32768]{0}', space=vmem, size = 0x8000, scoped, tag = 'input window, operand 26, single buffered']
    #allocation30 [shape = 'u8[32768]{0}', space=vmem, size = 0x8000, scoped, tag = 'input window, operand 28, single buffered']
    #allocation31 [shape = 's32[1]{0}', space=sflag, size = 0x4, scoped, tag = 'scoped memory for uencoder_forward.1']
    #allocation32 [shape = 'u8[2048]{0}', space=vmem, size = 0x800, scoped, tag = 'output window, operand 0, single buffered']
    #allocation33 [shape = 'u8[4096]{0}', space=vmem, size = 0x1000, scoped, tag = 'output window, operand 1, single buffered']
    #allocation34 [shape = 's32[1]{0}', space=sflag, size = 0x4, scoped, tag = 'scoped memory for uencoder_forward.1']
    #allocation35 [shape = 'u8[8192]{0}', space=vmem, size = 0x2000, scoped, tag = 'output window, operand 2, single buffered']
    #allocation36 [shape = 'u8[16384]{0}', space=vmem, size = 0x4000, scoped, tag = 'output window, operand 3, single buffered']
    #allocation37 [shape = 's32[1]{0}', space=sflag, size = 0x4, scoped, tag = 'scoped memory for uencoder_forward.1']
    #allocation38 [shape = 'u8[32768]{0}', space=vmem, size = 0x8000, scoped, tag = 'output window, operand 4, single buffered']
    %103 = vsyncpa [#allocation4], 0
    %104 = vsyncpa [#allocation7], 0
    %105 = vsyncpa [#allocation10], 0
    %106 = vsyncpa [#allocation13], 0
    %107 = vsyncpa [#allocation16], 0
    %108 = vsyncpa [#allocation19], 0
    %109 = vsyncpa [#allocation22], 0
    %110 = vsyncpa [#allocation25], 0
    %111 = vsyncpa [#allocation28], 0
    %112 = vsyncpa [#allocation31], 0
    %113 = vsyncpa [#allocation5], 0
    %114 = vsyncpa [#allocation34], 0
    %115 = vsyncpa [#allocation37], 0
    // Predicated region
    $region2: #{uencoder_forward.1} parent=1 // pred_check
      _
    $region3: #{uencoder_forward.1} parent=1 // pred_check_branch
      %117 = sbr.rel (0) target = $region5
    $region4: #{uencoder_forward.1} parent=1 // pred_region
      _
    $region5: #{uencoder_forward.1} parent=1 // pred_fallthru
      _
    // Predicated region
    $region6: #{uencoder_forward.1} parent=1 // pred_check
      _
    $region7: #{uencoder_forward.1} parent=1 // pred_check_branch
      %119 = sbr.rel (0) target = $region9
    $region8: #{uencoder_forward.1} parent=1 // pred_region
      _
    $region9: #{uencoder_forward.1} parent=1 // pred_fallthru
      _
    // Predicated region
    $region10: #{uencoder_forward.1} parent=1 // pred_check
      _
    $region11: #{uencoder_forward.1} parent=1 // pred_check_branch
      %121 = sbr.rel (0) target = $region13
    $region12: #{uencoder_forward.1} parent=1 // pred_region
      %s123 = ssub.s32 512, 512
      %124 = vsyncadd [#allocation4], %s123
      %s125 = sshll.u32 [#allocation3], 4
      %s126 = int_to_ptr.vmem [resolvable:$true] %s125
      %131 = dma.hbm_to_vmem [thread:$0]  %s5, 512, %s126, [#allocation4], 64, 64, 4
    $region13: #{uencoder_forward.1} parent=1 // pred_fallthru
      _
    // Predicated region
    $region14: #{uencoder_forward.1} parent=1 // pred_check
      _
    $region15: #{uencoder_forward.1} parent=1 // pred_check_branch
      %133 = sbr.rel (0) target = $region17
    $region16: #{uencoder_forward.1} parent=1 // pred_region
      %s135 = ssub.s32 32, 32
      %136 = vsyncadd [#allocation7], %s135
      %s138 = sshll.u32 [#allocation6], 4
      %s139 = int_to_ptr.vmem [resolvable:$true] %s138
      %141 = dma.hbm_to_vmem [thread:$0]  %s7, 32, %s139, [#allocation7]
    $region17: #{uencoder_forward.1} parent=1 // pred_fallthru
      _
    // Predicated region
    $region18: #{uencoder_forward.1} parent=1 // pred_check
      _
    $region19: #{uencoder_forward.1} parent=1 // pred_check_branch
      %143 = sbr.rel (0) target = $region21
    $region20: #{uencoder_forward.1} parent=1 // pred_region
      _
    $region21: #{uencoder_forward.1} parent=1 // pred_fallthru
      _
    // Predicated region
    $region22: #{uencoder_forward.1} parent=1 // pred_check
      _
    $region23: #{uencoder_forward.1} parent=1 // pred_check_branch
      %145 = sbr.rel (0) target = $region25
    $region24: #{uencoder_forward.1} parent=1 // pred_region
      %s147 = ssub.s32 512, 512
      %148 = vsyncadd [#allocation7], %s147
      %s149 = sshll.u32 [#allocation8], 4
      %s150 = int_to_ptr.vmem [resolvable:$true] %s149
      %155 = dma.hbm_to_vmem [thread:$0]  %s11, 512, %s150, [#allocation7], 64, 64, 4
    $region25: #{uencoder_forward.1} parent=1 // pred_fallthru
      _
    // Predicated region
    $region26: #{uencoder_forward.1} parent=1 // pred_check
      _
    $region27: #{uencoder_forward.1} parent=1 // pred_check_branch
      %157 = sbr.rel (0) target = $region29
    $region28: #{uencoder_forward.1} parent=1 // pred_region
      %s159 = ssub.s32 32, 32
      %160 = vsyncadd [#allocation10], %s159
      %s162 = sshll.u32 [#allocation9], 4
      %s163 = int_to_ptr.vmem [resolvable:$true] %s162
      %165 = dma.hbm_to_vmem [thread:$0]  %s13, 32, %s163, [#allocation10]
    $region29: #{uencoder_forward.1} parent=1 // pred_fallthru
      _
    // Predicated region
    $region30: #{uencoder_forward.1} parent=1 // pred_check
      _
    $region31: #{uencoder_forward.1} parent=1 // pred_check_branch
      %167 = sbr.rel (0) target = $region33
    $region32: #{uencoder_forward.1} parent=1 // pred_region
      _
    $region33: #{uencoder_forward.1} parent=1 // pred_fallthru
      _
    // Predicated region
    $region34: #{uencoder_forward.1} parent=1 // pred_check
      _
    $region35: #{uencoder_forward.1} parent=1 // pred_check_branch
      %169 = sbr.rel (0) target = $region37
    $region36: #{uencoder_forward.1} parent=1 // pred_region
      %s171 = ssub.s32 512, 512
      %172 = vsyncadd [#allocation10], %s171
      %s173 = sshll.u32 [#allocation11], 4
      %s174 = int_to_ptr.vmem [resolvable:$true] %s173
      %179 = dma.hbm_to_vmem [thread:$0]  %s17, 512, %s174, [#allocation10], 64, 64, 4
    $region37: #{uencoder_forward.1} parent=1 // pred_fallthru
      _
    // Predicated region
    $region38: #{uencoder_forward.1} parent=1 // pred_check
      _
    $region39: #{uencoder_forward.1} parent=1 // pred_check_branch
      %181 = sbr.rel (0) target = $region41
    $region40: #{uencoder_forward.1} parent=1 // pred_region
      %s183 = ssub.s32 32, 32
      %184 = vsyncadd [#allocation13], %s183
      %s186 = sshll.u32 [#allocation12], 4
      %s187 = int_to_ptr.vmem [resolvable:$true] %s186
      %189 = dma.hbm_to_vmem [thread:$0]  %s19, 32, %s187, [#allocation13]
    $region41: #{uencoder_forward.1} parent=1 // pred_fallthru
      _
    // Predicated region
    $region42: #{uencoder_forward.1} parent=1 // pred_check
      _
    $region43: #{uencoder_forward.1} parent=1 // pred_check_branch
      %191 = sbr.rel (0) target = $region45
    $region44: #{uencoder_forward.1} parent=1 // pred_region
      _
    $region45: #{uencoder_forward.1} parent=1 // pred_fallthru
      _
    // Predicated region
    $region46: #{uencoder_forward.1} parent=1 // pred_check
      _
    $region47: #{uencoder_forward.1} parent=1 // pred_check_branch
      %193 = sbr.rel (0) target = $region49
    $region48: #{uencoder_forward.1} parent=1 // pred_region
      %s195 = ssub.s32 512, 512
      %196 = vsyncadd [#allocation13], %s195
      %s197 = sshll.u32 [#allocation14], 4
      %s198 = int_to_ptr.vmem [resolvable:$true] %s197
      %203 = dma.hbm_to_vmem [thread:$0]  %s23, 512, %s198, [#allocation13], 64, 64, 4
    $region49: #{uencoder_forward.1} parent=1 // pred_fallthru
      _
    // Predicated region
    $region50: #{uencoder_forward.1} parent=1 // pred_check
      _
    $region51: #{uencoder_forward.1} parent=1 // pred_check_branch
      %205 = sbr.rel (0) target = $region53
    $region52: #{uencoder_forward.1} parent=1 // pred_region
      %s207 = ssub.s32 32, 32
      %208 = vsyncadd [#allocation16], %s207
      %s210 = sshll.u32 [#allocation15], 4
      %s211 = int_to_ptr.vmem [resolvable:$true] %s210
      %213 = dma.hbm_to_vmem [thread:$0]  %s25, 32, %s211, [#allocation16]
    $region53: #{uencoder_forward.1} parent=1 // pred_fallthru
      _
    // Predicated region
    $region54: #{uencoder_forward.1} parent=1 // pred_check
      _
    $region55: #{uencoder_forward.1} parent=1 // pred_check_branch
      %215 = sbr.rel (0) target = $region57
    $region56: #{uencoder_forward.1} parent=1 // pred_region
      _
    $region57: #{uencoder_forward.1} parent=1 // pred_fallthru
      _
    // Predicated region
    $region58: #{uencoder_forward.1} parent=1 // pred_check
      _
    $region59: #{uencoder_forward.1} parent=1 // pred_check_branch
      %217 = sbr.rel (0) target = $region61
    $region60: #{uencoder_forward.1} parent=1 // pred_region
      %s219 = ssub.s32 512, 512
      %220 = vsyncadd [#allocation16], %s219
      %s221 = sshll.u32 [#allocation17], 4
      %s222 = int_to_ptr.vmem [resolvable:$true] %s221
      %227 = dma.hbm_to_vmem [thread:$0]  %s29, 512, %s222, [#allocation16], 64, 64, 4
    $region61: #{uencoder_forward.1} parent=1 // pred_fallthru
      _
    // Predicated region
    $region62: #{uencoder_forward.1} parent=1 // pred_check
      _
    $region63: #{uencoder_forward.1} parent=1 // pred_check_branch
      %229 = sbr.rel (0) target = $region65
    $region64: #{uencoder_forward.1} parent=1 // pred_region
      %s231 = ssub.s32 32, 32
      %232 = vsyncadd [#allocation19], %s231
      %s234 = sshll.u32 [#allocation18], 4
      %s235 = int_to_ptr.vmem [resolvable:$true] %s234
      %237 = dma.hbm_to_vmem [thread:$0]  %s31, 32, %s235, [#allocation19]
    $region65: #{uencoder_forward.1} parent=1 // pred_fallthru
      _
    // Predicated region
    $region66: #{uencoder_forward.1} parent=1 // pred_check
      _
    $region67: #{uencoder_forward.1} parent=1 // pred_check_branch
      %239 = sbr.rel (0) target = $region69
    $region68: #{uencoder_forward.1} parent=1 // pred_region
      _
    $region69: #{uencoder_forward.1} parent=1 // pred_fallthru
      _
    // Predicated region
    $region70: #{uencoder_forward.1} parent=1 // pred_check
      _
    $region71: #{uencoder_forward.1} parent=1 // pred_check_branch
      %241 = sbr.rel (0) target = $region73
    $region72: #{uencoder_forward.1} parent=1 // pred_region
      _
    $region73: #{uencoder_forward.1} parent=1 // pred_fallthru
      _
    // Predicated region
    $region74: #{uencoder_forward.1} parent=1 // pred_check
      _
    $region75: #{uencoder_forward.1} parent=1 // pred_check_branch
      %243 = sbr.rel (0) target = $region77
    $region76: #{uencoder_forward.1} parent=1 // pred_region
      _
    $region77: #{uencoder_forward.1} parent=1 // pred_fallthru
      _
    // Predicated region
    $region78: #{uencoder_forward.1} parent=1 // pred_check
      _
    $region79: #{uencoder_forward.1} parent=1 // pred_check_branch
      %245 = sbr.rel (0) target = $region81
    $region80: #{uencoder_forward.1} parent=1 // pred_region
      %s247 = ssub.s32 1024, 1024
      %248 = vsyncadd [#allocation19], %s247
      %s249 = sshll.u32 [#allocation20], 4
      %s250 = int_to_ptr.vmem [resolvable:$true] %s249
      %255 = dma.hbm_to_vmem [thread:$0]  %s39, 1024, %s250, [#allocation19], 128, 128, 8
    $region81: #{uencoder_forward.1} parent=1 // pred_fallthru
      _
    // Predicated region
    $region82: #{uencoder_forward.1} parent=1 // pred_check
      _
    $region83: #{uencoder_forward.1} parent=1 // pred_check_branch
      %257 = sbr.rel (0) target = $region85
    $region84: #{uencoder_forward.1} parent=1 // pred_region
      %s259 = ssub.s32 1024, 1024
      %260 = vsyncadd [#allocation22], %s259
      %s261 = sshll.u32 [#allocation21], 4
      %s262 = int_to_ptr.vmem [resolvable:$true] %s261
      %267 = dma.hbm_to_vmem [thread:$0]  %s41, 1024, %s262, [#allocation22], 128, 128, 8
    $region85: #{uencoder_forward.1} parent=1 // pred_fallthru
      _
    // Predicated region
    $region86: #{uencoder_forward.1} parent=1 // pred_check
      _
    $region87: #{uencoder_forward.1} parent=1 // pred_check_branch
      %269 = sbr.rel (0) target = $region89
    $region88: #{uencoder_forward.1} parent=1 // pred_region
      %s271 = ssub.s32 64, 64
      %272 = vsyncadd [#allocation22], %s271
      %s274 = sshll.u32 [#allocation23], 4
      %s275 = int_to_ptr.vmem [resolvable:$true] %s274
      %277 = dma.hbm_to_vmem [thread:$0]  %s43, 64, %s275, [#allocation22]
    $region89: #{uencoder_forward.1} parent=1 // pred_fallthru
      _
    // Predicated region
    $region90: #{uencoder_forward.1} parent=1 // pred_check
      _
    $region91: #{uencoder_forward.1} parent=1 // pred_check_branch
      %279 = sbr.rel (0) target = $region93
    $region92: #{uencoder_forward.1} parent=1 // pred_region
      %s281 = ssub.s32 1024, 1024
      %282 = vsyncadd [#allocation25], %s281
      %s283 = sshll.u32 [#allocation24], 4
      %s284 = int_to_ptr.vmem [resolvable:$true] %s283
      %289 = dma.hbm_to_vmem [thread:$0]  %s45, 1024, %s284, [#allocation25], 128, 128, 8
    $region93: #{uencoder_forward.1} parent=1 // pred_fallthru
      _
    // Predicated region
    $region94: #{uencoder_forward.1} parent=1 // pred_check
      _
    $region95: #{uencoder_forward.1} parent=1 // pred_check_branch
      %291 = sbr.rel (0) target = $region97
    $region96: #{uencoder_forward.1} parent=1 // pred_region
      %s293 = ssub.s32 1024, 1024
      %294 = vsyncadd [#allocation25], %s293
      %s295 = sshll.u32 [#allocation26], 4
      %s296 = int_to_ptr.vmem [resolvable:$true] %s295
      %301 = dma.hbm_to_vmem [thread:$0]  %s47, 1024, %s296, [#allocation25], 128, 128, 8
    $region97: #{uencoder_forward.1} parent=1 // pred_fallthru
      _
    // Predicated region
    $region98: #{uencoder_forward.1} parent=1 // pred_check
      _
    $region99: #{uencoder_forward.1} parent=1 // pred_check_branch
      %303 = sbr.rel (0) target = $region101
    $region100: #{uencoder_forward.1} parent=1 // pred_region
      _
    $region101: #{uencoder_forward.1} parent=1 // pred_fallthru
      _
    // Predicated region
    $region102: #{uencoder_forward.1} parent=1 // pred_check
      _
    $region103: #{uencoder_forward.1} parent=1 // pred_check_branch
      %305 = sbr.rel (0) target = $region105
    $region104: #{uencoder_forward.1} parent=1 // pred_region
      %s307 = ssub.s32 1024, 1024
      %308 = vsyncadd [#allocation28], %s307
      %s309 = sshll.u32 [#allocation27], 4
      %s310 = int_to_ptr.vmem [resolvable:$true] %s309
      %315 = dma.hbm_to_vmem [thread:$0]  %s51, 1024, %s310, [#allocation28], 128, 128, 8
    $region105: #{uencoder_forward.1} parent=1 // pred_fallthru
      _
    // Predicated region
    $region106: #{uencoder_forward.1} parent=1 // pred_check
      _
    $region107: #{uencoder_forward.1} parent=1 // pred_check_branch
      %317 = sbr.rel (0) target = $region109
    $region108: #{uencoder_forward.1} parent=1 // pred_region
      %s319 = ssub.s32 1024, 1024
      %320 = vsyncadd [#allocation28], %s319
      %s321 = sshll.u32 [#allocation29], 4
      %s322 = int_to_ptr.vmem [resolvable:$true] %s321
      %327 = dma.hbm_to_vmem [thread:$0]  %s53, 1024, %s322, [#allocation28], 128, 128, 8
    $region109: #{uencoder_forward.1} parent=1 // pred_fallthru
      _
    // Predicated region
    $region110: #{uencoder_forward.1} parent=1 // pred_check
      _
    $region111: #{uencoder_forward.1} parent=1 // pred_check_branch
      %329 = sbr.rel (0) target = $region113
    $region112: #{uencoder_forward.1} parent=1 // pred_region
      _
    $region113: #{uencoder_forward.1} parent=1 // pred_fallthru
      _
    // Predicated region
    $region114: #{uencoder_forward.1} parent=1 // pred_check
      _
    $region115: #{uencoder_forward.1} parent=1 // pred_check_branch
      %331 = sbr.rel (0) target = $region117
    $region116: #{uencoder_forward.1} parent=1 // pred_region
      %s333 = ssub.s32 1024, 1024
      %334 = vsyncadd [#allocation31], %s333
      %s335 = sshll.u32 [#allocation30], 4
      %s336 = int_to_ptr.vmem [resolvable:$true] %s335
      %341 = dma.hbm_to_vmem [thread:$0]  %s57, 1024, %s336, [#allocation31], 128, 128, 8
    $region117: #{uencoder_forward.1} parent=1 // pred_fallthru
      _
    // Predicated region
    $region118: #{uencoder_forward.1} parent=1 // pred_check
      _
    $region119: #{uencoder_forward.1} parent=1 // pred_check_branch
      %343 = sbr.rel (0) target = $region121
    $region120: #{uencoder_forward.1} parent=1 // pred_region
      _
    $region121: #{uencoder_forward.1} parent=1 // pred_fallthru
      _
    // Predicated region
    $region122: #{uencoder_forward.1} parent=1 // pred_check
      _
    $region123: #{uencoder_forward.1} parent=1 // pred_check_branch
      %345 = sbr.rel (0) target = $region125
    $region124: #{uencoder_forward.1} parent=1 // pred_region
      _
    $region125: #{uencoder_forward.1} parent=1 // pred_fallthru
      _
    // Predicated region
    $region126: #{uencoder_forward.1} parent=1 // pred_check
      _
    $region127: #{uencoder_forward.1} parent=1 // pred_check_branch
      %347 = sbr.rel (0) target = $region129
    $region128: #{uencoder_forward.1} parent=1 // pred_region
      _
    $region129: #{uencoder_forward.1} parent=1 // pred_fallthru
      _
    // Predicated region
    $region130: #{uencoder_forward.1} parent=1 // pred_check
      _
    $region131: #{uencoder_forward.1} parent=1 // pred_check_branch
      %349 = sbr.rel (0) target = $region133
    $region132: #{uencoder_forward.1} parent=1 // pred_region
      _
    $region133: #{uencoder_forward.1} parent=1 // pred_fallthru
      _
    // Predicated region
    $region134: #{uencoder_forward.1} parent=1 // pred_check
      _
    $region135: #{uencoder_forward.1} parent=1 // pred_check_branch
      %351 = sbr.rel (0) target = $region137
    $region136: #{uencoder_forward.1} parent=1 // pred_region
      _
    $region137: #{uencoder_forward.1} parent=1 // pred_fallthru
      _
    // Predicated region
    $region138: #{uencoder_forward.1} parent=1 // pred_check
      _
    $region139: #{uencoder_forward.1} parent=1 // pred_check_branch
      %353 = sbr.rel (0) target = $region141
    $region140: #{uencoder_forward.1} parent=1 // pred_region
      _
    $region141: #{uencoder_forward.1} parent=1 // pred_fallthru
      _
    // Predicated region
    $region142: #{uencoder_forward.1} parent=1 // pred_check
      _
    $region143: #{uencoder_forward.1} parent=1 // pred_check_branch
      %355 = sbr.rel (0) target = $region145
    $region144: #{uencoder_forward.1} parent=1 // pred_region
      _
    $region145: #{uencoder_forward.1} parent=1 // pred_fallthru
      _
    // Predicated region
    $region146: #{uencoder_forward.1} parent=1 // pred_check
      _
    $region147: #{uencoder_forward.1} parent=1 // pred_check_branch
      %357 = sbr.rel (0) target = $region149
    $region148: #{uencoder_forward.1} parent=1 // pred_region
      _
    $region149: #{uencoder_forward.1} parent=1 // pred_fallthru
      _
    // Predicated region
    $region150: #{uencoder_forward.1} parent=1 // pred_check
      _
    $region151: #{uencoder_forward.1} parent=1 // pred_check_branch
      %359 = sbr.rel (0) target = $region153
    $region152: #{uencoder_forward.1} parent=1 // pred_region
      _
    $region153: #{uencoder_forward.1} parent=1 // pred_fallthru
      _
    // Predicated region
    $region154: #{uencoder_forward.1} parent=1 // pred_check
      _
    $region155: #{uencoder_forward.1} parent=1 // pred_check_branch
      %361 = sbr.rel (0) target = $region157
    $region156: #{uencoder_forward.1} parent=1 // pred_region
      _
    $region157: #{uencoder_forward.1} parent=1 // pred_fallthru
      _
    // Predicated region
    $region158: #{uencoder_forward.1} parent=1 // pred_check
      _
    $region159: #{uencoder_forward.1} parent=1 // pred_check_branch
      %363 = sbr.rel (0) target = $region161
    $region160: #{uencoder_forward.1} parent=1 // pred_region
      _
    $region161: #{uencoder_forward.1} parent=1 // pred_fallthru
      _
    // Predicated region
    $region162: #{uencoder_forward.1} parent=1 // pred_check
      _
    $region163: #{uencoder_forward.1} parent=1 // pred_check_branch
      %365 = sbr.rel (0) target = $region165
    $region164: #{uencoder_forward.1} parent=1 // pred_region
      _
    $region165: #{uencoder_forward.1} parent=1 // pred_fallthru
      _
    // Predicated region
    $region166: #{uencoder_forward.1} parent=1 // pred_check
      _
    $region167: #{uencoder_forward.1} parent=1 // pred_check_branch
      %367 = sbr.rel (0) target = $region169
    $region168: #{uencoder_forward.1} parent=1 // pred_region
      _
    $region169: #{uencoder_forward.1} parent=1 // pred_fallthru
      _
    // Predicated region
    $region170: #{uencoder_forward.1} parent=1 // pred_check
      _
    $region171: #{uencoder_forward.1} parent=1 // pred_check_branch
      %369 = sbr.rel (0) target = $region173
    $region172: #{uencoder_forward.1} parent=1 // pred_region
      _
    $region173: #{uencoder_forward.1} parent=1 // pred_fallthru
      _
    // Predicated region
    $region174: #{uencoder_forward.1} parent=1 // pred_check
      _
    $region175: #{uencoder_forward.1} parent=1 // pred_check_branch
      %371 = sbr.rel (0) target = $region177
    $region176: #{uencoder_forward.1} parent=1 // pred_region
      _
    $region177: #{uencoder_forward.1} parent=1 // pred_fallthru
      _
    // Predicated region
    $region178: #{uencoder_forward.1} parent=1 // pred_check
      _
    $region179: #{uencoder_forward.1} parent=1 // pred_check_branch
      %373 = sbr.rel (0) target = $region181
    $region180: #{uencoder_forward.1} parent=1 // pred_region
      %374 = dma.done [#allocation4], 512
    $region181: #{uencoder_forward.1} parent=1 // pred_fallthru
      _
    // Predicated region
    $region182: #{uencoder_forward.1} parent=1 // pred_check
      _
    $region183: #{uencoder_forward.1} parent=1 // pred_check_branch
      %376 = sbr.rel (0) target = $region185
    $region184: #{uencoder_forward.1} parent=1 // pred_region
      %377 = dma.done [#allocation7], 32
    $region185: #{uencoder_forward.1} parent=1 // pred_fallthru
      _
    // Predicated region
    $region186: #{uencoder_forward.1} parent=1 // pred_check
      _
    $region187: #{uencoder_forward.1} parent=1 // pred_check_branch
      %379 = sbr.rel (0) target = $region189
    $region188: #{uencoder_forward.1} parent=1 // pred_region
      %380 = dma.done [#allocation7], 512
    $region189: #{uencoder_forward.1} parent=1 // pred_fallthru
      _
    // Predicated region
    $region190: #{uencoder_forward.1} parent=1 // pred_check
      _
    $region191: #{uencoder_forward.1} parent=1 // pred_check_branch
      %382 = sbr.rel (0) target = $region193
    $region192: #{uencoder_forward.1} parent=1 // pred_region
      %383 = dma.done [#allocation10], 32
    $region193: #{uencoder_forward.1} parent=1 // pred_fallthru
      _
    // Predicated region
    $region194: #{uencoder_forward.1} parent=1 // pred_check
      _
    $region195: #{uencoder_forward.1} parent=1 // pred_check_branch
      %385 = sbr.rel (0) target = $region197
    $region196: #{uencoder_forward.1} parent=1 // pred_region
      %386 = dma.done [#allocation10], 512
    $region197: #{uencoder_forward.1} parent=1 // pred_fallthru
      _
    // Predicated region
    $region198: #{uencoder_forward.1} parent=1 // pred_check
      _
    $region199: #{uencoder_forward.1} parent=1 // pred_check_branch
      %388 = sbr.rel (0) target = $region201
    $region200: #{uencoder_forward.1} parent=1 // pred_region
      %389 = dma.done [#allocation13], 32
    $region201: #{uencoder_forward.1} parent=1 // pred_fallthru
      _
    // Predicated region
    $region202: #{uencoder_forward.1} parent=1 // pred_check
      _
    $region203: #{uencoder_forward.1} parent=1 // pred_check_branch
      %391 = sbr.rel (0) target = $region205
    $region204: #{uencoder_forward.1} parent=1 // pred_region
      %392 = dma.done [#allocation13], 512
    $region205: #{uencoder_forward.1} parent=1 // pred_fallthru
      _
    // Predicated region
    $region206: #{uencoder_forward.1} parent=1 // pred_check
      _
    $region207: #{uencoder_forward.1} parent=1 // pred_check_branch
      %394 = sbr.rel (0) target = $region209
    $region208: #{uencoder_forward.1} parent=1 // pred_region
      %395 = dma.done [#allocation16], 32
    $region209: #{uencoder_forward.1} parent=1 // pred_fallthru
      _
    // Predicated region
    $region210: #{uencoder_forward.1} parent=1 // pred_check
      _
    $region211: #{uencoder_forward.1} parent=1 // pred_check_branch
      %397 = sbr.rel (0) target = $region213
    $region212: #{uencoder_forward.1} parent=1 // pred_region
      %398 = dma.done [#allocation16], 512
    $region213: #{uencoder_forward.1} parent=1 // pred_fallthru
      _
    // Predicated region
    $region214: #{uencoder_forward.1} parent=1 // pred_check
      _
    $region215: #{uencoder_forward.1} parent=1 // pred_check_branch
      %400 = sbr.rel (0) target = $region217
    $region216: #{uencoder_forward.1} parent=1 // pred_region
      %401 = dma.done [#allocation19], 32
    $region217: #{uencoder_forward.1} parent=1 // pred_fallthru
      _
    // Predicated region
    $region218: #{uencoder_forward.1} parent=1 // pred_check
      _
    $region219: #{uencoder_forward.1} parent=1 // pred_check_branch
      %403 = sbr.rel (0) target = $region221
    $region220: #{uencoder_forward.1} parent=1 // pred_region
      %404 = dma.done [#allocation19], 1024
    $region221: #{uencoder_forward.1} parent=1 // pred_fallthru
      _
    // Predicated region
    $region222: #{uencoder_forward.1} parent=1 // pred_check
      _
    $region223: #{uencoder_forward.1} parent=1 // pred_check_branch
      %406 = sbr.rel (0) target = $region225
    $region224: #{uencoder_forward.1} parent=1 // pred_region
      %407 = dma.done [#allocation22], 1024
    $region225: #{uencoder_forward.1} parent=1 // pred_fallthru
      _
    // Predicated region
    $region226: #{uencoder_forward.1} parent=1 // pred_check
      _
    $region227: #{uencoder_forward.1} parent=1 // pred_check_branch
      %409 = sbr.rel (0) target = $region229
    $region228: #{uencoder_forward.1} parent=1 // pred_region
      %410 = dma.done [#allocation22], 64
    $region229: #{uencoder_forward.1} parent=1 // pred_fallthru
      _
    // Predicated region
    $region230: #{uencoder_forward.1} parent=1 // pred_check
      _
    $region231: #{uencoder_forward.1} parent=1 // pred_check_branch
      %412 = sbr.rel (0) target = $region233
    $region232: #{uencoder_forward.1} parent=1 // pred_region
      %413 = dma.done [#allocation25], 1024
    $region233: #{uencoder_forward.1} parent=1 // pred_fallthru
      _
    // Predicated region
    $region234: #{uencoder_forward.1} parent=1 // pred_check
      _
    $region235: #{uencoder_forward.1} parent=1 // pred_check_branch
      %415 = sbr.rel (0) target = $region237
    $region236: #{uencoder_forward.1} parent=1 // pred_region
      %416 = dma.done [#allocation25], 1024
    $region237: #{uencoder_forward.1} parent=1 // pred_fallthru
      _
    // Predicated region
    $region238: #{uencoder_forward.1} parent=1 // pred_check
      _
    $region239: #{uencoder_forward.1} parent=1 // pred_check_branch
      %418 = sbr.rel (0) target = $region241
    $region240: #{uencoder_forward.1} parent=1 // pred_region
      %419 = dma.done [#allocation28], 1024
    $region241: #{uencoder_forward.1} parent=1 // pred_fallthru
      _
    // Predicated region
    $region242: #{uencoder_forward.1} parent=1 // pred_check
      _
    $region243: #{uencoder_forward.1} parent=1 // pred_check_branch
      %421 = sbr.rel (0) target = $region245
    $region244: #{uencoder_forward.1} parent=1 // pred_region
      %422 = dma.done [#allocation28], 1024
    $region245: #{uencoder_forward.1} parent=1 // pred_fallthru
      _
    // Predicated region
    $region246: #{uencoder_forward.1} parent=1 // pred_check
      _
    $region247: #{uencoder_forward.1} parent=1 // pred_check_branch
      %424 = sbr.rel (0) target = $region249
    $region248: #{uencoder_forward.1} parent=1 // pred_region
      %425 = dma.done [#allocation31], 1024
    $region249: #{uencoder_forward.1} parent=1 // pred_fallthru
      _
    %v427 = vld [vmem:[%s79] sm:$0xff]
    %v428 = vld [vmem:[%s79 + $0x8] sm:$0xff]
    %v429 = vld [vmem:[%s79 + $0x10] sm:$0xff]
    %v430 = vld [vmem:[%s79 + $0x18] sm:$0xff]
    %v431 = vld [vmem:[%s79 + $0x20] sm:$0xff]
    %v432 = vld [vmem:[%s79 + $0x28] sm:$0xff]
    %v433 = vld [vmem:[%s79 + $0x30] sm:$0xff]
    %v434 = vld [vmem:[%s79 + $0x38] sm:$0xff]
    %vm435 = vcmp.eq.s32.totalorder %v427, 1
    %vm436 = vcmp.eq.s32.totalorder %v428, 1
    %vm437 = vcmp.eq.s32.totalorder %v429, 1
    %vm438 = vcmp.eq.s32.totalorder %v430, 1
    %vm439 = vcmp.eq.s32.totalorder %v431, 1
    %vm440 = vcmp.eq.s32.totalorder %v432, 1
    %vm441 = vcmp.eq.s32.totalorder %v433, 1
    %vm442 = vcmp.eq.s32.totalorder %v434, 1
    %v443 = vld [vmem:[%s81] sm:$0xff]
    %v444 = vld [vmem:[%s81 + $0x8] sm:$0xff]
    %v445 = vld [vmem:[%s81 + $0x10] sm:$0xff]
    %v446 = vld [vmem:[%s81 + $0x18] sm:$0xff]
    %vm447 = vcmp.eq.s32.totalorder %v443, 1
    %vm448 = vcmp.eq.s32.totalorder %v444, 1
    %vm449 = vcmp.eq.s32.totalorder %v445, 1
    %vm450 = vcmp.eq.s32.totalorder %v446, 1
    %v451 = vld [vmem:[%s83] sm:$0xff]
    %v452 = vld [vmem:[%s83 + $0x8] sm:$0xff]
    %vm453 = vcmp.eq.s32.totalorder %v451, 1
    %vm454 = vcmp.eq.s32.totalorder %v452, 1
    %v455 = vld [vmem:[%s85] sm:$0xff]
    %vm456 = vcmp.eq.s32.totalorder %v455, 1
    %v457 = vld [vmem:[%s87] sm:$0xf]
    %vm458 = vcmp.eq.s32.totalorder %v457, 1
    %vm459 = vcmp.eq.s32.totalorder %v427, 2
    %vm460 = vcmp.eq.s32.totalorder %v428, 2
    %vm461 = vcmp.eq.s32.totalorder %v429, 2
    %vm462 = vcmp.eq.s32.totalorder %v430, 2
    %vm463 = vcmp.eq.s32.totalorder %v431, 2
    %vm464 = vcmp.eq.s32.totalorder %v432, 2
    %vm465 = vcmp.eq.s32.totalorder %v433, 2
    %vm466 = vcmp.eq.s32.totalorder %v434, 2
    %vm467 = vcmp.eq.s32.totalorder %v443, 2
    %vm468 = vcmp.eq.s32.totalorder %v444, 2
    %vm469 = vcmp.eq.s32.totalorder %v445, 2
    %vm470 = vcmp.eq.s32.totalorder %v446, 2
    %vm471 = vcmp.eq.s32.totalorder %v451, 2
    %vm472 = vcmp.eq.s32.totalorder %v452, 2
    %vm473 = vcmp.eq.s32.totalorder %v455, 2
    %vm474 = vcmp.eq.s32.totalorder %v457, 2
    %v475 = vld [vmem:[#allocation6] sm:$0x1]
    %v476 = vld [vmem:[#allocation6 + $0x1] sm:$0x1]
    %v477 = vld [vmem:[%s1] sm:$0xf]
    %v478 = vld [vmem:[%s1 + $0x4] sm:$0xf]
    %v479 = vld [vmem:[%s1 + $0x8] sm:$0xf]
    %v480 = vld [vmem:[%s1 + $0xc] sm:$0xf]
    %v481 = vld [vmem:[%s1 + $0x10] sm:$0xf]
    %v482 = vld [vmem:[%s1 + $0x14] sm:$0xf]
    %v483 = vld [vmem:[%s1 + $0x18] sm:$0xf]
    %v484 = vld [vmem:[%s1 + $0x1c] sm:$0xf]
    %v485 = vld [vmem:[%s3] sm:$0xff]
    %v486 = vld [vmem:[%s3 + $0x8] sm:$0xff]
    %v487 = vld [vmem:[%s3 + $0x10] sm:$0xff]
    %v488 = vld [vmem:[%s3 + $0x18] sm:$0xff]
    %v489 = vld [vmem:[%s3 + $0x20] sm:$0xff]
    %v490 = vld [vmem:[%s3 + $0x28] sm:$0xff]
    %v491 = vld [vmem:[%s3 + $0x30] sm:$0xff]
    %v492 = vld [vmem:[%s3 + $0x38] sm:$0xff]
    %v501 = vunpack.c.l.b16 %v477
    %v502 = vunpack.c.l.b16 %v478
    %v503 = vunpack.c.l.b16 %v479
    %v504 = vunpack.c.l.b16 %v480
    %v505 = vunpack.c.l.b16 %v481
    %v506 = vunpack.c.l.b16 %v482
    %v507 = vunpack.c.l.b16 %v483
    %v508 = vunpack.c.l.b16 %v484
    %v509 = vpack.c.b16 %v502, %v501
    %v510 = vpack.c.b16 %v504, %v503
    %v511 = vpack.c.b16 %v506, %v505
    %v512 = vpack.c.b16 %v508, %v507
    %v521 = vunpack.c.l.b16 %v485
    %v522 = vunpack.c.h.b16 %v485
    %v523 = vunpack.c.l.b16 %v486
    %v524 = vunpack.c.h.b16 %v486
    %v525 = vunpack.c.l.b16 %v487
    %v526 = vunpack.c.h.b16 %v487
    %v527 = vunpack.c.l.b16 %v488
    %v528 = vunpack.c.h.b16 %v488
    %v529 = vunpack.c.l.b16 %v489
    %v530 = vunpack.c.h.b16 %v489
    %v531 = vunpack.c.l.b16 %v490
    %v532 = vunpack.c.h.b16 %v490
    %v533 = vunpack.c.l.b16 %v491
    %v534 = vunpack.c.h.b16 %v491
    %v535 = vunpack.c.l.b16 %v492
    %v536 = vunpack.c.h.b16 %v492
    %v537 = vpack.c.b16 %v523, %v521
    %v538 = vpack.c.b16 %v524, %v522
    %v539 = vpack.c.b16 %v527, %v525
    %v540 = vpack.c.b16 %v528, %v526
    %v541 = vpack.c.b16 %v531, %v529
    %v542 = vpack.c.b16 %v532, %v530
    %v543 = vpack.c.b16 %v535, %v533
    %v544 = vpack.c.b16 %v536, %v534
    %vm553 = vcmask 523264
    %v555 = vsel %vm553, %v509, 0
    %v558 = vsel %vm553, %v510, 0
    %v561 = vsel %vm553, %v511, 0
    %v564 = vsel %vm553, %v512, 0
    %566 = vmatprep.subr.bf16.mxu0 %v538
    %567 = vmatpush1.bf16.msra.mxu0 %v537
    %568 = vmatprep.subr.bf16.mxu0 %v540
    %569 = vmatpush1.bf16.msra.mxu0 %v539
    %570 = vmatprep.subr.bf16.mxu0 %v542
    %571 = vmatpush1.bf16.msra.mxu0 %v541
    %572 = vmatprep.subr.bf16.mxu0 %v544
    %573 = vmatpush1.bf16.msra.mxu0 %v543
    %574 = vmatprep.subr.bf16.mxu0 0
    %575 = vmatpush1.bf16.msra.mxu0 0
    %576 = vmatprep.subr.bf16.mxu0 0
    %577 = vmatpush1.bf16.msra.mxu0 0
    %578 = vmatprep.subr.bf16.mxu0 0
    %579 = vmatpush1.bf16.msra.mxu0 0
    %580 = vmatprep.subr.bf16.mxu0 0
    %581 = vmatpush1.bf16.msra.mxu0 0
    %582 = vmatprep.subr.bf16.mxu0 0
    %583 = vmatpush1.bf16.msra.mxu0 0
    %584 = vmatprep.subr.bf16.mxu0 0
    %585 = vmatpush1.bf16.msra.mxu0 0
    %586 = vmatprep.subr.bf16.mxu0 0
    %587 = vmatpush1.bf16.msra.mxu0 0
    %588 = vmatprep.subr.bf16.mxu0 0
    %589 = vmatpush1.bf16.msra.mxu0 0
    %590 = vmatprep.subr.bf16.mxu0 0
    %591 = vmatpush1.bf16.msra.mxu0 0
    %592 = vmatprep.subr.bf16.mxu0 0
    %593 = vmatpush1.bf16.msra.mxu0 0
    %594 = vmatprep.subr.bf16.mxu0 0
    %595 = vmatpush1.bf16.msra.mxu0 0
    %596 = vmatprep.subr.bf16.mxu0 0
    %597 = vmatpush1.bf16.msra.mxu0 0
    %598 = vmatprep.mubr.bf16.mxu0 0
    %599 = vmatmul.mubr.bf16.gmra.mrb[0].mxu0 %v555
    %v600 = vpop.f32.mrb[0].mxu0
    %v601 = vadd.f32 0.0, %v600
    %v602 = vpop.f32.mrb[0].mxu0
    %v603 = vadd.f32 0.0, %v602
    %v604 = vpop.f32.mrb[0].mxu0
    %v605 = vadd.f32 0.0, %v604
    %v606 = vpop.f32.mrb[0].mxu0
    %v607 = vadd.f32 0.0, %v606
    %608 = vmatprep.mubr.bf16.mxu0 0
    %609 = vmatmul.mubr.bf16.gmra.mrb[0].mxu0 %v558
    %v610 = vpop.f32.mrb[0].mxu0
    %v611 = vadd.f32 0.0, %v610
    %v612 = vpop.f32.mrb[0].mxu0
    %v613 = vadd.f32 0.0, %v612
    %v614 = vpop.f32.mrb[0].mxu0
    %v615 = vadd.f32 0.0, %v614
    %v616 = vpop.f32.mrb[0].mxu0
    %v617 = vadd.f32 0.0, %v616
    %618 = vmatprep.mubr.bf16.mxu0 0
    %619 = vmatmul.mubr.bf16.gmra.mrb[0].mxu0 %v561
    %v620 = vpop.f32.mrb[0].mxu0
    %v621 = vadd.f32 0.0, %v620
    %v622 = vpop.f32.mrb[0].mxu0
    %v623 = vadd.f32 0.0, %v622
    %v624 = vpop.f32.mrb[0].mxu0
    %v625 = vadd.f32 0.0, %v624
    %v626 = vpop.f32.mrb[0].mxu0
    %v627 = vadd.f32 0.0, %v626
    %628 = vmatprep.mubr.bf16.mxu0 0
    %629 = vmatmul.mubr.bf16.gmra.mrb[0].mxu0 %v564
    %v630 = vpop.f32.mrb[0].mxu0
    %v631 = vadd.f32 0.0, %v630
    %v632 = vpop.f32.mrb[0].mxu0
    %v633 = vadd.f32 0.0, %v632
    %v634 = vpop.f32.mrb[0].mxu0
    %v635 = vadd.f32 0.0, %v634
    %v636 = vpop.f32.mrb[0].mxu0
    %v637 = vadd.f32 0.0, %v636
    %638 = vdwg.mxu0
    %vm655 = vcmask 1040384
    %v656 = vrot.slane %v601, 7
    %v657 = vrot.slane %v603, 7
    %v658 = vrot.slane %v605, 7
    %v659 = vsel %vm655, %v656, %v658
    %v660 = vrot.slane %v607, 7
    %v661 = vsel %vm655, %v657, %v660
    %v662 = vrot.slane %v611, 7
    %v663 = vsel %vm655, %v658, %v662
    %v664 = vrot.slane %v613, 7
    %v665 = vsel %vm655, %v660, %v664
    %v666 = vrot.slane %v615, 7
    %v667 = vsel %vm655, %v662, %v666
    %v668 = vrot.slane %v617, 7
    %v669 = vsel %vm655, %v664, %v668
    %v670 = vrot.slane %v621, 7
    %v671 = vsel %vm655, %v666, %v670
    %v672 = vrot.slane %v623, 7
    %v673 = vsel %vm655, %v668, %v672
    %v674 = vrot.slane %v625, 7
    %v675 = vsel %vm655, %v670, %v674
    %v676 = vrot.slane %v627, 7
    %v677 = vsel %vm655, %v672, %v676
    %v678 = vrot.slane %v631, 7
    %v679 = vsel %vm655, %v674, %v678
    %v680 = vrot.slane %v633, 7
    %v681 = vsel %vm655, %v676, %v680
    %v682 = vrot.slane %v635, 7
    %v683 = vsel %vm655, %v678, %v682
    %v684 = vrot.slane %v637, 7
    %v685 = vsel %vm655, %v680, %v684
    %704 = vst [vmem:[#allocation2] sm:$0xfe] %v656
    %vm705 = vcmask 523265
    %706 = vst.msk [vmem:[#allocation2 + $0x8] sm:$0xfe] %vm705, %v657
    %707 = vst [vmem:[#allocation2 + $0x10] sm:$0xff] %v659
    %708 = vst.msk [vmem:[#allocation2 + $0x18] sm:$0xff] %vm553, %v661
    %709 = vst [vmem:[#allocation2 + $0x20] sm:$0xff] %v663
    %710 = vst.msk [vmem:[#allocation2 + $0x28] sm:$0xff] %vm553, %v665
    %711 = vst [vmem:[#allocation2 + $0x30] sm:$0xff] %v667
    %712 = vst.msk [vmem:[#allocation2 + $0x38] sm:$0xff] %vm553, %v669
    %713 = vst [vmem:[#allocation2 + $0x40] sm:$0xff] %v671
    %714 = vst.msk [vmem:[#allocation2 + $0x48] sm:$0xff] %vm553, %v673
    %715 = vst [vmem:[#allocation2 + $0x50] sm:$0xff] %v675
    %716 = vst.msk [vmem:[#allocation2 + $0x58] sm:$0xff] %vm553, %v677
    %717 = vst [vmem:[#allocation2 + $0x60] sm:$0xff] %v679
    %718 = vst.msk [vmem:[#allocation2 + $0x68] sm:$0xff] %vm553, %v681
    %719 = vst [vmem:[#allocation2 + $0x70] sm:$0xff] %v683
    %720 = vst.msk [vmem:[#allocation2 + $0x78] sm:$0xff] %vm553, %v685
    %721 = vst [vmem:[#allocation2 + $0x80] sm:$0x1] %v682
    %vm722 = vcmask 516096
    %723 = vst.msk [vmem:[#allocation2 + $0x88] sm:$0x1] %vm722, %v684
    %v724 = vld [vmem:[#allocation2] sm:$0xff]
    %v725 = vld [vmem:[#allocation2 + $0x10] sm:$0xff]
    %v726 = vld [vmem:[#allocation2 + $0x20] sm:$0xff]
    %v727 = vld [vmem:[#allocation2 + $0x30] sm:$0xff]
    %v728 = vld [vmem:[#allocation2 + $0x40] sm:$0xff]
    %v729 = vld [vmem:[#allocation2 + $0x50] sm:$0xff]
    %v730 = vld [vmem:[#allocation2 + $0x60] sm:$0xff]
    %v731 = vld [vmem:[#allocation2 + $0x70] sm:$0xff]
    %v732 = vld [vmem:[#allocation2] sm:$0xfc]
    %v733 = vld [vmem:[#allocation2 + $0x80] sm:$0x3]
    %v734 = vld [vmem:[#allocation2 + $0x8] sm:$0xff]
    %v735 = vld [vmem:[#allocation2 + $0x18] sm:$0xff]
    %v736 = vld [vmem:[#allocation2 + $0x28] sm:$0xff]
    %v737 = vld [vmem:[#allocation2 + $0x38] sm:$0xff]
    %v738 = vld [vmem:[#allocation2 + $0x48] sm:$0xff]
    %v739 = vld [vmem:[#allocation2 + $0x58] sm:$0xff]
    %v740 = vld [vmem:[#allocation2 + $0x68] sm:$0xff]
    %v741 = vld [vmem:[#allocation2 + $0x78] sm:$0xff]
    %v742 = vld [vmem:[#allocation2 + $0x8] sm:$0xfc]
    %v743 = vld [vmem:[#allocation2 + $0x88] sm:$0x3]
    %v744 = vsel %vm435, 1, 0
    %v745 = vsel %vm436, 1, 0
    %v746 = vsel %vm437, 1, 0
    %v747 = vsel %vm438, 1, 0
    %v748 = vsel %vm439, 1, 0
    %v749 = vsel %vm440, 1, 0
    %v750 = vsel %vm441, 1, 0
    %v751 = vsel %vm442, 1, 0
    %752 = vset.pattern.permute.xlu0 0
    %753 = vperm.xlu0 %752, %v744
    %v754 = vpop.permute.xlu0 %753
    %755 = vset.pattern.permute.xlu0 0
    %756 = vperm.xlu0 %755, %v745
    %v757 = vpop.permute.xlu0 %756
    %758 = vset.pattern.permute.xlu0 0
    %759 = vperm.xlu0 %758, %v746
    %v760 = vpop.permute.xlu0 %759
    %761 = vset.pattern.permute.xlu0 0
    %762 = vperm.xlu0 %761, %v747
    %v763 = vpop.permute.xlu0 %762
    %764 = vset.pattern.permute.xlu0 0
    %765 = vperm.xlu0 %764, %v748
    %v766 = vpop.permute.xlu0 %765
    %767 = vset.pattern.permute.xlu0 0
    %768 = vperm.xlu0 %767, %v749
    %v769 = vpop.permute.xlu0 %768
    %770 = vset.pattern.permute.xlu0 0
    %771 = vperm.xlu0 %770, %v750
    %v772 = vpop.permute.xlu0 %771
    %773 = vset.pattern.permute.xlu0 0
    %774 = vperm.xlu0 %773, %v751
    %v775 = vpop.permute.xlu0 %774
    %vm776 = vcmp.eq.s32.totalorder %v754, 1
    %vm777 = vcmp.eq.s32.totalorder %v757, 1
    %vm778 = vcmp.eq.s32.totalorder %v760, 1
    %vm779 = vcmp.eq.s32.totalorder %v763, 1
    %vm780 = vcmp.eq.s32.totalorder %v766, 1
    %vm781 = vcmp.eq.s32.totalorder %v769, 1
    %vm782 = vcmp.eq.s32.totalorder %v772, 1
    %vm783 = vcmp.eq.s32.totalorder %v775, 1
    %vm793 = vcmask 1045504
    %v794 = vrot.slane %v732, 2
    %v795 = vrot.slane %v725, 2
    %v796 = vsel %vm793, %v794, %v795
    %v797 = vrot.slane %v726, 2
    %v798 = vsel %vm793, %v795, %v797
    %v799 = vrot.slane %v727, 2
    %v800 = vsel %vm793, %v797, %v799
    %v801 = vrot.slane %v728, 2
    %v802 = vsel %vm793, %v799, %v801
    %v803 = vrot.slane %v729, 2
    %v804 = vsel %vm793, %v801, %v803
    %v805 = vrot.slane %v730, 2
    %v806 = vsel %vm793, %v803, %v805
    %v807 = vrot.slane %v731, 2
    %v808 = vsel %vm793, %v805, %v807
    %v809 = vrot.slane %v733, 2
    %v810 = vsel %vm793, %v807, %v809
    %v819 = vsel %vm776, %v796, %v724
    %v820 = vsel %vm777, %v798, %v725
    %v821 = vsel %vm778, %v800, %v726
    %v822 = vsel %vm779, %v802, %v727
    %v823 = vsel %vm780, %v804, %v728
    %v824 = vsel %vm781, %v806, %v729
    %v825 = vsel %vm782, %v808, %v730
    %v826 = vsel %vm783, %v810, %v731
    %827 = vrot.lane.b32.xlu0 %v601, 64
    %v828 = vpop.permute.xlu0 %827
    %829 = vrot.lane.b32.xlu0 %v605, 64
    %v830 = vpop.permute.xlu0 %829
    %831 = vrot.lane.b32.xlu0 %v611, 64
    %v832 = vpop.permute.xlu0 %831
    %833 = vrot.lane.b32.xlu0 %v615, 64
    %v834 = vpop.permute.xlu0 %833
    %835 = vrot.lane.b32.xlu0 %v621, 64
    %v836 = vpop.permute.xlu0 %835
    %837 = vrot.lane.b32.xlu0 %v625, 64
    %v838 = vpop.permute.xlu0 %837
    %839 = vrot.lane.b32.xlu0 %v631, 64
    %v840 = vpop.permute.xlu0 %839
    %841 = vrot.lane.b32.xlu0 %v635, 64
    %v842 = vpop.permute.xlu0 %841
    %v851 = vadd.f32 %v819, %v828
    %v852 = vadd.f32 %v820, %v830
    %v853 = vadd.f32 %v821, %v832
    %v854 = vadd.f32 %v822, %v834
    %v855 = vadd.f32 %v823, %v836
    %v856 = vadd.f32 %v824, %v838
    %v857 = vadd.f32 %v825, %v840
    %v858 = vadd.f32 %v826, %v842
    %v859 = vsel %vm459, 1, 0
    %v860 = vsel %vm460, 1, 0
    %v861 = vsel %vm461, 1, 0
    %v862 = vsel %vm462, 1, 0
    %v863 = vsel %vm463, 1, 0
    %v864 = vsel %vm464, 1, 0
    %v865 = vsel %vm465, 1, 0
    %v866 = vsel %vm466, 1, 0
    %867 = vset.pattern.permute.xlu0 0
    %868 = vperm.xlu0 %867, %v859
    %v869 = vpop.permute.xlu0 %868
    %870 = vset.pattern.permute.xlu0 0
    %871 = vperm.xlu0 %870, %v860
    %v872 = vpop.permute.xlu0 %871
    %873 = vset.pattern.permute.xlu0 0
    %874 = vperm.xlu0 %873, %v861
    %v875 = vpop.permute.xlu0 %874
    %876 = vset.pattern.permute.xlu0 0
    %877 = vperm.xlu0 %876, %v862
    %v878 = vpop.permute.xlu0 %877
    %879 = vset.pattern.permute.xlu0 0
    %880 = vperm.xlu0 %879, %v863
    %v881 = vpop.permute.xlu0 %880
    %882 = vset.pattern.permute.xlu0 0
    %883 = vperm.xlu0 %882, %v864
    %v884 = vpop.permute.xlu0 %883
    %885 = vset.pattern.permute.xlu0 0
    %886 = vperm.xlu0 %885, %v865
    %v887 = vpop.permute.xlu0 %886
    %888 = vset.pattern.permute.xlu0 0
    %889 = vperm.xlu0 %888, %v866
    %v890 = vpop.permute.xlu0 %889
    %vm891 = vcmp.eq.s32.totalorder %v869, 1
    %vm892 = vcmp.eq.s32.totalorder %v872, 1
    %vm893 = vcmp.eq.s32.totalorder %v875, 1
    %vm894 = vcmp.eq.s32.totalorder %v878, 1
    %vm895 = vcmp.eq.s32.totalorder %v881, 1
    %vm896 = vcmp.eq.s32.totalorder %v884, 1
    %vm897 = vcmp.eq.s32.totalorder %v887, 1
    %vm898 = vcmp.eq.s32.totalorder %v890, 1
    %v908 = vrot.slane %v742, 2
    %v909 = vrot.slane %v735, 2
    %v910 = vsel %vm793, %v908, %v909
    %v911 = vrot.slane %v736, 2
    %v912 = vsel %vm793, %v909, %v911
    %v913 = vrot.slane %v737, 2
    %v914 = vsel %vm793, %v911, %v913
    %v915 = vrot.slane %v738, 2
    %v916 = vsel %vm793, %v913, %v915
    %v917 = vrot.slane %v739, 2
    %v918 = vsel %vm793, %v915, %v917
    %v919 = vrot.slane %v740, 2
    %v920 = vsel %vm793, %v917, %v919
    %v921 = vrot.slane %v741, 2
    %v922 = vsel %vm793, %v919, %v921
    %v923 = vrot.slane %v743, 2
    %v924 = vsel %vm793, %v921, %v923
    %v933 = vsel %vm891, %v734, %v910
    %v934 = vsel %vm892, %v735, %v912
    %v935 = vsel %vm893, %v736, %v914
    %v936 = vsel %vm894, %v737, %v916
    %v937 = vsel %vm895, %v738, %v918
    %v938 = vsel %vm896, %v739, %v920
    %v939 = vsel %vm897, %v740, %v922
    %v940 = vsel %vm898, %v741, %v924
    %v941 = vadd.f32 %v851, %v933
    %v942 = vadd.f32 %v852, %v934
    %v943 = vadd.f32 %v853, %v935
    %v944 = vadd.f32 %v854, %v936
    %v945 = vadd.f32 %v855, %v937
    %v946 = vadd.f32 %v856, %v938
    %v947 = vadd.f32 %v857, %v939
    %v948 = vadd.f32 %v858, %v940
    %v949 = vlaneseq
    %v950 = vshrl.u32 %v949, 7
    %v951 = vsub.s32 0, %v950
    %v952 = vrot.slane %v475, %v951
    %v953 = vadd.f32 %v941, %v952
    %v954 = vadd.f32 %v942, %v952
    %v955 = vadd.f32 %v943, %v952
    %v956 = vadd.f32 %v944, %v952
    %v957 = vadd.f32 %v945, %v952
    %v958 = vadd.f32 %v946, %v952
    %v959 = vadd.f32 %v947, %v952
    %v960 = vadd.f32 %v948, %v952
    %v961 = vmul.f32 %v953, 0.5
    %v962 = vmul.f32 %v954, 0.5
    %v963 = vmul.f32 %v955, 0.5
    %v964 = vmul.f32 %v956, 0.5
    %v965 = vmul.f32 %v957, 0.5
    %v966 = vmul.f32 %v958, 0.5
    %v967 = vmul.f32 %v959, 0.5
    %v968 = vmul.f32 %v960, 0.5
    %v969 = vmul.f32 %v953, 0.044715
    %v970 = vmul.f32 %v954, 0.044715
    %v971 = vmul.f32 %v955, 0.044715
    %v972 = vmul.f32 %v956, 0.044715
    %v973 = vmul.f32 %v957, 0.044715
    %v974 = vmul.f32 %v958, 0.044715
    %v975 = vmul.f32 %v959, 0.044715
    %v976 = vmul.f32 %v960, 0.044715
    %v977 = vmul.f32 %v969, %v953
    %v978 = vmul.f32 %v970, %v954
    %v979 = vmul.f32 %v971, %v955
    %v980 = vmul.f32 %v972, %v956
    %v981 = vmul.f32 %v973, %v957
    %v982 = vmul.f32 %v974, %v958
    %v983 = vmul.f32 %v975, %v959
    %v984 = vmul.f32 %v976, %v960
    %v985 = vmul.f32 %v977, %v953
    %v986 = vmul.f32 %v978, %v954
    %v987 = vmul.f32 %v979, %v955
    %v988 = vmul.f32 %v980, %v956
    %v989 = vmul.f32 %v981, %v957
    %v990 = vmul.f32 %v982, %v958
    %v991 = vmul.f32 %v983, %v959
    %v992 = vmul.f32 %v984, %v960
    %v993 = vadd.f32 %v953, %v985
    %v994 = vadd.f32 %v954, %v986
    %v995 = vadd.f32 %v955, %v987
    %v996 = vadd.f32 %v956, %v988
    %v997 = vadd.f32 %v957, %v989
    %v998 = vadd.f32 %v958, %v990
    %v999 = vadd.f32 %v959, %v991
    %v1000 = vadd.f32 %v960, %v992
    %v1001 = vmul.f32 %v993, 0.7978846
    %v1002 = vmul.f32 %v994, 0.7978846
    %v1003 = vmul.f32 %v995, 0.7978846
    %v1004 = vmul.f32 %v996, 0.7978846
    %v1005 = vmul.f32 %v997, 0.7978846
    %v1006 = vmul.f32 %v998, 0.7978846
    %v1007 = vmul.f32 %v999, 0.7978846
    %v1008 = vmul.f32 %v1000, 0.7978846
    %v1009 = vtanh.pop %v1001
    %v1010 = vtanh.pop %v1002
    %v1011 = vtanh.pop %v1003
    %v1012 = vtanh.pop %v1004
    %v1013 = vtanh.pop %v1005
    %v1014 = vtanh.pop %v1006
    %v1015 = vtanh.pop %v1007
    %v1016 = vtanh.pop %v1008
    %v1017 = vadd.f32 %v1009, 1.0
    %v1018 = vadd.f32 %v1010, 1.0
    %v1019 = vadd.f32 %v1011, 1.0
    %v1020 = vadd.f32 %v1012, 1.0
    %v1021 = vadd.f32 %v1013, 1.0
    %v1022 = vadd.f32 %v1014, 1.0
    %v1023 = vadd.f32 %v1015, 1.0
    %v1024 = vadd.f32 %v1016, 1.0
    %v1025 = vmul.f32 %v961, %v1017
    %v1026 = vmul.f32 %v962, %v1018
    %v1027 = vmul.f32 %v963, %v1019
    %v1028 = vmul.f32 %v964, %v1020
    %v1029 = vmul.f32 %v965, %v1021
    %v1030 = vmul.f32 %v966, %v1022
    %v1031 = vmul.f32 %v967, %v1023
    %v1032 = vmul.f32 %v968, %v1024
    %v1033 = vpack.c.bf16 %v1026, %v1025
    %v1034 = vpack.c.bf16 %v1028, %v1027
    %v1035 = vpack.c.bf16 %v1030, %v1029
    %v1036 = vpack.c.bf16 %v1032, %v1031
    %v1037 = vld [vmem:[#allocation3] sm:$0xf]
    %v1038 = vld [vmem:[#allocation3 + $0x4] sm:$0xf]
    %v1039 = vld [vmem:[#allocation3 + $0x8] sm:$0xf]
    %v1040 = vld [vmem:[#allocation3 + $0xc] sm:$0xf]
    %v1041 = vld [vmem:[#allocation3 + $0x10] sm:$0xf]
    %v1042 = vld [vmem:[#allocation3 + $0x14] sm:$0xf]
    %v1043 = vld [vmem:[#allocation3 + $0x18] sm:$0xf]
    %v1044 = vld [vmem:[#allocation3 + $0x1c] sm:$0xf]
    %v1045 = vlaneseq
    %v1046 = vshrl.u32 %v1045, 7
    %v1047 = vsub.s32 0, %v1046
    %v1048 = vrot.slane %v476, %v1047
    %v1057 = vunpack.c.l.b16 %v1037
    %v1058 = vunpack.c.l.b16 %v1038
    %v1059 = vunpack.c.l.b16 %v1039
    %v1060 = vunpack.c.l.b16 %v1040
    %v1061 = vunpack.c.l.b16 %v1041
    %v1062 = vunpack.c.l.b16 %v1042
    %v1063 = vunpack.c.l.b16 %v1043
    %v1064 = vunpack.c.l.b16 %v1044
    %v1065 = vpack.c.b16 %v1058, %v1057
    %v1066 = vpack.c.b16 %v1060, %v1059
    %v1067 = vpack.c.b16 %v1062, %v1061
    %v1068 = vpack.c.b16 %v1064, %v1063
    %v1074 = vsel %vm553, %v1033, 0
    %v1077 = vsel %vm553, %v1034, 0
    %v1080 = vsel %vm553, %v1035, 0
    %v1083 = vsel %vm553, %v1036, 0
    %1085 = vmatprep.subr.bf16.mxu0 0
    %1086 = vmatpush1.bf16.msra.mxu0 %v1065
    %1087 = vmatprep.subr.bf16.mxu0 0
    %1088 = vmatpush1.bf16.msra.mxu0 %v1066
    %1089 = vmatprep.subr.bf16.mxu0 0
    %1090 = vmatpush1.bf16.msra.mxu0 %v1067
    %1091 = vmatprep.subr.bf16.mxu0 0
    %1092 = vmatpush1.bf16.msra.mxu0 %v1068
    %1093 = vmatprep.subr.bf16.mxu0 0
    %1094 = vmatpush1.bf16.msra.mxu0 0
    %1095 = vmatprep.subr.bf16.mxu0 0
    %1096 = vmatpush1.bf16.msra.mxu0 0
    %1097 = vmatprep.subr.bf16.mxu0 0
    %1098 = vmatpush1.bf16.msra.mxu0 0
    %1099 = vmatprep.subr.bf16.mxu0 0
    %1100 = vmatpush1.bf16.msra.mxu0 0
    %1101 = vmatprep.subr.bf16.mxu0 0
    %1102 = vmatpush1.bf16.msra.mxu0 0
    %1103 = vmatprep.subr.bf16.mxu0 0
    %1104 = vmatpush1.bf16.msra.mxu0 0
    %1105 = vmatprep.subr.bf16.mxu0 0
    %1106 = vmatpush1.bf16.msra.mxu0 0
    %1107 = vmatprep.subr.bf16.mxu0 0
    %1108 = vmatpush1.bf16.msra.mxu0 0
    %1109 = vmatprep.subr.bf16.mxu0 0
    %1110 = vmatpush1.bf16.msra.mxu0 0
    %1111 = vmatprep.subr.bf16.mxu0 0
    %1112 = vmatpush1.bf16.msra.mxu0 0
    %1113 = vmatprep.subr.bf16.mxu0 0
    %1114 = vmatpush1.bf16.msra.mxu0 0
    %1115 = vmatprep.subr.bf16.mxu0 0
    %1116 = vmatpush1.bf16.msra.mxu0 0
    %1117 = vmatprep.mubr.bf16.mxu0 0
    %1118 = vmatmul.mubr.bf16.gmra.mrb[0].mxu0 %v1074
    %v1119 = vpop.f32.mrb[0].mxu0
    %v1120 = vadd.f32 %v1048, %v1119
    %v1121 = vpop.f32.mrb[0].mxu0
    %v1122 = vpop.f32.mrb[0].mxu0
    %v1123 = vadd.f32 %v1048, %v1122
    %v1124 = vpop.f32.mrb[0].mxu0
    %1125 = vmatprep.mubr.bf16.mxu0 0
    %1126 = vmatmul.mubr.bf16.gmra.mrb[0].mxu0 %v1077
    %v1127 = vpop.f32.mrb[0].mxu0
    %v1128 = vadd.f32 %v1048, %v1127
    %v1129 = vpop.f32.mrb[0].mxu0
    %v1130 = vpop.f32.mrb[0].mxu0
    %v1131 = vadd.f32 %v1048, %v1130
    %v1132 = vpop.f32.mrb[0].mxu0
    %1133 = vmatprep.mubr.bf16.mxu0 0
    %1134 = vmatmul.mubr.bf16.gmra.mrb[0].mxu0 %v1080
    %v1135 = vpop.f32.mrb[0].mxu0
    %v1136 = vadd.f32 %v1048, %v1135
    %v1137 = vpop.f32.mrb[0].mxu0
    %v1138 = vpop.f32.mrb[0].mxu0
    %v1139 = vadd.f32 %v1048, %v1138
    %v1140 = vpop.f32.mrb[0].mxu0
    %1141 = vmatprep.mubr.bf16.mxu0 0
    %1142 = vmatmul.mubr.bf16.gmra.mrb[0].mxu0 %v1083
    %v1143 = vpop.f32.mrb[0].mxu0
    %v1144 = vadd.f32 %v1048, %v1143
    %v1145 = vpop.f32.mrb[0].mxu0
    %v1146 = vpop.f32.mrb[0].mxu0
    %v1147 = vadd.f32 %v1048, %v1146
    %v1148 = vpop.f32.mrb[0].mxu0
    %1149 = vdwg.mxu0
    %v1150 = vmul.f32 %v1120, 0.5
    %v1151 = vmul.f32 %v1123, 0.5
    %v1152 = vmul.f32 %v1128, 0.5
    %v1153 = vmul.f32 %v1131, 0.5
    %v1154 = vmul.f32 %v1136, 0.5
    %v1155 = vmul.f32 %v1139, 0.5
    %v1156 = vmul.f32 %v1144, 0.5
    %v1157 = vmul.f32 %v1147, 0.5
    %v1158 = vmul.f32 %v1120, 0.044715
    %v1159 = vmul.f32 %v1123, 0.044715
    %v1160 = vmul.f32 %v1128, 0.044715
    %v1161 = vmul.f32 %v1131, 0.044715
    %v1162 = vmul.f32 %v1136, 0.044715
    %v1163 = vmul.f32 %v1139, 0.044715
    %v1164 = vmul.f32 %v1144, 0.044715
    %v1165 = vmul.f32 %v1147, 0.044715
    %v1166 = vmul.f32 %v1158, %v1120
    %v1167 = vmul.f32 %v1159, %v1123
    %v1168 = vmul.f32 %v1160, %v1128
    %v1169 = vmul.f32 %v1161, %v1131
    %v1170 = vmul.f32 %v1162, %v1136
    %v1171 = vmul.f32 %v1163, %v1139
    %v1172 = vmul.f32 %v1164, %v1144
    %v1173 = vmul.f32 %v1165, %v1147
    %v1174 = vmul.f32 %v1166, %v1120
    %v1175 = vmul.f32 %v1167, %v1123
    %v1176 = vmul.f32 %v1168, %v1128
    %v1177 = vmul.f32 %v1169, %v1131
    %v1178 = vmul.f32 %v1170, %v1136
    %v1179 = vmul.f32 %v1171, %v1139
    %v1180 = vmul.f32 %v1172, %v1144
    %v1181 = vmul.f32 %v1173, %v1147
    %v1182 = vadd.f32 %v1120, %v1174
    %v1183 = vadd.f32 %v1123, %v1175
    %v1184 = vadd.f32 %v1128, %v1176
    %v1185 = vadd.f32 %v1131, %v1177
    %v1186 = vadd.f32 %v1136, %v1178
    %v1187 = vadd.f32 %v1139, %v1179
    %v1188 = vadd.f32 %v1144, %v1180
    %v1189 = vadd.f32 %v1147, %v1181
    %v1190 = vmul.f32 %v1182, 0.7978846
    %v1191 = vmul.f32 %v1183, 0.7978846
    %v1192 = vmul.f32 %v1184, 0.7978846
    %v1193 = vmul.f32 %v1185, 0.7978846
    %v1194 = vmul.f32 %v1186, 0.7978846
    %v1195 = vmul.f32 %v1187, 0.7978846
    %v1196 = vmul.f32 %v1188, 0.7978846
    %v1197 = vmul.f32 %v1189, 0.7978846
    %v1198 = vtanh.pop %v1190
    %v1199 = vtanh.pop %v1191
    %v1200 = vtanh.pop %v1192
    %v1201 = vtanh.pop %v1193
    %v1202 = vtanh.pop %v1194
    %v1203 = vtanh.pop %v1195
    %v1204 = vtanh.pop %v1196
    %v1205 = vtanh.pop %v1197
    %v1206 = vadd.f32 %v1198, 1.0
    %v1207 = vadd.f32 %v1199, 1.0
    %v1208 = vadd.f32 %v1200, 1.0
    %v1209 = vadd.f32 %v1201, 1.0
    %v1210 = vadd.f32 %v1202, 1.0
    %v1211 = vadd.f32 %v1203, 1.0
    %v1212 = vadd.f32 %v1204, 1.0
    %v1213 = vadd.f32 %v1205, 1.0
    %v1214 = vmul.f32 %v1150, %v1206
    %v1215 = vmul.f32 %v1151, %v1207
    %v1216 = vmul.f32 %v1152, %v1208
    %v1217 = vmul.f32 %v1153, %v1209
    %v1218 = vmul.f32 %v1154, %v1210
    %v1219 = vmul.f32 %v1155, %v1211
    %v1220 = vmul.f32 %v1156, %v1212
    %v1221 = vmul.f32 %v1157, %v1213
    %v1222 = vld [vmem:[#allocation9] sm:$0x1]
    %v1223 = vld [vmem:[#allocation9 + $0x1] sm:$0x1]
    %v1224 = vpack.c.bf16 %v1215, %v1214
    %v1225 = vpack.c.bf16 %v1217, %v1216
    %v1226 = vpack.c.bf16 %v1219, %v1218
    %v1227 = vpack.c.bf16 %v1221, %v1220
    %v1228 = vunpack.c.l.bf16 %v1224
    %v1229 = vunpack.c.h.bf16 %v1224
    %v1230 = vunpack.c.l.bf16 %v1225
    %v1231 = vunpack.c.h.bf16 %v1225
    %v1232 = vunpack.c.l.bf16 %v1226
    %v1233 = vunpack.c.h.bf16 %v1226
    %v1234 = vunpack.c.l.bf16 %v1227
    %v1235 = vunpack.c.h.bf16 %v1227
    %v1236 = vsub.f32 %v1214, %v1228
    %v1237 = vsub.f32 %v1215, %v1229
    %v1238 = vsub.f32 %v1216, %v1230
    %v1239 = vsub.f32 %v1217, %v1231
    %v1240 = vsub.f32 %v1218, %v1232
    %v1241 = vsub.f32 %v1219, %v1233
    %v1242 = vsub.f32 %v1220, %v1234
    %v1243 = vsub.f32 %v1221, %v1235
    %v1244 = vpack.c.bf16 %v1237, %v1236
    %v1245 = vpack.c.bf16 %v1239, %v1238
    %v1246 = vpack.c.bf16 %v1241, %v1240
    %v1247 = vpack.c.bf16 %v1243, %v1242
    %v1248 = vld [vmem:[%s63] sm:$0xf]
    %v1249 = vld [vmem:[%s63 + $0x4] sm:$0xf]
    %v1250 = vld [vmem:[%s63 + $0x8] sm:$0xf]
    %v1251 = vld [vmem:[%s63 + $0xc] sm:$0xf]
    %v1256 = vunpack.c.l.b16 %v1248
    %v1257 = vunpack.c.l.b16 %v1249
    %v1258 = vunpack.c.l.b16 %v1250
    %v1259 = vunpack.c.l.b16 %v1251
    %v1260 = vpack.c.b16 %v1257, %v1256
    %v1261 = vpack.c.b16 %v1259, %v1258
    %v1263 = vsel %vm553, %v1260, 0
    %v1266 = vsel %vm553, %v1261, 0
    %1268 = vmatprep.subr.bf16.mxu0 0
    %1269 = vmatpush1.bf16.msra.mxu0 %v1244
    %1270 = vmatprep.subr.bf16.mxu0 0
    %1271 = vmatpush1.bf16.msra.mxu0 %v1245
    %1272 = vmatprep.subr.bf16.mxu0 0
    %1273 = vmatpush1.bf16.msra.mxu0 %v1246
    %1274 = vmatprep.subr.bf16.mxu0 0
    %1275 = vmatpush1.bf16.msra.mxu0 %v1247
    %1276 = vmatprep.subr.bf16.mxu0 0
    %1277 = vmatpush1.bf16.msra.mxu0 0
    %1278 = vmatprep.subr.bf16.mxu0 0
    %1279 = vmatpush1.bf16.msra.mxu0 0
    %1280 = vmatprep.subr.bf16.mxu0 0
    %1281 = vmatpush1.bf16.msra.mxu0 0
    %1282 = vmatprep.subr.bf16.mxu0 0
    %1283 = vmatpush1.bf16.msra.mxu0 0
    %1284 = vmatprep.subr.bf16.mxu0 0
    %1285 = vmatpush1.bf16.msra.mxu0 0
    %1286 = vmatprep.subr.bf16.mxu0 0
    %1287 = vmatpush1.bf16.msra.mxu0 0
    %1288 = vmatprep.subr.bf16.mxu0 0
    %1289 = vmatpush1.bf16.msra.mxu0 0
    %1290 = vmatprep.subr.bf16.mxu0 0
    %1291 = vmatpush1.bf16.msra.mxu0 0
    %1292 = vmatprep.subr.bf16.mxu0 0
    %1293 = vmatpush1.bf16.msra.mxu0 0
    %1294 = vmatprep.subr.bf16.mxu0 0
    %1295 = vmatpush1.bf16.msra.mxu0 0
    %1296 = vmatprep.subr.bf16.mxu0 0
    %1297 = vmatpush1.bf16.msra.mxu0 0
    %1298 = vmatprep.subr.bf16.mxu0 0
    %1299 = vmatpush1.bf16.msra.mxu0 0
    %1300 = vmatprep.mubr.bf16.mxu0 0
    %1301 = vmatmul.mubr.bf16.gmra.mrb[0].mxu0 %v1263
    %v1302 = vpop.f32.mrb[0].mxu0
    %v1303 = vadd.f32 0.0, %v1302
    %v1304 = vpop.f32.mrb[0].mxu0
    %v1305 = vpop.f32.mrb[0].mxu0
    %v1306 = vadd.f32 0.0, %v1305
    %v1307 = vpop.f32.mrb[0].mxu0
    %1308 = vmatprep.mubr.bf16.mxu0 0
    %1309 = vmatmul.mubr.bf16.gmra.mrb[0].mxu0 %v1266
    %v1310 = vpop.f32.mrb[0].mxu0
    %v1311 = vadd.f32 0.0, %v1310
    %v1312 = vpop.f32.mrb[0].mxu0
    %v1313 = vpop.f32.mrb[0].mxu0
    %v1314 = vadd.f32 0.0, %v1313
    %v1315 = vpop.f32.mrb[0].mxu0
    %1316 = vdwg.mxu0
    %1317 = vmatprep.subr.bf16.mxu0 0
    %1318 = vmatpush1.bf16.msra.mxu0 %v1224
    %1319 = vmatprep.subr.bf16.mxu0 0
    %1320 = vmatpush1.bf16.msra.mxu0 %v1225
    %1321 = vmatprep.subr.bf16.mxu0 0
    %1322 = vmatpush1.bf16.msra.mxu0 %v1226
    %1323 = vmatprep.subr.bf16.mxu0 0
    %1324 = vmatpush1.bf16.msra.mxu0 %v1227
    %1325 = vmatprep.subr.bf16.mxu0 0
    %1326 = vmatpush1.bf16.msra.mxu0 0
    %1327 = vmatprep.subr.bf16.mxu0 0
    %1328 = vmatpush1.bf16.msra.mxu0 0
    %1329 = vmatprep.subr.bf16.mxu0 0
    %1330 = vmatpush1.bf16.msra.mxu0 0
    %1331 = vmatprep.subr.bf16.mxu0 0
    %1332 = vmatpush1.bf16.msra.mxu0 0
    %1333 = vmatprep.subr.bf16.mxu0 0
    %1334 = vmatpush1.bf16.msra.mxu0 0
    %1335 = vmatprep.subr.bf16.mxu0 0
    %1336 = vmatpush1.bf16.msra.mxu0 0
    %1337 = vmatprep.subr.bf16.mxu0 0
    %1338 = vmatpush1.bf16.msra.mxu0 0
    %1339 = vmatprep.subr.bf16.mxu0 0
    %1340 = vmatpush1.bf16.msra.mxu0 0
    %1341 = vmatprep.subr.bf16.mxu0 0
    %1342 = vmatpush1.bf16.msra.mxu0 0
    %1343 = vmatprep.subr.bf16.mxu0 0
    %1344 = vmatpush1.bf16.msra.mxu0 0
    %1345 = vmatprep.subr.bf16.mxu0 0
    %1346 = vmatpush1.bf16.msra.mxu0 0
    %1347 = vmatprep.subr.bf16.mxu0 0
    %1348 = vmatpush1.bf16.msra.mxu0 0
    %1349 = vmatprep.mubr.bf16.mxu0 0
    %1350 = vmatmul.mubr.bf16.gmra.mrb[0].mxu0 %v1263
    %v1351 = vpop.f32.mrb[0].mxu0
    %v1352 = vadd.f32 %v1303, %v1351
    %v1353 = vpop.f32.mrb[0].mxu0
    %v1354 = vpop.f32.mrb[0].mxu0
    %v1355 = vadd.f32 %v1306, %v1354
    %v1356 = vpop.f32.mrb[0].mxu0
    %1357 = vmatprep.mubr.bf16.mxu0 0
    %1358 = vmatmul.mubr.bf16.gmra.mrb[0].mxu0 %v1266
    %v1359 = vpop.f32.mrb[0].mxu0
    %v1360 = vadd.f32 %v1311, %v1359
    %v1361 = vpop.f32.mrb[0].mxu0
    %v1362 = vpop.f32.mrb[0].mxu0
    %v1363 = vadd.f32 %v1314, %v1362
    %v1364 = vpop.f32.mrb[0].mxu0
    %1365 = vdwg.mxu0
    %v1366 = vpack.c.bf16 %v1355, %v1352
    %v1367 = vpack.c.bf16 %v1363, %v1360
    %v1368 = vld [vmem:[%s9] sm:$0xff]
    %v1369 = vld [vmem:[%s9 + $0x8] sm:$0xff]
    %v1370 = vld [vmem:[%s9 + $0x10] sm:$0xff]
    %v1371 = vld [vmem:[%s9 + $0x18] sm:$0xff]
    %v1372 = vld [vmem:[%s9 + $0x20] sm:$0xff]
    %v1373 = vld [vmem:[%s9 + $0x28] sm:$0xff]
    %v1374 = vld [vmem:[%s9 + $0x30] sm:$0xff]
    %v1375 = vld [vmem:[%s9 + $0x38] sm:$0xff]
    %v1384 = vunpack.c.l.b16 %v1368
    %v1385 = vunpack.c.h.b16 %v1368
    %v1386 = vunpack.c.l.b16 %v1369
    %v1387 = vunpack.c.h.b16 %v1369
    %v1388 = vunpack.c.l.b16 %v1370
    %v1389 = vunpack.c.h.b16 %v1370
    %v1390 = vunpack.c.l.b16 %v1371
    %v1391 = vunpack.c.h.b16 %v1371
    %v1392 = vunpack.c.l.b16 %v1372
    %v1393 = vunpack.c.h.b16 %v1372
    %v1394 = vunpack.c.l.b16 %v1373
    %v1395 = vunpack.c.h.b16 %v1373
    %v1396 = vunpack.c.l.b16 %v1374
    %v1397 = vunpack.c.h.b16 %v1374
    %v1398 = vunpack.c.l.b16 %v1375
    %v1399 = vunpack.c.h.b16 %v1375
    %v1400 = vpack.c.b16 %v1386, %v1384
    %v1401 = vpack.c.b16 %v1387, %v1385
    %v1402 = vpack.c.b16 %v1390, %v1388
    %v1403 = vpack.c.b16 %v1391, %v1389
    %v1404 = vpack.c.b16 %v1394, %v1392
    %v1405 = vpack.c.b16 %v1395, %v1393
    %v1406 = vpack.c.b16 %v1398, %v1396
    %v1407 = vpack.c.b16 %v1399, %v1397
    %v1417 = vsel %vm553, %v1366, 0
    %v1420 = vsel %vm553, %v1367, 0
    %1422 = vmatprep.subr.bf16.mxu0 %v1401
    %1423 = vmatpush1.bf16.msra.mxu0 %v1400
    %1424 = vmatprep.subr.bf16.mxu0 %v1403
    %1425 = vmatpush1.bf16.msra.mxu0 %v1402
    %1426 = vmatprep.subr.bf16.mxu0 %v1405
    %1427 = vmatpush1.bf16.msra.mxu0 %v1404
    %1428 = vmatprep.subr.bf16.mxu0 %v1407
    %1429 = vmatpush1.bf16.msra.mxu0 %v1406
    %1430 = vmatprep.subr.bf16.mxu0 0
    %1431 = vmatpush1.bf16.msra.mxu0 0
    %1432 = vmatprep.subr.bf16.mxu0 0
    %1433 = vmatpush1.bf16.msra.mxu0 0
    %1434 = vmatprep.subr.bf16.mxu0 0
    %1435 = vmatpush1.bf16.msra.mxu0 0
    %1436 = vmatprep.subr.bf16.mxu0 0
    %1437 = vmatpush1.bf16.msra.mxu0 0
    %1438 = vmatprep.subr.bf16.mxu0 0
    %1439 = vmatpush1.bf16.msra.mxu0 0
    %1440 = vmatprep.subr.bf16.mxu0 0
    %1441 = vmatpush1.bf16.msra.mxu0 0
    %1442 = vmatprep.subr.bf16.mxu0 0
    %1443 = vmatpush1.bf16.msra.mxu0 0
    %1444 = vmatprep.subr.bf16.mxu0 0
    %1445 = vmatpush1.bf16.msra.mxu0 0
    %1446 = vmatprep.subr.bf16.mxu0 0
    %1447 = vmatpush1.bf16.msra.mxu0 0
    %1448 = vmatprep.subr.bf16.mxu0 0
    %1449 = vmatpush1.bf16.msra.mxu0 0
    %1450 = vmatprep.subr.bf16.mxu0 0
    %1451 = vmatpush1.bf16.msra.mxu0 0
    %1452 = vmatprep.subr.bf16.mxu0 0
    %1453 = vmatpush1.bf16.msra.mxu0 0
    %1454 = vmatprep.mubr.bf16.mxu0 0
    %1455 = vmatmul.mubr.bf16.gmra.mrb[0].mxu0 %v1417
    %v1456 = vpop.f32.mrb[0].mxu0
    %v1457 = vadd.f32 0.0, %v1456
    %v1458 = vpop.f32.mrb[0].mxu0
    %v1459 = vadd.f32 0.0, %v1458
    %v1460 = vpop.f32.mrb[0].mxu0
    %v1461 = vadd.f32 0.0, %v1460
    %v1462 = vpop.f32.mrb[0].mxu0
    %v1463 = vadd.f32 0.0, %v1462
    %1464 = vmatprep.mubr.bf16.mxu0 0
    %1465 = vmatmul.mubr.bf16.gmra.mrb[0].mxu0 %v1420
    %v1466 = vpop.f32.mrb[0].mxu0
    %v1467 = vadd.f32 0.0, %v1466
    %v1468 = vpop.f32.mrb[0].mxu0
    %v1469 = vadd.f32 0.0, %v1468
    %v1470 = vpop.f32.mrb[0].mxu0
    %v1471 = vadd.f32 0.0, %v1470
    %v1472 = vpop.f32.mrb[0].mxu0
    %v1473 = vadd.f32 0.0, %v1472
    %1474 = vdwg.mxu0
    %v1483 = vrot.slane %v1457, 7
    %v1484 = vrot.slane %v1459, 7
    %v1485 = vrot.slane %v1461, 7
    %v1486 = vsel %vm655, %v1483, %v1485
    %v1487 = vrot.slane %v1463, 7
    %v1488 = vsel %vm655, %v1484, %v1487
    %v1489 = vrot.slane %v1467, 7
    %v1490 = vsel %vm655, %v1485, %v1489
    %v1491 = vrot.slane %v1469, 7
    %v1492 = vsel %vm655, %v1487, %v1491
    %v1493 = vrot.slane %v1471, 7
    %v1494 = vsel %vm655, %v1489, %v1493
    %v1495 = vrot.slane %v1473, 7
    %v1496 = vsel %vm655, %v1491, %v1495
    %1507 = vst [vmem:[#allocation2] sm:$0xfe] %v1483
    %1508 = vst.msk [vmem:[#allocation2 + $0x8] sm:$0xfe] %vm705, %v1484
    %1509 = vst [vmem:[#allocation2 + $0x10] sm:$0xff] %v1486
    %1510 = vst.msk [vmem:[#allocation2 + $0x18] sm:$0xff] %vm553, %v1488
    %1511 = vst [vmem:[#allocation2 + $0x20] sm:$0xff] %v1490
    %1512 = vst.msk [vmem:[#allocation2 + $0x28] sm:$0xff] %vm553, %v1492
    %1513 = vst [vmem:[#allocation2 + $0x30] sm:$0xff] %v1494
    %1514 = vst.msk [vmem:[#allocation2 + $0x38] sm:$0xff] %vm553, %v1496
    %1515 = vst [vmem:[#allocation2 + $0x40] sm:$0x1] %v1493
    %1516 = vst.msk [vmem:[#allocation2 + $0x48] sm:$0x1] %vm722, %v1495
    %v1517 = vld [vmem:[#allocation2] sm:$0xff]
    %v1518 = vld [vmem:[#allocation2 + $0x10] sm:$0xff]
    %v1519 = vld [vmem:[#allocation2 + $0x20] sm:$0xff]
    %v1520 = vld [vmem:[#allocation2 + $0x30] sm:$0xff]
    %v1521 = vld [vmem:[#allocation2] sm:$0xfc]
    %v1522 = vld [vmem:[#allocation2 + $0x40] sm:$0x3]
    %v1523 = vld [vmem:[#allocation2 + $0x8] sm:$0xff]
    %v1524 = vld [vmem:[#allocation2 + $0x18] sm:$0xff]
    %v1525 = vld [vmem:[#allocation2 + $0x28] sm:$0xff]
    %v1526 = vld [vmem:[#allocation2 + $0x38] sm:$0xff]
    %v1527 = vld [vmem:[#allocation2 + $0x8] sm:$0xfc]
    %v1528 = vld [vmem:[#allocation2 + $0x48] sm:$0x3]
    %v1529 = vsel %vm447, 1, 0
    %v1530 = vsel %vm448, 1, 0
    %v1531 = vsel %vm449, 1, 0
    %v1532 = vsel %vm450, 1, 0
    %1533 = vset.pattern.permute.xlu0 0
    %1534 = vperm.xlu0 %1533, %v1529
    %v1535 = vpop.permute.xlu0 %1534
    %1536 = vset.pattern.permute.xlu0 0
    %1537 = vperm.xlu0 %1536, %v1530
    %v1538 = vpop.permute.xlu0 %1537
    %1539 = vset.pattern.permute.xlu0 0
    %1540 = vperm.xlu0 %1539, %v1531
    %v1541 = vpop.permute.xlu0 %1540
    %1542 = vset.pattern.permute.xlu0 0
    %1543 = vperm.xlu0 %1542, %v1532
    %v1544 = vpop.permute.xlu0 %1543
    %vm1545 = vcmp.eq.s32.totalorder %v1535, 1
    %vm1546 = vcmp.eq.s32.totalorder %v1538, 1
    %vm1547 = vcmp.eq.s32.totalorder %v1541, 1
    %vm1548 = vcmp.eq.s32.totalorder %v1544, 1
    %v1554 = vrot.slane %v1521, 2
    %v1555 = vrot.slane %v1518, 2
    %v1556 = vsel %vm793, %v1554, %v1555
    %v1557 = vrot.slane %v1519, 2
    %v1558 = vsel %vm793, %v1555, %v1557
    %v1559 = vrot.slane %v1520, 2
    %v1560 = vsel %vm793, %v1557, %v1559
    %v1561 = vrot.slane %v1522, 2
    %v1562 = vsel %vm793, %v1559, %v1561
    %v1567 = vsel %vm1545, %v1556, %v1517
    %v1568 = vsel %vm1546, %v1558, %v1518
    %v1569 = vsel %vm1547, %v1560, %v1519
    %v1570 = vsel %vm1548, %v1562, %v1520
    %1571 = vrot.lane.b32.xlu0 %v1457, 64
    %v1572 = vpop.permute.xlu0 %1571
    %1573 = vrot.lane.b32.xlu0 %v1461, 64
    %v1574 = vpop.permute.xlu0 %1573
    %1575 = vrot.lane.b32.xlu0 %v1467, 64
    %v1576 = vpop.permute.xlu0 %1575
    %1577 = vrot.lane.b32.xlu0 %v1471, 64
    %v1578 = vpop.permute.xlu0 %1577
    %v1583 = vadd.f32 %v1567, %v1572
    %v1584 = vadd.f32 %v1568, %v1574
    %v1585 = vadd.f32 %v1569, %v1576
    %v1586 = vadd.f32 %v1570, %v1578
    %v1587 = vsel %vm467, 1, 0
    %v1588 = vsel %vm468, 1, 0
    %v1589 = vsel %vm469, 1, 0
    %v1590 = vsel %vm470, 1, 0
    %1591 = vset.pattern.permute.xlu0 0
    %1592 = vperm.xlu0 %1591, %v1587
    %v1593 = vpop.permute.xlu0 %1592
    %1594 = vset.pattern.permute.xlu0 0
    %1595 = vperm.xlu0 %1594, %v1588
    %v1596 = vpop.permute.xlu0 %1595
    %1597 = vset.pattern.permute.xlu0 0
    %1598 = vperm.xlu0 %1597, %v1589
    %v1599 = vpop.permute.xlu0 %1598
    %1600 = vset.pattern.permute.xlu0 0
    %1601 = vperm.xlu0 %1600, %v1590
    %v1602 = vpop.permute.xlu0 %1601
    %vm1603 = vcmp.eq.s32.totalorder %v1593, 1
    %vm1604 = vcmp.eq.s32.totalorder %v1596, 1
    %vm1605 = vcmp.eq.s32.totalorder %v1599, 1
    %vm1606 = vcmp.eq.s32.totalorder %v1602, 1
    %v1612 = vrot.slane %v1527, 2
    %v1613 = vrot.slane %v1524, 2
    %v1614 = vsel %vm793, %v1612, %v1613
    %v1615 = vrot.slane %v1525, 2
    %v1616 = vsel %vm793, %v1613, %v1615
    %v1617 = vrot.slane %v1526, 2
    %v1618 = vsel %vm793, %v1615, %v1617
    %v1619 = vrot.slane %v1528, 2
    %v1620 = vsel %vm793, %v1617, %v1619
    %v1625 = vsel %vm1603, %v1523, %v1614
    %v1626 = vsel %vm1604, %v1524, %v1616
    %v1627 = vsel %vm1605, %v1525, %v1618
    %v1628 = vsel %vm1606, %v1526, %v1620
    %v1629 = vadd.f32 %v1583, %v1625
    %v1630 = vadd.f32 %v1584, %v1626
    %v1631 = vadd.f32 %v1585, %v1627
    %v1632 = vadd.f32 %v1586, %v1628
    %v1633 = vlaneseq
    %v1634 = vshrl.u32 %v1633, 7
    %v1635 = vsub.s32 0, %v1634
    %v1636 = vrot.slane %v1222, %v1635
    %v1637 = vadd.f32 %v1629, %v1636
    %v1638 = vadd.f32 %v1630, %v1636
    %v1639 = vadd.f32 %v1631, %v1636
    %v1640 = vadd.f32 %v1632, %v1636
    %v1641 = vmul.f32 %v1637, 0.5
    %v1642 = vmul.f32 %v1638, 0.5
    %v1643 = vmul.f32 %v1639, 0.5
    %v1644 = vmul.f32 %v1640, 0.5
    %v1645 = vmul.f32 %v1637, 0.044715
    %v1646 = vmul.f32 %v1638, 0.044715
    %v1647 = vmul.f32 %v1639, 0.044715
    %v1648 = vmul.f32 %v1640, 0.044715
    %v1649 = vmul.f32 %v1645, %v1637
    %v1650 = vmul.f32 %v1646, %v1638
    %v1651 = vmul.f32 %v1647, %v1639
    %v1652 = vmul.f32 %v1648, %v1640
    %v1653 = vmul.f32 %v1649, %v1637
    %v1654 = vmul.f32 %v1650, %v1638
    %v1655 = vmul.f32 %v1651, %v1639
    %v1656 = vmul.f32 %v1652, %v1640
    %v1657 = vadd.f32 %v1637, %v1653
    %v1658 = vadd.f32 %v1638, %v1654
    %v1659 = vadd.f32 %v1639, %v1655
    %v1660 = vadd.f32 %v1640, %v1656
    %v1661 = vmul.f32 %v1657, 0.7978846
    %v1662 = vmul.f32 %v1658, 0.7978846
    %v1663 = vmul.f32 %v1659, 0.7978846
    %v1664 = vmul.f32 %v1660, 0.7978846
    %v1665 = vtanh.pop %v1661
    %v1666 = vtanh.pop %v1662
    %v1667 = vtanh.pop %v1663
    %v1668 = vtanh.pop %v1664
    %v1669 = vadd.f32 %v1665, 1.0
    %v1670 = vadd.f32 %v1666, 1.0
    %v1671 = vadd.f32 %v1667, 1.0
    %v1672 = vadd.f32 %v1668, 1.0
    %v1673 = vmul.f32 %v1641, %v1669
    %v1674 = vmul.f32 %v1642, %v1670
    %v1675 = vmul.f32 %v1643, %v1671
    %v1676 = vmul.f32 %v1644, %v1672
    %v1677 = vpack.c.bf16 %v1674, %v1673
    %v1678 = vpack.c.bf16 %v1676, %v1675
    %v1679 = vld [vmem:[#allocation8] sm:$0xf]
    %v1680 = vld [vmem:[#allocation8 + $0x4] sm:$0xf]
    %v1681 = vld [vmem:[#allocation8 + $0x8] sm:$0xf]
    %v1682 = vld [vmem:[#allocation8 + $0xc] sm:$0xf]
    %v1683 = vld [vmem:[#allocation8 + $0x10] sm:$0xf]
    %v1684 = vld [vmem:[#allocation8 + $0x14] sm:$0xf]
    %v1685 = vld [vmem:[#allocation8 + $0x18] sm:$0xf]
    %v1686 = vld [vmem:[#allocation8 + $0x1c] sm:$0xf]
    %v1687 = vlaneseq
    %v1688 = vshrl.u32 %v1687, 7
    %v1689 = vsub.s32 0, %v1688
    %v1690 = vrot.slane %v1223, %v1689
    %v1699 = vunpack.c.l.b16 %v1679
    %v1700 = vunpack.c.l.b16 %v1680
    %v1701 = vunpack.c.l.b16 %v1681
    %v1702 = vunpack.c.l.b16 %v1682
    %v1703 = vunpack.c.l.b16 %v1683
    %v1704 = vunpack.c.l.b16 %v1684
    %v1705 = vunpack.c.l.b16 %v1685
    %v1706 = vunpack.c.l.b16 %v1686
    %v1707 = vpack.c.b16 %v1700, %v1699
    %v1708 = vpack.c.b16 %v1702, %v1701
    %v1709 = vpack.c.b16 %v1704, %v1703
    %v1710 = vpack.c.b16 %v1706, %v1705
    %v1716 = vsel %vm553, %v1677, 0
    %v1719 = vsel %vm553, %v1678, 0
    %1721 = vmatprep.subr.bf16.mxu0 0
    %1722 = vmatpush1.bf16.msra.mxu0 %v1707
    %1723 = vmatprep.subr.bf16.mxu0 0
    %1724 = vmatpush1.bf16.msra.mxu0 %v1708
    %1725 = vmatprep.subr.bf16.mxu0 0
    %1726 = vmatpush1.bf16.msra.mxu0 %v1709
    %1727 = vmatprep.subr.bf16.mxu0 0
    %1728 = vmatpush1.bf16.msra.mxu0 %v1710
    %1729 = vmatprep.subr.bf16.mxu0 0
    %1730 = vmatpush1.bf16.msra.mxu0 0
    %1731 = vmatprep.subr.bf16.mxu0 0
    %1732 = vmatpush1.bf16.msra.mxu0 0
    %1733 = vmatprep.subr.bf16.mxu0 0
    %1734 = vmatpush1.bf16.msra.mxu0 0
    %1735 = vmatprep.subr.bf16.mxu0 0
    %1736 = vmatpush1.bf16.msra.mxu0 0
    %1737 = vmatprep.subr.bf16.mxu0 0
    %1738 = vmatpush1.bf16.msra.mxu0 0
    %1739 = vmatprep.subr.bf16.mxu0 0
    %1740 = vmatpush1.bf16.msra.mxu0 0
    %1741 = vmatprep.subr.bf16.mxu0 0
    %1742 = vmatpush1.bf16.msra.mxu0 0
    %1743 = vmatprep.subr.bf16.mxu0 0
    %1744 = vmatpush1.bf16.msra.mxu0 0
    %1745 = vmatprep.subr.bf16.mxu0 0
    %1746 = vmatpush1.bf16.msra.mxu0 0
    %1747 = vmatprep.subr.bf16.mxu0 0
    %1748 = vmatpush1.bf16.msra.mxu0 0
    %1749 = vmatprep.subr.bf16.mxu0 0
    %1750 = vmatpush1.bf16.msra.mxu0 0
    %1751 = vmatprep.subr.bf16.mxu0 0
    %1752 = vmatpush1.bf16.msra.mxu0 0
    %1753 = vmatprep.mubr.bf16.mxu0 0
    %1754 = vmatmul.mubr.bf16.gmra.mrb[0].mxu0 %v1716
    %v1755 = vpop.f32.mrb[0].mxu0
    %v1756 = vadd.f32 %v1690, %v1755
    %v1757 = vpop.f32.mrb[0].mxu0
    %v1758 = vpop.f32.mrb[0].mxu0
    %v1759 = vadd.f32 %v1690, %v1758
    %v1760 = vpop.f32.mrb[0].mxu0
    %1761 = vmatprep.mubr.bf16.mxu0 0
    %1762 = vmatmul.mubr.bf16.gmra.mrb[0].mxu0 %v1719
    %v1763 = vpop.f32.mrb[0].mxu0
    %v1764 = vadd.f32 %v1690, %v1763
    %v1765 = vpop.f32.mrb[0].mxu0
    %v1766 = vpop.f32.mrb[0].mxu0
    %v1767 = vadd.f32 %v1690, %v1766
    %v1768 = vpop.f32.mrb[0].mxu0
    %1769 = vdwg.mxu0
    %v1770 = vmul.f32 %v1756, 0.5
    %v1771 = vmul.f32 %v1759, 0.5
    %v1772 = vmul.f32 %v1764, 0.5
    %v1773 = vmul.f32 %v1767, 0.5
    %v1774 = vmul.f32 %v1756, 0.044715
    %v1775 = vmul.f32 %v1759, 0.044715
    %v1776 = vmul.f32 %v1764, 0.044715
    %v1777 = vmul.f32 %v1767, 0.044715
    %v1778 = vmul.f32 %v1774, %v1756
    %v1779 = vmul.f32 %v1775, %v1759
    %v1780 = vmul.f32 %v1776, %v1764
    %v1781 = vmul.f32 %v1777, %v1767
    %v1782 = vmul.f32 %v1778, %v1756
    %v1783 = vmul.f32 %v1779, %v1759
    %v1784 = vmul.f32 %v1780, %v1764
    %v1785 = vmul.f32 %v1781, %v1767
    %v1786 = vadd.f32 %v1756, %v1782
    %v1787 = vadd.f32 %v1759, %v1783
    %v1788 = vadd.f32 %v1764, %v1784
    %v1789 = vadd.f32 %v1767, %v1785
    %v1790 = vmul.f32 %v1786, 0.7978846
    %v1791 = vmul.f32 %v1787, 0.7978846
    %v1792 = vmul.f32 %v1788, 0.7978846
    %v1793 = vmul.f32 %v1789, 0.7978846
    %v1794 = vtanh.pop %v1790
    %v1795 = vtanh.pop %v1791
    %v1796 = vtanh.pop %v1792
    %v1797 = vtanh.pop %v1793
    %v1798 = vadd.f32 %v1794, 1.0
    %v1799 = vadd.f32 %v1795, 1.0
    %v1800 = vadd.f32 %v1796, 1.0
    %v1801 = vadd.f32 %v1797, 1.0
    %v1802 = vmul.f32 %v1770, %v1798
    %v1803 = vmul.f32 %v1771, %v1799
    %v1804 = vmul.f32 %v1772, %v1800
    %v1805 = vmul.f32 %v1773, %v1801
    %v1806 = vadd.f32 %v1352, %v1802
    %v1807 = vadd.f32 %v1355, %v1803
    %v1808 = vadd.f32 %v1360, %v1804
    %v1809 = vadd.f32 %v1363, %v1805
    %v1810 = vld [vmem:[#allocation12] sm:$0x1]
    %v1811 = vld [vmem:[#allocation12 + $0x1] sm:$0x1]
    %v1812 = vpack.c.bf16 %v1807, %v1806
    %v1813 = vpack.c.bf16 %v1809, %v1808
    %v1814 = vunpack.c.l.bf16 %v1812
    %v1815 = vunpack.c.h.bf16 %v1812
    %v1816 = vunpack.c.l.bf16 %v1813
    %v1817 = vunpack.c.h.bf16 %v1813
    %v1818 = vsub.f32 %v1806, %v1814
    %v1819 = vsub.f32 %v1807, %v1815
    %v1820 = vsub.f32 %v1808, %v1816
    %v1821 = vsub.f32 %v1809, %v1817
    %v1822 = vpack.c.bf16 %v1819, %v1818
    %v1823 = vpack.c.bf16 %v1821, %v1820
    %v1824 = vld [vmem:[%s65] sm:$0xf]
    %v1825 = vld [vmem:[%s65 + $0x4] sm:$0xf]
    %v1828 = vunpack.c.l.b16 %v1824
    %v1829 = vunpack.c.l.b16 %v1825
    %v1830 = vpack.c.b16 %v1829, %v1828
    %vm1831 = vcmask 261120
    %v1833 = vsel %vm1831, %v1830, 0
    %1835 = vmatprep.subr.bf16.mxu0 0
    %1836 = vmatpush1.bf16.msra.mxu0 %v1822
    %1837 = vmatprep.subr.bf16.mxu0 0
    %1838 = vmatpush1.bf16.msra.mxu0 %v1823
    %1839 = vmatprep.subr.bf16.mxu0 0
    %1840 = vmatpush1.bf16.msra.mxu0 0
    %1841 = vmatprep.subr.bf16.mxu0 0
    %1842 = vmatpush1.bf16.msra.mxu0 0
    %1843 = vmatprep.subr.bf16.mxu0 0
    %1844 = vmatpush1.bf16.msra.mxu0 0
    %1845 = vmatprep.subr.bf16.mxu0 0
    %1846 = vmatpush1.bf16.msra.mxu0 0
    %1847 = vmatprep.subr.bf16.mxu0 0
    %1848 = vmatpush1.bf16.msra.mxu0 0
    %1849 = vmatprep.subr.bf16.mxu0 0
    %1850 = vmatpush1.bf16.msra.mxu0 0
    %1851 = vmatprep.subr.bf16.mxu0 0
    %1852 = vmatpush1.bf16.msra.mxu0 0
    %1853 = vmatprep.subr.bf16.mxu0 0
    %1854 = vmatpush1.bf16.msra.mxu0 0
    %1855 = vmatprep.subr.bf16.mxu0 0
    %1856 = vmatpush1.bf16.msra.mxu0 0
    %1857 = vmatprep.subr.bf16.mxu0 0
    %1858 = vmatpush1.bf16.msra.mxu0 0
    %1859 = vmatprep.subr.bf16.mxu0 0
    %1860 = vmatpush1.bf16.msra.mxu0 0
    %1861 = vmatprep.subr.bf16.mxu0 0
    %1862 = vmatpush1.bf16.msra.mxu0 0
    %1863 = vmatprep.subr.bf16.mxu0 0
    %1864 = vmatpush1.bf16.msra.mxu0 0
    %1865 = vmatprep.subr.bf16.mxu0 0
    %1866 = vmatpush1.bf16.msra.mxu0 0
    %1867 = vmatprep.mubr.bf16.mxu0 0
    %1868 = vmatmul.mubr.bf16.gmra.mrb[0].mxu0 %v1833
    %v1869 = vpop.f32.mrb[0].mxu0
    %v1870 = vadd.f32 0.0, %v1869
    %v1871 = vpop.f32.mrb[0].mxu0
    %v1872 = vpop.f32.mrb[0].mxu0
    %v1873 = vadd.f32 0.0, %v1872
    %v1874 = vpop.f32.mrb[0].mxu0
    %1875 = vdwg.mxu0
    %1876 = vmatprep.subr.bf16.mxu0 0
    %1877 = vmatpush1.bf16.msra.mxu0 %v1812
    %1878 = vmatprep.subr.bf16.mxu0 0
    %1879 = vmatpush1.bf16.msra.mxu0 %v1813
    %1880 = vmatprep.subr.bf16.mxu0 0
    %1881 = vmatpush1.bf16.msra.mxu0 0
    %1882 = vmatprep.subr.bf16.mxu0 0
    %1883 = vmatpush1.bf16.msra.mxu0 0
    %1884 = vmatprep.subr.bf16.mxu0 0
    %1885 = vmatpush1.bf16.msra.mxu0 0
    %1886 = vmatprep.subr.bf16.mxu0 0
    %1887 = vmatpush1.bf16.msra.mxu0 0
    %1888 = vmatprep.subr.bf16.mxu0 0
    %1889 = vmatpush1.bf16.msra.mxu0 0
    %1890 = vmatprep.subr.bf16.mxu0 0
    %1891 = vmatpush1.bf16.msra.mxu0 0
    %1892 = vmatprep.subr.bf16.mxu0 0
    %1893 = vmatpush1.bf16.msra.mxu0 0
    %1894 = vmatprep.subr.bf16.mxu0 0
    %1895 = vmatpush1.bf16.msra.mxu0 0
    %1896 = vmatprep.subr.bf16.mxu0 0
    %1897 = vmatpush1.bf16.msra.mxu0 0
    %1898 = vmatprep.subr.bf16.mxu0 0
    %1899 = vmatpush1.bf16.msra.mxu0 0
    %1900 = vmatprep.subr.bf16.mxu0 0
    %1901 = vmatpush1.bf16.msra.mxu0 0
    %1902 = vmatprep.subr.bf16.mxu0 0
    %1903 = vmatpush1.bf16.msra.mxu0 0
    %1904 = vmatprep.subr.bf16.mxu0 0
    %1905 = vmatpush1.bf16.msra.mxu0 0
    %1906 = vmatprep.subr.bf16.mxu0 0
    %1907 = vmatpush1.bf16.msra.mxu0 0
    %1908 = vmatprep.mubr.bf16.mxu0 0
    %1909 = vmatmul.mubr.bf16.gmra.mrb[0].mxu0 %v1833
    %v1910 = vpop.f32.mrb[0].mxu0
    %v1911 = vadd.f32 %v1870, %v1910
    %v1912 = vpop.f32.mrb[0].mxu0
    %v1913 = vpop.f32.mrb[0].mxu0
    %v1914 = vadd.f32 %v1873, %v1913
    %v1915 = vpop.f32.mrb[0].mxu0
    %1916 = vdwg.mxu0
    %v1917 = vpack.c.bf16 %v1914, %v1911
    %v1918 = vld [vmem:[%s15] sm:$0xff]
    %v1919 = vld [vmem:[%s15 + $0x8] sm:$0xff]
    %v1920 = vld [vmem:[%s15 + $0x10] sm:$0xff]
    %v1921 = vld [vmem:[%s15 + $0x18] sm:$0xff]
    %v1922 = vld [vmem:[%s15 + $0x20] sm:$0xff]
    %v1923 = vld [vmem:[%s15 + $0x28] sm:$0xff]
    %v1924 = vld [vmem:[%s15 + $0x30] sm:$0xff]
    %v1925 = vld [vmem:[%s15 + $0x38] sm:$0xff]
    %v1934 = vunpack.c.l.b16 %v1918
    %v1935 = vunpack.c.h.b16 %v1918
    %v1936 = vunpack.c.l.b16 %v1919
    %v1937 = vunpack.c.h.b16 %v1919
    %v1938 = vunpack.c.l.b16 %v1920
    %v1939 = vunpack.c.h.b16 %v1920
    %v1940 = vunpack.c.l.b16 %v1921
    %v1941 = vunpack.c.h.b16 %v1921
    %v1942 = vunpack.c.l.b16 %v1922
    %v1943 = vunpack.c.h.b16 %v1922
    %v1944 = vunpack.c.l.b16 %v1923
    %v1945 = vunpack.c.h.b16 %v1923
    %v1946 = vunpack.c.l.b16 %v1924
    %v1947 = vunpack.c.h.b16 %v1924
    %v1948 = vunpack.c.l.b16 %v1925
    %v1949 = vunpack.c.h.b16 %v1925
    %v1950 = vpack.c.b16 %v1936, %v1934
    %v1951 = vpack.c.b16 %v1937, %v1935
    %v1952 = vpack.c.b16 %v1940, %v1938
    %v1953 = vpack.c.b16 %v1941, %v1939
    %v1954 = vpack.c.b16 %v1944, %v1942
    %v1955 = vpack.c.b16 %v1945, %v1943
    %v1956 = vpack.c.b16 %v1948, %v1946
    %v1957 = vpack.c.b16 %v1949, %v1947
    %v1967 = vsel %vm553, %v1917, 0
    %1969 = vmatprep.subr.bf16.mxu0 %v1951
    %1970 = vmatpush1.bf16.msra.mxu0 %v1950
    %1971 = vmatprep.subr.bf16.mxu0 %v1953
    %1972 = vmatpush1.bf16.msra.mxu0 %v1952
    %1973 = vmatprep.subr.bf16.mxu0 %v1955
    %1974 = vmatpush1.bf16.msra.mxu0 %v1954
    %1975 = vmatprep.subr.bf16.mxu0 %v1957
    %1976 = vmatpush1.bf16.msra.mxu0 %v1956
    %1977 = vmatprep.subr.bf16.mxu0 0
    %1978 = vmatpush1.bf16.msra.mxu0 0
    %1979 = vmatprep.subr.bf16.mxu0 0
    %1980 = vmatpush1.bf16.msra.mxu0 0
    %1981 = vmatprep.subr.bf16.mxu0 0
    %1982 = vmatpush1.bf16.msra.mxu0 0
    %1983 = vmatprep.subr.bf16.mxu0 0
    %1984 = vmatpush1.bf16.msra.mxu0 0
    %1985 = vmatprep.subr.bf16.mxu0 0
    %1986 = vmatpush1.bf16.msra.mxu0 0
    %1987 = vmatprep.subr.bf16.mxu0 0
    %1988 = vmatpush1.bf16.msra.mxu0 0
    %1989 = vmatprep.subr.bf16.mxu0 0
    %1990 = vmatpush1.bf16.msra.mxu0 0
    %1991 = vmatprep.subr.bf16.mxu0 0
    %1992 = vmatpush1.bf16.msra.mxu0 0
    %1993 = vmatprep.subr.bf16.mxu0 0
    %1994 = vmatpush1.bf16.msra.mxu0 0
    %1995 = vmatprep.subr.bf16.mxu0 0
    %1996 = vmatpush1.bf16.msra.mxu0 0
    %1997 = vmatprep.subr.bf16.mxu0 0
    %1998 = vmatpush1.bf16.msra.mxu0 0
    %1999 = vmatprep.subr.bf16.mxu0 0
    %2000 = vmatpush1.bf16.msra.mxu0 0
    %2001 = vmatprep.mubr.bf16.mxu0 0
    %2002 = vmatmul.mubr.bf16.gmra.mrb[0].mxu0 %v1967
    %v2003 = vpop.f32.mrb[0].mxu0
    %v2004 = vadd.f32 0.0, %v2003
    %v2005 = vpop.f32.mrb[0].mxu0
    %v2006 = vadd.f32 0.0, %v2005
    %v2007 = vpop.f32.mrb[0].mxu0
    %v2008 = vadd.f32 0.0, %v2007
    %v2009 = vpop.f32.mrb[0].mxu0
    %v2010 = vadd.f32 0.0, %v2009
    %2011 = vdwg.mxu0
    %v2016 = vrot.slane %v2004, 7
    %v2017 = vrot.slane %v2006, 7
    %v2018 = vrot.slane %v2008, 7
    %v2019 = vsel %vm655, %v2016, %v2018
    %v2020 = vrot.slane %v2010, 7
    %v2021 = vsel %vm655, %v2017, %v2020
    %2028 = vst [vmem:[#allocation2] sm:$0xfe] %v2016
    %2029 = vst.msk [vmem:[#allocation2 + $0x8] sm:$0xfe] %vm705, %v2017
    %2030 = vst [vmem:[#allocation2 + $0x10] sm:$0xff] %v2019
    %2031 = vst.msk [vmem:[#allocation2 + $0x18] sm:$0xff] %vm553, %v2021
    %2032 = vst [vmem:[#allocation2 + $0x20] sm:$0x1] %v2018
    %2033 = vst.msk [vmem:[#allocation2 + $0x28] sm:$0x1] %vm722, %v2020
    %v2034 = vld [vmem:[#allocation2] sm:$0xff]
    %v2035 = vld [vmem:[#allocation2 + $0x10] sm:$0xff]
    %v2036 = vld [vmem:[#allocation2] sm:$0xfc]
    %v2037 = vld [vmem:[#allocation2 + $0x20] sm:$0x3]
    %v2038 = vld [vmem:[#allocation2 + $0x8] sm:$0xff]
    %v2039 = vld [vmem:[#allocation2 + $0x18] sm:$0xff]
    %v2040 = vld [vmem:[#allocation2 + $0x8] sm:$0xfc]
    %v2041 = vld [vmem:[#allocation2 + $0x28] sm:$0x3]
    %v2042 = vsel %vm453, 1, 0
    %v2043 = vsel %vm454, 1, 0
    %2044 = vset.pattern.permute.xlu0 0
    %2045 = vperm.xlu0 %2044, %v2042
    %v2046 = vpop.permute.xlu0 %2045
    %2047 = vset.pattern.permute.xlu0 0
    %2048 = vperm.xlu0 %2047, %v2043
    %v2049 = vpop.permute.xlu0 %2048
    %vm2050 = vcmp.eq.s32.totalorder %v2046, 1
    %vm2051 = vcmp.eq.s32.totalorder %v2049, 1
    %v2055 = vrot.slane %v2036, 2
    %v2056 = vrot.slane %v2035, 2
    %v2057 = vsel %vm793, %v2055, %v2056
    %v2058 = vrot.slane %v2037, 2
    %v2059 = vsel %vm793, %v2056, %v2058
    %v2062 = vsel %vm2050, %v2057, %v2034
    %v2063 = vsel %vm2051, %v2059, %v2035
    %2064 = vrot.lane.b32.xlu0 %v2004, 64
    %v2065 = vpop.permute.xlu0 %2064
    %2066 = vrot.lane.b32.xlu0 %v2008, 64
    %v2067 = vpop.permute.xlu0 %2066
    %v2070 = vadd.f32 %v2062, %v2065
    %v2071 = vadd.f32 %v2063, %v2067
    %v2072 = vsel %vm471, 1, 0
    %v2073 = vsel %vm472, 1, 0
    %2074 = vset.pattern.permute.xlu0 0
    %2075 = vperm.xlu0 %2074, %v2072
    %v2076 = vpop.permute.xlu0 %2075
    %2077 = vset.pattern.permute.xlu0 0
    %2078 = vperm.xlu0 %2077, %v2073
    %v2079 = vpop.permute.xlu0 %2078
    %vm2080 = vcmp.eq.s32.totalorder %v2076, 1
    %vm2081 = vcmp.eq.s32.totalorder %v2079, 1
    %v2085 = vrot.slane %v2040, 2
    %v2086 = vrot.slane %v2039, 2
    %v2087 = vsel %vm793, %v2085, %v2086
    %v2088 = vrot.slane %v2041, 2
    %v2089 = vsel %vm793, %v2086, %v2088
    %v2092 = vsel %vm2080, %v2038, %v2087
    %v2093 = vsel %vm2081, %v2039, %v2089
    %v2094 = vadd.f32 %v2070, %v2092
    %v2095 = vadd.f32 %v2071, %v2093
    %v2096 = vlaneseq
    %v2097 = vshrl.u32 %v2096, 7
    %v2098 = vsub.s32 0, %v2097
    %v2099 = vrot.slane %v1810, %v2098
    %v2100 = vadd.f32 %v2094, %v2099
    %v2101 = vadd.f32 %v2095, %v2099
    %v2102 = vmul.f32 %v2100, 0.5
    %v2103 = vmul.f32 %v2101, 0.5
    %v2104 = vmul.f32 %v2100, 0.044715
    %v2105 = vmul.f32 %v2101, 0.044715
    %v2106 = vmul.f32 %v2104, %v2100
    %v2107 = vmul.f32 %v2105, %v2101
    %v2108 = vmul.f32 %v2106, %v2100
    %v2109 = vmul.f32 %v2107, %v2101
    %v2110 = vadd.f32 %v2100, %v2108
    %v2111 = vadd.f32 %v2101, %v2109
    %v2112 = vmul.f32 %v2110, 0.7978846
    %v2113 = vmul.f32 %v2111, 0.7978846
    %v2114 = vtanh.pop %v2112
    %v2115 = vtanh.pop %v2113
    %v2116 = vadd.f32 %v2114, 1.0
    %v2117 = vadd.f32 %v2115, 1.0
    %v2118 = vmul.f32 %v2102, %v2116
    %v2119 = vmul.f32 %v2103, %v2117
    %v2120 = vpack.c.bf16 %v2119, %v2118
    %v2121 = vld [vmem:[#allocation11] sm:$0xf]
    %v2122 = vld [vmem:[#allocation11 + $0x4] sm:$0xf]
    %v2123 = vld [vmem:[#allocation11 + $0x8] sm:$0xf]
    %v2124 = vld [vmem:[#allocation11 + $0xc] sm:$0xf]
    %v2125 = vld [vmem:[#allocation11 + $0x10] sm:$0xf]
    %v2126 = vld [vmem:[#allocation11 + $0x14] sm:$0xf]
    %v2127 = vld [vmem:[#allocation11 + $0x18] sm:$0xf]
    %v2128 = vld [vmem:[#allocation11 + $0x1c] sm:$0xf]
    %v2129 = vlaneseq
    %v2130 = vshrl.u32 %v2129, 7
    %v2131 = vsub.s32 0, %v2130
    %v2132 = vrot.slane %v1811, %v2131
    %v2141 = vunpack.c.l.b16 %v2121
    %v2142 = vunpack.c.l.b16 %v2122
    %v2143 = vunpack.c.l.b16 %v2123
    %v2144 = vunpack.c.l.b16 %v2124
    %v2145 = vunpack.c.l.b16 %v2125
    %v2146 = vunpack.c.l.b16 %v2126
    %v2147 = vunpack.c.l.b16 %v2127
    %v2148 = vunpack.c.l.b16 %v2128
    %v2149 = vpack.c.b16 %v2142, %v2141
    %v2150 = vpack.c.b16 %v2144, %v2143
    %v2151 = vpack.c.b16 %v2146, %v2145
    %v2152 = vpack.c.b16 %v2148, %v2147
    %v2158 = vsel %vm553, %v2120, 0
    %2160 = vmatprep.subr.bf16.mxu0 0
    %2161 = vmatpush1.bf16.msra.mxu0 %v2149
    %2162 = vmatprep.subr.bf16.mxu0 0
    %2163 = vmatpush1.bf16.msra.mxu0 %v2150
    %2164 = vmatprep.subr.bf16.mxu0 0
    %2165 = vmatpush1.bf16.msra.mxu0 %v2151
    %2166 = vmatprep.subr.bf16.mxu0 0
    %2167 = vmatpush1.bf16.msra.mxu0 %v2152
    %2168 = vmatprep.subr.bf16.mxu0 0
    %2169 = vmatpush1.bf16.msra.mxu0 0
    %2170 = vmatprep.subr.bf16.mxu0 0
    %2171 = vmatpush1.bf16.msra.mxu0 0
    %2172 = vmatprep.subr.bf16.mxu0 0
    %2173 = vmatpush1.bf16.msra.mxu0 0
    %2174 = vmatprep.subr.bf16.mxu0 0
    %2175 = vmatpush1.bf16.msra.mxu0 0
    %2176 = vmatprep.subr.bf16.mxu0 0
    %2177 = vmatpush1.bf16.msra.mxu0 0
    %2178 = vmatprep.subr.bf16.mxu0 0
    %2179 = vmatpush1.bf16.msra.mxu0 0
    %2180 = vmatprep.subr.bf16.mxu0 0
    %2181 = vmatpush1.bf16.msra.mxu0 0
    %2182 = vmatprep.subr.bf16.mxu0 0
    %2183 = vmatpush1.bf16.msra.mxu0 0
    %2184 = vmatprep.subr.bf16.mxu0 0
    %2185 = vmatpush1.bf16.msra.mxu0 0
    %2186 = vmatprep.subr.bf16.mxu0 0
    %2187 = vmatpush1.bf16.msra.mxu0 0
    %2188 = vmatprep.subr.bf16.mxu0 0
    %2189 = vmatpush1.bf16.msra.mxu0 0
    %2190 = vmatprep.subr.bf16.mxu0 0
    %2191 = vmatpush1.bf16.msra.mxu0 0
    %2192 = vmatprep.mubr.bf16.mxu0 0
    %2193 = vmatmul.mubr.bf16.gmra.mrb[0].mxu0 %v2158
    %v2194 = vpop.f32.mrb[0].mxu0
    %v2195 = vadd.f32 %v2132, %v2194
    %v2196 = vpop.f32.mrb[0].mxu0
    %v2197 = vpop.f32.mrb[0].mxu0
    %v2198 = vadd.f32 %v2132, %v2197
    %v2199 = vpop.f32.mrb[0].mxu0
    %2200 = vdwg.mxu0
    %v2201 = vmul.f32 %v2195, 0.5
    %v2202 = vmul.f32 %v2198, 0.5
    %v2203 = vmul.f32 %v2195, 0.044715
    %v2204 = vmul.f32 %v2198, 0.044715
    %v2205 = vmul.f32 %v2203, %v2195
    %v2206 = vmul.f32 %v2204, %v2198
    %v2207 = vmul.f32 %v2205, %v2195
    %v2208 = vmul.f32 %v2206, %v2198
    %v2209 = vadd.f32 %v2195, %v2207
    %v2210 = vadd.f32 %v2198, %v2208
    %v2211 = vmul.f32 %v2209, 0.7978846
    %v2212 = vmul.f32 %v2210, 0.7978846
    %v2213 = vtanh.pop %v2211
    %v2214 = vtanh.pop %v2212
    %v2215 = vadd.f32 %v2213, 1.0
    %v2216 = vadd.f32 %v2214, 1.0
    %v2217 = vmul.f32 %v2201, %v2215
    %v2218 = vmul.f32 %v2202, %v2216
    %v2219 = vadd.f32 %v1911, %v2217
    %v2220 = vadd.f32 %v1914, %v2218
    %v2221 = vld [vmem:[#allocation15] sm:$0x1]
    %v2222 = vld [vmem:[#allocation15 + $0x1] sm:$0x1]
    %v2223 = vpack.c.bf16 %v2220, %v2219
    %v2224 = vunpack.c.l.bf16 %v2223
    %v2225 = vunpack.c.h.bf16 %v2223
    %v2226 = vsub.f32 %v2219, %v2224
    %v2227 = vsub.f32 %v2220, %v2225
    %v2228 = vpack.c.bf16 %v2227, %v2226
    %v2229 = vld [vmem:[%s67] sm:$0xf]
    %vm2230 = vcmask 130048
    %v2232 = vsel %vm2230, %v2229, 0
    %2234 = vmatprep.subr.bf16.mxu0 0
    %2235 = vmatpush1.bf16.msra.mxu0 %v2228
    %2236 = vmatprep.subr.bf16.mxu0 0
    %2237 = vmatpush1.bf16.msra.mxu0 0
    %2238 = vmatprep.subr.bf16.mxu0 0
    %2239 = vmatpush1.bf16.msra.mxu0 0
    %2240 = vmatprep.subr.bf16.mxu0 0
    %2241 = vmatpush1.bf16.msra.mxu0 0
    %2242 = vmatprep.subr.bf16.mxu0 0
    %2243 = vmatpush1.bf16.msra.mxu0 0
    %2244 = vmatprep.subr.bf16.mxu0 0
    %2245 = vmatpush1.bf16.msra.mxu0 0
    %2246 = vmatprep.subr.bf16.mxu0 0
    %2247 = vmatpush1.bf16.msra.mxu0 0
    %2248 = vmatprep.subr.bf16.mxu0 0
    %2249 = vmatpush1.bf16.msra.mxu0 0
    %2250 = vmatprep.subr.bf16.mxu0 0
    %2251 = vmatpush1.bf16.msra.mxu0 0
    %2252 = vmatprep.subr.bf16.mxu0 0
    %2253 = vmatpush1.bf16.msra.mxu0 0
    %2254 = vmatprep.subr.bf16.mxu0 0
    %2255 = vmatpush1.bf16.msra.mxu0 0
    %2256 = vmatprep.subr.bf16.mxu0 0
    %2257 = vmatpush1.bf16.msra.mxu0 0
    %2258 = vmatprep.subr.bf16.mxu0 0
    %2259 = vmatpush1.bf16.msra.mxu0 0
    %2260 = vmatprep.subr.bf16.mxu0 0
    %2261 = vmatpush1.bf16.msra.mxu0 0
    %2262 = vmatprep.subr.bf16.mxu0 0
    %2263 = vmatpush1.bf16.msra.mxu0 0
    %2264 = vmatprep.subr.bf16.mxu0 0
    %2265 = vmatpush1.bf16.msra.mxu0 0
    %2266 = vmatprep.mubr.bf16.mxu0 0
    %2267 = vmatmul.mubr.bf16.gmra.mrb[0].mxu0 %v2232
    %v2268 = vpop.f32.mrb[0].mxu0
    %v2269 = vadd.f32 0.0, %v2268
    %v2270 = vpop.f32.mrb[0].mxu0
    %v2271 = vpop.f32.mrb[0].mxu0
    %v2272 = vpop.f32.mrb[0].mxu0
    %2273 = vdwg.mxu0
    %2274 = vmatprep.subr.bf16.mxu0 0
    %2275 = vmatpush1.bf16.msra.mxu0 %v2223
    %2276 = vmatprep.subr.bf16.mxu0 0
    %2277 = vmatpush1.bf16.msra.mxu0 0
    %2278 = vmatprep.subr.bf16.mxu0 0
    %2279 = vmatpush1.bf16.msra.mxu0 0
    %2280 = vmatprep.subr.bf16.mxu0 0
    %2281 = vmatpush1.bf16.msra.mxu0 0
    %2282 = vmatprep.subr.bf16.mxu0 0
    %2283 = vmatpush1.bf16.msra.mxu0 0
    %2284 = vmatprep.subr.bf16.mxu0 0
    %2285 = vmatpush1.bf16.msra.mxu0 0
    %2286 = vmatprep.subr.bf16.mxu0 0
    %2287 = vmatpush1.bf16.msra.mxu0 0
    %2288 = vmatprep.subr.bf16.mxu0 0
    %2289 = vmatpush1.bf16.msra.mxu0 0
    %2290 = vmatprep.subr.bf16.mxu0 0
    %2291 = vmatpush1.bf16.msra.mxu0 0
    %2292 = vmatprep.subr.bf16.mxu0 0
    %2293 = vmatpush1.bf16.msra.mxu0 0
    %2294 = vmatprep.subr.bf16.mxu0 0
    %2295 = vmatpush1.bf16.msra.mxu0 0
    %2296 = vmatprep.subr.bf16.mxu0 0
    %2297 = vmatpush1.bf16.msra.mxu0 0
    %2298 = vmatprep.subr.bf16.mxu0 0
    %2299 = vmatpush1.bf16.msra.mxu0 0
    %2300 = vmatprep.subr.bf16.mxu0 0
    %2301 = vmatpush1.bf16.msra.mxu0 0
    %2302 = vmatprep.subr.bf16.mxu0 0
    %2303 = vmatpush1.bf16.msra.mxu0 0
    %2304 = vmatprep.subr.bf16.mxu0 0
    %2305 = vmatpush1.bf16.msra.mxu0 0
    %2306 = vmatprep.mubr.bf16.mxu0 0
    %2307 = vmatmul.mubr.bf16.gmra.mrb[0].mxu0 %v2232
    %v2308 = vpop.f32.mrb[0].mxu0
    %v2309 = vadd.f32 %v2269, %v2308
    %v2310 = vpop.f32.mrb[0].mxu0
    %v2311 = vpop.f32.mrb[0].mxu0
    %v2312 = vpop.f32.mrb[0].mxu0
    %2313 = vdwg.mxu0
    %v2314 = vpack.c.bf16 %v2309, %v2309
    %v2315 = vld [vmem:[%s21] sm:$0xff]
    %v2316 = vld [vmem:[%s21 + $0x8] sm:$0xff]
    %v2317 = vld [vmem:[%s21 + $0x10] sm:$0xff]
    %v2318 = vld [vmem:[%s21 + $0x18] sm:$0xff]
    %v2319 = vld [vmem:[%s21 + $0x20] sm:$0xff]
    %v2320 = vld [vmem:[%s21 + $0x28] sm:$0xff]
    %v2321 = vld [vmem:[%s21 + $0x30] sm:$0xff]
    %v2322 = vld [vmem:[%s21 + $0x38] sm:$0xff]
    %v2331 = vunpack.c.l.b16 %v2315
    %v2332 = vunpack.c.h.b16 %v2315
    %v2333 = vunpack.c.l.b16 %v2316
    %v2334 = vunpack.c.h.b16 %v2316
    %v2335 = vunpack.c.l.b16 %v2317
    %v2336 = vunpack.c.h.b16 %v2317
    %v2337 = vunpack.c.l.b16 %v2318
    %v2338 = vunpack.c.h.b16 %v2318
    %v2339 = vunpack.c.l.b16 %v2319
    %v2340 = vunpack.c.h.b16 %v2319
    %v2341 = vunpack.c.l.b16 %v2320
    %v2342 = vunpack.c.h.b16 %v2320
    %v2343 = vunpack.c.l.b16 %v2321
    %v2344 = vunpack.c.h.b16 %v2321
    %v2345 = vunpack.c.l.b16 %v2322
    %v2346 = vunpack.c.h.b16 %v2322
    %v2347 = vpack.c.b16 %v2333, %v2331
    %v2348 = vpack.c.b16 %v2334, %v2332
    %v2349 = vpack.c.b16 %v2337, %v2335
    %v2350 = vpack.c.b16 %v2338, %v2336
    %v2351 = vpack.c.b16 %v2341, %v2339
    %v2352 = vpack.c.b16 %v2342, %v2340
    %v2353 = vpack.c.b16 %v2345, %v2343
    %v2354 = vpack.c.b16 %v2346, %v2344
    %v2364 = vsel %vm553, %v2314, 0
    %2366 = vmatprep.subr.bf16.mxu0 %v2348
    %2367 = vmatpush1.bf16.msra.mxu0 %v2347
    %2368 = vmatprep.subr.bf16.mxu0 %v2350
    %2369 = vmatpush1.bf16.msra.mxu0 %v2349
    %2370 = vmatprep.subr.bf16.mxu0 %v2352
    %2371 = vmatpush1.bf16.msra.mxu0 %v2351
    %2372 = vmatprep.subr.bf16.mxu0 %v2354
    %2373 = vmatpush1.bf16.msra.mxu0 %v2353
    %2374 = vmatprep.subr.bf16.mxu0 0
    %2375 = vmatpush1.bf16.msra.mxu0 0
    %2376 = vmatprep.subr.bf16.mxu0 0
    %2377 = vmatpush1.bf16.msra.mxu0 0
    %2378 = vmatprep.subr.bf16.mxu0 0
    %2379 = vmatpush1.bf16.msra.mxu0 0
    %2380 = vmatprep.subr.bf16.mxu0 0
    %2381 = vmatpush1.bf16.msra.mxu0 0
    %2382 = vmatprep.subr.bf16.mxu0 0
    %2383 = vmatpush1.bf16.msra.mxu0 0
    %2384 = vmatprep.subr.bf16.mxu0 0
    %2385 = vmatpush1.bf16.msra.mxu0 0
    %2386 = vmatprep.subr.bf16.mxu0 0
    %2387 = vmatpush1.bf16.msra.mxu0 0
    %2388 = vmatprep.subr.bf16.mxu0 0
    %2389 = vmatpush1.bf16.msra.mxu0 0
    %2390 = vmatprep.subr.bf16.mxu0 0
    %2391 = vmatpush1.bf16.msra.mxu0 0
    %2392 = vmatprep.subr.bf16.mxu0 0
    %2393 = vmatpush1.bf16.msra.mxu0 0
    %2394 = vmatprep.subr.bf16.mxu0 0
    %2395 = vmatpush1.bf16.msra.mxu0 0
    %2396 = vmatprep.subr.bf16.mxu0 0
    %2397 = vmatpush1.bf16.msra.mxu0 0
    %2398 = vmatprep.mubr.bf16.mxu0 0
    %2399 = vmatmul.mubr.bf16.gmra.mrb[0].mxu0 %v2364
    %v2400 = vpop.f32.mrb[0].mxu0
    %v2401 = vadd.f32 0.0, %v2400
    %v2402 = vpop.f32.mrb[0].mxu0
    %v2403 = vadd.f32 0.0, %v2402
    %v2404 = vpop.f32.mrb[0].mxu0
    %v2405 = vpop.f32.mrb[0].mxu0
    %2406 = vdwg.mxu0
    %v2409 = vrot.slane %v2401, 7
    %v2410 = vrot.slane %v2403, 7
    %2413 = vst [vmem:[#allocation2] sm:$0xfe] %v2409
    %2414 = vst.msk [vmem:[#allocation2 + $0x8] sm:$0xfe] %vm705, %v2410
    %2415 = vst [vmem:[#allocation2 + $0x10] sm:$0x1] %v2409
    %2416 = vst.msk [vmem:[#allocation2 + $0x18] sm:$0x1] %vm722, %v2410
    %v2417 = vld [vmem:[#allocation2] sm:$0xff]
    %v2418 = vld [vmem:[#allocation2] sm:$0xfc]
    %v2419 = vld [vmem:[#allocation2 + $0x10] sm:$0x3]
    %v2420 = vld [vmem:[#allocation2 + $0x8] sm:$0xff]
    %v2421 = vld [vmem:[#allocation2 + $0x8] sm:$0xfc]
    %v2422 = vld [vmem:[#allocation2 + $0x18] sm:$0x3]
    %v2423 = vsel %vm456, 1, 0
    %2424 = vset.pattern.permute.xlu0 0
    %2425 = vperm.xlu0 %2424, %v2423
    %v2426 = vpop.permute.xlu0 %2425
    %vm2427 = vcmp.eq.s32.totalorder %v2426, 1
    %v2430 = vrot.slane %v2418, 2
    %v2431 = vrot.slane %v2419, 2
    %v2432 = vsel %vm793, %v2430, %v2431
    %v2434 = vsel %vm2427, %v2432, %v2417
    %2435 = vrot.lane.b32.xlu0 %v2401, 64
    %v2436 = vpop.permute.xlu0 %2435
    %v2438 = vadd.f32 %v2434, %v2436
    %v2439 = vsel %vm473, 1, 0
    %2440 = vset.pattern.permute.xlu0 0
    %2441 = vperm.xlu0 %2440, %v2439
    %v2442 = vpop.permute.xlu0 %2441
    %vm2443 = vcmp.eq.s32.totalorder %v2442, 1
    %v2446 = vrot.slane %v2421, 2
    %v2447 = vrot.slane %v2422, 2
    %v2448 = vsel %vm793, %v2446, %v2447
    %v2450 = vsel %vm2443, %v2420, %v2448
    %v2451 = vadd.f32 %v2438, %v2450
    %v2452 = vlaneseq
    %v2453 = vshrl.u32 %v2452, 7
    %v2454 = vsub.s32 0, %v2453
    %v2455 = vrot.slane %v2221, %v2454
    %v2456 = vadd.f32 %v2451, %v2455
    %v2457 = vmul.f32 %v2456, 0.5
    %v2458 = vmul.f32 %v2456, 0.044715
    %v2459 = vmul.f32 %v2458, %v2456
    %v2460 = vmul.f32 %v2459, %v2456
    %v2461 = vadd.f32 %v2456, %v2460
    %v2462 = vmul.f32 %v2461, 0.7978846
    %v2463 = vtanh.pop %v2462
    %v2464 = vadd.f32 %v2463, 1.0
    %v2465 = vmul.f32 %v2457, %v2464
    %v2466 = vpack.c.bf16 %v2465, %v2465
    %v2467 = vld [vmem:[#allocation14] sm:$0xf]
    %v2468 = vld [vmem:[#allocation14 + $0x4] sm:$0xf]
    %v2469 = vld [vmem:[#allocation14 + $0x8] sm:$0xf]
    %v2470 = vld [vmem:[#allocation14 + $0xc] sm:$0xf]
    %v2471 = vld [vmem:[#allocation14 + $0x10] sm:$0xf]
    %v2472 = vld [vmem:[#allocation14 + $0x14] sm:$0xf]
    %v2473 = vld [vmem:[#allocation14 + $0x18] sm:$0xf]
    %v2474 = vld [vmem:[#allocation14 + $0x1c] sm:$0xf]
    %v2475 = vlaneseq
    %v2476 = vshrl.u32 %v2475, 7
    %v2477 = vsub.s32 0, %v2476
    %v2478 = vrot.slane %v2222, %v2477
    %v2487 = vunpack.c.l.b16 %v2467
    %v2488 = vunpack.c.l.b16 %v2468
    %v2489 = vunpack.c.l.b16 %v2469
    %v2490 = vunpack.c.l.b16 %v2470
    %v2491 = vunpack.c.l.b16 %v2471
    %v2492 = vunpack.c.l.b16 %v2472
    %v2493 = vunpack.c.l.b16 %v2473
    %v2494 = vunpack.c.l.b16 %v2474
    %v2495 = vpack.c.b16 %v2488, %v2487
    %v2496 = vpack.c.b16 %v2490, %v2489
    %v2497 = vpack.c.b16 %v2492, %v2491
    %v2498 = vpack.c.b16 %v2494, %v2493
    %v2504 = vsel %vm553, %v2466, 0
    %2506 = vmatprep.subr.bf16.mxu0 0
    %2507 = vmatpush1.bf16.msra.mxu0 %v2495
    %2508 = vmatprep.subr.bf16.mxu0 0
    %2509 = vmatpush1.bf16.msra.mxu0 %v2496
    %2510 = vmatprep.subr.bf16.mxu0 0
    %2511 = vmatpush1.bf16.msra.mxu0 %v2497
    %2512 = vmatprep.subr.bf16.mxu0 0
    %2513 = vmatpush1.bf16.msra.mxu0 %v2498
    %2514 = vmatprep.subr.bf16.mxu0 0
    %2515 = vmatpush1.bf16.msra.mxu0 0
    %2516 = vmatprep.subr.bf16.mxu0 0
    %2517 = vmatpush1.bf16.msra.mxu0 0
    %2518 = vmatprep.subr.bf16.mxu0 0
    %2519 = vmatpush1.bf16.msra.mxu0 0
    %2520 = vmatprep.subr.bf16.mxu0 0
    %2521 = vmatpush1.bf16.msra.mxu0 0
    %2522 = vmatprep.subr.bf16.mxu0 0
    %2523 = vmatpush1.bf16.msra.mxu0 0
    %2524 = vmatprep.subr.bf16.mxu0 0
    %2525 = vmatpush1.bf16.msra.mxu0 0
    %2526 = vmatprep.subr.bf16.mxu0 0
    %2527 = vmatpush1.bf16.msra.mxu0 0
    %2528 = vmatprep.subr.bf16.mxu0 0
    %2529 = vmatpush1.bf16.msra.mxu0 0
    %2530 = vmatprep.subr.bf16.mxu0 0
    %2531 = vmatpush1.bf16.msra.mxu0 0
    %2532 = vmatprep.subr.bf16.mxu0 0
    %2533 = vmatpush1.bf16.msra.mxu0 0
    %2534 = vmatprep.subr.bf16.mxu0 0
    %2535 = vmatpush1.bf16.msra.mxu0 0
    %2536 = vmatprep.subr.bf16.mxu0 0
    %2537 = vmatpush1.bf16.msra.mxu0 0
    %2538 = vmatprep.mubr.bf16.mxu0 0
    %2539 = vmatmul.mubr.bf16.gmra.mrb[0].mxu0 %v2504
    %v2540 = vpop.f32.mrb[0].mxu0
    %v2541 = vadd.f32 %v2478, %v2540
    %v2542 = vpop.f32.mrb[0].mxu0
    %v2543 = vpop.f32.mrb[0].mxu0
    %v2544 = vpop.f32.mrb[0].mxu0
    %2545 = vdwg.mxu0
    %v2546 = vmul.f32 %v2541, 0.5
    %v2547 = vmul.f32 %v2541, 0.044715
    %v2548 = vmul.f32 %v2547, %v2541
    %v2549 = vmul.f32 %v2548, %v2541
    %v2550 = vadd.f32 %v2541, %v2549
    %v2551 = vmul.f32 %v2550, 0.7978846
    %v2552 = vtanh.pop %v2551
    %v2553 = vadd.f32 %v2552, 1.0
    %v2554 = vmul.f32 %v2546, %v2553
    %v2555 = vadd.f32 %v2309, %v2554
    %v2556 = vld [vmem:[#allocation18] sm:$0x1]
    %v2557 = vld [vmem:[#allocation18 + $0x1] sm:$0x1]
    %v2558 = vpack.c.bf16 %v2555, %v2555
    %v2559 = vunpack.c.l.bf16 %v2558
    %v2560 = vsub.f32 %v2555, %v2559
    %v2561 = vpack.c.bf16 %v2560, %v2560
    %v2562 = vld [vmem:[%s69] sm:$0x3]
    %vm2563 = vcmask 64512
    %v2565 = vsel %vm2563, %v2562, 0
    %vm2567 = vcmask 1043456
    %v2569 = vsel %vm2567, %v2561, 0
    %2571 = vmatprep.subr.bf16.mxu0 0
    %2572 = vmatpush1.bf16.msra.mxu0 %v2569
    %2573 = vmatprep.subr.bf16.mxu0 0
    %2574 = vmatpush1.bf16.msra.mxu0 0
    %2575 = vmatprep.subr.bf16.mxu0 0
    %2576 = vmatpush1.bf16.msra.mxu0 0
    %2577 = vmatprep.subr.bf16.mxu0 0
    %2578 = vmatpush1.bf16.msra.mxu0 0
    %2579 = vmatprep.subr.bf16.mxu0 0
    %2580 = vmatpush1.bf16.msra.mxu0 0
    %2581 = vmatprep.subr.bf16.mxu0 0
    %2582 = vmatpush1.bf16.msra.mxu0 0
    %2583 = vmatprep.subr.bf16.mxu0 0
    %2584 = vmatpush1.bf16.msra.mxu0 0
    %2585 = vmatprep.subr.bf16.mxu0 0
    %2586 = vmatpush1.bf16.msra.mxu0 0
    %2587 = vmatprep.subr.bf16.mxu0 0
    %2588 = vmatpush1.bf16.msra.mxu0 0
    %2589 = vmatprep.subr.bf16.mxu0 0
    %2590 = vmatpush1.bf16.msra.mxu0 0
    %2591 = vmatprep.subr.bf16.mxu0 0
    %2592 = vmatpush1.bf16.msra.mxu0 0
    %2593 = vmatprep.subr.bf16.mxu0 0
    %2594 = vmatpush1.bf16.msra.mxu0 0
    %2595 = vmatprep.subr.bf16.mxu0 0
    %2596 = vmatpush1.bf16.msra.mxu0 0
    %2597 = vmatprep.subr.bf16.mxu0 0
    %2598 = vmatpush1.bf16.msra.mxu0 0
    %2599 = vmatprep.subr.bf16.mxu0 0
    %2600 = vmatpush1.bf16.msra.mxu0 0
    %2601 = vmatprep.subr.bf16.mxu0 0
    %2602 = vmatpush1.bf16.msra.mxu0 0
    %2603 = vmatprep.mubr.bf16.mxu0 0
    %2604 = vmatmul.mubr.bf16.gmra.mrb[0].mxu0 %v2565
    %v2605 = vpop.f32.mrb[0].mxu0
    %v2606 = vadd.f32 0.0, %v2605
    %v2607 = vpop.f32.mrb[0].mxu0
    %v2608 = vpop.f32.mrb[0].mxu0
    %v2609 = vpop.f32.mrb[0].mxu0
    %2610 = vdwg.mxu0
    %v2612 = vsel %vm2567, %v2558, 0
    %2614 = vmatprep.subr.bf16.mxu0 0
    %2615 = vmatpush1.bf16.msra.mxu0 %v2612
    %2616 = vmatprep.subr.bf16.mxu0 0
    %2617 = vmatpush1.bf16.msra.mxu0 0
    %2618 = vmatprep.subr.bf16.mxu0 0
    %2619 = vmatpush1.bf16.msra.mxu0 0
    %2620 = vmatprep.subr.bf16.mxu0 0
    %2621 = vmatpush1.bf16.msra.mxu0 0
    %2622 = vmatprep.subr.bf16.mxu0 0
    %2623 = vmatpush1.bf16.msra.mxu0 0
    %2624 = vmatprep.subr.bf16.mxu0 0
    %2625 = vmatpush1.bf16.msra.mxu0 0
    %2626 = vmatprep.subr.bf16.mxu0 0
    %2627 = vmatpush1.bf16.msra.mxu0 0
    %2628 = vmatprep.subr.bf16.mxu0 0
    %2629 = vmatpush1.bf16.msra.mxu0 0
    %2630 = vmatprep.subr.bf16.mxu0 0
    %2631 = vmatpush1.bf16.msra.mxu0 0
    %2632 = vmatprep.subr.bf16.mxu0 0
    %2633 = vmatpush1.bf16.msra.mxu0 0
    %2634 = vmatprep.subr.bf16.mxu0 0
    %2635 = vmatpush1.bf16.msra.mxu0 0
    %2636 = vmatprep.subr.bf16.mxu0 0
    %2637 = vmatpush1.bf16.msra.mxu0 0
    %2638 = vmatprep.subr.bf16.mxu0 0
    %2639 = vmatpush1.bf16.msra.mxu0 0
    %2640 = vmatprep.subr.bf16.mxu0 0
    %2641 = vmatpush1.bf16.msra.mxu0 0
    %2642 = vmatprep.subr.bf16.mxu0 0
    %2643 = vmatpush1.bf16.msra.mxu0 0
    %2644 = vmatprep.subr.bf16.mxu0 0
    %2645 = vmatpush1.bf16.msra.mxu0 0
    %2646 = vmatprep.mubr.bf16.mxu0 0
    %2647 = vmatmul.mubr.bf16.gmra.mrb[0].mxu0 %v2565
    %v2648 = vpop.f32.mrb[0].mxu0
    %v2649 = vadd.f32 %v2606, %v2648
    %v2650 = vpop.f32.mrb[0].mxu0
    %v2651 = vpop.f32.mrb[0].mxu0
    %v2652 = vpop.f32.mrb[0].mxu0
    %2653 = vdwg.mxu0
    %v2654 = vpack.c.bf16 %v2649, %v2649
    %v2655 = vld [vmem:[%s27] sm:$0xff]
    %v2656 = vld [vmem:[%s27 + $0x8] sm:$0xff]
    %v2657 = vld [vmem:[%s27 + $0x10] sm:$0xff]
    %v2658 = vld [vmem:[%s27 + $0x18] sm:$0xff]
    %v2659 = vld [vmem:[%s27 + $0x20] sm:$0xff]
    %v2660 = vld [vmem:[%s27 + $0x28] sm:$0xff]
    %v2661 = vld [vmem:[%s27 + $0x30] sm:$0xff]
    %v2662 = vld [vmem:[%s27 + $0x38] sm:$0xff]
    %v2671 = vunpack.c.l.b16 %v2655
    %v2672 = vunpack.c.h.b16 %v2655
    %v2673 = vunpack.c.l.b16 %v2656
    %v2674 = vunpack.c.h.b16 %v2656
    %v2675 = vunpack.c.l.b16 %v2657
    %v2676 = vunpack.c.h.b16 %v2657
    %v2677 = vunpack.c.l.b16 %v2658
    %v2678 = vunpack.c.h.b16 %v2658
    %v2679 = vunpack.c.l.b16 %v2659
    %v2680 = vunpack.c.h.b16 %v2659
    %v2681 = vunpack.c.l.b16 %v2660
    %v2682 = vunpack.c.h.b16 %v2660
    %v2683 = vunpack.c.l.b16 %v2661
    %v2684 = vunpack.c.h.b16 %v2661
    %v2685 = vunpack.c.l.b16 %v2662
    %v2686 = vunpack.c.h.b16 %v2662
    %v2687 = vpack.c.b16 %v2673, %v2671
    %v2688 = vpack.c.b16 %v2674, %v2672
    %v2689 = vpack.c.b16 %v2677, %v2675
    %v2690 = vpack.c.b16 %v2678, %v2676
    %v2691 = vpack.c.b16 %v2681, %v2679
    %v2692 = vpack.c.b16 %v2682, %v2680
    %v2693 = vpack.c.b16 %v2685, %v2683
    %v2694 = vpack.c.b16 %v2686, %v2684
    %v2704 = vsel %vm553, %v2654, 0
    %2706 = vmatprep.subr.bf16.mxu0 %v2688
    %2707 = vmatpush1.bf16.msra.mxu0 %v2687
    %2708 = vmatprep.subr.bf16.mxu0 %v2690
    %2709 = vmatpush1.bf16.msra.mxu0 %v2689
    %2710 = vmatprep.subr.bf16.mxu0 %v2692
    %2711 = vmatpush1.bf16.msra.mxu0 %v2691
    %2712 = vmatprep.subr.bf16.mxu0 %v2694
    %2713 = vmatpush1.bf16.msra.mxu0 %v2693
    %2714 = vmatprep.subr.bf16.mxu0 0
    %2715 = vmatpush1.bf16.msra.mxu0 0
    %2716 = vmatprep.subr.bf16.mxu0 0
    %2717 = vmatpush1.bf16.msra.mxu0 0
    %2718 = vmatprep.subr.bf16.mxu0 0
    %2719 = vmatpush1.bf16.msra.mxu0 0
    %2720 = vmatprep.subr.bf16.mxu0 0
    %2721 = vmatpush1.bf16.msra.mxu0 0
    %2722 = vmatprep.subr.bf16.mxu0 0
    %2723 = vmatpush1.bf16.msra.mxu0 0
    %2724 = vmatprep.subr.bf16.mxu0 0
    %2725 = vmatpush1.bf16.msra.mxu0 0
    %2726 = vmatprep.subr.bf16.mxu0 0
    %2727 = vmatpush1.bf16.msra.mxu0 0
    %2728 = vmatprep.subr.bf16.mxu0 0
    %2729 = vmatpush1.bf16.msra.mxu0 0
    %2730 = vmatprep.subr.bf16.mxu0 0
    %2731 = vmatpush1.bf16.msra.mxu0 0
    %2732 = vmatprep.subr.bf16.mxu0 0
    %2733 = vmatpush1.bf16.msra.mxu0 0
    %2734 = vmatprep.subr.bf16.mxu0 0
    %2735 = vmatpush1.bf16.msra.mxu0 0
    %2736 = vmatprep.subr.bf16.mxu0 0
    %2737 = vmatpush1.bf16.msra.mxu0 0
    %2738 = vmatprep.mubr.bf16.mxu0 0
    %2739 = vmatmul.mubr.bf16.gmra.mrb[0].mxu0 %v2704
    %v2740 = vpop.f32.mrb[0].mxu0
    %v2741 = vadd.f32 0.0, %v2740
    %v2742 = vpop.f32.mrb[0].mxu0
    %v2743 = vadd.f32 0.0, %v2742
    %v2744 = vpop.f32.mrb[0].mxu0
    %v2745 = vpop.f32.mrb[0].mxu0
    %2746 = vdwg.mxu0
    %v2749 = vrot.slane %v2741, 7
    %v2750 = vrot.slane %v2743, 7
    %2753 = vst [vmem:[#allocation2] sm:$0x1e] %v2749
    %vm2754 = vcmask 520193
    %2755 = vst.msk [vmem:[#allocation2 + $0x8] sm:$0x1e] %vm2754, %v2750
    %v2756 = vld [vmem:[#allocation2] sm:$0xf]
    %v2757 = vld [vmem:[#allocation2] sm:$0x3c]
    %v2758 = vld [vmem:[#allocation2 + $0x8] sm:$0xf]
    %v2759 = vld [vmem:[#allocation2 + $0x8] sm:$0x3c]
    %v2760 = vsel %vm458, 1, 0
    %2761 = vset.pattern.permute.xlu0 0
    %2762 = vperm.xlu0 %2761, %v2760
    %v2763 = vpop.permute.xlu0 %2762
    %vm2764 = vcmp.eq.s32.totalorder %v2763, 1
    %v2766 = vrot.slane %v2757, 2
    %v2768 = vsel %vm2764, %v2766, %v2756
    %2769 = vrot.lane.b32.xlu0 %v2741, 64
    %v2770 = vpop.permute.xlu0 %2769
    %v2772 = vadd.f32 %v2768, %v2770
    %v2773 = vsel %vm474, 1, 0
    %2774 = vset.pattern.permute.xlu0 0
    %2775 = vperm.xlu0 %2774, %v2773
    %v2776 = vpop.permute.xlu0 %2775
    %vm2777 = vcmp.eq.s32.totalorder %v2776, 1
    %v2779 = vrot.slane %v2759, 2
    %v2781 = vsel %vm2777, %v2758, %v2779
    %v2782 = vadd.f32 %v2772, %v2781
    %v2783 = vlaneseq
    %v2784 = vshrl.u32 %v2783, 7
    %v2785 = vsub.s32 0, %v2784
    %v2786 = vrot.slane %v2556, %v2785
    %v2787 = vadd.f32 %v2782, %v2786
    %v2788 = vmul.f32 %v2787, 0.5
    %v2789 = vmul.f32 %v2787, 0.044715
    %v2790 = vmul.f32 %v2789, %v2787
    %v2791 = vmul.f32 %v2790, %v2787
    %v2792 = vadd.f32 %v2787, %v2791
    %v2793 = vmul.f32 %v2792, 0.7978846
    %v2794 = vtanh.pop %v2793
    %v2795 = vadd.f32 %v2794, 1.0
    %v2796 = vmul.f32 %v2788, %v2795
    %v2797 = vpack.c.bf16 %v2796, %v2796
    %v2798 = vld [vmem:[#allocation17] sm:$0xf]
    %v2799 = vld [vmem:[#allocation17 + $0x4] sm:$0xf]
    %v2800 = vld [vmem:[#allocation17 + $0x8] sm:$0xf]
    %v2801 = vld [vmem:[#allocation17 + $0xc] sm:$0xf]
    %v2802 = vld [vmem:[#allocation17 + $0x10] sm:$0xf]
    %v2803 = vld [vmem:[#allocation17 + $0x14] sm:$0xf]
    %v2804 = vld [vmem:[#allocation17 + $0x18] sm:$0xf]
    %v2805 = vld [vmem:[#allocation17 + $0x1c] sm:$0xf]
    %v2806 = vlaneseq
    %v2807 = vshrl.u32 %v2806, 7
    %v2808 = vsub.s32 0, %v2807
    %v2809 = vrot.slane %v2557, %v2808
    %v2818 = vunpack.c.l.b16 %v2798
    %v2819 = vunpack.c.l.b16 %v2799
    %v2820 = vunpack.c.l.b16 %v2800
    %v2821 = vunpack.c.l.b16 %v2801
    %v2822 = vunpack.c.l.b16 %v2802
    %v2823 = vunpack.c.l.b16 %v2803
    %v2824 = vunpack.c.l.b16 %v2804
    %v2825 = vunpack.c.l.b16 %v2805
    %v2826 = vpack.c.b16 %v2819, %v2818
    %v2827 = vpack.c.b16 %v2821, %v2820
    %v2828 = vpack.c.b16 %v2823, %v2822
    %v2829 = vpack.c.b16 %v2825, %v2824
    %v2835 = vsel %vm553, %v2797, 0
    %2837 = vmatprep.subr.bf16.mxu0 0
    %2838 = vmatpush1.bf16.msra.mxu0 %v2826
    %2839 = vmatprep.subr.bf16.mxu0 0
    %2840 = vmatpush1.bf16.msra.mxu0 %v2827
    %2841 = vmatprep.subr.bf16.mxu0 0
    %2842 = vmatpush1.bf16.msra.mxu0 %v2828
    %2843 = vmatprep.subr.bf16.mxu0 0
    %2844 = vmatpush1.bf16.msra.mxu0 %v2829
    %2845 = vmatprep.subr.bf16.mxu0 0
    %2846 = vmatpush1.bf16.msra.mxu0 0
    %2847 = vmatprep.subr.bf16.mxu0 0
    %2848 = vmatpush1.bf16.msra.mxu0 0
    %2849 = vmatprep.subr.bf16.mxu0 0
    %2850 = vmatpush1.bf16.msra.mxu0 0
    %2851 = vmatprep.subr.bf16.mxu0 0
    %2852 = vmatpush1.bf16.msra.mxu0 0
    %2853 = vmatprep.subr.bf16.mxu0 0
    %2854 = vmatpush1.bf16.msra.mxu0 0
    %2855 = vmatprep.subr.bf16.mxu0 0
    %2856 = vmatpush1.bf16.msra.mxu0 0
    %2857 = vmatprep.subr.bf16.mxu0 0
    %2858 = vmatpush1.bf16.msra.mxu0 0
    %2859 = vmatprep.subr.bf16.mxu0 0
    %2860 = vmatpush1.bf16.msra.mxu0 0
    %2861 = vmatprep.subr.bf16.mxu0 0
    %2862 = vmatpush1.bf16.msra.mxu0 0
    %2863 = vmatprep.subr.bf16.mxu0 0
    %2864 = vmatpush1.bf16.msra.mxu0 0
    %2865 = vmatprep.subr.bf16.mxu0 0
    %2866 = vmatpush1.bf16.msra.mxu0 0
    %2867 = vmatprep.subr.bf16.mxu0 0
    %2868 = vmatpush1.bf16.msra.mxu0 0
    %2869 = vmatprep.mubr.bf16.mxu0 0
    %2870 = vmatmul.mubr.bf16.gmra.mrb[0].mxu0 %v2835
    %v2871 = vpop.f32.mrb[0].mxu0
    %v2872 = vadd.f32 %v2809, %v2871
    %v2873 = vpop.f32.mrb[0].mxu0
    %v2874 = vpop.f32.mrb[0].mxu0
    %v2875 = vpop.f32.mrb[0].mxu0
    %2876 = vdwg.mxu0
    %v2877 = vmul.f32 %v2872, 0.5
    %v2878 = vmul.f32 %v2872, 0.044715
    %v2879 = vmul.f32 %v2878, %v2872
    %v2880 = vmul.f32 %v2879, %v2872
    %v2881 = vadd.f32 %v2872, %v2880
    %v2882 = vmul.f32 %v2881, 0.7978846
    %v2883 = vtanh.pop %v2882
    %v2884 = vadd.f32 %v2883, 1.0
    %v2885 = vmul.f32 %v2877, %v2884
    %v2886 = vadd.f32 %v2649, %v2885
    %v2887 = vld [vmem:[%s37] sm:$0x1]
    %s2888 = scalar_lea.vmem %s37, 1
    %v2889 = vld [vmem:[%s2888] ss:$2 sm:$0x3]
    %v2890 = vpack.c.bf16 %v2886, %v2886
    %v2891 = vld [vmem:[%s33] sm:$0xff]
    %v2892 = vld [vmem:[%s33 + $0x8] sm:$0xff]
    %v2893 = vld [vmem:[%s33 + $0x10] sm:$0xff]
    %v2894 = vld [vmem:[%s33 + $0x18] sm:$0xff]
    %v2895 = vld [vmem:[%s33 + $0x20] sm:$0xff]
    %v2896 = vld [vmem:[%s33 + $0x28] sm:$0xff]
    %v2897 = vld [vmem:[%s33 + $0x30] sm:$0xff]
    %v2898 = vld [vmem:[%s33 + $0x38] sm:$0xff]
    %v2907 = vunpack.c.l.b16 %v2891
    %v2908 = vunpack.c.h.b16 %v2891
    %v2909 = vunpack.c.l.b16 %v2892
    %v2910 = vunpack.c.h.b16 %v2892
    %v2911 = vunpack.c.l.b16 %v2893
    %v2912 = vunpack.c.h.b16 %v2893
    %v2913 = vunpack.c.l.b16 %v2894
    %v2914 = vunpack.c.h.b16 %v2894
    %v2915 = vunpack.c.l.b16 %v2895
    %v2916 = vunpack.c.h.b16 %v2895
    %v2917 = vunpack.c.l.b16 %v2896
    %v2918 = vunpack.c.h.b16 %v2896
    %v2919 = vunpack.c.l.b16 %v2897
    %v2920 = vunpack.c.h.b16 %v2897
    %v2921 = vunpack.c.l.b16 %v2898
    %v2922 = vunpack.c.h.b16 %v2898
    %v2923 = vpack.c.b16 %v2909, %v2907
    %v2924 = vpack.c.b16 %v2910, %v2908
    %v2925 = vpack.c.b16 %v2913, %v2911
    %v2926 = vpack.c.b16 %v2914, %v2912
    %v2927 = vpack.c.b16 %v2917, %v2915
    %v2928 = vpack.c.b16 %v2918, %v2916
    %v2929 = vpack.c.b16 %v2921, %v2919
    %v2930 = vpack.c.b16 %v2922, %v2920
    %v2940 = vsel %vm553, %v2890, 0
    %2942 = vmatprep.subr.bf16.mxu0 %v2924
    %2943 = vmatpush1.bf16.msra.mxu0 %v2923
    %2944 = vmatprep.subr.bf16.mxu0 %v2926
    %2945 = vmatpush1.bf16.msra.mxu0 %v2925
    %2946 = vmatprep.subr.bf16.mxu0 %v2928
    %2947 = vmatpush1.bf16.msra.mxu0 %v2927
    %2948 = vmatprep.subr.bf16.mxu0 %v2930
    %2949 = vmatpush1.bf16.msra.mxu0 %v2929
    %2950 = vmatprep.subr.bf16.mxu0 0
    %2951 = vmatpush1.bf16.msra.mxu0 0
    %2952 = vmatprep.subr.bf16.mxu0 0
    %2953 = vmatpush1.bf16.msra.mxu0 0
    %2954 = vmatprep.subr.bf16.mxu0 0
    %2955 = vmatpush1.bf16.msra.mxu0 0
    %2956 = vmatprep.subr.bf16.mxu0 0
    %2957 = vmatpush1.bf16.msra.mxu0 0
    %2958 = vmatprep.subr.bf16.mxu0 0
    %2959 = vmatpush1.bf16.msra.mxu0 0
    %2960 = vmatprep.subr.bf16.mxu0 0
    %2961 = vmatpush1.bf16.msra.mxu0 0
    %2962 = vmatprep.subr.bf16.mxu0 0
    %2963 = vmatpush1.bf16.msra.mxu0 0
    %2964 = vmatprep.subr.bf16.mxu0 0
    %2965 = vmatpush1.bf16.msra.mxu0 0
    %2966 = vmatprep.subr.bf16.mxu0 0
    %2967 = vmatpush1.bf16.msra.mxu0 0
    %2968 = vmatprep.subr.bf16.mxu0 0
    %2969 = vmatpush1.bf16.msra.mxu0 0
    %2970 = vmatprep.subr.bf16.mxu0 0
    %2971 = vmatpush1.bf16.msra.mxu0 0
    %2972 = vmatprep.subr.bf16.mxu0 0
    %2973 = vmatpush1.bf16.msra.mxu0 0
    %2974 = vmatprep.mubr.bf16.mxu0 0
    %2975 = vmatmul.mubr.bf16.gmra.mrb[0].mxu0 %v2940
    %v2976 = vpop.f32.mrb[0].mxu0
    %v2977 = vadd.f32 0.0, %v2976
    %v2978 = vpop.f32.mrb[0].mxu0
    %v2979 = vadd.f32 0.0, %v2978
    %v2980 = vpop.f32.mrb[0].mxu0
    %v2981 = vpop.f32.mrb[0].mxu0
    %2982 = vdwg.mxu0
    %v2985 = vrot.slane %v2977, 7
    %v2986 = vrot.slane %v2979, 7
    %2989 = vst [vmem:[#allocation2] sm:$0x1e] %v2985
    %2990 = vst.msk [vmem:[#allocation2 + $0x8] sm:$0x1e] %vm2754, %v2986
    %v2991 = vld [vmem:[#allocation2] sm:$0xf]
    %v2992 = vld [vmem:[#allocation2] sm:$0x3c]
    %v2993 = vld [vmem:[#allocation2 + $0x8] sm:$0xf]
    %v2994 = vld [vmem:[#allocation2 + $0x8] sm:$0x3c]
    %v2996 = vrot.slane %v2992, 2
    %v2998 = vsel %vm2764, %v2996, %v2991
    %2999 = vrot.lane.b32.xlu0 %v2977, 64
    %v3000 = vpop.permute.xlu0 %2999
    %v3002 = vadd.f32 %v2998, %v3000
    %v3004 = vrot.slane %v2994, 2
    %v3006 = vsel %vm2777, %v2993, %v3004
    %v3007 = vadd.f32 %v3002, %v3006
    %v3008 = vlaneseq
    %v3009 = vshrl.u32 %v3008, 7
    %v3010 = vsub.s32 0, %v3009
    %v3011 = vrot.slane %v2887, %v3010
    %v3012 = vadd.f32 %v3007, %v3011
    %v3013 = vmul.f32 %v3012, 0.5
    %v3014 = vmul.f32 %v3012, 0.044715
    %v3015 = vmul.f32 %v3014, %v3012
    %v3016 = vmul.f32 %v3015, %v3012
    %v3017 = vadd.f32 %v3012, %v3016
    %v3018 = vmul.f32 %v3017, 0.7978846
    %v3019 = vtanh.pop %v3018
    %v3020 = vadd.f32 %v3019, 1.0
    %v3021 = vmul.f32 %v3013, %v3020
    %v3022 = vadd.f32 %v3021, %v2872
    %v3023 = vpack.c.bf16 %v3022, %v3022
    %v3024 = vld [vmem:[%s35] sm:$0xff]
    %v3025 = vld [vmem:[%s35 + $0x8] sm:$0xff]
    %v3026 = vld [vmem:[%s35 + $0x10] sm:$0xff]
    %v3027 = vld [vmem:[%s35 + $0x18] sm:$0xff]
    %v3028 = vld [vmem:[%s35 + $0x20] sm:$0xff]
    %v3029 = vld [vmem:[%s35 + $0x28] sm:$0xff]
    %v3030 = vld [vmem:[%s35 + $0x30] sm:$0xff]
    %v3031 = vld [vmem:[%s35 + $0x38] sm:$0xff]
    %v3033 = vlaneseq
    %v3034 = vshrl.u32 %v3033, 7
    %v3035 = vsub.s32 0, %v3034
    %v3036 = vrot.slane %v2889, %v3035
    %v3037 = vlaneseq
    %v3038 = vshrl.u32 %v3037, 7
    %v3039 = vsub.s32 1, %v3038
    %v3040 = vrot.slane %v2889, %v3039
    %v3051 = vunpack.c.l.b16 %v3024
    %v3052 = vunpack.c.h.b16 %v3024
    %v3053 = vunpack.c.l.b16 %v3025
    %v3054 = vunpack.c.h.b16 %v3025
    %v3055 = vunpack.c.l.b16 %v3026
    %v3056 = vunpack.c.h.b16 %v3026
    %v3057 = vunpack.c.l.b16 %v3027
    %v3058 = vunpack.c.h.b16 %v3027
    %v3059 = vunpack.c.l.b16 %v3028
    %v3060 = vunpack.c.h.b16 %v3028
    %v3061 = vunpack.c.l.b16 %v3029
    %v3062 = vunpack.c.h.b16 %v3029
    %v3063 = vunpack.c.l.b16 %v3030
    %v3064 = vunpack.c.h.b16 %v3030
    %v3065 = vunpack.c.l.b16 %v3031
    %v3066 = vunpack.c.h.b16 %v3031
    %v3067 = vpack.c.b16 %v3053, %v3051
    %v3068 = vpack.c.b16 %v3054, %v3052
    %v3069 = vpack.c.b16 %v3057, %v3055
    %v3070 = vpack.c.b16 %v3058, %v3056
    %v3071 = vpack.c.b16 %v3061, %v3059
    %v3072 = vpack.c.b16 %v3062, %v3060
    %v3073 = vpack.c.b16 %v3065, %v3063
    %v3074 = vpack.c.b16 %v3066, %v3064
    %v3084 = vsel %vm553, %v3023, 0
    %3086 = vmatprep.subr.bf16.mxu0 %v3068
    %3087 = vmatpush1.bf16.msra.mxu0 %v3067
    %3088 = vmatprep.subr.bf16.mxu0 %v3070
    %3089 = vmatpush1.bf16.msra.mxu0 %v3069
    %3090 = vmatprep.subr.bf16.mxu0 %v3072
    %3091 = vmatpush1.bf16.msra.mxu0 %v3071
    %3092 = vmatprep.subr.bf16.mxu0 %v3074
    %3093 = vmatpush1.bf16.msra.mxu0 %v3073
    %3094 = vmatprep.subr.bf16.mxu0 0
    %3095 = vmatpush1.bf16.msra.mxu0 0
    %3096 = vmatprep.subr.bf16.mxu0 0
    %3097 = vmatpush1.bf16.msra.mxu0 0
    %3098 = vmatprep.subr.bf16.mxu0 0
    %3099 = vmatpush1.bf16.msra.mxu0 0
    %3100 = vmatprep.subr.bf16.mxu0 0
    %3101 = vmatpush1.bf16.msra.mxu0 0
    %3102 = vmatprep.subr.bf16.mxu0 0
    %3103 = vmatpush1.bf16.msra.mxu0 0
    %3104 = vmatprep.subr.bf16.mxu0 0
    %3105 = vmatpush1.bf16.msra.mxu0 0
    %3106 = vmatprep.subr.bf16.mxu0 0
    %3107 = vmatpush1.bf16.msra.mxu0 0
    %3108 = vmatprep.subr.bf16.mxu0 0
    %3109 = vmatpush1.bf16.msra.mxu0 0
    %3110 = vmatprep.subr.bf16.mxu0 0
    %3111 = vmatpush1.bf16.msra.mxu0 0
    %3112 = vmatprep.subr.bf16.mxu0 0
    %3113 = vmatpush1.bf16.msra.mxu0 0
    %3114 = vmatprep.subr.bf16.mxu0 0
    %3115 = vmatpush1.bf16.msra.mxu0 0
    %3116 = vmatprep.subr.bf16.mxu0 0
    %3117 = vmatpush1.bf16.msra.mxu0 0
    %3118 = vmatprep.mubr.bf16.mxu0 0
    %3119 = vmatmul.mubr.bf16.gmra.mrb[0].mxu0 %v3084
    %v3120 = vpop.f32.mrb[0].mxu0
    %v3121 = vadd.f32 %v3036, %v3120
    %v3122 = vpop.f32.mrb[0].mxu0
    %v3123 = vadd.f32 %v3040, %v3122
    %v3124 = vpop.f32.mrb[0].mxu0
    %v3125 = vpop.f32.mrb[0].mxu0
    %3126 = vdwg.mxu0
    %3127 = vst [vmem:[#allocation32] sm:$0xf] %v3121
    %v3128 = vmul.f32 %v3123, 0.5
    %v3129 = vmul.f32 %v3123, 0.044715
    %v3130 = vmul.f32 %v3129, %v3123
    %v3131 = vmul.f32 %v3130, %v3123
    %v3132 = vadd.f32 %v3123, %v3131
    %v3133 = vmul.f32 %v3132, 0.7978846
    %v3134 = vtanh.pop %v3133
    %v3135 = vadd.f32 %v3134, 1.0
    %v3136 = vmul.f32 %v3128, %v3135
    %v3137 = vadd.f32 %v2886, %v3136
    %v3138 = vpack.c.bf16 %v3137, %v3137
    %v3139 = vunpack.c.l.bf16 %v3138
    %v3140 = vsub.f32 %v3137, %v3139
    %v3141 = vpack.c.bf16 %v3140, %v3140
    %v3142 = vld [vmem:[%s71] sm:$0xf]
    %vm3143 = vcmask 31744
    %v3145 = vsel %vm3143, %v3142, 0
    %vm3147 = vcmask 1041408
    %v3149 = vsel %vm3147, %v3141, 0
    %3151 = vmatprep.subr.bf16.mxu0 0
    %3152 = vmatpush1.bf16.msra.mxu0 %v3149
    %3153 = vmatprep.subr.bf16.mxu0 0
    %3154 = vmatpush1.bf16.msra.mxu0 0
    %3155 = vmatprep.subr.bf16.mxu0 0
    %3156 = vmatpush1.bf16.msra.mxu0 0
    %3157 = vmatprep.subr.bf16.mxu0 0
    %3158 = vmatpush1.bf16.msra.mxu0 0
    %3159 = vmatprep.subr.bf16.mxu0 0
    %3160 = vmatpush1.bf16.msra.mxu0 0
    %3161 = vmatprep.subr.bf16.mxu0 0
    %3162 = vmatpush1.bf16.msra.mxu0 0
    %3163 = vmatprep.subr.bf16.mxu0 0
    %3164 = vmatpush1.bf16.msra.mxu0 0
    %3165 = vmatprep.subr.bf16.mxu0 0
    %3166 = vmatpush1.bf16.msra.mxu0 0
    %3167 = vmatprep.subr.bf16.mxu0 0
    %3168 = vmatpush1.bf16.msra.mxu0 0
    %3169 = vmatprep.subr.bf16.mxu0 0
    %3170 = vmatpush1.bf16.msra.mxu0 0
    %3171 = vmatprep.subr.bf16.mxu0 0
    %3172 = vmatpush1.bf16.msra.mxu0 0
    %3173 = vmatprep.subr.bf16.mxu0 0
    %3174 = vmatpush1.bf16.msra.mxu0 0
    %3175 = vmatprep.subr.bf16.mxu0 0
    %3176 = vmatpush1.bf16.msra.mxu0 0
    %3177 = vmatprep.subr.bf16.mxu0 0
    %3178 = vmatpush1.bf16.msra.mxu0 0
    %3179 = vmatprep.subr.bf16.mxu0 0
    %3180 = vmatpush1.bf16.msra.mxu0 0
    %3181 = vmatprep.subr.bf16.mxu0 0
    %3182 = vmatpush1.bf16.msra.mxu0 0
    %3183 = vmatprep.mubr.bf16.mxu0 0
    %3184 = vmatmul.mubr.bf16.gmra.mrb[0].mxu0 %v3145
    %v3185 = vpop.f32.mrb[0].mxu0
    %v3186 = vadd.f32 0.0, %v3185
    %v3187 = vpop.f32.mrb[0].mxu0
    %v3188 = vpop.f32.mrb[0].mxu0
    %v3189 = vpop.f32.mrb[0].mxu0
    %3190 = vdwg.mxu0
    %v3192 = vsel %vm3147, %v3138, 0
    %3194 = vmatprep.subr.bf16.mxu0 0
    %3195 = vmatpush1.bf16.msra.mxu0 %v3192
    %3196 = vmatprep.subr.bf16.mxu0 0
    %3197 = vmatpush1.bf16.msra.mxu0 0
    %3198 = vmatprep.subr.bf16.mxu0 0
    %3199 = vmatpush1.bf16.msra.mxu0 0
    %3200 = vmatprep.subr.bf16.mxu0 0
    %3201 = vmatpush1.bf16.msra.mxu0 0
    %3202 = vmatprep.subr.bf16.mxu0 0
    %3203 = vmatpush1.bf16.msra.mxu0 0
    %3204 = vmatprep.subr.bf16.mxu0 0
    %3205 = vmatpush1.bf16.msra.mxu0 0
    %3206 = vmatprep.subr.bf16.mxu0 0
    %3207 = vmatpush1.bf16.msra.mxu0 0
    %3208 = vmatprep.subr.bf16.mxu0 0
    %3209 = vmatpush1.bf16.msra.mxu0 0
    %3210 = vmatprep.subr.bf16.mxu0 0
    %3211 = vmatpush1.bf16.msra.mxu0 0
    %3212 = vmatprep.subr.bf16.mxu0 0
    %3213 = vmatpush1.bf16.msra.mxu0 0
    %3214 = vmatprep.subr.bf16.mxu0 0
    %3215 = vmatpush1.bf16.msra.mxu0 0
    %3216 = vmatprep.subr.bf16.mxu0 0
    %3217 = vmatpush1.bf16.msra.mxu0 0
    %3218 = vmatprep.subr.bf16.mxu0 0
    %3219 = vmatpush1.bf16.msra.mxu0 0
    %3220 = vmatprep.subr.bf16.mxu0 0
    %3221 = vmatpush1.bf16.msra.mxu0 0
    %3222 = vmatprep.subr.bf16.mxu0 0
    %3223 = vmatpush1.bf16.msra.mxu0 0
    %3224 = vmatprep.subr.bf16.mxu0 0
    %3225 = vmatpush1.bf16.msra.mxu0 0
    %3226 = vmatprep.mubr.bf16.mxu0 0
    %3227 = vmatmul.mubr.bf16.gmra.mrb[0].mxu0 %v3145
    %v3228 = vpop.f32.mrb[0].mxu0
    %v3229 = vadd.f32 %v3186, %v3228
    %v3230 = vpop.f32.mrb[0].mxu0
    %v3231 = vpop.f32.mrb[0].mxu0
    %v3232 = vpop.f32.mrb[0].mxu0
    %3233 = vdwg.mxu0
    %v3234 = vld [vmem:[#allocation23] sm:$0x1]
    %s3235 = scalar_lea.vmem [#allocation23], 1
    %v3236 = vld [vmem:[%s3235] ss:$2 sm:$0x3]
    %v3237 = vpack.c.bf16 %v3229, %v3229
    %v3238 = vld [vmem:[#allocation20] sm:$0xff]
    %v3239 = vld [vmem:[#allocation20 + $0x8] sm:$0xff]
    %v3240 = vld [vmem:[#allocation20 + $0x10] sm:$0xff]
    %v3241 = vld [vmem:[#allocation20 + $0x18] sm:$0xff]
    %v3242 = vld [vmem:[#allocation20 + $0x20] sm:$0xff]
    %v3243 = vld [vmem:[#allocation20 + $0x28] sm:$0xff]
    %v3244 = vld [vmem:[#allocation20 + $0x30] sm:$0xff]
    %v3245 = vld [vmem:[#allocation20 + $0x38] sm:$0xff]
    %v3254 = vunpack.c.l.b16 %v3238
    %v3255 = vunpack.c.h.b16 %v3238
    %v3256 = vunpack.c.l.b16 %v3239
    %v3257 = vunpack.c.h.b16 %v3239
    %v3258 = vunpack.c.l.b16 %v3240
    %v3259 = vunpack.c.h.b16 %v3240
    %v3260 = vunpack.c.l.b16 %v3241
    %v3261 = vunpack.c.h.b16 %v3241
    %v3262 = vunpack.c.l.b16 %v3242
    %v3263 = vunpack.c.h.b16 %v3242
    %v3264 = vunpack.c.l.b16 %v3243
    %v3265 = vunpack.c.h.b16 %v3243
    %v3266 = vunpack.c.l.b16 %v3244
    %v3267 = vunpack.c.h.b16 %v3244
    %v3268 = vunpack.c.l.b16 %v3245
    %v3269 = vunpack.c.h.b16 %v3245
    %v3270 = vpack.c.b16 %v3256, %v3254
    %v3271 = vpack.c.b16 %v3257, %v3255
    %v3272 = vpack.c.b16 %v3260, %v3258
    %v3273 = vpack.c.b16 %v3261, %v3259
    %v3274 = vpack.c.b16 %v3264, %v3262
    %v3275 = vpack.c.b16 %v3265, %v3263
    %v3276 = vpack.c.b16 %v3268, %v3266
    %v3277 = vpack.c.b16 %v3269, %v3267
    %v3287 = vsel %vm553, %v3237, 0
    %3289 = vmatprep.subr.bf16.mxu0 %v3271
    %3290 = vmatpush1.bf16.msra.mxu0 %v3270
    %3291 = vmatprep.subr.bf16.mxu0 %v3273
    %3292 = vmatpush1.bf16.msra.mxu0 %v3272
    %3293 = vmatprep.subr.bf16.mxu0 %v3275
    %3294 = vmatpush1.bf16.msra.mxu0 %v3274
    %3295 = vmatprep.subr.bf16.mxu0 %v3277
    %3296 = vmatpush1.bf16.msra.mxu0 %v3276
    %3297 = vmatprep.subr.bf16.mxu0 0
    %3298 = vmatpush1.bf16.msra.mxu0 0
    %3299 = vmatprep.subr.bf16.mxu0 0
    %3300 = vmatpush1.bf16.msra.mxu0 0
    %3301 = vmatprep.subr.bf16.mxu0 0
    %3302 = vmatpush1.bf16.msra.mxu0 0
    %3303 = vmatprep.subr.bf16.mxu0 0
    %3304 = vmatpush1.bf16.msra.mxu0 0
    %3305 = vmatprep.subr.bf16.mxu0 0
    %3306 = vmatpush1.bf16.msra.mxu0 0
    %3307 = vmatprep.subr.bf16.mxu0 0
    %3308 = vmatpush1.bf16.msra.mxu0 0
    %3309 = vmatprep.subr.bf16.mxu0 0
    %3310 = vmatpush1.bf16.msra.mxu0 0
    %3311 = vmatprep.subr.bf16.mxu0 0
    %3312 = vmatpush1.bf16.msra.mxu0 0
    %3313 = vmatprep.subr.bf16.mxu0 0
    %3314 = vmatpush1.bf16.msra.mxu0 0
    %3315 = vmatprep.subr.bf16.mxu0 0
    %3316 = vmatpush1.bf16.msra.mxu0 0
    %3317 = vmatprep.subr.bf16.mxu0 0
    %3318 = vmatpush1.bf16.msra.mxu0 0
    %3319 = vmatprep.subr.bf16.mxu0 0
    %3320 = vmatpush1.bf16.msra.mxu0 0
    %3321 = vmatprep.mubr.bf16.mxu0 0
    %3322 = vmatmul.mubr.bf16.gmra.mrb[0].mxu0 %v3287
    %v3323 = vpop.f32.mrb[0].mxu0
    %v3324 = vadd.f32 0.0, %v3323
    %v3325 = vpop.f32.mrb[0].mxu0
    %v3326 = vadd.f32 0.0, %v3325
    %v3327 = vpop.f32.mrb[0].mxu0
    %v3328 = vpop.f32.mrb[0].mxu0
    %3329 = vdwg.mxu0
    %v3332 = vrot.slane %v3324, 7
    %v3333 = vrot.slane %v3326, 7
    %3336 = vst [vmem:[#allocation2] sm:$0xfe] %v3332
    %3337 = vst.msk [vmem:[#allocation2 + $0x8] sm:$0xfe] %vm705, %v3333
    %3338 = vst [vmem:[#allocation2 + $0x10] sm:$0x1] %v3332
    %3339 = vst.msk [vmem:[#allocation2 + $0x18] sm:$0x1] %vm722, %v3333
    %v3340 = vld [vmem:[#allocation2] sm:$0xff]
    %v3341 = vld [vmem:[#allocation2] sm:$0xfc]
    %v3342 = vld [vmem:[#allocation2 + $0x10] sm:$0x3]
    %v3343 = vld [vmem:[#allocation2 + $0x8] sm:$0xff]
    %v3344 = vld [vmem:[#allocation2 + $0x8] sm:$0xfc]
    %v3345 = vld [vmem:[#allocation2 + $0x18] sm:$0x3]
    %v3348 = vrot.slane %v3341, 2
    %v3349 = vrot.slane %v3342, 2
    %v3350 = vsel %vm793, %v3348, %v3349
    %v3352 = vsel %vm2427, %v3350, %v3340
    %3353 = vrot.lane.b32.xlu0 %v3324, 64
    %v3354 = vpop.permute.xlu0 %3353
    %v3356 = vadd.f32 %v3352, %v3354
    %v3359 = vrot.slane %v3344, 2
    %v3360 = vrot.slane %v3345, 2
    %v3361 = vsel %vm793, %v3359, %v3360
    %v3363 = vsel %vm2443, %v3343, %v3361
    %v3364 = vadd.f32 %v3356, %v3363
    %v3365 = vlaneseq
    %v3366 = vshrl.u32 %v3365, 7
    %v3367 = vsub.s32 0, %v3366
    %v3368 = vrot.slane %v3234, %v3367
    %v3369 = vadd.f32 %v3364, %v3368
    %v3370 = vmul.f32 %v3369, 0.5
    %v3371 = vmul.f32 %v3369, 0.044715
    %v3372 = vmul.f32 %v3371, %v3369
    %v3373 = vmul.f32 %v3372, %v3369
    %v3374 = vadd.f32 %v3369, %v3373
    %v3375 = vmul.f32 %v3374, 0.7978846
    %v3376 = vtanh.pop %v3375
    %v3377 = vadd.f32 %v3376, 1.0
    %v3378 = vmul.f32 %v3370, %v3377
    %v3379 = vadd.f32 %v3378, %v2541
    %v3380 = vpack.c.bf16 %v3379, %v3379
    %v3381 = vld [vmem:[#allocation21] sm:$0xff]
    %v3382 = vld [vmem:[#allocation21 + $0x8] sm:$0xff]
    %v3383 = vld [vmem:[#allocation21 + $0x10] sm:$0xff]
    %v3384 = vld [vmem:[#allocation21 + $0x18] sm:$0xff]
    %v3385 = vld [vmem:[#allocation21 + $0x20] sm:$0xff]
    %v3386 = vld [vmem:[#allocation21 + $0x28] sm:$0xff]
    %v3387 = vld [vmem:[#allocation21 + $0x30] sm:$0xff]
    %v3388 = vld [vmem:[#allocation21 + $0x38] sm:$0xff]
    %v3390 = vlaneseq
    %v3391 = vshrl.u32 %v3390, 7
    %v3392 = vsub.s32 0, %v3391
    %v3393 = vrot.slane %v3236, %v3392
    %v3394 = vlaneseq
    %v3395 = vshrl.u32 %v3394, 7
    %v3396 = vsub.s32 1, %v3395
    %v3397 = vrot.slane %v3236, %v3396
    %v3408 = vunpack.c.l.b16 %v3381
    %v3409 = vunpack.c.h.b16 %v3381
    %v3410 = vunpack.c.l.b16 %v3382
    %v3411 = vunpack.c.h.b16 %v3382
    %v3412 = vunpack.c.l.b16 %v3383
    %v3413 = vunpack.c.h.b16 %v3383
    %v3414 = vunpack.c.l.b16 %v3384
    %v3415 = vunpack.c.h.b16 %v3384
    %v3416 = vunpack.c.l.b16 %v3385
    %v3417 = vunpack.c.h.b16 %v3385
    %v3418 = vunpack.c.l.b16 %v3386
    %v3419 = vunpack.c.h.b16 %v3386
    %v3420 = vunpack.c.l.b16 %v3387
    %v3421 = vunpack.c.h.b16 %v3387
    %v3422 = vunpack.c.l.b16 %v3388
    %v3423 = vunpack.c.h.b16 %v3388
    %v3424 = vpack.c.b16 %v3410, %v3408
    %v3425 = vpack.c.b16 %v3411, %v3409
    %v3426 = vpack.c.b16 %v3414, %v3412
    %v3427 = vpack.c.b16 %v3415, %v3413
    %v3428 = vpack.c.b16 %v3418, %v3416
    %v3429 = vpack.c.b16 %v3419, %v3417
    %v3430 = vpack.c.b16 %v3422, %v3420
    %v3431 = vpack.c.b16 %v3423, %v3421
    %v3441 = vsel %vm553, %v3380, 0
    %3443 = vmatprep.subr.bf16.mxu0 %v3425
    %3444 = vmatpush1.bf16.msra.mxu0 %v3424
    %3445 = vmatprep.subr.bf16.mxu0 %v3427
    %3446 = vmatpush1.bf16.msra.mxu0 %v3426
    %3447 = vmatprep.subr.bf16.mxu0 %v3429
    %3448 = vmatpush1.bf16.msra.mxu0 %v3428
    %3449 = vmatprep.subr.bf16.mxu0 %v3431
    %3450 = vmatpush1.bf16.msra.mxu0 %v3430
    %3451 = vmatprep.subr.bf16.mxu0 0
    %3452 = vmatpush1.bf16.msra.mxu0 0
    %3453 = vmatprep.subr.bf16.mxu0 0
    %3454 = vmatpush1.bf16.msra.mxu0 0
    %3455 = vmatprep.subr.bf16.mxu0 0
    %3456 = vmatpush1.bf16.msra.mxu0 0
    %3457 = vmatprep.subr.bf16.mxu0 0
    %3458 = vmatpush1.bf16.msra.mxu0 0
    %3459 = vmatprep.subr.bf16.mxu0 0
    %3460 = vmatpush1.bf16.msra.mxu0 0
    %3461 = vmatprep.subr.bf16.mxu0 0
    %3462 = vmatpush1.bf16.msra.mxu0 0
    %3463 = vmatprep.subr.bf16.mxu0 0
    %3464 = vmatpush1.bf16.msra.mxu0 0
    %3465 = vmatprep.subr.bf16.mxu0 0
    %3466 = vmatpush1.bf16.msra.mxu0 0
    %3467 = vmatprep.subr.bf16.mxu0 0
    %3468 = vmatpush1.bf16.msra.mxu0 0
    %3469 = vmatprep.subr.bf16.mxu0 0
    %3470 = vmatpush1.bf16.msra.mxu0 0
    %3471 = vmatprep.subr.bf16.mxu0 0
    %3472 = vmatpush1.bf16.msra.mxu0 0
    %3473 = vmatprep.subr.bf16.mxu0 0
    %3474 = vmatpush1.bf16.msra.mxu0 0
    %3475 = vmatprep.mubr.bf16.mxu0 0
    %3476 = vmatmul.mubr.bf16.gmra.mrb[0].mxu0 %v3441
    %v3477 = vpop.f32.mrb[0].mxu0
    %v3478 = vadd.f32 %v3393, %v3477
    %v3479 = vpop.f32.mrb[0].mxu0
    %v3480 = vadd.f32 %v3397, %v3479
    %v3481 = vpop.f32.mrb[0].mxu0
    %v3482 = vpop.f32.mrb[0].mxu0
    %3483 = vdwg.mxu0
    %3484 = vst [vmem:[#allocation33] sm:$0xff] %v3478
    %v3485 = vmul.f32 %v3480, 0.5
    %v3486 = vmul.f32 %v3480, 0.044715
    %v3487 = vmul.f32 %v3486, %v3480
    %v3488 = vmul.f32 %v3487, %v3480
    %v3489 = vadd.f32 %v3480, %v3488
    %v3490 = vmul.f32 %v3489, 0.7978846
    %v3491 = vtanh.pop %v3490
    %v3492 = vadd.f32 %v3491, 1.0
    %v3493 = vmul.f32 %v3485, %v3492
    %v3494 = vadd.f32 %v3229, %v3493
    %v3495 = vpack.c.bf16 %v3494, %v3494
    %v3496 = vunpack.c.l.bf16 %v3495
    %v3497 = vsub.f32 %v3494, %v3496
    %v3498 = vpack.c.bf16 %v3497, %v3497
    %v3499 = vld [vmem:[%s73] sm:$0xf]
    %v3500 = vld [vmem:[%s73 + $0x4] sm:$0xf]
    %v3503 = vunpack.c.l.b16 %v3499
    %v3504 = vunpack.c.l.b16 %v3500
    %v3505 = vpack.c.b16 %v3504, %v3503
    %v3507 = vsel %vm2563, %v3505, 0
    %v3510 = vsel %vm2567, %v3498, 0
    %3512 = vmatprep.subr.bf16.mxu0 0
    %3513 = vmatpush1.bf16.msra.mxu0 %v3510
    %3514 = vmatprep.subr.bf16.mxu0 0
    %3515 = vmatpush1.bf16.msra.mxu0 0
    %3516 = vmatprep.subr.bf16.mxu0 0
    %3517 = vmatpush1.bf16.msra.mxu0 0
    %3518 = vmatprep.subr.bf16.mxu0 0
    %3519 = vmatpush1.bf16.msra.mxu0 0
    %3520 = vmatprep.subr.bf16.mxu0 0
    %3521 = vmatpush1.bf16.msra.mxu0 0
    %3522 = vmatprep.subr.bf16.mxu0 0
    %3523 = vmatpush1.bf16.msra.mxu0 0
    %3524 = vmatprep.subr.bf16.mxu0 0
    %3525 = vmatpush1.bf16.msra.mxu0 0
    %3526 = vmatprep.subr.bf16.mxu0 0
    %3527 = vmatpush1.bf16.msra.mxu0 0
    %3528 = vmatprep.subr.bf16.mxu0 0
    %3529 = vmatpush1.bf16.msra.mxu0 0
    %3530 = vmatprep.subr.bf16.mxu0 0
    %3531 = vmatpush1.bf16.msra.mxu0 0
    %3532 = vmatprep.subr.bf16.mxu0 0
    %3533 = vmatpush1.bf16.msra.mxu0 0
    %3534 = vmatprep.subr.bf16.mxu0 0
    %3535 = vmatpush1.bf16.msra.mxu0 0
    %3536 = vmatprep.subr.bf16.mxu0 0
    %3537 = vmatpush1.bf16.msra.mxu0 0
    %3538 = vmatprep.subr.bf16.mxu0 0
    %3539 = vmatpush1.bf16.msra.mxu0 0
    %3540 = vmatprep.subr.bf16.mxu0 0
    %3541 = vmatpush1.bf16.msra.mxu0 0
    %3542 = vmatprep.subr.bf16.mxu0 0
    %3543 = vmatpush1.bf16.msra.mxu0 0
    %3544 = vmatprep.mubr.bf16.mxu0 0
    %3545 = vmatmul.mubr.bf16.gmra.mrb[0].mxu0 %v3507
    %v3546 = vpop.f32.mrb[0].mxu0
    %v3547 = vadd.f32 0.0, %v3546
    %v3548 = vpop.f32.mrb[0].mxu0
    %v3549 = vpop.f32.mrb[0].mxu0
    %v3550 = vadd.f32 0.0, %v3549
    %v3551 = vpop.f32.mrb[0].mxu0
    %3552 = vdwg.mxu0
    %v3554 = vsel %vm2567, %v3495, 0
    %3556 = vmatprep.subr.bf16.mxu0 0
    %3557 = vmatpush1.bf16.msra.mxu0 %v3554
    %3558 = vmatprep.subr.bf16.mxu0 0
    %3559 = vmatpush1.bf16.msra.mxu0 0
    %3560 = vmatprep.subr.bf16.mxu0 0
    %3561 = vmatpush1.bf16.msra.mxu0 0
    %3562 = vmatprep.subr.bf16.mxu0 0
    %3563 = vmatpush1.bf16.msra.mxu0 0
    %3564 = vmatprep.subr.bf16.mxu0 0
    %3565 = vmatpush1.bf16.msra.mxu0 0
    %3566 = vmatprep.subr.bf16.mxu0 0
    %3567 = vmatpush1.bf16.msra.mxu0 0
    %3568 = vmatprep.subr.bf16.mxu0 0
    %3569 = vmatpush1.bf16.msra.mxu0 0
    %3570 = vmatprep.subr.bf16.mxu0 0
    %3571 = vmatpush1.bf16.msra.mxu0 0
    %3572 = vmatprep.subr.bf16.mxu0 0
    %3573 = vmatpush1.bf16.msra.mxu0 0
    %3574 = vmatprep.subr.bf16.mxu0 0
    %3575 = vmatpush1.bf16.msra.mxu0 0
    %3576 = vmatprep.subr.bf16.mxu0 0
    %3577 = vmatpush1.bf16.msra.mxu0 0
    %3578 = vmatprep.subr.bf16.mxu0 0
    %3579 = vmatpush1.bf16.msra.mxu0 0
    %3580 = vmatprep.subr.bf16.mxu0 0
    %3581 = vmatpush1.bf16.msra.mxu0 0
    %3582 = vmatprep.subr.bf16.mxu0 0
    %3583 = vmatpush1.bf16.msra.mxu0 0
    %3584 = vmatprep.subr.bf16.mxu0 0
    %3585 = vmatpush1.bf16.msra.mxu0 0
    %3586 = vmatprep.subr.bf16.mxu0 0
    %3587 = vmatpush1.bf16.msra.mxu0 0
    %3588 = vmatprep.mubr.bf16.mxu0 0
    %3589 = vmatmul.mubr.bf16.gmra.mrb[0].mxu0 %v3507
    %v3590 = vpop.f32.mrb[0].mxu0
    %v3591 = vadd.f32 %v3547, %v3590
    %v3592 = vpop.f32.mrb[0].mxu0
    %v3593 = vpop.f32.mrb[0].mxu0
    %v3594 = vadd.f32 %v3550, %v3593
    %v3595 = vpop.f32.mrb[0].mxu0
    %3596 = vdwg.mxu0
    %v3597 = vld [vmem:[%s49] sm:$0x1]
    %s3598 = scalar_lea.vmem %s49, 1
    %v3599 = vld [vmem:[%s3598] ss:$2 sm:$0x3]
    %v3600 = vpack.c.bf16 %v3594, %v3591
    %v3601 = vld [vmem:[#allocation24] sm:$0xff]
    %v3602 = vld [vmem:[#allocation24 + $0x8] sm:$0xff]
    %v3603 = vld [vmem:[#allocation24 + $0x10] sm:$0xff]
    %v3604 = vld [vmem:[#allocation24 + $0x18] sm:$0xff]
    %v3605 = vld [vmem:[#allocation24 + $0x20] sm:$0xff]
    %v3606 = vld [vmem:[#allocation24 + $0x28] sm:$0xff]
    %v3607 = vld [vmem:[#allocation24 + $0x30] sm:$0xff]
    %v3608 = vld [vmem:[#allocation24 + $0x38] sm:$0xff]
    %v3617 = vunpack.c.l.b16 %v3601
    %v3618 = vunpack.c.h.b16 %v3601
    %v3619 = vunpack.c.l.b16 %v3602
    %v3620 = vunpack.c.h.b16 %v3602
    %v3621 = vunpack.c.l.b16 %v3603
    %v3622 = vunpack.c.h.b16 %v3603
    %v3623 = vunpack.c.l.b16 %v3604
    %v3624 = vunpack.c.h.b16 %v3604
    %v3625 = vunpack.c.l.b16 %v3605
    %v3626 = vunpack.c.h.b16 %v3605
    %v3627 = vunpack.c.l.b16 %v3606
    %v3628 = vunpack.c.h.b16 %v3606
    %v3629 = vunpack.c.l.b16 %v3607
    %v3630 = vunpack.c.h.b16 %v3607
    %v3631 = vunpack.c.l.b16 %v3608
    %v3632 = vunpack.c.h.b16 %v3608
    %v3633 = vpack.c.b16 %v3619, %v3617
    %v3634 = vpack.c.b16 %v3620, %v3618
    %v3635 = vpack.c.b16 %v3623, %v3621
    %v3636 = vpack.c.b16 %v3624, %v3622
    %v3637 = vpack.c.b16 %v3627, %v3625
    %v3638 = vpack.c.b16 %v3628, %v3626
    %v3639 = vpack.c.b16 %v3631, %v3629
    %v3640 = vpack.c.b16 %v3632, %v3630
    %v3650 = vsel %vm553, %v3600, 0
    %3652 = vmatprep.subr.bf16.mxu0 %v3634
    %3653 = vmatpush1.bf16.msra.mxu0 %v3633
    %3654 = vmatprep.subr.bf16.mxu0 %v3636
    %3655 = vmatpush1.bf16.msra.mxu0 %v3635
    %3656 = vmatprep.subr.bf16.mxu0 %v3638
    %3657 = vmatpush1.bf16.msra.mxu0 %v3637
    %3658 = vmatprep.subr.bf16.mxu0 %v3640
    %3659 = vmatpush1.bf16.msra.mxu0 %v3639
    %3660 = vmatprep.subr.bf16.mxu0 0
    %3661 = vmatpush1.bf16.msra.mxu0 0
    %3662 = vmatprep.subr.bf16.mxu0 0
    %3663 = vmatpush1.bf16.msra.mxu0 0
    %3664 = vmatprep.subr.bf16.mxu0 0
    %3665 = vmatpush1.bf16.msra.mxu0 0
    %3666 = vmatprep.subr.bf16.mxu0 0
    %3667 = vmatpush1.bf16.msra.mxu0 0
    %3668 = vmatprep.subr.bf16.mxu0 0
    %3669 = vmatpush1.bf16.msra.mxu0 0
    %3670 = vmatprep.subr.bf16.mxu0 0
    %3671 = vmatpush1.bf16.msra.mxu0 0
    %3672 = vmatprep.subr.bf16.mxu0 0
    %3673 = vmatpush1.bf16.msra.mxu0 0
    %3674 = vmatprep.subr.bf16.mxu0 0
    %3675 = vmatpush1.bf16.msra.mxu0 0
    %3676 = vmatprep.subr.bf16.mxu0 0
    %3677 = vmatpush1.bf16.msra.mxu0 0
    %3678 = vmatprep.subr.bf16.mxu0 0
    %3679 = vmatpush1.bf16.msra.mxu0 0
    %3680 = vmatprep.subr.bf16.mxu0 0
    %3681 = vmatpush1.bf16.msra.mxu0 0
    %3682 = vmatprep.subr.bf16.mxu0 0
    %3683 = vmatpush1.bf16.msra.mxu0 0
    %3684 = vmatprep.mubr.bf16.mxu0 0
    %3685 = vmatmul.mubr.bf16.gmra.mrb[0].mxu0 %v3650
    %v3686 = vpop.f32.mrb[0].mxu0
    %v3687 = vadd.f32 0.0, %v3686
    %v3688 = vpop.f32.mrb[0].mxu0
    %v3689 = vadd.f32 0.0, %v3688
    %v3690 = vpop.f32.mrb[0].mxu0
    %v3691 = vadd.f32 0.0, %v3690
    %v3692 = vpop.f32.mrb[0].mxu0
    %v3693 = vadd.f32 0.0, %v3692
    %3694 = vdwg.mxu0
    %v3699 = vrot.slane %v3687, 7
    %v3700 = vrot.slane %v3689, 7
    %v3701 = vrot.slane %v3691, 7
    %v3702 = vsel %vm655, %v3699, %v3701
    %v3703 = vrot.slane %v3693, 7
    %v3704 = vsel %vm655, %v3700, %v3703
    %3711 = vst [vmem:[#allocation2] sm:$0xfe] %v3699
    %3712 = vst.msk [vmem:[#allocation2 + $0x8] sm:$0xfe] %vm705, %v3700
    %3713 = vst [vmem:[#allocation2 + $0x10] sm:$0xff] %v3702
    %3714 = vst.msk [vmem:[#allocation2 + $0x18] sm:$0xff] %vm553, %v3704
    %3715 = vst [vmem:[#allocation2 + $0x20] sm:$0x1] %v3701
    %3716 = vst.msk [vmem:[#allocation2 + $0x28] sm:$0x1] %vm722, %v3703
    %v3717 = vld [vmem:[#allocation2] sm:$0xff]
    %v3718 = vld [vmem:[#allocation2 + $0x10] sm:$0xff]
    %v3719 = vld [vmem:[#allocation2] sm:$0xfc]
    %v3720 = vld [vmem:[#allocation2 + $0x20] sm:$0x3]
    %v3721 = vld [vmem:[#allocation2 + $0x8] sm:$0xff]
    %v3722 = vld [vmem:[#allocation2 + $0x18] sm:$0xff]
    %v3723 = vld [vmem:[#allocation2 + $0x8] sm:$0xfc]
    %v3724 = vld [vmem:[#allocation2 + $0x28] sm:$0x3]
    %v3728 = vrot.slane %v3719, 2
    %v3729 = vrot.slane %v3718, 2
    %v3730 = vsel %vm793, %v3728, %v3729
    %v3731 = vrot.slane %v3720, 2
    %v3732 = vsel %vm793, %v3729, %v3731
    %v3735 = vsel %vm2050, %v3730, %v3717
    %v3736 = vsel %vm2051, %v3732, %v3718
    %3737 = vrot.lane.b32.xlu0 %v3687, 64
    %v3738 = vpop.permute.xlu0 %3737
    %3739 = vrot.lane.b32.xlu0 %v3691, 64
    %v3740 = vpop.permute.xlu0 %3739
    %v3743 = vadd.f32 %v3735, %v3738
    %v3744 = vadd.f32 %v3736, %v3740
    %v3748 = vrot.slane %v3723, 2
    %v3749 = vrot.slane %v3722, 2
    %v3750 = vsel %vm793, %v3748, %v3749
    %v3751 = vrot.slane %v3724, 2
    %v3752 = vsel %vm793, %v3749, %v3751
    %v3755 = vsel %vm2080, %v3721, %v3750
    %v3756 = vsel %vm2081, %v3722, %v3752
    %v3757 = vadd.f32 %v3743, %v3755
    %v3758 = vadd.f32 %v3744, %v3756
    %v3759 = vlaneseq
    %v3760 = vshrl.u32 %v3759, 7
    %v3761 = vsub.s32 0, %v3760
    %v3762 = vrot.slane %v3597, %v3761
    %v3763 = vadd.f32 %v3757, %v3762
    %v3764 = vadd.f32 %v3758, %v3762
    %v3765 = vmul.f32 %v3763, 0.5
    %v3766 = vmul.f32 %v3764, 0.5
    %v3767 = vmul.f32 %v3763, 0.044715
    %v3768 = vmul.f32 %v3764, 0.044715
    %v3769 = vmul.f32 %v3767, %v3763
    %v3770 = vmul.f32 %v3768, %v3764
    %v3771 = vmul.f32 %v3769, %v3763
    %v3772 = vmul.f32 %v3770, %v3764
    %v3773 = vadd.f32 %v3763, %v3771
    %v3774 = vadd.f32 %v3764, %v3772
    %v3775 = vmul.f32 %v3773, 0.7978846
    %v3776 = vmul.f32 %v3774, 0.7978846
    %v3777 = vtanh.pop %v3775
    %v3778 = vtanh.pop %v3776
    %v3779 = vadd.f32 %v3777, 1.0
    %v3780 = vadd.f32 %v3778, 1.0
    %v3781 = vmul.f32 %v3765, %v3779
    %v3782 = vmul.f32 %v3766, %v3780
    %v3783 = vadd.f32 %v3781, %v2195
    %v3784 = vadd.f32 %v3782, %v2198
    %v3785 = vpack.c.bf16 %v3784, %v3783
    %v3786 = vld [vmem:[#allocation26] sm:$0xff]
    %v3787 = vld [vmem:[#allocation26 + $0x8] sm:$0xff]
    %v3788 = vld [vmem:[#allocation26 + $0x10] sm:$0xff]
    %v3789 = vld [vmem:[#allocation26 + $0x18] sm:$0xff]
    %v3790 = vld [vmem:[#allocation26 + $0x20] sm:$0xff]
    %v3791 = vld [vmem:[#allocation26 + $0x28] sm:$0xff]
    %v3792 = vld [vmem:[#allocation26 + $0x30] sm:$0xff]
    %v3793 = vld [vmem:[#allocation26 + $0x38] sm:$0xff]
    %v3795 = vlaneseq
    %v3796 = vshrl.u32 %v3795, 7
    %v3797 = vsub.s32 0, %v3796
    %v3798 = vrot.slane %v3599, %v3797
    %v3799 = vlaneseq
    %v3800 = vshrl.u32 %v3799, 7
    %v3801 = vsub.s32 1, %v3800
    %v3802 = vrot.slane %v3599, %v3801
    %v3813 = vunpack.c.l.b16 %v3786
    %v3814 = vunpack.c.h.b16 %v3786
    %v3815 = vunpack.c.l.b16 %v3787
    %v3816 = vunpack.c.h.b16 %v3787
    %v3817 = vunpack.c.l.b16 %v3788
    %v3818 = vunpack.c.h.b16 %v3788
    %v3819 = vunpack.c.l.b16 %v3789
    %v3820 = vunpack.c.h.b16 %v3789
    %v3821 = vunpack.c.l.b16 %v3790
    %v3822 = vunpack.c.h.b16 %v3790
    %v3823 = vunpack.c.l.b16 %v3791
    %v3824 = vunpack.c.h.b16 %v3791
    %v3825 = vunpack.c.l.b16 %v3792
    %v3826 = vunpack.c.h.b16 %v3792
    %v3827 = vunpack.c.l.b16 %v3793
    %v3828 = vunpack.c.h.b16 %v3793
    %v3829 = vpack.c.b16 %v3815, %v3813
    %v3830 = vpack.c.b16 %v3816, %v3814
    %v3831 = vpack.c.b16 %v3819, %v3817
    %v3832 = vpack.c.b16 %v3820, %v3818
    %v3833 = vpack.c.b16 %v3823, %v3821
    %v3834 = vpack.c.b16 %v3824, %v3822
    %v3835 = vpack.c.b16 %v3827, %v3825
    %v3836 = vpack.c.b16 %v3828, %v3826
    %v3846 = vsel %vm553, %v3785, 0
    %3848 = vmatprep.subr.bf16.mxu0 %v3830
    %3849 = vmatpush1.bf16.msra.mxu0 %v3829
    %3850 = vmatprep.subr.bf16.mxu0 %v3832
    %3851 = vmatpush1.bf16.msra.mxu0 %v3831
    %3852 = vmatprep.subr.bf16.mxu0 %v3834
    %3853 = vmatpush1.bf16.msra.mxu0 %v3833
    %3854 = vmatprep.subr.bf16.mxu0 %v3836
    %3855 = vmatpush1.bf16.msra.mxu0 %v3835
    %3856 = vmatprep.subr.bf16.mxu0 0
    %3857 = vmatpush1.bf16.msra.mxu0 0
    %3858 = vmatprep.subr.bf16.mxu0 0
    %3859 = vmatpush1.bf16.msra.mxu0 0
    %3860 = vmatprep.subr.bf16.mxu0 0
    %3861 = vmatpush1.bf16.msra.mxu0 0
    %3862 = vmatprep.subr.bf16.mxu0 0
    %3863 = vmatpush1.bf16.msra.mxu0 0
    %3864 = vmatprep.subr.bf16.mxu0 0
    %3865 = vmatpush1.bf16.msra.mxu0 0
    %3866 = vmatprep.subr.bf16.mxu0 0
    %3867 = vmatpush1.bf16.msra.mxu0 0
    %3868 = vmatprep.subr.bf16.mxu0 0
    %3869 = vmatpush1.bf16.msra.mxu0 0
    %3870 = vmatprep.subr.bf16.mxu0 0
    %3871 = vmatpush1.bf16.msra.mxu0 0
    %3872 = vmatprep.subr.bf16.mxu0 0
    %3873 = vmatpush1.bf16.msra.mxu0 0
    %3874 = vmatprep.subr.bf16.mxu0 0
    %3875 = vmatpush1.bf16.msra.mxu0 0
    %3876 = vmatprep.subr.bf16.mxu0 0
    %3877 = vmatpush1.bf16.msra.mxu0 0
    %3878 = vmatprep.subr.bf16.mxu0 0
    %3879 = vmatpush1.bf16.msra.mxu0 0
    %3880 = vmatprep.mubr.bf16.mxu0 0
    %3881 = vmatmul.mubr.bf16.gmra.mrb[0].mxu0 %v3846
    %v3882 = vpop.f32.mrb[0].mxu0
    %v3883 = vadd.f32 %v3798, %v3882
    %v3884 = vpop.f32.mrb[0].mxu0
    %v3885 = vadd.f32 %v3802, %v3884
    %v3886 = vpop.f32.mrb[0].mxu0
    %v3887 = vadd.f32 %v3798, %v3886
    %v3888 = vpop.f32.mrb[0].mxu0
    %v3889 = vadd.f32 %v3802, %v3888
    %3890 = vdwg.mxu0
    %3891 = vst [vmem:[#allocation35] sm:$0xff] %v3883
    %3892 = vst [vmem:[#allocation35 + $0x8] sm:$0xff] %v3887
    %v3893 = vmul.f32 %v3885, 0.5
    %v3894 = vmul.f32 %v3889, 0.5
    %v3895 = vmul.f32 %v3885, 0.044715
    %v3896 = vmul.f32 %v3889, 0.044715
    %v3897 = vmul.f32 %v3895, %v3885
    %v3898 = vmul.f32 %v3896, %v3889
    %v3899 = vmul.f32 %v3897, %v3885
    %v3900 = vmul.f32 %v3898, %v3889
    %v3901 = vadd.f32 %v3885, %v3899
    %v3902 = vadd.f32 %v3889, %v3900
    %v3903 = vmul.f32 %v3901, 0.7978846
    %v3904 = vmul.f32 %v3902, 0.7978846
    %v3905 = vtanh.pop %v3903
    %v3906 = vtanh.pop %v3904
    %v3907 = vadd.f32 %v3905, 1.0
    %v3908 = vadd.f32 %v3906, 1.0
    %v3909 = vmul.f32 %v3893, %v3907
    %v3910 = vmul.f32 %v3894, %v3908
    %v3911 = vadd.f32 %v3591, %v3909
    %v3912 = vadd.f32 %v3594, %v3910
    %v3913 = vpack.c.bf16 %v3912, %v3911
    %v3914 = vunpack.c.l.bf16 %v3913
    %v3915 = vunpack.c.h.bf16 %v3913
    %v3916 = vsub.f32 %v3911, %v3914
    %v3917 = vsub.f32 %v3912, %v3915
    %v3918 = vpack.c.bf16 %v3917, %v3916
    %v3919 = vld [vmem:[%s75] sm:$0xf]
    %v3920 = vld [vmem:[%s75 + $0x4] sm:$0xf]
    %v3921 = vld [vmem:[%s75 + $0x8] sm:$0xf]
    %v3922 = vld [vmem:[%s75 + $0xc] sm:$0xf]
    %v3927 = vunpack.c.l.b16 %v3919
    %v3928 = vunpack.c.l.b16 %v3920
    %v3929 = vunpack.c.l.b16 %v3921
    %v3930 = vunpack.c.l.b16 %v3922
    %v3931 = vpack.c.b16 %v3928, %v3927
    %v3932 = vpack.c.b16 %v3930, %v3929
    %v3934 = vsel %vm2230, %v3931, 0
    %v3937 = vsel %vm2230, %v3932, 0
    %3939 = vmatprep.subr.bf16.mxu0 0
    %3940 = vmatpush1.bf16.msra.mxu0 %v3918
    %3941 = vmatprep.subr.bf16.mxu0 0
    %3942 = vmatpush1.bf16.msra.mxu0 0
    %3943 = vmatprep.subr.bf16.mxu0 0
    %3944 = vmatpush1.bf16.msra.mxu0 0
    %3945 = vmatprep.subr.bf16.mxu0 0
    %3946 = vmatpush1.bf16.msra.mxu0 0
    %3947 = vmatprep.subr.bf16.mxu0 0
    %3948 = vmatpush1.bf16.msra.mxu0 0
    %3949 = vmatprep.subr.bf16.mxu0 0
    %3950 = vmatpush1.bf16.msra.mxu0 0
    %3951 = vmatprep.subr.bf16.mxu0 0
    %3952 = vmatpush1.bf16.msra.mxu0 0
    %3953 = vmatprep.subr.bf16.mxu0 0
    %3954 = vmatpush1.bf16.msra.mxu0 0
    %3955 = vmatprep.subr.bf16.mxu0 0
    %3956 = vmatpush1.bf16.msra.mxu0 0
    %3957 = vmatprep.subr.bf16.mxu0 0
    %3958 = vmatpush1.bf16.msra.mxu0 0
    %3959 = vmatprep.subr.bf16.mxu0 0
    %3960 = vmatpush1.bf16.msra.mxu0 0
    %3961 = vmatprep.subr.bf16.mxu0 0
    %3962 = vmatpush1.bf16.msra.mxu0 0
    %3963 = vmatprep.subr.bf16.mxu0 0
    %3964 = vmatpush1.bf16.msra.mxu0 0
    %3965 = vmatprep.subr.bf16.mxu0 0
    %3966 = vmatpush1.bf16.msra.mxu0 0
    %3967 = vmatprep.subr.bf16.mxu0 0
    %3968 = vmatpush1.bf16.msra.mxu0 0
    %3969 = vmatprep.subr.bf16.mxu0 0
    %3970 = vmatpush1.bf16.msra.mxu0 0
    %3971 = vmatprep.mubr.bf16.mxu0 0
    %3972 = vmatmul.mubr.bf16.gmra.mrb[0].mxu0 %v3934
    %v3973 = vpop.f32.mrb[0].mxu0
    %v3974 = vadd.f32 0.0, %v3973
    %v3975 = vpop.f32.mrb[0].mxu0
    %v3976 = vpop.f32.mrb[0].mxu0
    %v3977 = vadd.f32 0.0, %v3976
    %v3978 = vpop.f32.mrb[0].mxu0
    %3979 = vmatprep.mubr.bf16.mxu0 0
    %3980 = vmatmul.mubr.bf16.gmra.mrb[0].mxu0 %v3937
    %v3981 = vpop.f32.mrb[0].mxu0
    %v3982 = vadd.f32 0.0, %v3981
    %v3983 = vpop.f32.mrb[0].mxu0
    %v3984 = vpop.f32.mrb[0].mxu0
    %v3985 = vadd.f32 0.0, %v3984
    %v3986 = vpop.f32.mrb[0].mxu0
    %3987 = vdwg.mxu0
    %3988 = vmatprep.subr.bf16.mxu0 0
    %3989 = vmatpush1.bf16.msra.mxu0 %v3913
    %3990 = vmatprep.subr.bf16.mxu0 0
    %3991 = vmatpush1.bf16.msra.mxu0 0
    %3992 = vmatprep.subr.bf16.mxu0 0
    %3993 = vmatpush1.bf16.msra.mxu0 0
    %3994 = vmatprep.subr.bf16.mxu0 0
    %3995 = vmatpush1.bf16.msra.mxu0 0
    %3996 = vmatprep.subr.bf16.mxu0 0
    %3997 = vmatpush1.bf16.msra.mxu0 0
    %3998 = vmatprep.subr.bf16.mxu0 0
    %3999 = vmatpush1.bf16.msra.mxu0 0
    %4000 = vmatprep.subr.bf16.mxu0 0
    %4001 = vmatpush1.bf16.msra.mxu0 0
    %4002 = vmatprep.subr.bf16.mxu0 0
    %4003 = vmatpush1.bf16.msra.mxu0 0
    %4004 = vmatprep.subr.bf16.mxu0 0
    %4005 = vmatpush1.bf16.msra.mxu0 0
    %4006 = vmatprep.subr.bf16.mxu0 0
    %4007 = vmatpush1.bf16.msra.mxu0 0
    %4008 = vmatprep.subr.bf16.mxu0 0
    %4009 = vmatpush1.bf16.msra.mxu0 0
    %4010 = vmatprep.subr.bf16.mxu0 0
    %4011 = vmatpush1.bf16.msra.mxu0 0
    %4012 = vmatprep.subr.bf16.mxu0 0
    %4013 = vmatpush1.bf16.msra.mxu0 0
    %4014 = vmatprep.subr.bf16.mxu0 0
    %4015 = vmatpush1.bf16.msra.mxu0 0
    %4016 = vmatprep.subr.bf16.mxu0 0
    %4017 = vmatpush1.bf16.msra.mxu0 0
    %4018 = vmatprep.subr.bf16.mxu0 0
    %4019 = vmatpush1.bf16.msra.mxu0 0
    %4020 = vmatprep.mubr.bf16.mxu0 0
    %4021 = vmatmul.mubr.bf16.gmra.mrb[0].mxu0 %v3934
    %v4022 = vpop.f32.mrb[0].mxu0
    %v4023 = vadd.f32 %v3974, %v4022
    %v4024 = vpop.f32.mrb[0].mxu0
    %v4025 = vpop.f32.mrb[0].mxu0
    %v4026 = vadd.f32 %v3977, %v4025
    %v4027 = vpop.f32.mrb[0].mxu0
    %4028 = vmatprep.mubr.bf16.mxu0 0
    %4029 = vmatmul.mubr.bf16.gmra.mrb[0].mxu0 %v3937
    %v4030 = vpop.f32.mrb[0].mxu0
    %v4031 = vadd.f32 %v3982, %v4030
    %v4032 = vpop.f32.mrb[0].mxu0
    %v4033 = vpop.f32.mrb[0].mxu0
    %v4034 = vadd.f32 %v3985, %v4033
    %v4035 = vpop.f32.mrb[0].mxu0
    %4036 = vdwg.mxu0
    %v4037 = vld [vmem:[%s55] sm:$0x1]
    %s4038 = scalar_lea.vmem %s55, 1
    %v4039 = vld [vmem:[%s4038] ss:$2 sm:$0x3]
    %v4040 = vpack.c.bf16 %v4026, %v4023
    %v4041 = vpack.c.bf16 %v4034, %v4031
    %v4042 = vld [vmem:[#allocation27] sm:$0xff]
    %v4043 = vld [vmem:[#allocation27 + $0x8] sm:$0xff]
    %v4044 = vld [vmem:[#allocation27 + $0x10] sm:$0xff]
    %v4045 = vld [vmem:[#allocation27 + $0x18] sm:$0xff]
    %v4046 = vld [vmem:[#allocation27 + $0x20] sm:$0xff]
    %v4047 = vld [vmem:[#allocation27 + $0x28] sm:$0xff]
    %v4048 = vld [vmem:[#allocation27 + $0x30] sm:$0xff]
    %v4049 = vld [vmem:[#allocation27 + $0x38] sm:$0xff]
    %v4058 = vunpack.c.l.b16 %v4042
    %v4059 = vunpack.c.h.b16 %v4042
    %v4060 = vunpack.c.l.b16 %v4043
    %v4061 = vunpack.c.h.b16 %v4043
    %v4062 = vunpack.c.l.b16 %v4044
    %v4063 = vunpack.c.h.b16 %v4044
    %v4064 = vunpack.c.l.b16 %v4045
    %v4065 = vunpack.c.h.b16 %v4045
    %v4066 = vunpack.c.l.b16 %v4046
    %v4067 = vunpack.c.h.b16 %v4046
    %v4068 = vunpack.c.l.b16 %v4047
    %v4069 = vunpack.c.h.b16 %v4047
    %v4070 = vunpack.c.l.b16 %v4048
    %v4071 = vunpack.c.h.b16 %v4048
    %v4072 = vunpack.c.l.b16 %v4049
    %v4073 = vunpack.c.h.b16 %v4049
    %v4074 = vpack.c.b16 %v4060, %v4058
    %v4075 = vpack.c.b16 %v4061, %v4059
    %v4076 = vpack.c.b16 %v4064, %v4062
    %v4077 = vpack.c.b16 %v4065, %v4063
    %v4078 = vpack.c.b16 %v4068, %v4066
    %v4079 = vpack.c.b16 %v4069, %v4067
    %v4080 = vpack.c.b16 %v4072, %v4070
    %v4081 = vpack.c.b16 %v4073, %v4071
    %v4091 = vsel %vm553, %v4040, 0
    %v4094 = vsel %vm553, %v4041, 0
    %4096 = vmatprep.subr.bf16.mxu0 %v4075
    %4097 = vmatpush1.bf16.msra.mxu0 %v4074
    %4098 = vmatprep.subr.bf16.mxu0 %v4077
    %4099 = vmatpush1.bf16.msra.mxu0 %v4076
    %4100 = vmatprep.subr.bf16.mxu0 %v4079
    %4101 = vmatpush1.bf16.msra.mxu0 %v4078
    %4102 = vmatprep.subr.bf16.mxu0 %v4081
    %4103 = vmatpush1.bf16.msra.mxu0 %v4080
    %4104 = vmatprep.subr.bf16.mxu0 0
    %4105 = vmatpush1.bf16.msra.mxu0 0
    %4106 = vmatprep.subr.bf16.mxu0 0
    %4107 = vmatpush1.bf16.msra.mxu0 0
    %4108 = vmatprep.subr.bf16.mxu0 0
    %4109 = vmatpush1.bf16.msra.mxu0 0
    %4110 = vmatprep.subr.bf16.mxu0 0
    %4111 = vmatpush1.bf16.msra.mxu0 0
    %4112 = vmatprep.subr.bf16.mxu0 0
    %4113 = vmatpush1.bf16.msra.mxu0 0
    %4114 = vmatprep.subr.bf16.mxu0 0
    %4115 = vmatpush1.bf16.msra.mxu0 0
    %4116 = vmatprep.subr.bf16.mxu0 0
    %4117 = vmatpush1.bf16.msra.mxu0 0
    %4118 = vmatprep.subr.bf16.mxu0 0
    %4119 = vmatpush1.bf16.msra.mxu0 0
    %4120 = vmatprep.subr.bf16.mxu0 0
    %4121 = vmatpush1.bf16.msra.mxu0 0
    %4122 = vmatprep.subr.bf16.mxu0 0
    %4123 = vmatpush1.bf16.msra.mxu0 0
    %4124 = vmatprep.subr.bf16.mxu0 0
    %4125 = vmatpush1.bf16.msra.mxu0 0
    %4126 = vmatprep.subr.bf16.mxu0 0
    %4127 = vmatpush1.bf16.msra.mxu0 0
    %4128 = vmatprep.mubr.bf16.mxu0 0
    %4129 = vmatmul.mubr.bf16.gmra.mrb[0].mxu0 %v4091
    %v4130 = vpop.f32.mrb[0].mxu0
    %v4131 = vadd.f32 0.0, %v4130
    %v4132 = vpop.f32.mrb[0].mxu0
    %v4133 = vadd.f32 0.0, %v4132
    %v4134 = vpop.f32.mrb[0].mxu0
    %v4135 = vadd.f32 0.0, %v4134
    %v4136 = vpop.f32.mrb[0].mxu0
    %v4137 = vadd.f32 0.0, %v4136
    %4138 = vmatprep.mubr.bf16.mxu0 0
    %4139 = vmatmul.mubr.bf16.gmra.mrb[0].mxu0 %v4094
    %v4140 = vpop.f32.mrb[0].mxu0
    %v4141 = vadd.f32 0.0, %v4140
    %v4142 = vpop.f32.mrb[0].mxu0
    %v4143 = vadd.f32 0.0, %v4142
    %v4144 = vpop.f32.mrb[0].mxu0
    %v4145 = vadd.f32 0.0, %v4144
    %v4146 = vpop.f32.mrb[0].mxu0
    %v4147 = vadd.f32 0.0, %v4146
    %4148 = vdwg.mxu0
    %v4157 = vrot.slane %v4131, 7
    %v4158 = vrot.slane %v4133, 7
    %v4159 = vrot.slane %v4135, 7
    %v4160 = vsel %vm655, %v4157, %v4159
    %v4161 = vrot.slane %v4137, 7
    %v4162 = vsel %vm655, %v4158, %v4161
    %v4163 = vrot.slane %v4141, 7
    %v4164 = vsel %vm655, %v4159, %v4163
    %v4165 = vrot.slane %v4143, 7
    %v4166 = vsel %vm655, %v4161, %v4165
    %v4167 = vrot.slane %v4145, 7
    %v4168 = vsel %vm655, %v4163, %v4167
    %v4169 = vrot.slane %v4147, 7
    %v4170 = vsel %vm655, %v4165, %v4169
    %4181 = vst [vmem:[#allocation2] sm:$0xfe] %v4157
    %4182 = vst.msk [vmem:[#allocation2 + $0x8] sm:$0xfe] %vm705, %v4158
    %4183 = vst [vmem:[#allocation2 + $0x10] sm:$0xff] %v4160
    %4184 = vst.msk [vmem:[#allocation2 + $0x18] sm:$0xff] %vm553, %v4162
    %4185 = vst [vmem:[#allocation2 + $0x20] sm:$0xff] %v4164
    %4186 = vst.msk [vmem:[#allocation2 + $0x28] sm:$0xff] %vm553, %v4166
    %4187 = vst [vmem:[#allocation2 + $0x30] sm:$0xff] %v4168
    %4188 = vst.msk [vmem:[#allocation2 + $0x38] sm:$0xff] %vm553, %v4170
    %4189 = vst [vmem:[#allocation2 + $0x40] sm:$0x1] %v4167
    %4190 = vst.msk [vmem:[#allocation2 + $0x48] sm:$0x1] %vm722, %v4169
    %v4191 = vld [vmem:[#allocation2] sm:$0xff]
    %v4192 = vld [vmem:[#allocation2 + $0x10] sm:$0xff]
    %v4193 = vld [vmem:[#allocation2 + $0x20] sm:$0xff]
    %v4194 = vld [vmem:[#allocation2 + $0x30] sm:$0xff]
    %v4195 = vld [vmem:[#allocation2] sm:$0xfc]
    %v4196 = vld [vmem:[#allocation2 + $0x40] sm:$0x3]
    %v4197 = vld [vmem:[#allocation2 + $0x8] sm:$0xff]
    %v4198 = vld [vmem:[#allocation2 + $0x18] sm:$0xff]
    %v4199 = vld [vmem:[#allocation2 + $0x28] sm:$0xff]
    %v4200 = vld [vmem:[#allocation2 + $0x38] sm:$0xff]
    %v4201 = vld [vmem:[#allocation2 + $0x8] sm:$0xfc]
    %v4202 = vld [vmem:[#allocation2 + $0x48] sm:$0x3]
    %v4208 = vrot.slane %v4195, 2
    %v4209 = vrot.slane %v4192, 2
    %v4210 = vsel %vm793, %v4208, %v4209
    %v4211 = vrot.slane %v4193, 2
    %v4212 = vsel %vm793, %v4209, %v4211
    %v4213 = vrot.slane %v4194, 2
    %v4214 = vsel %vm793, %v4211, %v4213
    %v4215 = vrot.slane %v4196, 2
    %v4216 = vsel %vm793, %v4213, %v4215
    %v4221 = vsel %vm1545, %v4210, %v4191
    %v4222 = vsel %vm1546, %v4212, %v4192
    %v4223 = vsel %vm1547, %v4214, %v4193
    %v4224 = vsel %vm1548, %v4216, %v4194
    %4225 = vrot.lane.b32.xlu0 %v4131, 64
    %v4226 = vpop.permute.xlu0 %4225
    %4227 = vrot.lane.b32.xlu0 %v4135, 64
    %v4228 = vpop.permute.xlu0 %4227
    %4229 = vrot.lane.b32.xlu0 %v4141, 64
    %v4230 = vpop.permute.xlu0 %4229
    %4231 = vrot.lane.b32.xlu0 %v4145, 64
    %v4232 = vpop.permute.xlu0 %4231
    %v4237 = vadd.f32 %v4221, %v4226
    %v4238 = vadd.f32 %v4222, %v4228
    %v4239 = vadd.f32 %v4223, %v4230
    %v4240 = vadd.f32 %v4224, %v4232
    %v4246 = vrot.slane %v4201, 2
    %v4247 = vrot.slane %v4198, 2
    %v4248 = vsel %vm793, %v4246, %v4247
    %v4249 = vrot.slane %v4199, 2
    %v4250 = vsel %vm793, %v4247, %v4249
    %v4251 = vrot.slane %v4200, 2
    %v4252 = vsel %vm793, %v4249, %v4251
    %v4253 = vrot.slane %v4202, 2
    %v4254 = vsel %vm793, %v4251, %v4253
    %v4259 = vsel %vm1603, %v4197, %v4248
    %v4260 = vsel %vm1604, %v4198, %v4250
    %v4261 = vsel %vm1605, %v4199, %v4252
    %v4262 = vsel %vm1606, %v4200, %v4254
    %v4263 = vadd.f32 %v4237, %v4259
    %v4264 = vadd.f32 %v4238, %v4260
    %v4265 = vadd.f32 %v4239, %v4261
    %v4266 = vadd.f32 %v4240, %v4262
    %v4267 = vlaneseq
    %v4268 = vshrl.u32 %v4267, 7
    %v4269 = vsub.s32 0, %v4268
    %v4270 = vrot.slane %v4037, %v4269
    %v4271 = vadd.f32 %v4263, %v4270
    %v4272 = vadd.f32 %v4264, %v4270
    %v4273 = vadd.f32 %v4265, %v4270
    %v4274 = vadd.f32 %v4266, %v4270
    %v4275 = vmul.f32 %v4271, 0.5
    %v4276 = vmul.f32 %v4272, 0.5
    %v4277 = vmul.f32 %v4273, 0.5
    %v4278 = vmul.f32 %v4274, 0.5
    %v4279 = vmul.f32 %v4271, 0.044715
    %v4280 = vmul.f32 %v4272, 0.044715
    %v4281 = vmul.f32 %v4273, 0.044715
    %v4282 = vmul.f32 %v4274, 0.044715
    %v4283 = vmul.f32 %v4279, %v4271
    %v4284 = vmul.f32 %v4280, %v4272
    %v4285 = vmul.f32 %v4281, %v4273
    %v4286 = vmul.f32 %v4282, %v4274
    %v4287 = vmul.f32 %v4283, %v4271
    %v4288 = vmul.f32 %v4284, %v4272
    %v4289 = vmul.f32 %v4285, %v4273
    %v4290 = vmul.f32 %v4286, %v4274
    %v4291 = vadd.f32 %v4271, %v4287
    %v4292 = vadd.f32 %v4272, %v4288
    %v4293 = vadd.f32 %v4273, %v4289
    %v4294 = vadd.f32 %v4274, %v4290
    %v4295 = vmul.f32 %v4291, 0.7978846
    %v4296 = vmul.f32 %v4292, 0.7978846
    %v4297 = vmul.f32 %v4293, 0.7978846
    %v4298 = vmul.f32 %v4294, 0.7978846
    %v4299 = vtanh.pop %v4295
    %v4300 = vtanh.pop %v4296
    %v4301 = vtanh.pop %v4297
    %v4302 = vtanh.pop %v4298
    %v4303 = vadd.f32 %v4299, 1.0
    %v4304 = vadd.f32 %v4300, 1.0
    %v4305 = vadd.f32 %v4301, 1.0
    %v4306 = vadd.f32 %v4302, 1.0
    %v4307 = vmul.f32 %v4275, %v4303
    %v4308 = vmul.f32 %v4276, %v4304
    %v4309 = vmul.f32 %v4277, %v4305
    %v4310 = vmul.f32 %v4278, %v4306
    %v4311 = vadd.f32 %v4307, %v1756
    %v4312 = vadd.f32 %v4308, %v1759
    %v4313 = vadd.f32 %v4309, %v1764
    %v4314 = vadd.f32 %v4310, %v1767
    %v4315 = vpack.c.bf16 %v4312, %v4311
    %v4316 = vpack.c.bf16 %v4314, %v4313
    %v4317 = vld [vmem:[#allocation29] sm:$0xff]
    %v4318 = vld [vmem:[#allocation29 + $0x8] sm:$0xff]
    %v4319 = vld [vmem:[#allocation29 + $0x10] sm:$0xff]
    %v4320 = vld [vmem:[#allocation29 + $0x18] sm:$0xff]
    %v4321 = vld [vmem:[#allocation29 + $0x20] sm:$0xff]
    %v4322 = vld [vmem:[#allocation29 + $0x28] sm:$0xff]
    %v4323 = vld [vmem:[#allocation29 + $0x30] sm:$0xff]
    %v4324 = vld [vmem:[#allocation29 + $0x38] sm:$0xff]
    %v4326 = vlaneseq
    %v4327 = vshrl.u32 %v4326, 7
    %v4328 = vsub.s32 0, %v4327
    %v4329 = vrot.slane %v4039, %v4328
    %v4330 = vlaneseq
    %v4331 = vshrl.u32 %v4330, 7
    %v4332 = vsub.s32 1, %v4331
    %v4333 = vrot.slane %v4039, %v4332
    %v4344 = vunpack.c.l.b16 %v4317
    %v4345 = vunpack.c.h.b16 %v4317
    %v4346 = vunpack.c.l.b16 %v4318
    %v4347 = vunpack.c.h.b16 %v4318
    %v4348 = vunpack.c.l.b16 %v4319
    %v4349 = vunpack.c.h.b16 %v4319
    %v4350 = vunpack.c.l.b16 %v4320
    %v4351 = vunpack.c.h.b16 %v4320
    %v4352 = vunpack.c.l.b16 %v4321
    %v4353 = vunpack.c.h.b16 %v4321
    %v4354 = vunpack.c.l.b16 %v4322
    %v4355 = vunpack.c.h.b16 %v4322
    %v4356 = vunpack.c.l.b16 %v4323
    %v4357 = vunpack.c.h.b16 %v4323
    %v4358 = vunpack.c.l.b16 %v4324
    %v4359 = vunpack.c.h.b16 %v4324
    %v4360 = vpack.c.b16 %v4346, %v4344
    %v4361 = vpack.c.b16 %v4347, %v4345
    %v4362 = vpack.c.b16 %v4350, %v4348
    %v4363 = vpack.c.b16 %v4351, %v4349
    %v4364 = vpack.c.b16 %v4354, %v4352
    %v4365 = vpack.c.b16 %v4355, %v4353
    %v4366 = vpack.c.b16 %v4358, %v4356
    %v4367 = vpack.c.b16 %v4359, %v4357
    %v4377 = vsel %vm553, %v4315, 0
    %v4380 = vsel %vm553, %v4316, 0
    %4382 = vmatprep.subr.bf16.mxu0 %v4361
    %4383 = vmatpush1.bf16.msra.mxu0 %v4360
    %4384 = vmatprep.subr.bf16.mxu0 %v4363
    %4385 = vmatpush1.bf16.msra.mxu0 %v4362
    %4386 = vmatprep.subr.bf16.mxu0 %v4365
    %4387 = vmatpush1.bf16.msra.mxu0 %v4364
    %4388 = vmatprep.subr.bf16.mxu0 %v4367
    %4389 = vmatpush1.bf16.msra.mxu0 %v4366
    %4390 = vmatprep.subr.bf16.mxu0 0
    %4391 = vmatpush1.bf16.msra.mxu0 0
    %4392 = vmatprep.subr.bf16.mxu0 0
    %4393 = vmatpush1.bf16.msra.mxu0 0
    %4394 = vmatprep.subr.bf16.mxu0 0
    %4395 = vmatpush1.bf16.msra.mxu0 0
    %4396 = vmatprep.subr.bf16.mxu0 0
    %4397 = vmatpush1.bf16.msra.mxu0 0
    %4398 = vmatprep.subr.bf16.mxu0 0
    %4399 = vmatpush1.bf16.msra.mxu0 0
    %4400 = vmatprep.subr.bf16.mxu0 0
    %4401 = vmatpush1.bf16.msra.mxu0 0
    %4402 = vmatprep.subr.bf16.mxu0 0
    %4403 = vmatpush1.bf16.msra.mxu0 0
    %4404 = vmatprep.subr.bf16.mxu0 0
    %4405 = vmatpush1.bf16.msra.mxu0 0
    %4406 = vmatprep.subr.bf16.mxu0 0
    %4407 = vmatpush1.bf16.msra.mxu0 0
    %4408 = vmatprep.subr.bf16.mxu0 0
    %4409 = vmatpush1.bf16.msra.mxu0 0
    %4410 = vmatprep.subr.bf16.mxu0 0
    %4411 = vmatpush1.bf16.msra.mxu0 0
    %4412 = vmatprep.subr.bf16.mxu0 0
    %4413 = vmatpush1.bf16.msra.mxu0 0
    %4414 = vmatprep.mubr.bf16.mxu0 0
    %4415 = vmatmul.mubr.bf16.gmra.mrb[0].mxu0 %v4377
    %v4416 = vpop.f32.mrb[0].mxu0
    %v4417 = vadd.f32 %v4329, %v4416
    %v4418 = vpop.f32.mrb[0].mxu0
    %v4419 = vadd.f32 %v4333, %v4418
    %v4420 = vpop.f32.mrb[0].mxu0
    %v4421 = vadd.f32 %v4329, %v4420
    %v4422 = vpop.f32.mrb[0].mxu0
    %v4423 = vadd.f32 %v4333, %v4422
    %4424 = vmatprep.mubr.bf16.mxu0 0
    %4425 = vmatmul.mubr.bf16.gmra.mrb[0].mxu0 %v4380
    %v4426 = vpop.f32.mrb[0].mxu0
    %v4427 = vadd.f32 %v4329, %v4426
    %v4428 = vpop.f32.mrb[0].mxu0
    %v4429 = vadd.f32 %v4333, %v4428
    %v4430 = vpop.f32.mrb[0].mxu0
    %v4431 = vadd.f32 %v4329, %v4430
    %v4432 = vpop.f32.mrb[0].mxu0
    %v4433 = vadd.f32 %v4333, %v4432
    %4434 = vdwg.mxu0
    %4435 = vst [vmem:[#allocation36] sm:$0xff] %v4417
    %4436 = vst [vmem:[#allocation36 + $0x8] sm:$0xff] %v4421
    %4437 = vst [vmem:[#allocation36 + $0x10] sm:$0xff] %v4427
    %4438 = vst [vmem:[#allocation36 + $0x18] sm:$0xff] %v4431
    %v4439 = vmul.f32 %v4419, 0.5
    %v4440 = vmul.f32 %v4423, 0.5
    %v4441 = vmul.f32 %v4429, 0.5
    %v4442 = vmul.f32 %v4433, 0.5
    %v4443 = vmul.f32 %v4419, 0.044715
    %v4444 = vmul.f32 %v4423, 0.044715
    %v4445 = vmul.f32 %v4429, 0.044715
    %v4446 = vmul.f32 %v4433, 0.044715
    %v4447 = vmul.f32 %v4443, %v4419
    %v4448 = vmul.f32 %v4444, %v4423
    %v4449 = vmul.f32 %v4445, %v4429
    %v4450 = vmul.f32 %v4446, %v4433
    %v4451 = vmul.f32 %v4447, %v4419
    %v4452 = vmul.f32 %v4448, %v4423
    %v4453 = vmul.f32 %v4449, %v4429
    %v4454 = vmul.f32 %v4450, %v4433
    %v4455 = vadd.f32 %v4419, %v4451
    %v4456 = vadd.f32 %v4423, %v4452
    %v4457 = vadd.f32 %v4429, %v4453
    %v4458 = vadd.f32 %v4433, %v4454
    %v4459 = vmul.f32 %v4455, 0.7978846
    %v4460 = vmul.f32 %v4456, 0.7978846
    %v4461 = vmul.f32 %v4457, 0.7978846
    %v4462 = vmul.f32 %v4458, 0.7978846
    %v4463 = vtanh.pop %v4459
    %v4464 = vtanh.pop %v4460
    %v4465 = vtanh.pop %v4461
    %v4466 = vtanh.pop %v4462
    %v4467 = vadd.f32 %v4463, 1.0
    %v4468 = vadd.f32 %v4464, 1.0
    %v4469 = vadd.f32 %v4465, 1.0
    %v4470 = vadd.f32 %v4466, 1.0
    %v4471 = vmul.f32 %v4439, %v4467
    %v4472 = vmul.f32 %v4440, %v4468
    %v4473 = vmul.f32 %v4441, %v4469
    %v4474 = vmul.f32 %v4442, %v4470
    %v4475 = vadd.f32 %v4023, %v4471
    %v4476 = vadd.f32 %v4026, %v4472
    %v4477 = vadd.f32 %v4031, %v4473
    %v4478 = vadd.f32 %v4034, %v4474
    %v4479 = vpack.c.bf16 %v4476, %v4475
    %v4480 = vpack.c.bf16 %v4478, %v4477
    %v4481 = vunpack.c.l.bf16 %v4479
    %v4482 = vunpack.c.h.bf16 %v4479
    %v4483 = vunpack.c.l.bf16 %v4480
    %v4484 = vunpack.c.h.bf16 %v4480
    %v4485 = vsub.f32 %v4475, %v4481
    %v4486 = vsub.f32 %v4476, %v4482
    %v4487 = vsub.f32 %v4477, %v4483
    %v4488 = vsub.f32 %v4478, %v4484
    %v4489 = vpack.c.bf16 %v4486, %v4485
    %v4490 = vpack.c.bf16 %v4488, %v4487
    %v4491 = vld [vmem:[%s77] sm:$0xf]
    %v4492 = vld [vmem:[%s77 + $0x4] sm:$0xf]
    %v4493 = vld [vmem:[%s77 + $0x8] sm:$0xf]
    %v4494 = vld [vmem:[%s77 + $0xc] sm:$0xf]
    %v4495 = vld [vmem:[%s77 + $0x10] sm:$0xf]
    %v4496 = vld [vmem:[%s77 + $0x14] sm:$0xf]
    %v4497 = vld [vmem:[%s77 + $0x18] sm:$0xf]
    %v4498 = vld [vmem:[%s77 + $0x1c] sm:$0xf]
    %v4507 = vunpack.c.l.b16 %v4491
    %v4508 = vunpack.c.l.b16 %v4492
    %v4509 = vunpack.c.l.b16 %v4493
    %v4510 = vunpack.c.l.b16 %v4494
    %v4511 = vunpack.c.l.b16 %v4495
    %v4512 = vunpack.c.l.b16 %v4496
    %v4513 = vunpack.c.l.b16 %v4497
    %v4514 = vunpack.c.l.b16 %v4498
    %v4515 = vpack.c.b16 %v4508, %v4507
    %v4516 = vpack.c.b16 %v4510, %v4509
    %v4517 = vpack.c.b16 %v4512, %v4511
    %v4518 = vpack.c.b16 %v4514, %v4513
    %v4520 = vsel %vm1831, %v4515, 0
    %v4523 = vsel %vm1831, %v4516, 0
    %v4526 = vsel %vm1831, %v4517, 0
    %v4529 = vsel %vm1831, %v4518, 0
    %4531 = vmatprep.subr.bf16.mxu0 0
    %4532 = vmatpush1.bf16.msra.mxu0 %v4489
    %4533 = vmatprep.subr.bf16.mxu0 0
    %4534 = vmatpush1.bf16.msra.mxu0 %v4490
    %4535 = vmatprep.subr.bf16.mxu0 0
    %4536 = vmatpush1.bf16.msra.mxu0 0
    %4537 = vmatprep.subr.bf16.mxu0 0
    %4538 = vmatpush1.bf16.msra.mxu0 0
    %4539 = vmatprep.subr.bf16.mxu0 0
    %4540 = vmatpush1.bf16.msra.mxu0 0
    %4541 = vmatprep.subr.bf16.mxu0 0
    %4542 = vmatpush1.bf16.msra.mxu0 0
    %4543 = vmatprep.subr.bf16.mxu0 0
    %4544 = vmatpush1.bf16.msra.mxu0 0
    %4545 = vmatprep.subr.bf16.mxu0 0
    %4546 = vmatpush1.bf16.msra.mxu0 0
    %4547 = vmatprep.subr.bf16.mxu0 0
    %4548 = vmatpush1.bf16.msra.mxu0 0
    %4549 = vmatprep.subr.bf16.mxu0 0
    %4550 = vmatpush1.bf16.msra.mxu0 0
    %4551 = vmatprep.subr.bf16.mxu0 0
    %4552 = vmatpush1.bf16.msra.mxu0 0
    %4553 = vmatprep.subr.bf16.mxu0 0
    %4554 = vmatpush1.bf16.msra.mxu0 0
    %4555 = vmatprep.subr.bf16.mxu0 0
    %4556 = vmatpush1.bf16.msra.mxu0 0
    %4557 = vmatprep.subr.bf16.mxu0 0
    %4558 = vmatpush1.bf16.msra.mxu0 0
    %4559 = vmatprep.subr.bf16.mxu0 0
    %4560 = vmatpush1.bf16.msra.mxu0 0
    %4561 = vmatprep.subr.bf16.mxu0 0
    %4562 = vmatpush1.bf16.msra.mxu0 0
    %4563 = vmatprep.mubr.bf16.mxu0 0
    %4564 = vmatmul.mubr.bf16.gmra.mrb[0].mxu0 %v4520
    %v4565 = vpop.f32.mrb[0].mxu0
    %v4566 = vadd.f32 0.0, %v4565
    %v4567 = vpop.f32.mrb[0].mxu0
    %v4568 = vpop.f32.mrb[0].mxu0
    %v4569 = vadd.f32 0.0, %v4568
    %v4570 = vpop.f32.mrb[0].mxu0
    %4571 = vmatprep.mubr.bf16.mxu0 0
    %4572 = vmatmul.mubr.bf16.gmra.mrb[0].mxu0 %v4523
    %v4573 = vpop.f32.mrb[0].mxu0
    %v4574 = vadd.f32 0.0, %v4573
    %v4575 = vpop.f32.mrb[0].mxu0
    %v4576 = vpop.f32.mrb[0].mxu0
    %v4577 = vadd.f32 0.0, %v4576
    %v4578 = vpop.f32.mrb[0].mxu0
    %4579 = vmatprep.mubr.bf16.mxu0 0
    %4580 = vmatmul.mubr.bf16.gmra.mrb[0].mxu0 %v4526
    %v4581 = vpop.f32.mrb[0].mxu0
    %v4582 = vadd.f32 0.0, %v4581
    %v4583 = vpop.f32.mrb[0].mxu0
    %v4584 = vpop.f32.mrb[0].mxu0
    %v4585 = vadd.f32 0.0, %v4584
    %v4586 = vpop.f32.mrb[0].mxu0
    %4587 = vmatprep.mubr.bf16.mxu0 0
    %4588 = vmatmul.mubr.bf16.gmra.mrb[0].mxu0 %v4529
    %v4589 = vpop.f32.mrb[0].mxu0
    %v4590 = vadd.f32 0.0, %v4589
    %v4591 = vpop.f32.mrb[0].mxu0
    %v4592 = vpop.f32.mrb[0].mxu0
    %v4593 = vadd.f32 0.0, %v4592
    %v4594 = vpop.f32.mrb[0].mxu0
    %4595 = vdwg.mxu0
    %4596 = vmatprep.subr.bf16.mxu0 0
    %4597 = vmatpush1.bf16.msra.mxu0 %v4479
    %4598 = vmatprep.subr.bf16.mxu0 0
    %4599 = vmatpush1.bf16.msra.mxu0 %v4480
    %4600 = vmatprep.subr.bf16.mxu0 0
    %4601 = vmatpush1.bf16.msra.mxu0 0
    %4602 = vmatprep.subr.bf16.mxu0 0
    %4603 = vmatpush1.bf16.msra.mxu0 0
    %4604 = vmatprep.subr.bf16.mxu0 0
    %4605 = vmatpush1.bf16.msra.mxu0 0
    %4606 = vmatprep.subr.bf16.mxu0 0
    %4607 = vmatpush1.bf16.msra.mxu0 0
    %4608 = vmatprep.subr.bf16.mxu0 0
    %4609 = vmatpush1.bf16.msra.mxu0 0
    %4610 = vmatprep.subr.bf16.mxu0 0
    %4611 = vmatpush1.bf16.msra.mxu0 0
    %4612 = vmatprep.subr.bf16.mxu0 0
    %4613 = vmatpush1.bf16.msra.mxu0 0
    %4614 = vmatprep.subr.bf16.mxu0 0
    %4615 = vmatpush1.bf16.msra.mxu0 0
    %4616 = vmatprep.subr.bf16.mxu0 0
    %4617 = vmatpush1.bf16.msra.mxu0 0
    %4618 = vmatprep.subr.bf16.mxu0 0
    %4619 = vmatpush1.bf16.msra.mxu0 0
    %4620 = vmatprep.subr.bf16.mxu0 0
    %4621 = vmatpush1.bf16.msra.mxu0 0
    %4622 = vmatprep.subr.bf16.mxu0 0
    %4623 = vmatpush1.bf16.msra.mxu0 0
    %4624 = vmatprep.subr.bf16.mxu0 0
    %4625 = vmatpush1.bf16.msra.mxu0 0
    %4626 = vmatprep.subr.bf16.mxu0 0
    %4627 = vmatpush1.bf16.msra.mxu0 0
    %4628 = vmatprep.mubr.bf16.mxu0 0
    %4629 = vmatmul.mubr.bf16.gmra.mrb[0].mxu0 %v4520
    %v4630 = vpop.f32.mrb[0].mxu0
    %v4631 = vadd.f32 %v4566, %v4630
    %v4632 = vpop.f32.mrb[0].mxu0
    %v4633 = vpop.f32.mrb[0].mxu0
    %v4634 = vadd.f32 %v4569, %v4633
    %v4635 = vpop.f32.mrb[0].mxu0
    %4636 = vmatprep.mubr.bf16.mxu0 0
    %4637 = vmatmul.mubr.bf16.gmra.mrb[0].mxu0 %v4523
    %v4638 = vpop.f32.mrb[0].mxu0
    %v4639 = vadd.f32 %v4574, %v4638
    %v4640 = vpop.f32.mrb[0].mxu0
    %v4641 = vpop.f32.mrb[0].mxu0
    %v4642 = vadd.f32 %v4577, %v4641
    %v4643 = vpop.f32.mrb[0].mxu0
    %4644 = vmatprep.mubr.bf16.mxu0 0
    %4645 = vmatmul.mubr.bf16.gmra.mrb[0].mxu0 %v4526
    %v4646 = vpop.f32.mrb[0].mxu0
    %v4647 = vadd.f32 %v4582, %v4646
    %v4648 = vpop.f32.mrb[0].mxu0
    %v4649 = vpop.f32.mrb[0].mxu0
    %v4650 = vadd.f32 %v4585, %v4649
    %v4651 = vpop.f32.mrb[0].mxu0
    %4652 = vmatprep.mubr.bf16.mxu0 0
    %4653 = vmatmul.mubr.bf16.gmra.mrb[0].mxu0 %v4529
    %v4654 = vpop.f32.mrb[0].mxu0
    %v4655 = vadd.f32 %v4590, %v4654
    %v4656 = vpop.f32.mrb[0].mxu0
    %v4657 = vpop.f32.mrb[0].mxu0
    %v4658 = vadd.f32 %v4593, %v4657
    %v4659 = vpop.f32.mrb[0].mxu0
    %4660 = vdwg.mxu0
    %v4661 = vld [vmem:[%s61] sm:$0x1]
    %v4662 = vld [vmem:[%s61 + $0x1] sm:$0x1]
    %v4663 = vpack.c.bf16 %v4634, %v4631
    %v4664 = vpack.c.bf16 %v4642, %v4639
    %v4665 = vpack.c.bf16 %v4650, %v4647
    %v4666 = vpack.c.bf16 %v4658, %v4655
    %v4667 = vld [vmem:[#allocation30] sm:$0xff]
    %v4668 = vld [vmem:[#allocation30 + $0x8] sm:$0xff]
    %v4669 = vld [vmem:[#allocation30 + $0x10] sm:$0xff]
    %v4670 = vld [vmem:[#allocation30 + $0x18] sm:$0xff]
    %v4671 = vld [vmem:[#allocation30 + $0x20] sm:$0xff]
    %v4672 = vld [vmem:[#allocation30 + $0x28] sm:$0xff]
    %v4673 = vld [vmem:[#allocation30 + $0x30] sm:$0xff]
    %v4674 = vld [vmem:[#allocation30 + $0x38] sm:$0xff]
    %v4683 = vunpack.c.l.b16 %v4667
    %v4684 = vunpack.c.h.b16 %v4667
    %v4685 = vunpack.c.l.b16 %v4668
    %v4686 = vunpack.c.h.b16 %v4668
    %v4687 = vunpack.c.l.b16 %v4669
    %v4688 = vunpack.c.h.b16 %v4669
    %v4689 = vunpack.c.l.b16 %v4670
    %v4690 = vunpack.c.h.b16 %v4670
    %v4691 = vunpack.c.l.b16 %v4671
    %v4692 = vunpack.c.h.b16 %v4671
    %v4693 = vunpack.c.l.b16 %v4672
    %v4694 = vunpack.c.h.b16 %v4672
    %v4695 = vunpack.c.l.b16 %v4673
    %v4696 = vunpack.c.h.b16 %v4673
    %v4697 = vunpack.c.l.b16 %v4674
    %v4698 = vunpack.c.h.b16 %v4674
    %v4699 = vpack.c.b16 %v4685, %v4683
    %v4700 = vpack.c.b16 %v4686, %v4684
    %v4701 = vpack.c.b16 %v4689, %v4687
    %v4702 = vpack.c.b16 %v4690, %v4688
    %v4703 = vpack.c.b16 %v4693, %v4691
    %v4704 = vpack.c.b16 %v4694, %v4692
    %v4705 = vpack.c.b16 %v4697, %v4695
    %v4706 = vpack.c.b16 %v4698, %v4696
    %v4716 = vsel %vm553, %v4663, 0
    %v4719 = vsel %vm553, %v4664, 0
    %v4722 = vsel %vm553, %v4665, 0
    %v4725 = vsel %vm553, %v4666, 0
    %4727 = vmatprep.subr.bf16.mxu0 %v4700
    %4728 = vmatpush1.bf16.msra.mxu0 %v4699
    %4729 = vmatprep.subr.bf16.mxu0 %v4702
    %4730 = vmatpush1.bf16.msra.mxu0 %v4701
    %4731 = vmatprep.subr.bf16.mxu0 %v4704
    %4732 = vmatpush1.bf16.msra.mxu0 %v4703
    %4733 = vmatprep.subr.bf16.mxu0 %v4706
    %4734 = vmatpush1.bf16.msra.mxu0 %v4705
    %4735 = vmatprep.subr.bf16.mxu0 0
    %4736 = vmatpush1.bf16.msra.mxu0 0
    %4737 = vmatprep.subr.bf16.mxu0 0
    %4738 = vmatpush1.bf16.msra.mxu0 0
    %4739 = vmatprep.subr.bf16.mxu0 0
    %4740 = vmatpush1.bf16.msra.mxu0 0
    %4741 = vmatprep.subr.bf16.mxu0 0
    %4742 = vmatpush1.bf16.msra.mxu0 0
    %4743 = vmatprep.subr.bf16.mxu0 0
    %4744 = vmatpush1.bf16.msra.mxu0 0
    %4745 = vmatprep.subr.bf16.mxu0 0
    %4746 = vmatpush1.bf16.msra.mxu0 0
    %4747 = vmatprep.subr.bf16.mxu0 0
    %4748 = vmatpush1.bf16.msra.mxu0 0
    %4749 = vmatprep.subr.bf16.mxu0 0
    %4750 = vmatpush1.bf16.msra.mxu0 0
    %4751 = vmatprep.subr.bf16.mxu0 0
    %4752 = vmatpush1.bf16.msra.mxu0 0
    %4753 = vmatprep.subr.bf16.mxu0 0
    %4754 = vmatpush1.bf16.msra.mxu0 0
    %4755 = vmatprep.subr.bf16.mxu0 0
    %4756 = vmatpush1.bf16.msra.mxu0 0
    %4757 = vmatprep.subr.bf16.mxu0 0
    %4758 = vmatpush1.bf16.msra.mxu0 0
    %4759 = vmatprep.mubr.bf16.mxu0 0
    %4760 = vmatmul.mubr.bf16.gmra.mrb[0].mxu0 %v4716
    %v4761 = vpop.f32.mrb[0].mxu0
    %v4762 = vadd.f32 0.0, %v4761
    %v4763 = vpop.f32.mrb[0].mxu0
    %v4764 = vadd.f32 0.0, %v4763
    %v4765 = vpop.f32.mrb[0].mxu0
    %v4766 = vadd.f32 0.0, %v4765
    %v4767 = vpop.f32.mrb[0].mxu0
    %v4768 = vadd.f32 0.0, %v4767
    %4769 = vmatprep.mubr.bf16.mxu0 0
    %4770 = vmatmul.mubr.bf16.gmra.mrb[0].mxu0 %v4719
    %v4771 = vpop.f32.mrb[0].mxu0
    %v4772 = vadd.f32 0.0, %v4771
    %v4773 = vpop.f32.mrb[0].mxu0
    %v4774 = vadd.f32 0.0, %v4773
    %v4775 = vpop.f32.mrb[0].mxu0
    %v4776 = vadd.f32 0.0, %v4775
    %v4777 = vpop.f32.mrb[0].mxu0
    %v4778 = vadd.f32 0.0, %v4777
    %4779 = vmatprep.mubr.bf16.mxu0 0
    %4780 = vmatmul.mubr.bf16.gmra.mrb[0].mxu0 %v4722
    %v4781 = vpop.f32.mrb[0].mxu0
    %v4782 = vadd.f32 0.0, %v4781
    %v4783 = vpop.f32.mrb[0].mxu0
    %v4784 = vadd.f32 0.0, %v4783
    %v4785 = vpop.f32.mrb[0].mxu0
    %v4786 = vadd.f32 0.0, %v4785
    %v4787 = vpop.f32.mrb[0].mxu0
    %v4788 = vadd.f32 0.0, %v4787
    %4789 = vmatprep.mubr.bf16.mxu0 0
    %4790 = vmatmul.mubr.bf16.gmra.mrb[0].mxu0 %v4725
    %v4791 = vpop.f32.mrb[0].mxu0
    %v4792 = vadd.f32 0.0, %v4791
    %v4793 = vpop.f32.mrb[0].mxu0
    %v4794 = vadd.f32 0.0, %v4793
    %v4795 = vpop.f32.mrb[0].mxu0
    %v4796 = vadd.f32 0.0, %v4795
    %v4797 = vpop.f32.mrb[0].mxu0
    %v4798 = vadd.f32 0.0, %v4797
    %4799 = vdwg.mxu0
    %v4816 = vrot.slane %v4762, 7
    %v4817 = vrot.slane %v4764, 7
    %v4818 = vrot.slane %v4766, 7
    %v4819 = vsel %vm655, %v4816, %v4818
    %v4820 = vrot.slane %v4768, 7
    %v4821 = vsel %vm655, %v4817, %v4820
    %v4822 = vrot.slane %v4772, 7
    %v4823 = vsel %vm655, %v4818, %v4822
    %v4824 = vrot.slane %v4774, 7
    %v4825 = vsel %vm655, %v4820, %v4824
    %v4826 = vrot.slane %v4776, 7
    %v4827 = vsel %vm655, %v4822, %v4826
    %v4828 = vrot.slane %v4778, 7
    %v4829 = vsel %vm655, %v4824, %v4828
    %v4830 = vrot.slane %v4782, 7
    %v4831 = vsel %vm655, %v4826, %v4830
    %v4832 = vrot.slane %v4784, 7
    %v4833 = vsel %vm655, %v4828, %v4832
    %v4834 = vrot.slane %v4786, 7
    %v4835 = vsel %vm655, %v4830, %v4834
    %v4836 = vrot.slane %v4788, 7
    %v4837 = vsel %vm655, %v4832, %v4836
    %v4838 = vrot.slane %v4792, 7
    %v4839 = vsel %vm655, %v4834, %v4838
    %v4840 = vrot.slane %v4794, 7
    %v4841 = vsel %vm655, %v4836, %v4840
    %v4842 = vrot.slane %v4796, 7
    %v4843 = vsel %vm655, %v4838, %v4842
    %v4844 = vrot.slane %v4798, 7
    %v4845 = vsel %vm655, %v4840, %v4844
    %4864 = vst [vmem:[#allocation2] sm:$0xfe] %v4816
    %4865 = vst.msk [vmem:[#allocation2 + $0x8] sm:$0xfe] %vm705, %v4817
    %4866 = vst [vmem:[#allocation2 + $0x10] sm:$0xff] %v4819
    %4867 = vst.msk [vmem:[#allocation2 + $0x18] sm:$0xff] %vm553, %v4821
    %4868 = vst [vmem:[#allocation2 + $0x20] sm:$0xff] %v4823
    %4869 = vst.msk [vmem:[#allocation2 + $0x28] sm:$0xff] %vm553, %v4825
    %4870 = vst [vmem:[#allocation2 + $0x30] sm:$0xff] %v4827
    %4871 = vst.msk [vmem:[#allocation2 + $0x38] sm:$0xff] %vm553, %v4829
    %4872 = vst [vmem:[#allocation2 + $0x40] sm:$0xff] %v4831
    %4873 = vst.msk [vmem:[#allocation2 + $0x48] sm:$0xff] %vm553, %v4833
    %4874 = vst [vmem:[#allocation2 + $0x50] sm:$0xff] %v4835
    %4875 = vst.msk [vmem:[#allocation2 + $0x58] sm:$0xff] %vm553, %v4837
    %4876 = vst [vmem:[#allocation2 + $0x60] sm:$0xff] %v4839
    %4877 = vst.msk [vmem:[#allocation2 + $0x68] sm:$0xff] %vm553, %v4841
    %4878 = vst [vmem:[#allocation2 + $0x70] sm:$0xff] %v4843
    %4879 = vst.msk [vmem:[#allocation2 + $0x78] sm:$0xff] %vm553, %v4845
    %4880 = vst [vmem:[#allocation2 + $0x80] sm:$0x1] %v4842
    %4881 = vst.msk [vmem:[#allocation2 + $0x88] sm:$0x1] %vm722, %v4844
    %v4882 = vld [vmem:[#allocation2] sm:$0xff]
    %v4883 = vld [vmem:[#allocation2 + $0x10] sm:$0xff]
    %v4884 = vld [vmem:[#allocation2 + $0x20] sm:$0xff]
    %v4885 = vld [vmem:[#allocation2 + $0x30] sm:$0xff]
    %v4886 = vld [vmem:[#allocation2 + $0x40] sm:$0xff]
    %v4887 = vld [vmem:[#allocation2 + $0x50] sm:$0xff]
    %v4888 = vld [vmem:[#allocation2 + $0x60] sm:$0xff]
    %v4889 = vld [vmem:[#allocation2 + $0x70] sm:$0xff]
    %v4890 = vld [vmem:[#allocation2] sm:$0xfc]
    %v4891 = vld [vmem:[#allocation2 + $0x80] sm:$0x3]
    %v4892 = vld [vmem:[#allocation2 + $0x8] sm:$0xff]
    %v4893 = vld [vmem:[#allocation2 + $0x18] sm:$0xff]
    %v4894 = vld [vmem:[#allocation2 + $0x28] sm:$0xff]
    %v4895 = vld [vmem:[#allocation2 + $0x38] sm:$0xff]
    %v4896 = vld [vmem:[#allocation2 + $0x48] sm:$0xff]
    %v4897 = vld [vmem:[#allocation2 + $0x58] sm:$0xff]
    %v4898 = vld [vmem:[#allocation2 + $0x68] sm:$0xff]
    %v4899 = vld [vmem:[#allocation2 + $0x78] sm:$0xff]
    %v4900 = vld [vmem:[#allocation2 + $0x8] sm:$0xfc]
    %v4901 = vld [vmem:[#allocation2 + $0x88] sm:$0x3]
    %v4911 = vrot.slane %v4890, 2
    %v4912 = vrot.slane %v4883, 2
    %v4913 = vsel %vm793, %v4911, %v4912
    %v4914 = vrot.slane %v4884, 2
    %v4915 = vsel %vm793, %v4912, %v4914
    %v4916 = vrot.slane %v4885, 2
    %v4917 = vsel %vm793, %v4914, %v4916
    %v4918 = vrot.slane %v4886, 2
    %v4919 = vsel %vm793, %v4916, %v4918
    %v4920 = vrot.slane %v4887, 2
    %v4921 = vsel %vm793, %v4918, %v4920
    %v4922 = vrot.slane %v4888, 2
    %v4923 = vsel %vm793, %v4920, %v4922
    %v4924 = vrot.slane %v4889, 2
    %v4925 = vsel %vm793, %v4922, %v4924
    %v4926 = vrot.slane %v4891, 2
    %v4927 = vsel %vm793, %v4924, %v4926
    %v4936 = vsel %vm776, %v4913, %v4882
    %v4937 = vsel %vm777, %v4915, %v4883
    %v4938 = vsel %vm778, %v4917, %v4884
    %v4939 = vsel %vm779, %v4919, %v4885
    %v4940 = vsel %vm780, %v4921, %v4886
    %v4941 = vsel %vm781, %v4923, %v4887
    %v4942 = vsel %vm782, %v4925, %v4888
    %v4943 = vsel %vm783, %v4927, %v4889
    %4944 = vrot.lane.b32.xlu0 %v4762, 64
    %v4945 = vpop.permute.xlu0 %4944
    %4946 = vrot.lane.b32.xlu0 %v4766, 64
    %v4947 = vpop.permute.xlu0 %4946
    %4948 = vrot.lane.b32.xlu0 %v4772, 64
    %v4949 = vpop.permute.xlu0 %4948
    %4950 = vrot.lane.b32.xlu0 %v4776, 64
    %v4951 = vpop.permute.xlu0 %4950
    %4952 = vrot.lane.b32.xlu0 %v4782, 64
    %v4953 = vpop.permute.xlu0 %4952
    %4954 = vrot.lane.b32.xlu0 %v4786, 64
    %v4955 = vpop.permute.xlu0 %4954
    %4956 = vrot.lane.b32.xlu0 %v4792, 64
    %v4957 = vpop.permute.xlu0 %4956
    %4958 = vrot.lane.b32.xlu0 %v4796, 64
    %v4959 = vpop.permute.xlu0 %4958
    %v4968 = vadd.f32 %v4936, %v4945
    %v4969 = vadd.f32 %v4937, %v4947
    %v4970 = vadd.f32 %v4938, %v4949
    %v4971 = vadd.f32 %v4939, %v4951
    %v4972 = vadd.f32 %v4940, %v4953
    %v4973 = vadd.f32 %v4941, %v4955
    %v4974 = vadd.f32 %v4942, %v4957
    %v4975 = vadd.f32 %v4943, %v4959
    %v4985 = vrot.slane %v4900, 2
    %v4986 = vrot.slane %v4893, 2
    %v4987 = vsel %vm793, %v4985, %v4986
    %v4988 = vrot.slane %v4894, 2
    %v4989 = vsel %vm793, %v4986, %v4988
    %v4990 = vrot.slane %v4895, 2
    %v4991 = vsel %vm793, %v4988, %v4990
    %v4992 = vrot.slane %v4896, 2
    %v4993 = vsel %vm793, %v4990, %v4992
    %v4994 = vrot.slane %v4897, 2
    %v4995 = vsel %vm793, %v4992, %v4994
    %v4996 = vrot.slane %v4898, 2
    %v4997 = vsel %vm793, %v4994, %v4996
    %v4998 = vrot.slane %v4899, 2
    %v4999 = vsel %vm793, %v4996, %v4998
    %v5000 = vrot.slane %v4901, 2
    %v5001 = vsel %vm793, %v4998, %v5000
    %v5010 = vsel %vm891, %v4892, %v4987
    %v5011 = vsel %vm892, %v4893, %v4989
    %v5012 = vsel %vm893, %v4894, %v4991
    %v5013 = vsel %vm894, %v4895, %v4993
    %v5014 = vsel %vm895, %v4896, %v4995
    %v5015 = vsel %vm896, %v4897, %v4997
    %v5016 = vsel %vm897, %v4898, %v4999
    %v5017 = vsel %vm898, %v4899, %v5001
    %v5018 = vadd.f32 %v4968, %v5010
    %v5019 = vadd.f32 %v4969, %v5011
    %v5020 = vadd.f32 %v4970, %v5012
    %v5021 = vadd.f32 %v4971, %v5013
    %v5022 = vadd.f32 %v4972, %v5014
    %v5023 = vadd.f32 %v4973, %v5015
    %v5024 = vadd.f32 %v4974, %v5016
    %v5025 = vadd.f32 %v4975, %v5017
    %v5026 = vlaneseq
    %v5027 = vshrl.u32 %v5026, 7
    %v5028 = vsub.s32 0, %v5027
    %v5029 = vrot.slane %v4661, %v5028
    %v5030 = vadd.f32 %v5018, %v5029
    %v5031 = vadd.f32 %v5019, %v5029
    %v5032 = vadd.f32 %v5020, %v5029
    %v5033 = vadd.f32 %v5021, %v5029
    %v5034 = vadd.f32 %v5022, %v5029
    %v5035 = vadd.f32 %v5023, %v5029
    %v5036 = vadd.f32 %v5024, %v5029
    %v5037 = vadd.f32 %v5025, %v5029
    %v5038 = vmul.f32 %v5030, 0.5
    %v5039 = vmul.f32 %v5031, 0.5
    %v5040 = vmul.f32 %v5032, 0.5
    %v5041 = vmul.f32 %v5033, 0.5
    %v5042 = vmul.f32 %v5034, 0.5
    %v5043 = vmul.f32 %v5035, 0.5
    %v5044 = vmul.f32 %v5036, 0.5
    %v5045 = vmul.f32 %v5037, 0.5
    %v5046 = vmul.f32 %v5030, 0.044715
    %v5047 = vmul.f32 %v5031, 0.044715
    %v5048 = vmul.f32 %v5032, 0.044715
    %v5049 = vmul.f32 %v5033, 0.044715
    %v5050 = vmul.f32 %v5034, 0.044715
    %v5051 = vmul.f32 %v5035, 0.044715
    %v5052 = vmul.f32 %v5036, 0.044715
    %v5053 = vmul.f32 %v5037, 0.044715
    %v5054 = vmul.f32 %v5046, %v5030
    %v5055 = vmul.f32 %v5047, %v5031
    %v5056 = vmul.f32 %v5048, %v5032
    %v5057 = vmul.f32 %v5049, %v5033
    %v5058 = vmul.f32 %v5050, %v5034
    %v5059 = vmul.f32 %v5051, %v5035
    %v5060 = vmul.f32 %v5052, %v5036
    %v5061 = vmul.f32 %v5053, %v5037
    %v5062 = vmul.f32 %v5054, %v5030
    %v5063 = vmul.f32 %v5055, %v5031
    %v5064 = vmul.f32 %v5056, %v5032
    %v5065 = vmul.f32 %v5057, %v5033
    %v5066 = vmul.f32 %v5058, %v5034
    %v5067 = vmul.f32 %v5059, %v5035
    %v5068 = vmul.f32 %v5060, %v5036
    %v5069 = vmul.f32 %v5061, %v5037
    %v5070 = vadd.f32 %v5030, %v5062
    %v5071 = vadd.f32 %v5031, %v5063
    %v5072 = vadd.f32 %v5032, %v5064
    %v5073 = vadd.f32 %v5033, %v5065
    %v5074 = vadd.f32 %v5034, %v5066
    %v5075 = vadd.f32 %v5035, %v5067
    %v5076 = vadd.f32 %v5036, %v5068
    %v5077 = vadd.f32 %v5037, %v5069
    %v5078 = vmul.f32 %v5070, 0.7978846
    %v5079 = vmul.f32 %v5071, 0.7978846
    %v5080 = vmul.f32 %v5072, 0.7978846
    %v5081 = vmul.f32 %v5073, 0.7978846
    %v5082 = vmul.f32 %v5074, 0.7978846
    %v5083 = vmul.f32 %v5075, 0.7978846
    %v5084 = vmul.f32 %v5076, 0.7978846
    %v5085 = vmul.f32 %v5077, 0.7978846
    %v5086 = vtanh.pop %v5078
    %v5087 = vtanh.pop %v5079
    %v5088 = vtanh.pop %v5080
    %v5089 = vtanh.pop %v5081
    %v5090 = vtanh.pop %v5082
    %v5091 = vtanh.pop %v5083
    %v5092 = vtanh.pop %v5084
    %v5093 = vtanh.pop %v5085
    %v5094 = vadd.f32 %v5086, 1.0
    %v5095 = vadd.f32 %v5087, 1.0
    %v5096 = vadd.f32 %v5088, 1.0
    %v5097 = vadd.f32 %v5089, 1.0
    %v5098 = vadd.f32 %v5090, 1.0
    %v5099 = vadd.f32 %v5091, 1.0
    %v5100 = vadd.f32 %v5092, 1.0
    %v5101 = vadd.f32 %v5093, 1.0
    %v5102 = vmul.f32 %v5038, %v5094
    %v5103 = vmul.f32 %v5039, %v5095
    %v5104 = vmul.f32 %v5040, %v5096
    %v5105 = vmul.f32 %v5041, %v5097
    %v5106 = vmul.f32 %v5042, %v5098
    %v5107 = vmul.f32 %v5043, %v5099
    %v5108 = vmul.f32 %v5044, %v5100
    %v5109 = vmul.f32 %v5045, %v5101
    %v5110 = vadd.f32 %v5102, %v1120
    %v5111 = vadd.f32 %v5103, %v1123
    %v5112 = vadd.f32 %v5104, %v1128
    %v5113 = vadd.f32 %v5105, %v1131
    %v5114 = vadd.f32 %v5106, %v1136
    %v5115 = vadd.f32 %v5107, %v1139
    %v5116 = vadd.f32 %v5108, %v1144
    %v5117 = vadd.f32 %v5109, %v1147
    %v5118 = vpack.c.bf16 %v5111, %v5110
    %v5119 = vpack.c.bf16 %v5113, %v5112
    %v5120 = vpack.c.bf16 %v5115, %v5114
    %v5121 = vpack.c.bf16 %v5117, %v5116
    %v5122 = vld [vmem:[%s59] sm:$0xf]
    %v5123 = vld [vmem:[%s59 + $0x4] sm:$0xf]
    %v5124 = vld [vmem:[%s59 + $0x8] sm:$0xf]
    %v5125 = vld [vmem:[%s59 + $0xc] sm:$0xf]
    %v5126 = vld [vmem:[%s59 + $0x10] sm:$0xf]
    %v5127 = vld [vmem:[%s59 + $0x14] sm:$0xf]
    %v5128 = vld [vmem:[%s59 + $0x18] sm:$0xf]
    %v5129 = vld [vmem:[%s59 + $0x1c] sm:$0xf]
    %v5130 = vlaneseq
    %v5131 = vshrl.u32 %v5130, 7
    %v5132 = vsub.s32 0, %v5131
    %v5133 = vrot.slane %v4662, %v5132
    %v5142 = vunpack.c.l.b16 %v5122
    %v5143 = vunpack.c.l.b16 %v5123
    %v5144 = vunpack.c.l.b16 %v5124
    %v5145 = vunpack.c.l.b16 %v5125
    %v5146 = vunpack.c.l.b16 %v5126
    %v5147 = vunpack.c.l.b16 %v5127
    %v5148 = vunpack.c.l.b16 %v5128
    %v5149 = vunpack.c.l.b16 %v5129
    %v5150 = vpack.c.b16 %v5143, %v5142
    %v5151 = vpack.c.b16 %v5145, %v5144
    %v5152 = vpack.c.b16 %v5147, %v5146
    %v5153 = vpack.c.b16 %v5149, %v5148
    %v5159 = vsel %vm553, %v5118, 0
    %v5162 = vsel %vm553, %v5119, 0
    %v5165 = vsel %vm553, %v5120, 0
    %v5168 = vsel %vm553, %v5121, 0
    %5170 = vmatprep.subr.bf16.mxu0 0
    %5171 = vmatpush1.bf16.msra.mxu0 %v5150
    %5172 = vmatprep.subr.bf16.mxu0 0
    %5173 = vmatpush1.bf16.msra.mxu0 %v5151
    %5174 = vmatprep.subr.bf16.mxu0 0
    %5175 = vmatpush1.bf16.msra.mxu0 %v5152
    %5176 = vmatprep.subr.bf16.mxu0 0
    %5177 = vmatpush1.bf16.msra.mxu0 %v5153
    %5178 = vmatprep.subr.bf16.mxu0 0
    %5179 = vmatpush1.bf16.msra.mxu0 0
    %5180 = vmatprep.subr.bf16.mxu0 0
    %5181 = vmatpush1.bf16.msra.mxu0 0
    %5182 = vmatprep.subr.bf16.mxu0 0
    %5183 = vmatpush1.bf16.msra.mxu0 0
    %5184 = vmatprep.subr.bf16.mxu0 0
    %5185 = vmatpush1.bf16.msra.mxu0 0
    %5186 = vmatprep.subr.bf16.mxu0 0
    %5187 = vmatpush1.bf16.msra.mxu0 0
    %5188 = vmatprep.subr.bf16.mxu0 0
    %5189 = vmatpush1.bf16.msra.mxu0 0
    %5190 = vmatprep.subr.bf16.mxu0 0
    %5191 = vmatpush1.bf16.msra.mxu0 0
    %5192 = vmatprep.subr.bf16.mxu0 0
    %5193 = vmatpush1.bf16.msra.mxu0 0
    %5194 = vmatprep.subr.bf16.mxu0 0
    %5195 = vmatpush1.bf16.msra.mxu0 0
    %5196 = vmatprep.subr.bf16.mxu0 0
    %5197 = vmatpush1.bf16.msra.mxu0 0
    %5198 = vmatprep.subr.bf16.mxu0 0
    %5199 = vmatpush1.bf16.msra.mxu0 0
    %5200 = vmatprep.subr.bf16.mxu0 0
    %5201 = vmatpush1.bf16.msra.mxu0 0
    %5202 = vmatprep.mubr.bf16.mxu0 0
    %5203 = vmatmul.mubr.bf16.gmra.mrb[0].mxu0 %v5159
    %v5204 = vpop.f32.mrb[0].mxu0
    %v5205 = vadd.f32 %v5133, %v5204
    %v5206 = vpop.f32.mrb[0].mxu0
    %v5207 = vpop.f32.mrb[0].mxu0
    %v5208 = vadd.f32 %v5133, %v5207
    %v5209 = vpop.f32.mrb[0].mxu0
    %5210 = vmatprep.mubr.bf16.mxu0 0
    %5211 = vmatmul.mubr.bf16.gmra.mrb[0].mxu0 %v5162
    %v5212 = vpop.f32.mrb[0].mxu0
    %v5213 = vadd.f32 %v5133, %v5212
    %v5214 = vpop.f32.mrb[0].mxu0
    %v5215 = vpop.f32.mrb[0].mxu0
    %v5216 = vadd.f32 %v5133, %v5215
    %v5217 = vpop.f32.mrb[0].mxu0
    %5218 = vmatprep.mubr.bf16.mxu0 0
    %5219 = vmatmul.mubr.bf16.gmra.mrb[0].mxu0 %v5165
    %v5220 = vpop.f32.mrb[0].mxu0
    %v5221 = vadd.f32 %v5133, %v5220
    %v5222 = vpop.f32.mrb[0].mxu0
    %v5223 = vpop.f32.mrb[0].mxu0
    %v5224 = vadd.f32 %v5133, %v5223
    %v5225 = vpop.f32.mrb[0].mxu0
    %5226 = vmatprep.mubr.bf16.mxu0 0
    %5227 = vmatmul.mubr.bf16.gmra.mrb[0].mxu0 %v5168
    %v5228 = vpop.f32.mrb[0].mxu0
    %v5229 = vadd.f32 %v5133, %v5228
    %v5230 = vpop.f32.mrb[0].mxu0
    %v5231 = vpop.f32.mrb[0].mxu0
    %v5232 = vadd.f32 %v5133, %v5231
    %v5233 = vpop.f32.mrb[0].mxu0
    %5234 = vdwg.mxu0
    %5235 = vst [vmem:[#allocation38] sm:$0xff] %v5205
    %5236 = vst [vmem:[#allocation38 + $0x8] sm:$0xff] %v5208
    %5237 = vst [vmem:[#allocation38 + $0x10] sm:$0xff] %v5213
    %5238 = vst [vmem:[#allocation38 + $0x18] sm:$0xff] %v5216
    %5239 = vst [vmem:[#allocation38 + $0x20] sm:$0xff] %v5221
    %5240 = vst [vmem:[#allocation38 + $0x28] sm:$0xff] %v5224
    %5241 = vst [vmem:[#allocation38 + $0x30] sm:$0xff] %v5229
    %5242 = vst [vmem:[#allocation38 + $0x38] sm:$0xff] %v5232
    // Predicated region
    $region250: #{uencoder_forward.1} parent=1 // pred_check
      _
    $region251: #{uencoder_forward.1} parent=1 // pred_check_branch
      %5244 = sbr.rel (0) target = $region253
    $region252: #{uencoder_forward.1} parent=1 // pred_region
      %s5246 = ssub.s32 64, 64
      %5247 = vsyncadd [#allocation5], %s5246
      %s5249 = sshll.u32 [#allocation32], 4
      %s5250 = int_to_ptr.vmem [resolvable:$true] %s5249
      %5252 = dma.vmem_to_hbm [thread:$0]  %s5250, 64, %s89, [#allocation5]
    $region253: #{uencoder_forward.1} parent=1 // pred_fallthru
      _
    // Predicated region
    $region254: #{uencoder_forward.1} parent=1 // pred_check
      _
    $region255: #{uencoder_forward.1} parent=1 // pred_check_branch
      %5254 = sbr.rel (0) target = $region257
    $region256: #{uencoder_forward.1} parent=1 // pred_region
      %s5256 = ssub.s32 128, 128
      %5257 = vsyncadd [#allocation34], %s5256
      %s5259 = sshll.u32 [#allocation33], 4
      %s5260 = int_to_ptr.vmem [resolvable:$true] %s5259
      %5262 = dma.vmem_to_hbm [thread:$0]  %s5260, 128, %s91, [#allocation34]
    $region257: #{uencoder_forward.1} parent=1 // pred_fallthru
      _
    // Predicated region
    $region258: #{uencoder_forward.1} parent=1 // pred_check
      _
    $region259: #{uencoder_forward.1} parent=1 // pred_check_branch
      %5264 = sbr.rel (0) target = $region261
    $region260: #{uencoder_forward.1} parent=1 // pred_region
      %s5266 = ssub.s32 256, 256
      %5267 = vsyncadd [#allocation34], %s5266
      %s5268 = sshll.u32 [#allocation35], 4
      %s5269 = int_to_ptr.vmem [resolvable:$true] %s5268
      %5274 = dma.vmem_to_hbm [thread:$0]  %s5269, 256, %s93, [#allocation34], 128, 128, 8
    $region261: #{uencoder_forward.1} parent=1 // pred_fallthru
      _
    // Predicated region
    $region262: #{uencoder_forward.1} parent=1 // pred_check
      _
    $region263: #{uencoder_forward.1} parent=1 // pred_check_branch
      %5276 = sbr.rel (0) target = $region265
    $region264: #{uencoder_forward.1} parent=1 // pred_region
      %s5278 = ssub.s32 512, 512
      %5279 = vsyncadd [#allocation37], %s5278
      %s5280 = sshll.u32 [#allocation36], 4
      %s5281 = int_to_ptr.vmem [resolvable:$true] %s5280
      %5286 = dma.vmem_to_hbm [thread:$0]  %s5281, 512, %s95, [#allocation37], 128, 128, 8
    $region265: #{uencoder_forward.1} parent=1 // pred_fallthru
      _
    // Predicated region
    $region266: #{uencoder_forward.1} parent=1 // pred_check
      _
    $region267: #{uencoder_forward.1} parent=1 // pred_check_branch
      %5288 = sbr.rel (0) target = $region269
    $region268: #{uencoder_forward.1} parent=1 // pred_region
      %s5290 = ssub.s32 1024, 1024
      %5291 = vsyncadd [#allocation37], %s5290
      %s5292 = sshll.u32 [#allocation38], 4
      %s5293 = int_to_ptr.vmem [resolvable:$true] %s5292
      %5298 = dma.vmem_to_hbm [thread:$0]  %s5293, 1024, %s97, [#allocation37], 128, 128, 8
    $region269: #{uencoder_forward.1} parent=1 // pred_fallthru
      _
    // Predicated region
    $region270: #{uencoder_forward.1} parent=1 // pred_check
      _
    $region271: #{uencoder_forward.1} parent=1 // pred_check_branch
      %5300 = sbr.rel (0) target = $region273
    $region272: #{uencoder_forward.1} parent=1 // pred_region
      %5301 = dma.done [#allocation5], 64
    $region273: #{uencoder_forward.1} parent=1 // pred_fallthru
      _
    // Predicated region
    $region274: #{uencoder_forward.1} parent=1 // pred_check
      _
    $region275: #{uencoder_forward.1} parent=1 // pred_check_branch
      %5303 = sbr.rel (0) target = $region277
    $region276: #{uencoder_forward.1} parent=1 // pred_region
      %5304 = dma.done [#allocation34], 128
    $region277: #{uencoder_forward.1} parent=1 // pred_fallthru
      _
    // Predicated region
    $region278: #{uencoder_forward.1} parent=1 // pred_check
      _
    $region279: #{uencoder_forward.1} parent=1 // pred_check_branch
      %5306 = sbr.rel (0) target = $region281
    $region280: #{uencoder_forward.1} parent=1 // pred_region
      %5307 = dma.done [#allocation34], 256
    $region281: #{uencoder_forward.1} parent=1 // pred_fallthru
      _
    // Predicated region
    $region282: #{uencoder_forward.1} parent=1 // pred_check
      _
    $region283: #{uencoder_forward.1} parent=1 // pred_check_branch
      %5309 = sbr.rel (0) target = $region285
    $region284: #{uencoder_forward.1} parent=1 // pred_region
      %5310 = dma.done [#allocation37], 512
    $region285: #{uencoder_forward.1} parent=1 // pred_fallthru
      _
    // Predicated region
    $region286: #{uencoder_forward.1} parent=1 // pred_check
      _
    $region287: #{uencoder_forward.1} parent=1 // pred_check_branch
      %5312 = sbr.rel (0) target = $region289
    $region288: #{uencoder_forward.1} parent=1 // pred_region
      %5313 = dma.done [#allocation37], 1024
    $region289: #{uencoder_forward.1} parent=1 // pred_fallthru
      _
    %5314 = vsyncpa [#allocation4], 1
    %5315 = vsyncpa [#allocation7], 1
    %5316 = vsyncpa [#allocation10], 1
    %5317 = vsyncpa [#allocation13], 1
    %5318 = vsyncpa [#allocation16], 1
    %5319 = vsyncpa [#allocation19], 1
    %5320 = vsyncpa [#allocation22], 1
    %5321 = vsyncpa [#allocation25], 1
    %5322 = vsyncpa [#allocation28], 1
    %5323 = vsyncpa [#allocation31], 1
    %5324 = vsyncpa [#allocation5], 1
    %5325 = vsyncpa [#allocation34], 1
    %5326 = vsyncpa [#allocation37], 1

</llo_original>
